<compile_context>
chip_gen: v7x
topology: tpu7x:2x2x1
jax: 0.10.0
libtpu: 0.0.40
codegen_flags: <defaults>
</compile_context>

<pallas_src>
import functools

import numpy as np
import jax
import jax.numpy as jnp
from jax.experimental import pallas as pl
from jax.experimental.pallas import tpu as pltpu


def _round_up(v, m):
    return ((v + m - 1) // m) * m


# ------------------------------ static plan ----------------------------------

def make_plan(image_size, image_channel_size, channel_size, num_classes=10,
              batch_tile=2):
    """Static layout plan: column-space strides/offsets, matmul widths, masks."""
    H = W = image_size
    assert H % 8 == 0, "image_size must be divisible by 8"
    B = batch_tile
    Cin = image_channel_size
    cs = channel_size
    C = (Cin, cs, 2 * cs, 4 * cs)
    Hs = (H, H // 2, H // 4, H // 8)
    Ws = (W, W // 2, W // 4, W // 8)

    R0 = B * W                      # base row stride of the column space
    U = R0 + B
    O = (7 * U, 6 * U, 4 * U, 0)    # valid-data offsets: input, act1, act2, act3
    strides = tuple((R0 << l, B << l) for l in range(4))

    def needed(l):                  # columns needed to hold layer-l valid data
        ry, rx = strides[l]
        return O[l] + ry * (Hs[l] - 1) + rx * (Ws[l] - 1) + B

    # max patch-read offset of layer l = 3 * (row + col stride of its *input*)
    dmax = (None, 3 * U, 6 * U, 12 * U)
    nc3 = _round_up(needed(3), 128)
    nc2 = _round_up(max(needed(2), nc3 + dmax[3]), 128)
    nc1 = _round_up(max(needed(1), nc2 + dmax[2]), 128)
    nc0 = _round_up(max(O[0] + B * H * W, nc1 + dmax[1]), 128)
    NC = (nc0, nc1, nc2, nc3)

    # per-tap read offsets (into each layer's *input* buffer)
    deltas = tuple(
        tuple(kh * strides[l - 1][0] + kw * strides[l - 1][1]
              for kh in range(4) for kw in range(4))
        for l in (1, 2, 3))

    # per-tap {0,1} masks over each layer's output columns (implements the
    # conv zero padding and zeroes the redundant / out-of-image columns).
    masks = []
    for l in (1, 2, 3):
        ry, rx = strides[l]
        n = np.arange(NC[l], dtype=np.int64)
        t = n - O[l]
        y = t // ry
        r = t - y * ry
        x = r // rx
        b = r - x * rx
        col_ok = (t >= 0) & (y < Hs[l]) & (x < Ws[l]) & (b < B)
        m = np.zeros((16, NC[l]), np.float32)
        for kh in range(4):
            for kw in range(4):
                yi = 2 * y + kh - 1
                xi = 2 * x + kw - 1
                ok = (col_ok & (yi >= 0) & (yi < Hs[l - 1])
                      & (xi >= 0) & (xi < Ws[l - 1]))
                m[kh * 4 + kw] = ok.astype(np.float32)
        masks.append(m)

    ry3, rx3 = strides[3]
    head_pos = tuple(O[3] + y * ry3 + x * rx3
                     for y in range(Hs[3]) for x in range(Ws[3]))

    return dict(H=H, W=W, B=B, Cin=Cin, cs=cs, C=C, Hs=Hs, Ws=Ws,
                num_classes=num_classes, nh=num_classes + 1,
                F=C[3] * Hs[3] * Ws[3],
                R0=R0, U=U, O=O, strides=strides, NC=NC, deltas=deltas,
                head_pos=head_pos, masks=tuple(masks))


# ------------------------------ pallas kernel ---------------------------------

def _build_critic_call(plan, n_tiles):
    # TODO(synk): for very large image_size / batch_tile, add a second grid axis
    # tiling the column space and re-densify deeper layers (the 4^l redundant
    # columns eventually become MXU/VMEM bound); fine at these sizes.
    B = plan["B"]
    Cin, C1, C2, C3 = plan["C"]
    nh, F = plan["nh"], plan["F"]
    NC = plan["NC"]
    deltas = plan["deltas"]
    head_pos = plan["head_pos"]
    bf16 = jnp.bfloat16

    def kernel(x_ref, w1, b1, m1, w2, b2, m2, w3, b3, m3, wh, bh,
               head_out, feat_out, p1, p2, p3, a1, a2, a3):

        def conv_layer(read_src, mask_ref, patch_ref, w_ref, b_ref, act_ref,
                       dl, nc, cin):
            # im2col: 16 taps -> 16 contiguous, masked, lane-dense slice copies.
            for t in range(16):
                patch_ref[t * cin:(t + 1) * cin, :] = (
                    read_src(dl[t], nc) * mask_ref[t:t + 1, :])
            acc = jnp.dot(w_ref[...], patch_ref[...],
                          preferred_element_type=jnp.float32)
            acc = acc + b_ref[...]
            # F.leaky_relu default negative_slope = 0.01
            act = jnp.where(acc >= 0.0, acc, 0.01 * acc)
            act_ref[...] = act.astype(act_ref.dtype)

        conv_layer(lambda d, nc: x_ref[0, :, d:d + nc], m1, p1, w1, b1, a1,
                   deltas[0], NC[1], Cin)
        conv_layer(lambda d, nc: a1[:, d:d + nc], m2, p2, w2, b2, a2,
                   deltas[1], NC[2], C1)
        conv_layer(lambda d, nc: a2[:, d:d + nc], m3, p3, w3, b3, a3,
                   deltas[2], NC[3], C2)

        # Fused head [fc | fc_aux]: gather the (H/8)*(W/8) feature positions,
        # each a contiguous (C3, B) slice, then a single (nh, F) @ (F, B).
        fcol = jnp.concatenate([a3[:, p:p + B] for p in head_pos], axis=0)
        head = jnp.dot(wh[...], fcol, preferred_element_type=jnp.float32)
        head = head + bh[...]
        head_out[0] = head
        feat_out[0] = fcol.astype(feat_out.dtype)

    def const(shape):                     # grid-invariant (resident) operand
        return pl.BlockSpec(shape, lambda i: (0, 0))

    in_specs = [
        pl.BlockSpec((1, Cin, NC[0]), lambda i: (i, 0, 0)),    # input batch tile
        const((C1, 16 * Cin)), const((C1, 1)), const((16, NC[1])),
        const((C2, 16 * C1)), const((C2, 1)), const((16, NC[2])),
        const((C3, 16 * C2)), const((C3, 1)), const((16, NC[3])),
        const((nh, F)), const((nh, 1)),
    ]
    out_specs = (
        pl.BlockSpec((1, nh, B), lambda i: (i, 0, 0)),         # head logits
        pl.BlockSpec((1, F, B), lambda i: (i, 0, 0)),          # features
    )
    out_shape = (jax.ShapeDtypeStruct((n_tiles, nh, B), jnp.float32),
                 jax.ShapeDtypeStruct((n_tiles, F, B), jnp.float32))
    scratch_shapes = [
        pltpu.VMEM((16 * Cin, NC[1]), bf16),    # im2col patches, layers 1..3
        pltpu.VMEM((16 * C1, NC[2]), bf16),
        pltpu.VMEM((16 * C2, NC[3]), bf16),
        pltpu.VMEM((C1, NC[1]), bf16),          # staged activations
        pltpu.VMEM((C2, NC[2]), bf16),
        pltpu.VMEM((C3, NC[3]), bf16),
    ]
    return pl.pallas_call(
        kernel,
        out_shape=out_shape,
        grid=(n_tiles,),
        in_specs=in_specs,
        out_specs=out_specs,
        scratch_shapes=scratch_shapes,
        compiler_params=pltpu.CompilerParams(
            dimension_semantics=("parallel",),
            vmem_limit_bytes=32 * 1024 * 1024),
    )


# --------------------------- parameter handling -------------------------------

def init_critic_params(key, image_size, image_channel_size, channel_size,
                       num_classes=10):
    ks = jax.random.split(key, 10)
    cs = channel_size
    feat = (image_size // 8) ** 2 * cs * 4

    def u(k, shape, fan_in):
        bound = 1.0 / np.sqrt(fan_in)
        return jax.random.uniform(k, shape, jnp.float32, -bound, bound)

    return {
        "conv1_w": u(ks[0], (cs, image_channel_size, 4, 4), image_channel_size * 16),
        "conv1_b": u(ks[1], (cs,), image_channel_size * 16),
        "conv2_w": u(ks[2], (cs * 2, cs, 4, 4), cs * 16),
        "conv2_b": u(ks[3], (cs * 2,), cs * 16),
        "conv3_w": u(ks[4], (cs * 4, cs * 2, 4, 4), cs * 2 * 16),
        "conv3_b": u(ks[5], (cs * 4,), cs * 2 * 16),
        "fc_w": u(ks[6], (1, feat), feat),          # torch Linear layout (out, in)
        "fc_b": u(ks[7], (1,), feat),
        "fc_aux_w": u(ks[8], (num_classes, feat), feat),
        "fc_aux_b": u(ks[9], (num_classes,), feat),
    }


def prepare_critic_params(raw, plan):
    """One-time re-layout of all weights into kernel-friendly bf16 shapes."""
    bf16 = jnp.bfloat16
    C3 = plan["C"][3]
    m3 = plan["Hs"][3] * plan["Ws"][3]
    nh = plan["nh"]

    def conv_w(wg):                 # (Cout, Cin, 4, 4) -> tap-major (Cout, 16*Cin)
        cout, cin = wg.shape[0], wg.shape[1]
        return wg.transpose(0, 2, 3, 1).reshape(cout, 16 * cin).astype(bf16)

    w_head = jnp.concatenate([raw["fc_w"], raw["fc_aux_w"]], axis=0)   # (nh, F)
    # torch feature index is c*m3 + s (channel-major); kernel builds the feature
    # column spatial-major (s*C3 + c) -> permute head columns accordingly.
    w_head = (w_head.reshape(nh, C3, m3).transpose(0, 2, 1)
              .reshape(nh, C3 * m3).astype(bf16))
    b_head = jnp.concatenate([raw["fc_b"], raw["fc_aux_b"]]).reshape(-1, 1)

    return {
        "w1": conv_w(raw["conv1_w"]),
        "b1": raw["conv1_b"].reshape(-1, 1).astype(jnp.float32),
        "w2": conv_w(raw["conv2_w"]),
        "b2": raw["conv2_b"].reshape(-1, 1).astype(jnp.float32),
        "w3": conv_w(raw["conv3_w"]),
        "b3": raw["conv3_b"].reshape(-1, 1).astype(jnp.float32),
        "wh": w_head,
        "bh": b_head.astype(jnp.float32),
        "m1": jnp.asarray(plan["masks"][0], bf16),
        "m2": jnp.asarray(plan["masks"][1], bf16),
        "m3": jnp.asarray(plan["masks"][2], bf16),
    }


# ------------------------------- forward --------------------------------------

def make_critic_forward(plan):
    H, W, B, Cin = plan["H"], plan["W"], plan["B"], plan["Cin"]
    nh, F = plan["nh"], plan["F"]
    C3 = plan["C"][3]
    m3 = plan["Hs"][3] * plan["Ws"][3]
    O0, W0 = plan["O"][0], plan["NC"][0]

    @functools.partial(jax.jit, static_argnames=("if_features",))
    def forward(params, x, if_features=False):
        n = x.shape[0]
        pad = (-n) % B
        if pad:
            x = jnp.pad(x, ((0, pad), (0, 0), (0, 0), (0, 0)))
        t = (n + pad) // B
        # (T, B, Cin, H, W) -> (T, Cin, H, W, B) -> batch-minor flat column space
        xt = (x.astype(jnp.bfloat16)
              .reshape(t, B, Cin, H, W).transpose(0, 2, 3, 4, 1)
              .reshape(t, Cin, H * W * B))
        xt = jnp.pad(xt, ((0, 0), (0, 0), (O0, W0 - O0 - H * W * B)))

        head, feat = _build_critic_call(plan, t)(
            xt, params["w1"], params["b1"], params["m1"],
            params["w2"], params["b2"], params["m2"],
            params["w3"], params["b3"], params["m3"],
            params["wh"], params["bh"])

        head = head.transpose(0, 2, 1).reshape(t * B, nh)[:n]      # (n, nh)
        realfake = jnp.squeeze(jax.nn.sigmoid(head[:, 0:1]))
        logits = head[:, 1:]
        classes_p = jax.nn.softmax(logits, axis=1)   # nn.Softmax() on 2D -> dim 1
        if not if_features:
            return realfake, classes_p, logits
        feat = feat.transpose(0, 2, 1).reshape(t * B, F)[:n]       # spatial-major
        features = feat.reshape(n, m3, C3).transpose(0, 2, 1).reshape(n, F)
        return realfake, classes_p, logits, features

    return forward


# ------------------------- pure-JAX reference (f32) ----------------------------

def reference_forward(raw, x):
    hi = jax.lax.Precision.HIGHEST

    def conv(h, w, b):
        y = jax.lax.conv_general_dilated(
            h, w, window_strides=(2, 2), padding=((1, 1), (1, 1)),
            dimension_numbers=("NCHW", "OIHW", "NCHW"), precision=hi)
        y = y + b.reshape(1, -1, 1, 1)
        return jnp.where(y >= 0.0, y, 0.01 * y)

    h = conv(x, raw["conv1_w"], raw["conv1_b"])
    h = conv(h, raw["conv2_w"], raw["conv2_b"])
    h = conv(h, raw["conv3_w"], raw["conv3_b"])
    feat = h.reshape(x.shape[0], -1)
    logits = jnp.dot(feat, raw["fc_aux_w"].T, precision=hi) + raw["fc_aux_b"]
    realfake = jax.nn.sigmoid(
        jnp.dot(feat, raw["fc_w"].T, precision=hi) + raw["fc_b"])[:, 0]
    return realfake, logits, feat


# --------------------------------- main ----------------------------------------

if __name__ == "__main__":
    image_size = 16
    image_channel_size = 4
    channel_size = 8
    num_classes = 10
    batch = 2

    key = jax.random.PRNGKey(0)
    k_param, k_x = jax.random.split(key)

    plan = make_plan(image_size, image_channel_size, channel_size,
                     num_classes=num_classes, batch_tile=batch)
    raw = init_critic_params(k_param, image_size, image_channel_size,
                             channel_size, num_classes)
    params = prepare_critic_params(raw, plan)
    forward = make_critic_forward(plan)

    x = jax.random.normal(
        k_x, (batch, image_channel_size, image_size, image_size), jnp.float32)

    realfake, classes_p, logits = forward(params, x, if_features=False)
    jax.block_until_ready((realfake, classes_p, logits))

    assert realfake.shape == (batch,)
    assert classes_p.shape == (batch, num_classes)
    assert logits.shape == (batch, num_classes)

    # Numerical check vs pure-JAX f32 reference (kernel uses bf16 operands with
    # f32 accumulation -> allow ~1e-2-level deviation).
    rf_ref, logits_ref, feat_ref = reference_forward(raw, x)
    _, _, _, features = forward(params, x, if_features=True)
    assert float(jnp.max(jnp.abs(logits - logits_ref))) < 6e-2
    assert float(jnp.max(jnp.abs(realfake - rf_ref))) < 3e-2
    assert float(jnp.max(jnp.abs(features - feat_ref))) < 3e-2

    print("KERNEL_OK")
</pallas_src>

<mosaic_0001>
module attributes {stable_mosaic.version = 11 : i64} {
  func.func @kernel(%arg0: i32, %arg1: memref<1x4x1280xbf16, #tpu.memory_space<vmem>>, %arg2: memref<8x64xbf16, #tpu.memory_space<vmem>>, %arg3: memref<8x1xf32, #tpu.memory_space<vmem>>, %arg4: memref<16x1152xbf16, #tpu.memory_space<vmem>>, %arg5: memref<16x128xbf16, #tpu.memory_space<vmem>>, %arg6: memref<16x1xf32, #tpu.memory_space<vmem>>, %arg7: memref<16x896xbf16, #tpu.memory_space<vmem>>, %arg8: memref<32x256xbf16, #tpu.memory_space<vmem>>, %arg9: memref<32x1xf32, #tpu.memory_space<vmem>>, %arg10: memref<16x384xbf16, #tpu.memory_space<vmem>>, %arg11: memref<11x128xbf16, #tpu.memory_space<vmem>>, %arg12: memref<11x1xf32, #tpu.memory_space<vmem>>, %arg13: memref<1x11x2xf32, #tpu.memory_space<vmem>>, %arg14: memref<1x128x2xf32, #tpu.memory_space<vmem>>, %arg15: memref<64x1152xbf16, #tpu.memory_space<vmem>>, %arg16: memref<128x896xbf16, #tpu.memory_space<vmem>>, %arg17: memref<256x384xbf16, #tpu.memory_space<vmem>>, %arg18: memref<8x1152xbf16, #tpu.memory_space<vmem>>, %arg19: memref<16x896xbf16, #tpu.memory_space<vmem>>, %arg20: memref<32x384xbf16, #tpu.memory_space<vmem>>) attributes {dimension_semantics = [#tpu.dimension_semantics<parallel>], iteration_bounds = array<i64: 1>, scalar_prefetch = 0 : i64, scratch_operands = 6 : i64, tpu.core_type = #tpu.core_type<tc>, window_params = [{transform_indices = @transform_0, window_bounds = array<i64: 1, 4, 1280>}, {pipeline_mode = #tpu.pipeline_mode<synchronous>, transform_indices = @transform_1, window_bounds = array<i64: 8, 64>}, {pipeline_mode = #tpu.pipeline_mode<synchronous>, transform_indices = @transform_2, window_bounds = array<i64: 8, 1>}, {pipeline_mode = #tpu.pipeline_mode<synchronous>, transform_indices = @transform_3, window_bounds = array<i64: 16, 1152>}, {pipeline_mode = #tpu.pipeline_mode<synchronous>, transform_indices = @transform_4, window_bounds = array<i64: 16, 128>}, {pipeline_mode = #tpu.pipeline_mode<synchronous>, transform_indices = @transform_5, window_bounds = array<i64: 16, 1>}, {pipeline_mode = #tpu.pipeline_mode<synchronous>, transform_indices = @transform_6, window_bounds = array<i64: 16, 896>}, {pipeline_mode = #tpu.pipeline_mode<synchronous>, transform_indices = @transform_7, window_bounds = array<i64: 32, 256>}, {pipeline_mode = #tpu.pipeline_mode<synchronous>, transform_indices = @transform_8, window_bounds = array<i64: 32, 1>}, {pipeline_mode = #tpu.pipeline_mode<synchronous>, transform_indices = @transform_9, window_bounds = array<i64: 16, 384>}, {pipeline_mode = #tpu.pipeline_mode<synchronous>, transform_indices = @transform_10, window_bounds = array<i64: 11, 128>}, {pipeline_mode = #tpu.pipeline_mode<synchronous>, transform_indices = @transform_11, window_bounds = array<i64: 11, 1>}, {transform_indices = @transform_12, window_bounds = array<i64: 1, 11, 2>}, {transform_indices = @transform_13, window_bounds = array<i64: 1, 128, 2>}]} {
    %c0 = arith.constant 0 : index
    %c0_0 = arith.constant 0 : index
    %c0_1 = arith.constant 0 : index
    %0 = vector.load %arg1[%c0, %c0_0, %c0_1] : memref<1x4x1280xbf16, #tpu.memory_space<vmem>>, vector<1x4x1152xbf16>
    %1 = vector.shape_cast %0 : vector<1x4x1152xbf16> to vector<4x1152xbf16>
    %c0_2 = arith.constant 0 : index
    %c0_3 = arith.constant 0 : index
    %2 = vector.load %arg4[%c0_2, %c0_3] : memref<16x1152xbf16, #tpu.memory_space<vmem>>, vector<1x1152xbf16>
    %3 = vector.broadcast %2 : vector<1x1152xbf16> to vector<4x1152xbf16>
    %4 = arith.mulf %1, %3 : vector<4x1152xbf16>
    %c0_4 = arith.constant 0 : index
    %c0_5 = arith.constant 0 : index
    %5 = vector.load %arg15[%c0_4, %c0_5] : memref<64x1152xbf16, #tpu.memory_space<vmem>>, vector<4x1152xbf16>
    tpu.vector_store %arg15[%c0_4, %c0_5], %4 {strides = array<i32>} : memref<64x1152xbf16, #tpu.memory_space<vmem>>, vector<4x1152xbf16>,
    %c0_6 = arith.constant 0 : index
    %c0_7 = arith.constant 0 : index
    %c2 = arith.constant 2 : index
    %6 = vector.load %arg1[%c0_6, %c0_7, %c2] : memref<1x4x1280xbf16, #tpu.memory_space<vmem>>, vector<1x4x1152xbf16>
    %7 = vector.shape_cast %6 : vector<1x4x1152xbf16> to vector<4x1152xbf16>
    %c1 = arith.constant 1 : index
    %c0_8 = arith.constant 0 : index
    %8 = vector.load %arg4[%c1, %c0_8] : memref<16x1152xbf16, #tpu.memory_space<vmem>>, vector<1x1152xbf16>
    %9 = vector.broadcast %8 : vector<1x1152xbf16> to vector<4x1152xbf16>
    %10 = arith.mulf %7, %9 : vector<4x1152xbf16>
    %c4 = arith.constant 4 : index
    %c0_9 = arith.constant 0 : index
    %11 = vector.load %arg15[%c4, %c0_9] : memref<64x1152xbf16, #tpu.memory_space<vmem>>, vector<4x1152xbf16>
    tpu.vector_store %arg15[%c4, %c0_9], %10 {strides = array<i32>} : memref<64x1152xbf16, #tpu.memory_space<vmem>>, vector<4x1152xbf16>,
    %c0_10 = arith.constant 0 : index
    %c0_11 = arith.constant 0 : index
    %c4_12 = arith.constant 4 : index
    %12 = vector.load %arg1[%c0_10, %c0_11, %c4_12] : memref<1x4x1280xbf16, #tpu.memory_space<vmem>>, vector<1x4x1152xbf16>
    %13 = vector.shape_cast %12 : vector<1x4x1152xbf16> to vector<4x1152xbf16>
    %c2_13 = arith.constant 2 : index
    %c0_14 = arith.constant 0 : index
    %14 = vector.load %arg4[%c2_13, %c0_14] : memref<16x1152xbf16, #tpu.memory_space<vmem>>, vector<1x1152xbf16>
    %15 = vector.broadcast %14 : vector<1x1152xbf16> to vector<4x1152xbf16>
    %16 = arith.mulf %13, %15 : vector<4x1152xbf16>
    %c8 = arith.constant 8 : index
    %c0_15 = arith.constant 0 : index
    %17 = vector.load %arg15[%c8, %c0_15] : memref<64x1152xbf16, #tpu.memory_space<vmem>>, vector<4x1152xbf16>
    tpu.vector_store %arg15[%c8, %c0_15], %16 {strides = array<i32>} : memref<64x1152xbf16, #tpu.memory_space<vmem>>, vector<4x1152xbf16>,
    %c0_16 = arith.constant 0 : index
    %c0_17 = arith.constant 0 : index
    %c6 = arith.constant 6 : index
    %18 = vector.load %arg1[%c0_16, %c0_17, %c6] : memref<1x4x1280xbf16, #tpu.memory_space<vmem>>, vector<1x4x1152xbf16>
    %19 = vector.shape_cast %18 : vector<1x4x1152xbf16> to vector<4x1152xbf16>
    %c3 = arith.constant 3 : index
    %c0_18 = arith.constant 0 : index
    %20 = vector.load %arg4[%c3, %c0_18] : memref<16x1152xbf16, #tpu.memory_space<vmem>>, vector<1x1152xbf16>
    %21 = vector.broadcast %20 : vector<1x1152xbf16> to vector<4x1152xbf16>
    %22 = arith.mulf %19, %21 : vector<4x1152xbf16>
    %c12 = arith.constant 12 : index
    %c0_19 = arith.constant 0 : index
    %23 = vector.load %arg15[%c12, %c0_19] : memref<64x1152xbf16, #tpu.memory_space<vmem>>, vector<4x1152xbf16>
    tpu.vector_store %arg15[%c12, %c0_19], %22 {strides = array<i32>} : memref<64x1152xbf16, #tpu.memory_space<vmem>>, vector<4x1152xbf16>,
    %c0_20 = arith.constant 0 : index
    %c0_21 = arith.constant 0 : index
    %c32 = arith.constant 32 : index
    %24 = vector.load %arg1[%c0_20, %c0_21, %c32] : memref<1x4x1280xbf16, #tpu.memory_space<vmem>>, vector<1x4x1152xbf16>
    %25 = vector.shape_cast %24 : vector<1x4x1152xbf16> to vector<4x1152xbf16>
    %c4_22 = arith.constant 4 : index
    %c0_23 = arith.constant 0 : index
    %26 = vector.load %arg4[%c4_22, %c0_23] : memref<16x1152xbf16, #tpu.memory_space<vmem>>, vector<1x1152xbf16>
    %27 = vector.broadcast %26 : vector<1x1152xbf16> to vector<4x1152xbf16>
    %28 = arith.mulf %25, %27 : vector<4x1152xbf16>
    %c16 = arith.constant 16 : index
    %c0_24 = arith.constant 0 : index
    %29 = vector.load %arg15[%c16, %c0_24] : memref<64x1152xbf16, #tpu.memory_space<vmem>>, vector<4x1152xbf16>
    tpu.vector_store %arg15[%c16, %c0_24], %28 {strides = array<i32>} : memref<64x1152xbf16, #tpu.memory_space<vmem>>, vector<4x1152xbf16>,
    %c0_25 = arith.constant 0 : index
    %c0_26 = arith.constant 0 : index
    %c34 = arith.constant 34 : index
    %30 = vector.load %arg1[%c0_25, %c0_26, %c34] : memref<1x4x1280xbf16, #tpu.memory_space<vmem>>, vector<1x4x1152xbf16>
    %31 = vector.shape_cast %30 : vector<1x4x1152xbf16> to vector<4x1152xbf16>
    %c5 = arith.constant 5 : index
    %c0_27 = arith.constant 0 : index
    %32 = vector.load %arg4[%c5, %c0_27] : memref<16x1152xbf16, #tpu.memory_space<vmem>>, vector<1x1152xbf16>
    %33 = vector.broadcast %32 : vector<1x1152xbf16> to vector<4x1152xbf16>
    %34 = arith.mulf %31, %33 : vector<4x1152xbf16>
    %c20 = arith.constant 20 : index
    %c0_28 = arith.constant 0 : index
    %35 = vector.load %arg15[%c20, %c0_28] : memref<64x1152xbf16, #tpu.memory_space<vmem>>, vector<4x1152xbf16>
    tpu.vector_store %arg15[%c20, %c0_28], %34 {strides = array<i32>} : memref<64x1152xbf16, #tpu.memory_space<vmem>>, vector<4x1152xbf16>,
    %c0_29 = arith.constant 0 : index
    %c0_30 = arith.constant 0 : index
    %c36 = arith.constant 36 : index
    %36 = vector.load %arg1[%c0_29, %c0_30, %c36] : memref<1x4x1280xbf16, #tpu.memory_space<vmem>>, vector<1x4x1152xbf16>
    %37 = vector.shape_cast %36 : vector<1x4x1152xbf16> to vector<4x1152xbf16>
    %c6_31 = arith.constant 6 : index
    %c0_32 = arith.constant 0 : index
    %38 = vector.load %arg4[%c6_31, %c0_32] : memref<16x1152xbf16, #tpu.memory_space<vmem>>, vector<1x1152xbf16>
    %39 = vector.broadcast %38 : vector<1x1152xbf16> to vector<4x1152xbf16>
    %40 = arith.mulf %37, %39 : vector<4x1152xbf16>
    %c24 = arith.constant 24 : index
    %c0_33 = arith.constant 0 : index
    %41 = vector.load %arg15[%c24, %c0_33] : memref<64x1152xbf16, #tpu.memory_space<vmem>>, vector<4x1152xbf16>
    tpu.vector_store %arg15[%c24, %c0_33], %40 {strides = array<i32>} : memref<64x1152xbf16, #tpu.memory_space<vmem>>, vector<4x1152xbf16>,
    %c0_34 = arith.constant 0 : index
    %c0_35 = arith.constant 0 : index
    %c38 = arith.constant 38 : index
    %42 = vector.load %arg1[%c0_34, %c0_35, %c38] : memref<1x4x1280xbf16, #tpu.memory_space<vmem>>, vector<1x4x1152xbf16>
    %43 = vector.shape_cast %42 : vector<1x4x1152xbf16> to vector<4x1152xbf16>
    %c7 = arith.constant 7 : index
    %c0_36 = arith.constant 0 : index
    %44 = vector.load %arg4[%c7, %c0_36] : memref<16x1152xbf16, #tpu.memory_space<vmem>>, vector<1x1152xbf16>
    %45 = vector.broadcast %44 : vector<1x1152xbf16> to vector<4x1152xbf16>
    %46 = arith.mulf %43, %45 : vector<4x1152xbf16>
    %c28 = arith.constant 28 : index
    %c0_37 = arith.constant 0 : index
    %47 = vector.load %arg15[%c28, %c0_37] : memref<64x1152xbf16, #tpu.memory_space<vmem>>, vector<4x1152xbf16>
    tpu.vector_store %arg15[%c28, %c0_37], %46 {strides = array<i32>} : memref<64x1152xbf16, #tpu.memory_space<vmem>>, vector<4x1152xbf16>,
    %c0_38 = arith.constant 0 : index
    %c0_39 = arith.constant 0 : index
    %c64 = arith.constant 64 : index
    %48 = vector.load %arg1[%c0_38, %c0_39, %c64] : memref<1x4x1280xbf16, #tpu.memory_space<vmem>>, vector<1x4x1152xbf16>
    %49 = vector.shape_cast %48 : vector<1x4x1152xbf16> to vector<4x1152xbf16>
    %c8_40 = arith.constant 8 : index
    %c0_41 = arith.constant 0 : index
    %50 = vector.load %arg4[%c8_40, %c0_41] : memref<16x1152xbf16, #tpu.memory_space<vmem>>, vector<1x1152xbf16>
    %51 = vector.broadcast %50 : vector<1x1152xbf16> to vector<4x1152xbf16>
    %52 = arith.mulf %49, %51 : vector<4x1152xbf16>
    %c32_42 = arith.constant 32 : index
    %c0_43 = arith.constant 0 : index
    %53 = vector.load %arg15[%c32_42, %c0_43] : memref<64x1152xbf16, #tpu.memory_space<vmem>>, vector<4x1152xbf16>
    tpu.vector_store %arg15[%c32_42, %c0_43], %52 {strides = array<i32>} : memref<64x1152xbf16, #tpu.memory_space<vmem>>, vector<4x1152xbf16>,
    %c0_44 = arith.constant 0 : index
    %c0_45 = arith.constant 0 : index
    %c66 = arith.constant 66 : index
    %54 = vector.load %arg1[%c0_44, %c0_45, %c66] : memref<1x4x1280xbf16, #tpu.memory_space<vmem>>, vector<1x4x1152xbf16>
    %55 = vector.shape_cast %54 : vector<1x4x1152xbf16> to vector<4x1152xbf16>
    %c9 = arith.constant 9 : index
    %c0_46 = arith.constant 0 : index
    %56 = vector.load %arg4[%c9, %c0_46] : memref<16x1152xbf16, #tpu.memory_space<vmem>>, vector<1x1152xbf16>
    %57 = vector.broadcast %56 : vector<1x1152xbf16> to vector<4x1152xbf16>
    %58 = arith.mulf %55, %57 : vector<4x1152xbf16>
    %c36_47 = arith.constant 36 : index
    %c0_48 = arith.constant 0 : index
    %59 = vector.load %arg15[%c36_47, %c0_48] : memref<64x1152xbf16, #tpu.memory_space<vmem>>, vector<4x1152xbf16>
    tpu.vector_store %arg15[%c36_47, %c0_48], %58 {strides = array<i32>} : memref<64x1152xbf16, #tpu.memory_space<vmem>>, vector<4x1152xbf16>,
    %c0_49 = arith.constant 0 : index
    %c0_50 = arith.constant 0 : index
    %c68 = arith.constant 68 : index
    %60 = vector.load %arg1[%c0_49, %c0_50, %c68] : memref<1x4x1280xbf16, #tpu.memory_space<vmem>>, vector<1x4x1152xbf16>
    %61 = vector.shape_cast %60 : vector<1x4x1152xbf16> to vector<4x1152xbf16>
    %c10 = arith.constant 10 : index
    %c0_51 = arith.constant 0 : index
    %62 = vector.load %arg4[%c10, %c0_51] : memref<16x1152xbf16, #tpu.memory_space<vmem>>, vector<1x1152xbf16>
    %63 = vector.broadcast %62 : vector<1x1152xbf16> to vector<4x1152xbf16>
    %64 = arith.mulf %61, %63 : vector<4x1152xbf16>
    %c40 = arith.constant 40 : index
    %c0_52 = arith.constant 0 : index
    %65 = vector.load %arg15[%c40, %c0_52] : memref<64x1152xbf16, #tpu.memory_space<vmem>>, vector<4x1152xbf16>
    tpu.vector_store %arg15[%c40, %c0_52], %64 {strides = array<i32>} : memref<64x1152xbf16, #tpu.memory_space<vmem>>, vector<4x1152xbf16>,
    %c0_53 = arith.constant 0 : index
    %c0_54 = arith.constant 0 : index
    %c70 = arith.constant 70 : index
    %66 = vector.load %arg1[%c0_53, %c0_54, %c70] : memref<1x4x1280xbf16, #tpu.memory_space<vmem>>, vector<1x4x1152xbf16>
    %67 = vector.shape_cast %66 : vector<1x4x1152xbf16> to vector<4x1152xbf16>
    %c11 = arith.constant 11 : index
    %c0_55 = arith.constant 0 : index
    %68 = vector.load %arg4[%c11, %c0_55] : memref<16x1152xbf16, #tpu.memory_space<vmem>>, vector<1x1152xbf16>
    %69 = vector.broadcast %68 : vector<1x1152xbf16> to vector<4x1152xbf16>
    %70 = arith.mulf %67, %69 : vector<4x1152xbf16>
    %c44 = arith.constant 44 : index
    %c0_56 = arith.constant 0 : index
    %71 = vector.load %arg15[%c44, %c0_56] : memref<64x1152xbf16, #tpu.memory_space<vmem>>, vector<4x1152xbf16>
    tpu.vector_store %arg15[%c44, %c0_56], %70 {strides = array<i32>} : memref<64x1152xbf16, #tpu.memory_space<vmem>>, vector<4x1152xbf16>,
    %c0_57 = arith.constant 0 : index
    %c0_58 = arith.constant 0 : index
    %c96 = arith.constant 96 : index
    %72 = vector.load %arg1[%c0_57, %c0_58, %c96] : memref<1x4x1280xbf16, #tpu.memory_space<vmem>>, vector<1x4x1152xbf16>
    %73 = vector.shape_cast %72 : vector<1x4x1152xbf16> to vector<4x1152xbf16>
    %c12_59 = arith.constant 12 : index
    %c0_60 = arith.constant 0 : index
    %74 = vector.load %arg4[%c12_59, %c0_60] : memref<16x1152xbf16, #tpu.memory_space<vmem>>, vector<1x1152xbf16>
    %75 = vector.broadcast %74 : vector<1x1152xbf16> to vector<4x1152xbf16>
    %76 = arith.mulf %73, %75 : vector<4x1152xbf16>
    %c48 = arith.constant 48 : index
    %c0_61 = arith.constant 0 : index
    %77 = vector.load %arg15[%c48, %c0_61] : memref<64x1152xbf16, #tpu.memory_space<vmem>>, vector<4x1152xbf16>
    tpu.vector_store %arg15[%c48, %c0_61], %76 {strides = array<i32>} : memref<64x1152xbf16, #tpu.memory_space<vmem>>, vector<4x1152xbf16>,
    %c0_62 = arith.constant 0 : index
    %c0_63 = arith.constant 0 : index
    %c98 = arith.constant 98 : index
    %78 = vector.load %arg1[%c0_62, %c0_63, %c98] : memref<1x4x1280xbf16, #tpu.memory_space<vmem>>, vector<1x4x1152xbf16>
    %79 = vector.shape_cast %78 : vector<1x4x1152xbf16> to vector<4x1152xbf16>
    %c13 = arith.constant 13 : index
    %c0_64 = arith.constant 0 : index
    %80 = vector.load %arg4[%c13, %c0_64] : memref<16x1152xbf16, #tpu.memory_space<vmem>>, vector<1x1152xbf16>
    %81 = vector.broadcast %80 : vector<1x1152xbf16> to vector<4x1152xbf16>
    %82 = arith.mulf %79, %81 : vector<4x1152xbf16>
    %c52 = arith.constant 52 : index
    %c0_65 = arith.constant 0 : index
    %83 = vector.load %arg15[%c52, %c0_65] : memref<64x1152xbf16, #tpu.memory_space<vmem>>, vector<4x1152xbf16>
    tpu.vector_store %arg15[%c52, %c0_65], %82 {strides = array<i32>} : memref<64x1152xbf16, #tpu.memory_space<vmem>>, vector<4x1152xbf16>,
    %c0_66 = arith.constant 0 : index
    %c0_67 = arith.constant 0 : index
    %c100 = arith.constant 100 : index
    %84 = vector.load %arg1[%c0_66, %c0_67, %c100] : memref<1x4x1280xbf16, #tpu.memory_space<vmem>>, vector<1x4x1152xbf16>
    %85 = vector.shape_cast %84 : vector<1x4x1152xbf16> to vector<4x1152xbf16>
    %c14 = arith.constant 14 : index
    %c0_68 = arith.constant 0 : index
    %86 = vector.load %arg4[%c14, %c0_68] : memref<16x1152xbf16, #tpu.memory_space<vmem>>, vector<1x1152xbf16>
    %87 = vector.broadcast %86 : vector<1x1152xbf16> to vector<4x1152xbf16>
    %88 = arith.mulf %85, %87 : vector<4x1152xbf16>
    %c56 = arith.constant 56 : index
    %c0_69 = arith.constant 0 : index
    %89 = vector.load %arg15[%c56, %c0_69] : memref<64x1152xbf16, #tpu.memory_space<vmem>>, vector<4x1152xbf16>
    tpu.vector_store %arg15[%c56, %c0_69], %88 {strides = array<i32>} : memref<64x1152xbf16, #tpu.memory_space<vmem>>, vector<4x1152xbf16>,
    %c0_70 = arith.constant 0 : index
    %c0_71 = arith.constant 0 : index
    %c102 = arith.constant 102 : index
    %90 = vector.load %arg1[%c0_70, %c0_71, %c102] : memref<1x4x1280xbf16, #tpu.memory_space<vmem>>, vector<1x4x1152xbf16>
    %91 = vector.shape_cast %90 : vector<1x4x1152xbf16> to vector<4x1152xbf16>
    %c15 = arith.constant 15 : index
    %c0_72 = arith.constant 0 : index
    %92 = vector.load %arg4[%c15, %c0_72] : memref<16x1152xbf16, #tpu.memory_space<vmem>>, vector<1x1152xbf16>
    %93 = vector.broadcast %92 : vector<1x1152xbf16> to vector<4x1152xbf16>
    %94 = arith.mulf %91, %93 : vector<4x1152xbf16>
    %c60 = arith.constant 60 : index
    %c0_73 = arith.constant 0 : index
    %95 = vector.load %arg15[%c60, %c0_73] : memref<64x1152xbf16, #tpu.memory_space<vmem>>, vector<4x1152xbf16>
    tpu.vector_store %arg15[%c60, %c0_73], %94 {strides = array<i32>} : memref<64x1152xbf16, #tpu.memory_space<vmem>>, vector<4x1152xbf16>,
    %c0_74 = arith.constant 0 : index
    %c0_75 = arith.constant 0 : index
    %96 = vector.load %arg2[%c0_74, %c0_75] : memref<8x64xbf16, #tpu.memory_space<vmem>>, vector<8x64xbf16>
    %c0_76 = arith.constant 0 : index
    %c0_77 = arith.constant 0 : index
    %97 = vector.load %arg15[%c0_76, %c0_77] : memref<64x1152xbf16, #tpu.memory_space<vmem>>, vector<64x1152xbf16>
    %cst = arith.constant dense<0.000000e+00> : vector<8x1152xf32>
    %98 = tpu.matmul %96, %97, %cst {dimension_numbers = #tpu.dot_dimension_numbers<[1], [0], [0], [1], [0, 0, 1, 1], [], []>} : vector<8x64xbf16>, vector<64x1152xbf16>, vector<8x1152xf32> -> vector<8x1152xf32>
    %c0_78 = arith.constant 0 : index
    %c0_79 = arith.constant 0 : index
    %99 = vector.load %arg3[%c0_78, %c0_79] : memref<8x1xf32, #tpu.memory_space<vmem>>, vector<8x1xf32>
    %100 = vector.broadcast %99 : vector<8x1xf32> to vector<8x1152xf32>
    %101 = arith.addf %98, %100 : vector<8x1152xf32>
    %cst_80 = arith.constant 0.000000e+00 : f32
    %102 = vector.broadcast %cst_80 : f32 to vector<8x1152xf32>
    %103 = arith.cmpf oge, %101, %102 : vector<8x1152xf32>
    %cst_81 = arith.constant 0.00999999977 : f32
    %104 = vector.broadcast %cst_81 : f32 to vector<8x1152xf32>
    %105 = arith.mulf %104, %101 : vector<8x1152xf32>
    %106 = arith.select %103, %101, %105 : vector<8x1152xi1>, vector<8x1152xf32>
    %107 = arith.truncf %106 : vector<8x1152xf32> to vector<8x1152xbf16>
    %c0_82 = arith.constant 0 : index
    %c0_83 = arith.constant 0 : index
    %108 = vector.load %arg18[%c0_82, %c0_83] : memref<8x1152xbf16, #tpu.memory_space<vmem>>, vector<8x1152xbf16>
    tpu.vector_store %arg18[%c0_82, %c0_83], %107 {strides = array<i32>} : memref<8x1152xbf16, #tpu.memory_space<vmem>>, vector<8x1152xbf16>,
    %c0_84 = arith.constant 0 : index
    %c0_85 = arith.constant 0 : index
    %109 = vector.load %arg18[%c0_84, %c0_85] : memref<8x1152xbf16, #tpu.memory_space<vmem>>, vector<8x896xbf16>
    %c0_86 = arith.constant 0 : index
    %c0_87 = arith.constant 0 : index
    %110 = vector.load %arg7[%c0_86, %c0_87] : memref<16x896xbf16, #tpu.memory_space<vmem>>, vector<1x896xbf16>
    %111 = vector.broadcast %110 : vector<1x896xbf16> to vector<8x896xbf16>
    %112 = arith.mulf %109, %111 : vector<8x896xbf16>
    %c0_88 = arith.constant 0 : index
    %c0_89 = arith.constant 0 : index
    %113 = vector.load %arg16[%c0_88, %c0_89] : memref<128x896xbf16, #tpu.memory_space<vmem>>, vector<8x896xbf16>
    tpu.vector_store %arg16[%c0_88, %c0_89], %112 {strides = array<i32>} : memref<128x896xbf16, #tpu.memory_space<vmem>>, vector<8x896xbf16>,
    %c0_90 = arith.constant 0 : index
    %c4_91 = arith.constant 4 : index
    %114 = vector.load %arg18[%c0_90, %c4_91] : memref<8x1152xbf16, #tpu.memory_space<vmem>>, vector<8x896xbf16>
    %c1_92 = arith.constant 1 : index
    %c0_93 = arith.constant 0 : index
    %115 = vector.load %arg7[%c1_92, %c0_93] : memref<16x896xbf16, #tpu.memory_space<vmem>>, vector<1x896xbf16>
    %116 = vector.broadcast %115 : vector<1x896xbf16> to vector<8x896xbf16>
    %117 = arith.mulf %114, %116 : vector<8x896xbf16>
    %c8_94 = arith.constant 8 : index
    %c0_95 = arith.constant 0 : index
    %118 = vector.load %arg16[%c8_94, %c0_95] : memref<128x896xbf16, #tpu.memory_space<vmem>>, vector<8x896xbf16>
    tpu.vector_store %arg16[%c8_94, %c0_95], %117 {strides = array<i32>} : memref<128x896xbf16, #tpu.memory_space<vmem>>, vector<8x896xbf16>,
    %c0_96 = arith.constant 0 : index
    %c8_97 = arith.constant 8 : index
    %119 = vector.load %arg18[%c0_96, %c8_97] : memref<8x1152xbf16, #tpu.memory_space<vmem>>, vector<8x896xbf16>
    %c2_98 = arith.constant 2 : index
    %c0_99 = arith.constant 0 : index
    %120 = vector.load %arg7[%c2_98, %c0_99] : memref<16x896xbf16, #tpu.memory_space<vmem>>, vector<1x896xbf16>
    %121 = vector.broadcast %120 : vector<1x896xbf16> to vector<8x896xbf16>
    %122 = arith.mulf %119, %121 : vector<8x896xbf16>
    %c16_100 = arith.constant 16 : index
    %c0_101 = arith.constant 0 : index
    %123 = vector.load %arg16[%c16_100, %c0_101] : memref<128x896xbf16, #tpu.memory_space<vmem>>, vector<8x896xbf16>
    tpu.vector_store %arg16[%c16_100, %c0_101], %122 {strides = array<i32>} : memref<128x896xbf16, #tpu.memory_space<vmem>>, vector<8x896xbf16>,
    %c0_102 = arith.constant 0 : index
    %c12_103 = arith.constant 12 : index
    %124 = vector.load %arg18[%c0_102, %c12_103] : memref<8x1152xbf16, #tpu.memory_space<vmem>>, vector<8x896xbf16>
    %c3_104 = arith.constant 3 : index
    %c0_105 = arith.constant 0 : index
    %125 = vector.load %arg7[%c3_104, %c0_105] : memref<16x896xbf16, #tpu.memory_space<vmem>>, vector<1x896xbf16>
    %126 = vector.broadcast %125 : vector<1x896xbf16> to vector<8x896xbf16>
    %127 = arith.mulf %124, %126 : vector<8x896xbf16>
    %c24_106 = arith.constant 24 : index
    %c0_107 = arith.constant 0 : index
    %128 = vector.load %arg16[%c24_106, %c0_107] : memref<128x896xbf16, #tpu.memory_space<vmem>>, vector<8x896xbf16>
    tpu.vector_store %arg16[%c24_106, %c0_107], %127 {strides = array<i32>} : memref<128x896xbf16, #tpu.memory_space<vmem>>, vector<8x896xbf16>,
    %c0_108 = arith.constant 0 : index
    %c64_109 = arith.constant 64 : index
    %129 = vector.load %arg18[%c0_108, %c64_109] : memref<8x1152xbf16, #tpu.memory_space<vmem>>, vector<8x896xbf16>
    %c4_110 = arith.constant 4 : index
    %c0_111 = arith.constant 0 : index
    %130 = vector.load %arg7[%c4_110, %c0_111] : memref<16x896xbf16, #tpu.memory_space<vmem>>, vector<1x896xbf16>
    %131 = vector.broadcast %130 : vector<1x896xbf16> to vector<8x896xbf16>
    %132 = arith.mulf %129, %131 : vector<8x896xbf16>
    %c32_112 = arith.constant 32 : index
    %c0_113 = arith.constant 0 : index
    %133 = vector.load %arg16[%c32_112, %c0_113] : memref<128x896xbf16, #tpu.memory_space<vmem>>, vector<8x896xbf16>
    tpu.vector_store %arg16[%c32_112, %c0_113], %132 {strides = array<i32>} : memref<128x896xbf16, #tpu.memory_space<vmem>>, vector<8x896xbf16>,
    %c0_114 = arith.constant 0 : index
    %c68_115 = arith.constant 68 : index
    %134 = vector.load %arg18[%c0_114, %c68_115] : memref<8x1152xbf16, #tpu.memory_space<vmem>>, vector<8x896xbf16>
    %c5_116 = arith.constant 5 : index
    %c0_117 = arith.constant 0 : index
    %135 = vector.load %arg7[%c5_116, %c0_117] : memref<16x896xbf16, #tpu.memory_space<vmem>>, vector<1x896xbf16>
    %136 = vector.broadcast %135 : vector<1x896xbf16> to vector<8x896xbf16>
    %137 = arith.mulf %134, %136 : vector<8x896xbf16>
    %c40_118 = arith.constant 40 : index
    %c0_119 = arith.constant 0 : index
    %138 = vector.load %arg16[%c40_118, %c0_119] : memref<128x896xbf16, #tpu.memory_space<vmem>>, vector<8x896xbf16>
    tpu.vector_store %arg16[%c40_118, %c0_119], %137 {strides = array<i32>} : memref<128x896xbf16, #tpu.memory_space<vmem>>, vector<8x896xbf16>,
    %c0_120 = arith.constant 0 : index
    %c72 = arith.constant 72 : index
    %139 = vector.load %arg18[%c0_120, %c72] : memref<8x1152xbf16, #tpu.memory_space<vmem>>, vector<8x896xbf16>
    %c6_121 = arith.constant 6 : index
    %c0_122 = arith.constant 0 : index
    %140 = vector.load %arg7[%c6_121, %c0_122] : memref<16x896xbf16, #tpu.memory_space<vmem>>, vector<1x896xbf16>
    %141 = vector.broadcast %140 : vector<1x896xbf16> to vector<8x896xbf16>
    %142 = arith.mulf %139, %141 : vector<8x896xbf16>
    %c48_123 = arith.constant 48 : index
    %c0_124 = arith.constant 0 : index
    %143 = vector.load %arg16[%c48_123, %c0_124] : memref<128x896xbf16, #tpu.memory_space<vmem>>, vector<8x896xbf16>
    tpu.vector_store %arg16[%c48_123, %c0_124], %142 {strides = array<i32>} : memref<128x896xbf16, #tpu.memory_space<vmem>>, vector<8x896xbf16>,
    %c0_125 = arith.constant 0 : index
    %c76 = arith.constant 76 : index
    %144 = vector.load %arg18[%c0_125, %c76] : memref<8x1152xbf16, #tpu.memory_space<vmem>>, vector<8x896xbf16>
    %c7_126 = arith.constant 7 : index
    %c0_127 = arith.constant 0 : index
    %145 = vector.load %arg7[%c7_126, %c0_127] : memref<16x896xbf16, #tpu.memory_space<vmem>>, vector<1x896xbf16>
    %146 = vector.broadcast %145 : vector<1x896xbf16> to vector<8x896xbf16>
    %147 = arith.mulf %144, %146 : vector<8x896xbf16>
    %c56_128 = arith.constant 56 : index
    %c0_129 = arith.constant 0 : index
    %148 = vector.load %arg16[%c56_128, %c0_129] : memref<128x896xbf16, #tpu.memory_space<vmem>>, vector<8x896xbf16>
    tpu.vector_store %arg16[%c56_128, %c0_129], %147 {strides = array<i32>} : memref<128x896xbf16, #tpu.memory_space<vmem>>, vector<8x896xbf16>,
    %c0_130 = arith.constant 0 : index
    %c128 = arith.constant 128 : index
    %149 = vector.load %arg18[%c0_130, %c128] : memref<8x1152xbf16, #tpu.memory_space<vmem>>, vector<8x896xbf16>
    %c8_131 = arith.constant 8 : index
    %c0_132 = arith.constant 0 : index
    %150 = vector.load %arg7[%c8_131, %c0_132] : memref<16x896xbf16, #tpu.memory_space<vmem>>, vector<1x896xbf16>
    %151 = vector.broadcast %150 : vector<1x896xbf16> to vector<8x896xbf16>
    %152 = arith.mulf %149, %151 : vector<8x896xbf16>
    %c64_133 = arith.constant 64 : index
    %c0_134 = arith.constant 0 : index
    %153 = vector.load %arg16[%c64_133, %c0_134] : memref<128x896xbf16, #tpu.memory_space<vmem>>, vector<8x896xbf16>
    tpu.vector_store %arg16[%c64_133, %c0_134], %152 {strides = array<i32>} : memref<128x896xbf16, #tpu.memory_space<vmem>>, vector<8x896xbf16>,
    %c0_135 = arith.constant 0 : index
    %c132 = arith.constant 132 : index
    %154 = vector.load %arg18[%c0_135, %c132] : memref<8x1152xbf16, #tpu.memory_space<vmem>>, vector<8x896xbf16>
    %c9_136 = arith.constant 9 : index
    %c0_137 = arith.constant 0 : index
    %155 = vector.load %arg7[%c9_136, %c0_137] : memref<16x896xbf16, #tpu.memory_space<vmem>>, vector<1x896xbf16>
    %156 = vector.broadcast %155 : vector<1x896xbf16> to vector<8x896xbf16>
    %157 = arith.mulf %154, %156 : vector<8x896xbf16>
    %c72_138 = arith.constant 72 : index
    %c0_139 = arith.constant 0 : index
    %158 = vector.load %arg16[%c72_138, %c0_139] : memref<128x896xbf16, #tpu.memory_space<vmem>>, vector<8x896xbf16>
    tpu.vector_store %arg16[%c72_138, %c0_139], %157 {strides = array<i32>} : memref<128x896xbf16, #tpu.memory_space<vmem>>, vector<8x896xbf16>,
    %c0_140 = arith.constant 0 : index
    %c136 = arith.constant 136 : index
    %159 = vector.load %arg18[%c0_140, %c136] : memref<8x1152xbf16, #tpu.memory_space<vmem>>, vector<8x896xbf16>
    %c10_141 = arith.constant 10 : index
    %c0_142 = arith.constant 0 : index
    %160 = vector.load %arg7[%c10_141, %c0_142] : memref<16x896xbf16, #tpu.memory_space<vmem>>, vector<1x896xbf16>
    %161 = vector.broadcast %160 : vector<1x896xbf16> to vector<8x896xbf16>
    %162 = arith.mulf %159, %161 : vector<8x896xbf16>
    %c80 = arith.constant 80 : index
    %c0_143 = arith.constant 0 : index
    %163 = vector.load %arg16[%c80, %c0_143] : memref<128x896xbf16, #tpu.memory_space<vmem>>, vector<8x896xbf16>
    tpu.vector_store %arg16[%c80, %c0_143], %162 {strides = array<i32>} : memref<128x896xbf16, #tpu.memory_space<vmem>>, vector<8x896xbf16>,
    %c0_144 = arith.constant 0 : index
    %c140 = arith.constant 140 : index
    %164 = vector.load %arg18[%c0_144, %c140] : memref<8x1152xbf16, #tpu.memory_space<vmem>>, vector<8x896xbf16>
    %c11_145 = arith.constant 11 : index
    %c0_146 = arith.constant 0 : index
    %165 = vector.load %arg7[%c11_145, %c0_146] : memref<16x896xbf16, #tpu.memory_space<vmem>>, vector<1x896xbf16>
    %166 = vector.broadcast %165 : vector<1x896xbf16> to vector<8x896xbf16>
    %167 = arith.mulf %164, %166 : vector<8x896xbf16>
    %c88 = arith.constant 88 : index
    %c0_147 = arith.constant 0 : index
    %168 = vector.load %arg16[%c88, %c0_147] : memref<128x896xbf16, #tpu.memory_space<vmem>>, vector<8x896xbf16>
    tpu.vector_store %arg16[%c88, %c0_147], %167 {strides = array<i32>} : memref<128x896xbf16, #tpu.memory_space<vmem>>, vector<8x896xbf16>,
    %c0_148 = arith.constant 0 : index
    %c192 = arith.constant 192 : index
    %169 = vector.load %arg18[%c0_148, %c192] : memref<8x1152xbf16, #tpu.memory_space<vmem>>, vector<8x896xbf16>
    %c12_149 = arith.constant 12 : index
    %c0_150 = arith.constant 0 : index
    %170 = vector.load %arg7[%c12_149, %c0_150] : memref<16x896xbf16, #tpu.memory_space<vmem>>, vector<1x896xbf16>
    %171 = vector.broadcast %170 : vector<1x896xbf16> to vector<8x896xbf16>
    %172 = arith.mulf %169, %171 : vector<8x896xbf16>
    %c96_151 = arith.constant 96 : index
    %c0_152 = arith.constant 0 : index
    %173 = vector.load %arg16[%c96_151, %c0_152] : memref<128x896xbf16, #tpu.memory_space<vmem>>, vector<8x896xbf16>
    tpu.vector_store %arg16[%c96_151, %c0_152], %172 {strides = array<i32>} : memref<128x896xbf16, #tpu.memory_space<vmem>>, vector<8x896xbf16>,
    %c0_153 = arith.constant 0 : index
    %c196 = arith.constant 196 : index
    %174 = vector.load %arg18[%c0_153, %c196] : memref<8x1152xbf16, #tpu.memory_space<vmem>>, vector<8x896xbf16>
    %c13_154 = arith.constant 13 : index
    %c0_155 = arith.constant 0 : index
    %175 = vector.load %arg7[%c13_154, %c0_155] : memref<16x896xbf16, #tpu.memory_space<vmem>>, vector<1x896xbf16>
    %176 = vector.broadcast %175 : vector<1x896xbf16> to vector<8x896xbf16>
    %177 = arith.mulf %174, %176 : vector<8x896xbf16>
    %c104 = arith.constant 104 : index
    %c0_156 = arith.constant 0 : index
    %178 = vector.load %arg16[%c104, %c0_156] : memref<128x896xbf16, #tpu.memory_space<vmem>>, vector<8x896xbf16>
    tpu.vector_store %arg16[%c104, %c0_156], %177 {strides = array<i32>} : memref<128x896xbf16, #tpu.memory_space<vmem>>, vector<8x896xbf16>,
    %c0_157 = arith.constant 0 : index
    %c200 = arith.constant 200 : index
    %179 = vector.load %arg18[%c0_157, %c200] : memref<8x1152xbf16, #tpu.memory_space<vmem>>, vector<8x896xbf16>
    %c14_158 = arith.constant 14 : index
    %c0_159 = arith.constant 0 : index
    %180 = vector.load %arg7[%c14_158, %c0_159] : memref<16x896xbf16, #tpu.memory_space<vmem>>, vector<1x896xbf16>
    %181 = vector.broadcast %180 : vector<1x896xbf16> to vector<8x896xbf16>
    %182 = arith.mulf %179, %181 : vector<8x896xbf16>
    %c112 = arith.constant 112 : index
    %c0_160 = arith.constant 0 : index
    %183 = vector.load %arg16[%c112, %c0_160] : memref<128x896xbf16, #tpu.memory_space<vmem>>, vector<8x896xbf16>
    tpu.vector_store %arg16[%c112, %c0_160], %182 {strides = array<i32>} : memref<128x896xbf16, #tpu.memory_space<vmem>>, vector<8x896xbf16>,
    %c0_161 = arith.constant 0 : index
    %c204 = arith.constant 204 : index
    %184 = vector.load %arg18[%c0_161, %c204] : memref<8x1152xbf16, #tpu.memory_space<vmem>>, vector<8x896xbf16>
    %c15_162 = arith.constant 15 : index
    %c0_163 = arith.constant 0 : index
    %185 = vector.load %arg7[%c15_162, %c0_163] : memref<16x896xbf16, #tpu.memory_space<vmem>>, vector<1x896xbf16>
    %186 = vector.broadcast %185 : vector<1x896xbf16> to vector<8x896xbf16>
    %187 = arith.mulf %184, %186 : vector<8x896xbf16>
    %c120 = arith.constant 120 : index
    %c0_164 = arith.constant 0 : index
    %188 = vector.load %arg16[%c120, %c0_164] : memref<128x896xbf16, #tpu.memory_space<vmem>>, vector<8x896xbf16>
    tpu.vector_store %arg16[%c120, %c0_164], %187 {strides = array<i32>} : memref<128x896xbf16, #tpu.memory_space<vmem>>, vector<8x896xbf16>,
    %c0_165 = arith.constant 0 : index
    %c0_166 = arith.constant 0 : index
    %189 = vector.load %arg5[%c0_165, %c0_166] : memref<16x128xbf16, #tpu.memory_space<vmem>>, vector<16x128xbf16>
    %c0_167 = arith.constant 0 : index
    %c0_168 = arith.constant 0 : index
    %190 = vector.load %arg16[%c0_167, %c0_168] : memref<128x896xbf16, #tpu.memory_space<vmem>>, vector<128x896xbf16>
    %cst_169 = arith.constant dense<0.000000e+00> : vector<16x896xf32>
    %191 = tpu.matmul %189, %190, %cst_169 {dimension_numbers = #tpu.dot_dimension_numbers<[1], [0], [0], [1], [0, 0, 1, 1], [], []>} : vector<16x128xbf16>, vector<128x896xbf16>, vector<16x896xf32> -> vector<16x896xf32>
    %c0_170 = arith.constant 0 : index
    %c0_171 = arith.constant 0 : index
    %192 = vector.load %arg6[%c0_170, %c0_171] : memref<16x1xf32, #tpu.memory_space<vmem>>, vector<16x1xf32>
    %193 = vector.broadcast %192 : vector<16x1xf32> to vector<16x896xf32>
    %194 = arith.addf %191, %193 : vector<16x896xf32>
    %cst_172 = arith.constant 0.000000e+00 : f32
    %195 = vector.broadcast %cst_172 : f32 to vector<16x896xf32>
    %196 = arith.cmpf oge, %194, %195 : vector<16x896xf32>
    %cst_173 = arith.constant 0.00999999977 : f32
    %197 = vector.broadcast %cst_173 : f32 to vector<16x896xf32>
    %198 = arith.mulf %197, %194 : vector<16x896xf32>
    %199 = arith.select %196, %194, %198 : vector<16x896xi1>, vector<16x896xf32>
    %200 = arith.truncf %199 : vector<16x896xf32> to vector<16x896xbf16>
    %c0_174 = arith.constant 0 : index
    %c0_175 = arith.constant 0 : index
    %201 = vector.load %arg19[%c0_174, %c0_175] : memref<16x896xbf16, #tpu.memory_space<vmem>>, vector<16x896xbf16>
    tpu.vector_store %arg19[%c0_174, %c0_175], %200 {strides = array<i32>} : memref<16x896xbf16, #tpu.memory_space<vmem>>, vector<16x896xbf16>,
    %c0_176 = arith.constant 0 : index
    %c0_177 = arith.constant 0 : index
    %202 = vector.load %arg19[%c0_176, %c0_177] : memref<16x896xbf16, #tpu.memory_space<vmem>>, vector<16x384xbf16>
    %c0_178 = arith.constant 0 : index
    %c0_179 = arith.constant 0 : index
    %203 = vector.load %arg10[%c0_178, %c0_179] : memref<16x384xbf16, #tpu.memory_space<vmem>>, vector<1x384xbf16>
    %204 = vector.broadcast %203 : vector<1x384xbf16> to vector<16x384xbf16>
    %205 = arith.mulf %202, %204 : vector<16x384xbf16>
    %c0_180 = arith.constant 0 : index
    %c0_181 = arith.constant 0 : index
    %206 = vector.load %arg17[%c0_180, %c0_181] : memref<256x384xbf16, #tpu.memory_space<vmem>>, vector<16x384xbf16>
    tpu.vector_store %arg17[%c0_180, %c0_181], %205 {strides = array<i32>} : memref<256x384xbf16, #tpu.memory_space<vmem>>, vector<16x384xbf16>,
    %c0_182 = arith.constant 0 : index
    %c8_183 = arith.constant 8 : index
    %207 = vector.load %arg19[%c0_182, %c8_183] : memref<16x896xbf16, #tpu.memory_space<vmem>>, vector<16x384xbf16>
    %c1_184 = arith.constant 1 : index
    %c0_185 = arith.constant 0 : index
    %208 = vector.load %arg10[%c1_184, %c0_185] : memref<16x384xbf16, #tpu.memory_space<vmem>>, vector<1x384xbf16>
    %209 = vector.broadcast %208 : vector<1x384xbf16> to vector<16x384xbf16>
    %210 = arith.mulf %207, %209 : vector<16x384xbf16>
    %c16_186 = arith.constant 16 : index
    %c0_187 = arith.constant 0 : index
    %211 = vector.load %arg17[%c16_186, %c0_187] : memref<256x384xbf16, #tpu.memory_space<vmem>>, vector<16x384xbf16>
    tpu.vector_store %arg17[%c16_186, %c0_187], %210 {strides = array<i32>} : memref<256x384xbf16, #tpu.memory_space<vmem>>, vector<16x384xbf16>,
    %c0_188 = arith.constant 0 : index
    %c16_189 = arith.constant 16 : index
    %212 = vector.load %arg19[%c0_188, %c16_189] : memref<16x896xbf16, #tpu.memory_space<vmem>>, vector<16x384xbf16>
    %c2_190 = arith.constant 2 : index
    %c0_191 = arith.constant 0 : index
    %213 = vector.load %arg10[%c2_190, %c0_191] : memref<16x384xbf16, #tpu.memory_space<vmem>>, vector<1x384xbf16>
    %214 = vector.broadcast %213 : vector<1x384xbf16> to vector<16x384xbf16>
    %215 = arith.mulf %212, %214 : vector<16x384xbf16>
    %c32_192 = arith.constant 32 : index
    %c0_193 = arith.constant 0 : index
    %216 = vector.load %arg17[%c32_192, %c0_193] : memref<256x384xbf16, #tpu.memory_space<vmem>>, vector<16x384xbf16>
    tpu.vector_store %arg17[%c32_192, %c0_193], %215 {strides = array<i32>} : memref<256x384xbf16, #tpu.memory_space<vmem>>, vector<16x384xbf16>,
    %c0_194 = arith.constant 0 : index
    %c24_195 = arith.constant 24 : index
    %217 = vector.load %arg19[%c0_194, %c24_195] : memref<16x896xbf16, #tpu.memory_space<vmem>>, vector<16x384xbf16>
    %c3_196 = arith.constant 3 : index
    %c0_197 = arith.constant 0 : index
    %218 = vector.load %arg10[%c3_196, %c0_197] : memref<16x384xbf16, #tpu.memory_space<vmem>>, vector<1x384xbf16>
    %219 = vector.broadcast %218 : vector<1x384xbf16> to vector<16x384xbf16>
    %220 = arith.mulf %217, %219 : vector<16x384xbf16>
    %c48_198 = arith.constant 48 : index
    %c0_199 = arith.constant 0 : index
    %221 = vector.load %arg17[%c48_198, %c0_199] : memref<256x384xbf16, #tpu.memory_space<vmem>>, vector<16x384xbf16>
    tpu.vector_store %arg17[%c48_198, %c0_199], %220 {strides = array<i32>} : memref<256x384xbf16, #tpu.memory_space<vmem>>, vector<16x384xbf16>,
    %c0_200 = arith.constant 0 : index
    %c128_201 = arith.constant 128 : index
    %222 = vector.load %arg19[%c0_200, %c128_201] : memref<16x896xbf16, #tpu.memory_space<vmem>>, vector<16x384xbf16>
    %c4_202 = arith.constant 4 : index
    %c0_203 = arith.constant 0 : index
    %223 = vector.load %arg10[%c4_202, %c0_203] : memref<16x384xbf16, #tpu.memory_space<vmem>>, vector<1x384xbf16>
    %224 = vector.broadcast %223 : vector<1x384xbf16> to vector<16x384xbf16>
    %225 = arith.mulf %222, %224 : vector<16x384xbf16>
    %c64_204 = arith.constant 64 : index
    %c0_205 = arith.constant 0 : index
    %226 = vector.load %arg17[%c64_204, %c0_205] : memref<256x384xbf16, #tpu.memory_space<vmem>>, vector<16x384xbf16>
    tpu.vector_store %arg17[%c64_204, %c0_205], %225 {strides = array<i32>} : memref<256x384xbf16, #tpu.memory_space<vmem>>, vector<16x384xbf16>,
    %c0_206 = arith.constant 0 : index
    %c136_207 = arith.constant 136 : index
    %227 = vector.load %arg19[%c0_206, %c136_207] : memref<16x896xbf16, #tpu.memory_space<vmem>>, vector<16x384xbf16>
    %c5_208 = arith.constant 5 : index
    %c0_209 = arith.constant 0 : index
    %228 = vector.load %arg10[%c5_208, %c0_209] : memref<16x384xbf16, #tpu.memory_space<vmem>>, vector<1x384xbf16>
    %229 = vector.broadcast %228 : vector<1x384xbf16> to vector<16x384xbf16>
    %230 = arith.mulf %227, %229 : vector<16x384xbf16>
    %c80_210 = arith.constant 80 : index
    %c0_211 = arith.constant 0 : index
    %231 = vector.load %arg17[%c80_210, %c0_211] : memref<256x384xbf16, #tpu.memory_space<vmem>>, vector<16x384xbf16>
    tpu.vector_store %arg17[%c80_210, %c0_211], %230 {strides = array<i32>} : memref<256x384xbf16, #tpu.memory_space<vmem>>, vector<16x384xbf16>,
    %c0_212 = arith.constant 0 : index
    %c144 = arith.constant 144 : index
    %232 = vector.load %arg19[%c0_212, %c144] : memref<16x896xbf16, #tpu.memory_space<vmem>>, vector<16x384xbf16>
    %c6_213 = arith.constant 6 : index
    %c0_214 = arith.constant 0 : index
    %233 = vector.load %arg10[%c6_213, %c0_214] : memref<16x384xbf16, #tpu.memory_space<vmem>>, vector<1x384xbf16>
    %234 = vector.broadcast %233 : vector<1x384xbf16> to vector<16x384xbf16>
    %235 = arith.mulf %232, %234 : vector<16x384xbf16>
    %c96_215 = arith.constant 96 : index
    %c0_216 = arith.constant 0 : index
    %236 = vector.load %arg17[%c96_215, %c0_216] : memref<256x384xbf16, #tpu.memory_space<vmem>>, vector<16x384xbf16>
    tpu.vector_store %arg17[%c96_215, %c0_216], %235 {strides = array<i32>} : memref<256x384xbf16, #tpu.memory_space<vmem>>, vector<16x384xbf16>,
    %c0_217 = arith.constant 0 : index
    %c152 = arith.constant 152 : index
    %237 = vector.load %arg19[%c0_217, %c152] : memref<16x896xbf16, #tpu.memory_space<vmem>>, vector<16x384xbf16>
    %c7_218 = arith.constant 7 : index
    %c0_219 = arith.constant 0 : index
    %238 = vector.load %arg10[%c7_218, %c0_219] : memref<16x384xbf16, #tpu.memory_space<vmem>>, vector<1x384xbf16>
    %239 = vector.broadcast %238 : vector<1x384xbf16> to vector<16x384xbf16>
    %240 = arith.mulf %237, %239 : vector<16x384xbf16>
    %c112_220 = arith.constant 112 : index
    %c0_221 = arith.constant 0 : index
    %241 = vector.load %arg17[%c112_220, %c0_221] : memref<256x384xbf16, #tpu.memory_space<vmem>>, vector<16x384xbf16>
    tpu.vector_store %arg17[%c112_220, %c0_221], %240 {strides = array<i32>} : memref<256x384xbf16, #tpu.memory_space<vmem>>, vector<16x384xbf16>,
    %c0_222 = arith.constant 0 : index
    %c256 = arith.constant 256 : index
    %242 = vector.load %arg19[%c0_222, %c256] : memref<16x896xbf16, #tpu.memory_space<vmem>>, vector<16x384xbf16>
    %c8_223 = arith.constant 8 : index
    %c0_224 = arith.constant 0 : index
    %243 = vector.load %arg10[%c8_223, %c0_224] : memref<16x384xbf16, #tpu.memory_space<vmem>>, vector<1x384xbf16>
    %244 = vector.broadcast %243 : vector<1x384xbf16> to vector<16x384xbf16>
    %245 = arith.mulf %242, %244 : vector<16x384xbf16>
    %c128_225 = arith.constant 128 : index
    %c0_226 = arith.constant 0 : index
    %246 = vector.load %arg17[%c128_225, %c0_226] : memref<256x384xbf16, #tpu.memory_space<vmem>>, vector<16x384xbf16>
    tpu.vector_store %arg17[%c128_225, %c0_226], %245 {strides = array<i32>} : memref<256x384xbf16, #tpu.memory_space<vmem>>, vector<16x384xbf16>,
    %c0_227 = arith.constant 0 : index
    %c264 = arith.constant 264 : index
    %247 = vector.load %arg19[%c0_227, %c264] : memref<16x896xbf16, #tpu.memory_space<vmem>>, vector<16x384xbf16>
    %c9_228 = arith.constant 9 : index
    %c0_229 = arith.constant 0 : index
    %248 = vector.load %arg10[%c9_228, %c0_229] : memref<16x384xbf16, #tpu.memory_space<vmem>>, vector<1x384xbf16>
    %249 = vector.broadcast %248 : vector<1x384xbf16> to vector<16x384xbf16>
    %250 = arith.mulf %247, %249 : vector<16x384xbf16>
    %c144_230 = arith.constant 144 : index
    %c0_231 = arith.constant 0 : index
    %251 = vector.load %arg17[%c144_230, %c0_231] : memref<256x384xbf16, #tpu.memory_space<vmem>>, vector<16x384xbf16>
    tpu.vector_store %arg17[%c144_230, %c0_231], %250 {strides = array<i32>} : memref<256x384xbf16, #tpu.memory_space<vmem>>, vector<16x384xbf16>,
    %c0_232 = arith.constant 0 : index
    %c272 = arith.constant 272 : index
    %252 = vector.load %arg19[%c0_232, %c272] : memref<16x896xbf16, #tpu.memory_space<vmem>>, vector<16x384xbf16>
    %c10_233 = arith.constant 10 : index
    %c0_234 = arith.constant 0 : index
    %253 = vector.load %arg10[%c10_233, %c0_234] : memref<16x384xbf16, #tpu.memory_space<vmem>>, vector<1x384xbf16>
    %254 = vector.broadcast %253 : vector<1x384xbf16> to vector<16x384xbf16>
    %255 = arith.mulf %252, %254 : vector<16x384xbf16>
    %c160 = arith.constant 160 : index
    %c0_235 = arith.constant 0 : index
    %256 = vector.load %arg17[%c160, %c0_235] : memref<256x384xbf16, #tpu.memory_space<vmem>>, vector<16x384xbf16>
    tpu.vector_store %arg17[%c160, %c0_235], %255 {strides = array<i32>} : memref<256x384xbf16, #tpu.memory_space<vmem>>, vector<16x384xbf16>,
    %c0_236 = arith.constant 0 : index
    %c280 = arith.constant 280 : index
    %257 = vector.load %arg19[%c0_236, %c280] : memref<16x896xbf16, #tpu.memory_space<vmem>>, vector<16x384xbf16>
    %c11_237 = arith.constant 11 : index
    %c0_238 = arith.constant 0 : index
    %258 = vector.load %arg10[%c11_237, %c0_238] : memref<16x384xbf16, #tpu.memory_space<vmem>>, vector<1x384xbf16>
    %259 = vector.broadcast %258 : vector<1x384xbf16> to vector<16x384xbf16>
    %260 = arith.mulf %257, %259 : vector<16x384xbf16>
    %c176 = arith.constant 176 : index
    %c0_239 = arith.constant 0 : index
    %261 = vector.load %arg17[%c176, %c0_239] : memref<256x384xbf16, #tpu.memory_space<vmem>>, vector<16x384xbf16>
    tpu.vector_store %arg17[%c176, %c0_239], %260 {strides = array<i32>} : memref<256x384xbf16, #tpu.memory_space<vmem>>, vector<16x384xbf16>,
    %c0_240 = arith.constant 0 : index
    %c384 = arith.constant 384 : index
    %262 = vector.load %arg19[%c0_240, %c384] : memref<16x896xbf16, #tpu.memory_space<vmem>>, vector<16x384xbf16>
    %c12_241 = arith.constant 12 : index
    %c0_242 = arith.constant 0 : index
    %263 = vector.load %arg10[%c12_241, %c0_242] : memref<16x384xbf16, #tpu.memory_space<vmem>>, vector<1x384xbf16>
    %264 = vector.broadcast %263 : vector<1x384xbf16> to vector<16x384xbf16>
    %265 = arith.mulf %262, %264 : vector<16x384xbf16>
    %c192_243 = arith.constant 192 : index
    %c0_244 = arith.constant 0 : index
    %266 = vector.load %arg17[%c192_243, %c0_244] : memref<256x384xbf16, #tpu.memory_space<vmem>>, vector<16x384xbf16>
    tpu.vector_store %arg17[%c192_243, %c0_244], %265 {strides = array<i32>} : memref<256x384xbf16, #tpu.memory_space<vmem>>, vector<16x384xbf16>,
    %c0_245 = arith.constant 0 : index
    %c392 = arith.constant 392 : index
    %267 = vector.load %arg19[%c0_245, %c392] : memref<16x896xbf16, #tpu.memory_space<vmem>>, vector<16x384xbf16>
    %c13_246 = arith.constant 13 : index
    %c0_247 = arith.constant 0 : index
    %268 = vector.load %arg10[%c13_246, %c0_247] : memref<16x384xbf16, #tpu.memory_space<vmem>>, vector<1x384xbf16>
    %269 = vector.broadcast %268 : vector<1x384xbf16> to vector<16x384xbf16>
    %270 = arith.mulf %267, %269 : vector<16x384xbf16>
    %c208 = arith.constant 208 : index
    %c0_248 = arith.constant 0 : index
    %271 = vector.load %arg17[%c208, %c0_248] : memref<256x384xbf16, #tpu.memory_space<vmem>>, vector<16x384xbf16>
    tpu.vector_store %arg17[%c208, %c0_248], %270 {strides = array<i32>} : memref<256x384xbf16, #tpu.memory_space<vmem>>, vector<16x384xbf16>,
    %c0_249 = arith.constant 0 : index
    %c400 = arith.constant 400 : index
    %272 = vector.load %arg19[%c0_249, %c400] : memref<16x896xbf16, #tpu.memory_space<vmem>>, vector<16x384xbf16>
    %c14_250 = arith.constant 14 : index
    %c0_251 = arith.constant 0 : index
    %273 = vector.load %arg10[%c14_250, %c0_251] : memref<16x384xbf16, #tpu.memory_space<vmem>>, vector<1x384xbf16>
    %274 = vector.broadcast %273 : vector<1x384xbf16> to vector<16x384xbf16>
    %275 = arith.mulf %272, %274 : vector<16x384xbf16>
    %c224 = arith.constant 224 : index
    %c0_252 = arith.constant 0 : index
    %276 = vector.load %arg17[%c224, %c0_252] : memref<256x384xbf16, #tpu.memory_space<vmem>>, vector<16x384xbf16>
    tpu.vector_store %arg17[%c224, %c0_252], %275 {strides = array<i32>} : memref<256x384xbf16, #tpu.memory_space<vmem>>, vector<16x384xbf16>,
    %c0_253 = arith.constant 0 : index
    %c408 = arith.constant 408 : index
    %277 = vector.load %arg19[%c0_253, %c408] : memref<16x896xbf16, #tpu.memory_space<vmem>>, vector<16x384xbf16>
    %c15_254 = arith.constant 15 : index
    %c0_255 = arith.constant 0 : index
    %278 = vector.load %arg10[%c15_254, %c0_255] : memref<16x384xbf16, #tpu.memory_space<vmem>>, vector<1x384xbf16>
    %279 = vector.broadcast %278 : vector<1x384xbf16> to vector<16x384xbf16>
    %280 = arith.mulf %277, %279 : vector<16x384xbf16>
    %c240 = arith.constant 240 : index
    %c0_256 = arith.constant 0 : index
    %281 = vector.load %arg17[%c240, %c0_256] : memref<256x384xbf16, #tpu.memory_space<vmem>>, vector<16x384xbf16>
    tpu.vector_store %arg17[%c240, %c0_256], %280 {strides = array<i32>} : memref<256x384xbf16, #tpu.memory_space<vmem>>, vector<16x384xbf16>,
    %c0_257 = arith.constant 0 : index
    %c0_258 = arith.constant 0 : index
    %282 = vector.load %arg8[%c0_257, %c0_258] : memref<32x256xbf16, #tpu.memory_space<vmem>>, vector<32x256xbf16>
    %c0_259 = arith.constant 0 : index
    %c0_260 = arith.constant 0 : index
    %283 = vector.load %arg17[%c0_259, %c0_260] : memref<256x384xbf16, #tpu.memory_space<vmem>>, vector<256x384xbf16>
    %cst_261 = arith.constant dense<0.000000e+00> : vector<32x384xf32>
    %284 = tpu.matmul %282, %283, %cst_261 {dimension_numbers = #tpu.dot_dimension_numbers<[1], [0], [0], [1], [0, 0, 1, 1], [], []>} : vector<32x256xbf16>, vector<256x384xbf16>, vector<32x384xf32> -> vector<32x384xf32>
    %c0_262 = arith.constant 0 : index
    %c0_263 = arith.constant 0 : index
    %285 = vector.load %arg9[%c0_262, %c0_263] : memref<32x1xf32, #tpu.memory_space<vmem>>, vector<32x1xf32>
    %286 = vector.broadcast %285 : vector<32x1xf32> to vector<32x384xf32>
    %287 = arith.addf %284, %286 : vector<32x384xf32>
    %cst_264 = arith.constant 0.000000e+00 : f32
    %288 = vector.broadcast %cst_264 : f32 to vector<32x384xf32>
    %289 = arith.cmpf oge, %287, %288 : vector<32x384xf32>
    %cst_265 = arith.constant 0.00999999977 : f32
    %290 = vector.broadcast %cst_265 : f32 to vector<32x384xf32>
    %291 = arith.mulf %290, %287 : vector<32x384xf32>
    %292 = arith.select %289, %287, %291 : vector<32x384xi1>, vector<32x384xf32>
    %293 = arith.truncf %292 : vector<32x384xf32> to vector<32x384xbf16>
    %c0_266 = arith.constant 0 : index
    %c0_267 = arith.constant 0 : index
    %294 = vector.load %arg20[%c0_266, %c0_267] : memref<32x384xbf16, #tpu.memory_space<vmem>>, vector<32x384xbf16>
    tpu.vector_store %arg20[%c0_266, %c0_267], %293 {strides = array<i32>} : memref<32x384xbf16, #tpu.memory_space<vmem>>, vector<32x384xbf16>,
    %c0_268 = arith.constant 0 : index
    %c0_269 = arith.constant 0 : index
    %295 = vector.load %arg20[%c0_268, %c0_269] : memref<32x384xbf16, #tpu.memory_space<vmem>>, vector<32x2xbf16>
    %c0_270 = arith.constant 0 : index
    %c16_271 = arith.constant 16 : index
    %296 = vector.load %arg20[%c0_270, %c16_271] : memref<32x384xbf16, #tpu.memory_space<vmem>>, vector<32x2xbf16>
    %c0_272 = arith.constant 0 : index
    %c256_273 = arith.constant 256 : index
    %297 = vector.load %arg20[%c0_272, %c256_273] : memref<32x384xbf16, #tpu.memory_space<vmem>>, vector<32x2xbf16>
    %c0_274 = arith.constant 0 : index
    %c272_275 = arith.constant 272 : index
    %298 = vector.load %arg20[%c0_274, %c272_275] : memref<32x384xbf16, #tpu.memory_space<vmem>>, vector<32x2xbf16>
    %299 = tpu.concatenate %295, %296, %297, %298 in 0 : vector<32x2xbf16>, vector<32x2xbf16>, vector<32x2xbf16>, vector<32x2xbf16> -> vector<128x2xbf16>
    %c0_276 = arith.constant 0 : index
    %c0_277 = arith.constant 0 : index
    %300 = vector.load %arg11[%c0_276, %c0_277] : memref<11x128xbf16, #tpu.memory_space<vmem>>, vector<11x128xbf16>
    %cst_278 = arith.constant dense<0.000000e+00> : vector<11x2xf32>
    %301 = tpu.matmul %300, %299, %cst_278 {dimension_numbers = #tpu.dot_dimension_numbers<[1], [0], [0], [1], [0, 0, 1, 1], [], []>} : vector<11x128xbf16>, vector<128x2xbf16>, vector<11x2xf32> -> vector<11x2xf32>
    %c0_279 = arith.constant 0 : index
    %c0_280 = arith.constant 0 : index
    %302 = vector.load %arg12[%c0_279, %c0_280] : memref<11x1xf32, #tpu.memory_space<vmem>>, vector<11x1xf32>
    %303 = vector.broadcast %302 : vector<11x1xf32> to vector<11x2xf32>
    %304 = arith.addf %301, %303 : vector<11x2xf32>
    %c0_281 = arith.constant 0 : index
    %c0_282 = arith.constant 0 : index
    %c0_283 = arith.constant 0 : index
    %305 = vector.load %arg13[%c0_281, %c0_282, %c0_283] : memref<1x11x2xf32, #tpu.memory_space<vmem>>, vector<1x11x2xf32>
    %306 = vector.shape_cast %305 : vector<1x11x2xf32> to vector<11x2xf32>
    %307 = vector.shape_cast %304 : vector<11x2xf32> to vector<1x11x2xf32>
    tpu.vector_store %arg13[%c0_281, %c0_282, %c0_283], %307 {strides = array<i32>} : memref<1x11x2xf32, #tpu.memory_space<vmem>>, vector<1x11x2xf32>,
    %308 = arith.extf %299 : vector<128x2xbf16> to vector<128x2xf32>
    %c0_284 = arith.constant 0 : index
    %c0_285 = arith.constant 0 : index
    %c0_286 = arith.constant 0 : index
    %309 = vector.load %arg14[%c0_284, %c0_285, %c0_286] : memref<1x128x2xf32, #tpu.memory_space<vmem>>, vector<1x128x2xf32>
    %310 = vector.shape_cast %309 : vector<1x128x2xf32> to vector<128x2xf32>
    %311 = vector.shape_cast %308 : vector<128x2xf32> to vector<1x128x2xf32>
    tpu.vector_store %arg14[%c0_284, %c0_285, %c0_286], %311 {strides = array<i32>} : memref<1x128x2xf32, #tpu.memory_space<vmem>>, vector<1x128x2xf32>,
    return
  }
  func.func @transform_0(%arg0: i32) -> (i32, i32, i32) {
    %c0_i32 = arith.constant 0 : i32
    %c0_i32_0 = arith.constant 0 : i32
    %c0_i32_1 = arith.constant 0 : i32
    return %arg0, %c0_i32, %c0_i32_0 : i32, i32, i32
  }
  func.func @transform_1(%arg0: i32) -> (i32, i32) {
    %c0_i32 = arith.constant 0 : i32
    %c0_i32_0 = arith.constant 0 : i32
    %c0_i32_1 = arith.constant 0 : i32
    return %c0_i32, %c0_i32_0 : i32, i32
  }
  func.func @transform_2(%arg0: i32) -> (i32, i32) {
    %c0_i32 = arith.constant 0 : i32
    %c0_i32_0 = arith.constant 0 : i32
    %c0_i32_1 = arith.constant 0 : i32
    return %c0_i32, %c0_i32_0 : i32, i32
  }
  func.func @transform_3(%arg0: i32) -> (i32, i32) {
    %c0_i32 = arith.constant 0 : i32
    %c0_i32_0 = arith.constant 0 : i32
    %c0_i32_1 = arith.constant 0 : i32
    return %c0_i32, %c0_i32_0 : i32, i32
  }
  func.func @transform_4(%arg0: i32) -> (i32, i32) {
    %c0_i32 = arith.constant 0 : i32
    %c0_i32_0 = arith.constant 0 : i32
    %c0_i32_1 = arith.constant 0 : i32
    return %c0_i32, %c0_i32_0 : i32, i32
  }
  func.func @transform_5(%arg0: i32) -> (i32, i32) {
    %c0_i32 = arith.constant 0 : i32
    %c0_i32_0 = arith.constant 0 : i32
    %c0_i32_1 = arith.constant 0 : i32
    return %c0_i32, %c0_i32_0 : i32, i32
  }
  func.func @transform_6(%arg0: i32) -> (i32, i32) {
    %c0_i32 = arith.constant 0 : i32
    %c0_i32_0 = arith.constant 0 : i32
    %c0_i32_1 = arith.constant 0 : i32
    return %c0_i32, %c0_i32_0 : i32, i32
  }
  func.func @transform_7(%arg0: i32) -> (i32, i32) {
    %c0_i32 = arith.constant 0 : i32
    %c0_i32_0 = arith.constant 0 : i32
    %c0_i32_1 = arith.constant 0 : i32
    return %c0_i32, %c0_i32_0 : i32, i32
  }
  func.func @transform_8(%arg0: i32) -> (i32, i32) {
    %c0_i32 = arith.constant 0 : i32
    %c0_i32_0 = arith.constant 0 : i32
    %c0_i32_1 = arith.constant 0 : i32
    return %c0_i32, %c0_i32_0 : i32, i32
  }
  func.func @transform_9(%arg0: i32) -> (i32, i32) {
    %c0_i32 = arith.constant 0 : i32
    %c0_i32_0 = arith.constant 0 : i32
    %c0_i32_1 = arith.constant 0 : i32
    return %c0_i32, %c0_i32_0 : i32, i32
  }
  func.func @transform_10(%arg0: i32) -> (i32, i32) {
    %c0_i32 = arith.constant 0 : i32
    %c0_i32_0 = arith.constant 0 : i32
    %c0_i32_1 = arith.constant 0 : i32
    return %c0_i32, %c0_i32_0 : i32, i32
  }
  func.func @transform_11(%arg0: i32) -> (i32, i32) {
    %c0_i32 = arith.constant 0 : i32
    %c0_i32_0 = arith.constant 0 : i32
    %c0_i32_1 = arith.constant 0 : i32
    return %c0_i32, %c0_i32_0 : i32, i32
  }
  func.func @transform_12(%arg0: i32) -> (i32, i32, i32) {
    %c0_i32 = arith.constant 0 : i32
    %c0_i32_0 = arith.constant 0 : i32
    %c0_i32_1 = arith.constant 0 : i32
    return %arg0, %c0_i32, %c0_i32_0 : i32, i32, i32
  }
  func.func @transform_13(%arg0: i32) -> (i32, i32, i32) {
    %c0_i32 = arith.constant 0 : i32
    %c0_i32_0 = arith.constant 0 : i32
    %c0_i32_1 = arith.constant 0 : i32
    return %arg0, %c0_i32, %c0_i32_0 : i32, i32, i32
  }
}

</mosaic_0001>

<llo_original>
// kernel: forward.1
$region0: #{forward.1}
  #allocation0 [shape = 'u32[]', space=smem, size = 0x4, offset = 0x4, fixed_abs, tag = 'smem constant byte address 0x4 - core index']
  #allocation1 [shape = 'u32[144,128]{1,0:T(1,128)}', space=vmem, size = 0x12000, scoped, tag = 'internal scratch']
  #allocation2 [shape = 'bf16[64,1152]{1,0:T(16,128)(2,1)}', space=vmem, size = 0x24000, scoped, tag = 'scratch operand']
  #allocation3 [shape = 'bf16[128,896]{1,0:T(16,128)(2,1)}', space=vmem, size = 0x38000, scoped, tag = 'scratch operand']
  #allocation4 [shape = 'bf16[256,384]{1,0:T(16,128)(2,1)}', space=vmem, size = 0x30000, scoped, tag = 'scratch operand']
  #allocation5 [shape = 'bf16[8,1152]{1,0:T(8,128)(2,1)}', space=vmem, size = 0x4800, scoped, tag = 'scratch operand']
  #allocation6 [shape = 'bf16[16,896]{1,0:T(16,128)(2,1)}', space=vmem, size = 0x7000, scoped, tag = 'scratch operand']
  #allocation7 [shape = 'bf16[32,384]{1,0:T(16,128)(2,1)}', space=vmem, size = 0x6000, scoped, tag = 'scratch operand']
  %s0 = inlined_call_operand.vmem [shape: bf16[1,4,1280], index: 0, kind: input, shape index: {}]
  %s1 = inlined_call_operand.vmem [shape: bf16[8,64], index: 1, kind: input, shape index: {}]
  %s2 = inlined_call_operand.vmem [shape: f32[8,1], index: 2, kind: input, shape index: {}]
  %s3 = inlined_call_operand.vmem [shape: bf16[16,1152], index: 3, kind: input, shape index: {}]
  %s4 = inlined_call_operand.vmem [shape: bf16[16,128], index: 4, kind: input, shape index: {}]
  %s5 = inlined_call_operand.vmem [shape: f32[16,1], index: 5, kind: input, shape index: {}]
  %s6 = inlined_call_operand.vmem [shape: bf16[16,896], index: 6, kind: input, shape index: {}]
  %s7 = inlined_call_operand.vmem [shape: bf16[32,256], index: 7, kind: input, shape index: {}]
  %s8 = inlined_call_operand.vmem [shape: f32[32,1], index: 8, kind: input, shape index: {}]
  %s9 = inlined_call_operand.vmem [shape: bf16[16,384], index: 9, kind: input, shape index: {}]
  %s10 = inlined_call_operand.vmem [shape: bf16[11,128], index: 10, kind: input, shape index: {}]
  %s11 = inlined_call_operand.vmem [shape: f32[11,1], index: 11, kind: input, shape index: {}]
  %s12 = inlined_call_operand.vmem [shape: f32[1,11,2], index: 12, kind: output, shape index: {0}]
  %s13 = inlined_call_operand.hbm [shape: f32[1,128,2], index: 13, kind: output, shape index: {1}]
  %14 = xla_tuple %s12, %s13
  %s15 = sld [smem:[#allocation0]]
  $region66: #{forward.1} parent=0
    _
  %s17 = ssub.s32 1, %s15
  %s18 = scalar_select 0, %s17, %s15
  $region1: #{forward.1} parent=0
    #allocation8 [shape = 'u8[65536]{0}', space=vmem, size = 0x10000, scoped, tag = 'output window, operand 1, single buffered']
    #allocation9 [shape = 's32[1]{0}', space=sflag, size = 0x4, scoped, tag = 'scoped memory for forward.1']
    %19 = vsyncpa [#allocation9], 0
    // Predicated region
    $region2: #{forward.1} parent=1 // pred_check
      _
    $region3: #{forward.1} parent=1 // pred_check_branch
      %21 = sbr.rel (0) target = $region5
    $region4: #{forward.1} parent=1 // pred_region
      _
    $region5: #{forward.1} parent=1 // pred_fallthru
      _
    // Predicated region
    $region6: #{forward.1} parent=1 // pred_check
      _
    $region7: #{forward.1} parent=1 // pred_check_branch
      %23 = sbr.rel (0) target = $region9
    $region8: #{forward.1} parent=1 // pred_region
      _
    $region9: #{forward.1} parent=1 // pred_fallthru
      _
    // Predicated region
    $region10: #{forward.1} parent=1 // pred_check
      _
    $region11: #{forward.1} parent=1 // pred_check_branch
      %25 = sbr.rel (0) target = $region13
    $region12: #{forward.1} parent=1 // pred_region
      _
    $region13: #{forward.1} parent=1 // pred_fallthru
      _
    // Predicated region
    $region14: #{forward.1} parent=1 // pred_check
      _
    $region15: #{forward.1} parent=1 // pred_check_branch
      %27 = sbr.rel (0) target = $region17
    $region16: #{forward.1} parent=1 // pred_region
      _
    $region17: #{forward.1} parent=1 // pred_fallthru
      _
    // Predicated region
    $region18: #{forward.1} parent=1 // pred_check
      _
    $region19: #{forward.1} parent=1 // pred_check_branch
      %29 = sbr.rel (0) target = $region21
    $region20: #{forward.1} parent=1 // pred_region
      _
    $region21: #{forward.1} parent=1 // pred_fallthru
      _
    // Predicated region
    $region22: #{forward.1} parent=1 // pred_check
      _
    $region23: #{forward.1} parent=1 // pred_check_branch
      %31 = sbr.rel (0) target = $region25
    $region24: #{forward.1} parent=1 // pred_region
      _
    $region25: #{forward.1} parent=1 // pred_fallthru
      _
    // Predicated region
    $region26: #{forward.1} parent=1 // pred_check
      _
    $region27: #{forward.1} parent=1 // pred_check_branch
      %33 = sbr.rel (0) target = $region29
    $region28: #{forward.1} parent=1 // pred_region
      _
    $region29: #{forward.1} parent=1 // pred_fallthru
      _
    // Predicated region
    $region30: #{forward.1} parent=1 // pred_check
      _
    $region31: #{forward.1} parent=1 // pred_check_branch
      %35 = sbr.rel (0) target = $region33
    $region32: #{forward.1} parent=1 // pred_region
      _
    $region33: #{forward.1} parent=1 // pred_fallthru
      _
    // Predicated region
    $region34: #{forward.1} parent=1 // pred_check
      _
    $region35: #{forward.1} parent=1 // pred_check_branch
      %37 = sbr.rel (0) target = $region37
    $region36: #{forward.1} parent=1 // pred_region
      _
    $region37: #{forward.1} parent=1 // pred_fallthru
      _
    // Predicated region
    $region38: #{forward.1} parent=1 // pred_check
      _
    $region39: #{forward.1} parent=1 // pred_check_branch
      %39 = sbr.rel (0) target = $region41
    $region40: #{forward.1} parent=1 // pred_region
      _
    $region41: #{forward.1} parent=1 // pred_fallthru
      _
    // Predicated region
    $region42: #{forward.1} parent=1 // pred_check
      _
    $region43: #{forward.1} parent=1 // pred_check_branch
      %41 = sbr.rel (0) target = $region45
    $region44: #{forward.1} parent=1 // pred_region
      _
    $region45: #{forward.1} parent=1 // pred_fallthru
      _
    // Predicated region
    $region46: #{forward.1} parent=1 // pred_check
      _
    $region47: #{forward.1} parent=1 // pred_check_branch
      %43 = sbr.rel (0) target = $region49
    $region48: #{forward.1} parent=1 // pred_region
      _
    $region49: #{forward.1} parent=1 // pred_fallthru
      _
    %v45 = vld [vmem:[%s0] sm:$0xff]
    %v46 = vld [vmem:[%s0 + $0x8] sm:$0xff]
    %v47 = vld [vmem:[%s0 + $0x10] sm:$0x3]
    %v48 = vld [vmem:[%s3] sm:$0x11]
    %v49 = vld [vmem:[%s3 + $0x8] sm:$0x11]
    %v50 = vld [vmem:[%s3 + $0x10] sm:$0x11]
    %v51 = vld [vmem:[%s3 + $0x18] sm:$0x11]
    %v52 = vld [vmem:[%s3 + $0x20] sm:$0x1]
    %v58 = vunpack.c.l.b16 %v48
    %v59 = vunpack.c.h.b16 %v48
    %v60 = vunpack.c.l.b16 %v49
    %v61 = vunpack.c.h.b16 %v49
    %v62 = vunpack.c.l.b16 %v50
    %v63 = vunpack.c.h.b16 %v50
    %v64 = vunpack.c.l.b16 %v51
    %v65 = vunpack.c.h.b16 %v51
    %v66 = vunpack.c.l.b16 %v52
    %v67 = vpack.c.b16 %v58, %v58
    %v68 = vpack.c.b16 %v59, %v59
    %v69 = vpack.c.b16 %v60, %v60
    %v70 = vpack.c.b16 %v61, %v61
    %v71 = vpack.c.b16 %v62, %v62
    %v72 = vpack.c.b16 %v63, %v63
    %v73 = vpack.c.b16 %v64, %v64
    %v74 = vpack.c.b16 %v65, %v65
    %v75 = vpack.c.b16 %v66, %v66
    %v77 = vpack.i.b16 %v67, %v67
    %v79 = vlaneseq
    %v80 = vshrl.u32 %v79, 7
    %v81 = vsub.s32 0, %v80
    %v82 = vrot.slane %v77, %v81
    %v84 = vpack.i.b16 %v68, %v68
    %v86 = vlaneseq
    %v87 = vshrl.u32 %v86, 7
    %v88 = vsub.s32 0, %v87
    %v89 = vrot.slane %v84, %v88
    %v91 = vpack.i.b16 %v69, %v69
    %v93 = vlaneseq
    %v94 = vshrl.u32 %v93, 7
    %v95 = vsub.s32 0, %v94
    %v96 = vrot.slane %v91, %v95
    %v98 = vpack.i.b16 %v70, %v70
    %v100 = vlaneseq
    %v101 = vshrl.u32 %v100, 7
    %v102 = vsub.s32 0, %v101
    %v103 = vrot.slane %v98, %v102
    %v105 = vpack.i.b16 %v71, %v71
    %v107 = vlaneseq
    %v108 = vshrl.u32 %v107, 7
    %v109 = vsub.s32 0, %v108
    %v110 = vrot.slane %v105, %v109
    %v112 = vpack.i.b16 %v72, %v72
    %v114 = vlaneseq
    %v115 = vshrl.u32 %v114, 7
    %v116 = vsub.s32 0, %v115
    %v117 = vrot.slane %v112, %v116
    %v119 = vpack.i.b16 %v73, %v73
    %v121 = vlaneseq
    %v122 = vshrl.u32 %v121, 7
    %v123 = vsub.s32 0, %v122
    %v124 = vrot.slane %v119, %v123
    %v126 = vpack.i.b16 %v74, %v74
    %v128 = vlaneseq
    %v129 = vshrl.u32 %v128, 7
    %v130 = vsub.s32 0, %v129
    %v131 = vrot.slane %v126, %v130
    %v133 = vpack.i.b16 %v75, %v75
    %v135 = vlaneseq
    %v136 = vshrl.u32 %v135, 7
    %v137 = vsub.s32 0, %v136
    %v138 = vrot.slane %v133, %v137
    %v148 = vcombine.low %v82, %v89
    %v149 = vcombine.low %v96, %v103
    %v151 = vunpack.c.l.s4 1983009808
    %v152 = vunpack.c.0.s8 %v151
    %v153 = vlaneseq
    %v154 = vshrl.u32 %v153, 7
    %v155 = vsub.s32 %v152, %v154
    %v156 = vrot.slane %v148, %v155
    %v158 = vunpack.c.l.s4 1983009808
    %v159 = vunpack.c.0.s8 %v158
    %v160 = vlaneseq
    %v161 = vshrl.u32 %v160, 7
    %v162 = vsub.s32 %v159, %v161
    %v163 = vrot.slane %v149, %v162
    %v164 = vcombine.low %v156, %v163
    %v165 = vcombine.low %v110, %v117
    %v166 = vcombine.low %v124, %v131
    %v168 = vunpack.c.l.s4 1983009808
    %v169 = vunpack.c.0.s8 %v168
    %v170 = vlaneseq
    %v171 = vshrl.u32 %v170, 7
    %v172 = vsub.s32 %v169, %v171
    %v173 = vrot.slane %v165, %v172
    %v175 = vunpack.c.l.s4 1983009808
    %v176 = vunpack.c.0.s8 %v175
    %v177 = vlaneseq
    %v178 = vshrl.u32 %v177, 7
    %v179 = vsub.s32 %v176, %v178
    %v180 = vrot.slane %v166, %v179
    %v181 = vcombine.low %v173, %v180
    %v183 = vunpack.c.l.s4 1983009808
    %v184 = vunpack.c.0.s8 %v183
    %v185 = vlaneseq
    %v186 = vshrl.u32 %v185, 7
    %v187 = vsub.s32 %v184, %v186
    %v188 = vrot.slane %v138, %v187
    %v192 = vmul.bf16 %v45, %v164
    %v193 = vmul.bf16 %v46, %v181
    %v194 = vmul.bf16 %v47, %v188
    %v198 = vcombine.high %v192, %v192
    %v200 = vunpack.c.l.s4 1983009808
    %v201 = vunpack.c.0.s8 %v200
    %v202 = vlaneseq
    %v203 = vshrl.u32 %v202, 7
    %v204 = vsub.s32 %v201, %v203
    %v205 = vrot.slane %v192, %v204
    %v207 = vunpack.c.l.s4 1983009808
    %v208 = vunpack.c.0.s8 %v207
    %v209 = vlaneseq
    %v210 = vshrl.u32 %v209, 7
    %v211 = vsub.s32 %v208, %v210
    %v212 = vrot.slane %v198, %v211
    %v213 = vcombine.high %v205, %v205
    %v214 = vcombine.high %v212, %v212
    %v215 = vcombine.high %v193, %v193
    %v217 = vunpack.c.l.s4 1983009808
    %v218 = vunpack.c.0.s8 %v217
    %v219 = vlaneseq
    %v220 = vshrl.u32 %v219, 7
    %v221 = vsub.s32 %v218, %v220
    %v222 = vrot.slane %v193, %v221
    %v224 = vunpack.c.l.s4 1983009808
    %v225 = vunpack.c.0.s8 %v224
    %v226 = vlaneseq
    %v227 = vshrl.u32 %v226, 7
    %v228 = vsub.s32 %v225, %v227
    %v229 = vrot.slane %v215, %v228
    %v230 = vcombine.high %v222, %v222
    %v231 = vcombine.high %v229, %v229
    %v233 = vunpack.c.l.s4 1983009808
    %v234 = vunpack.c.0.s8 %v233
    %v235 = vlaneseq
    %v236 = vshrl.u32 %v235, 7
    %v237 = vsub.s32 %v234, %v236
    %v238 = vrot.slane %v194, %v237
    %248 = vst [vmem:[#allocation2] sm:$0x3] %v205
    %249 = vst [vmem:[#allocation2 + $0x8] sm:$0x3] %v213
    %250 = vst [vmem:[#allocation2 + $0x10] sm:$0x3] %v212
    %251 = vst [vmem:[#allocation2 + $0x18] sm:$0x3] %v214
    %252 = vst [vmem:[#allocation2 + $0x20] sm:$0x3] %v222
    %253 = vst [vmem:[#allocation2 + $0x28] sm:$0x3] %v230
    %254 = vst [vmem:[#allocation2 + $0x30] sm:$0x3] %v229
    %255 = vst [vmem:[#allocation2 + $0x38] sm:$0x3] %v231
    %256 = vst [vmem:[#allocation2 + $0x40] sm:$0x3] %v238
    %v257 = vld [vmem:[%s0] sm:$0xff]
    %v258 = vld [vmem:[%s0 + $0x8] sm:$0xff]
    %v259 = vld [vmem:[%s0 + $0x10] sm:$0xf]
    %v260 = vld [vmem:[%s3] sm:$0x11]
    %v261 = vld [vmem:[%s3 + $0x8] sm:$0x11]
    %v262 = vld [vmem:[%s3 + $0x10] sm:$0x11]
    %v263 = vld [vmem:[%s3 + $0x18] sm:$0x11]
    %v264 = vld [vmem:[%s3 + $0x20] sm:$0x1]
    %v270 = vunpack.c.l.b16 %v260
    %v271 = vunpack.c.h.b16 %v260
    %v272 = vunpack.c.l.b16 %v261
    %v273 = vunpack.c.h.b16 %v261
    %v274 = vunpack.c.l.b16 %v262
    %v275 = vunpack.c.h.b16 %v262
    %v276 = vunpack.c.l.b16 %v263
    %v277 = vunpack.c.h.b16 %v263
    %v278 = vunpack.c.l.b16 %v264
    %v279 = vpack.c.b16 %v270, %v270
    %v280 = vpack.c.b16 %v271, %v271
    %v281 = vpack.c.b16 %v272, %v272
    %v282 = vpack.c.b16 %v273, %v273
    %v283 = vpack.c.b16 %v274, %v274
    %v284 = vpack.c.b16 %v275, %v275
    %v285 = vpack.c.b16 %v276, %v276
    %v286 = vpack.c.b16 %v277, %v277
    %v287 = vpack.c.b16 %v278, %v278
    %v289 = vshrl.u32 %v279, 16
    %v290 = vpack.i.b16 %v289, %v289
    %v292 = vlaneseq
    %v293 = vshrl.u32 %v292, 7
    %v294 = vsub.s32 0, %v293
    %v295 = vrot.slane %v290, %v294
    %v297 = vshrl.u32 %v280, 16
    %v298 = vpack.i.b16 %v297, %v297
    %v300 = vlaneseq
    %v301 = vshrl.u32 %v300, 7
    %v302 = vsub.s32 0, %v301
    %v303 = vrot.slane %v298, %v302
    %v305 = vshrl.u32 %v281, 16
    %v306 = vpack.i.b16 %v305, %v305
    %v308 = vlaneseq
    %v309 = vshrl.u32 %v308, 7
    %v310 = vsub.s32 0, %v309
    %v311 = vrot.slane %v306, %v310
    %v313 = vshrl.u32 %v282, 16
    %v314 = vpack.i.b16 %v313, %v313
    %v316 = vlaneseq
    %v317 = vshrl.u32 %v316, 7
    %v318 = vsub.s32 0, %v317
    %v319 = vrot.slane %v314, %v318
    %v321 = vshrl.u32 %v283, 16
    %v322 = vpack.i.b16 %v321, %v321
    %v324 = vlaneseq
    %v325 = vshrl.u32 %v324, 7
    %v326 = vsub.s32 0, %v325
    %v327 = vrot.slane %v322, %v326
    %v329 = vshrl.u32 %v284, 16
    %v330 = vpack.i.b16 %v329, %v329
    %v332 = vlaneseq
    %v333 = vshrl.u32 %v332, 7
    %v334 = vsub.s32 0, %v333
    %v335 = vrot.slane %v330, %v334
    %v337 = vshrl.u32 %v285, 16
    %v338 = vpack.i.b16 %v337, %v337
    %v340 = vlaneseq
    %v341 = vshrl.u32 %v340, 7
    %v342 = vsub.s32 0, %v341
    %v343 = vrot.slane %v338, %v342
    %v345 = vshrl.u32 %v286, 16
    %v346 = vpack.i.b16 %v345, %v345
    %v348 = vlaneseq
    %v349 = vshrl.u32 %v348, 7
    %v350 = vsub.s32 0, %v349
    %v351 = vrot.slane %v346, %v350
    %v353 = vshrl.u32 %v287, 16
    %v354 = vpack.i.b16 %v353, %v353
    %v356 = vlaneseq
    %v357 = vshrl.u32 %v356, 7
    %v358 = vsub.s32 0, %v357
    %v359 = vrot.slane %v354, %v358
    %v369 = vcombine.low %v295, %v303
    %v370 = vcombine.low %v311, %v319
    %v372 = vunpack.c.l.s4 1983009808
    %v373 = vunpack.c.0.s8 %v372
    %v374 = vlaneseq
    %v375 = vshrl.u32 %v374, 7
    %v376 = vsub.s32 %v373, %v375
    %v377 = vrot.slane %v369, %v376
    %v379 = vunpack.c.l.s4 1983009808
    %v380 = vunpack.c.0.s8 %v379
    %v381 = vlaneseq
    %v382 = vshrl.u32 %v381, 7
    %v383 = vsub.s32 %v380, %v382
    %v384 = vrot.slane %v370, %v383
    %v385 = vcombine.low %v377, %v384
    %v386 = vcombine.low %v327, %v335
    %v387 = vcombine.low %v343, %v351
    %v389 = vunpack.c.l.s4 1983009808
    %v390 = vunpack.c.0.s8 %v389
    %v391 = vlaneseq
    %v392 = vshrl.u32 %v391, 7
    %v393 = vsub.s32 %v390, %v392
    %v394 = vrot.slane %v386, %v393
    %v396 = vunpack.c.l.s4 1983009808
    %v397 = vunpack.c.0.s8 %v396
    %v398 = vlaneseq
    %v399 = vshrl.u32 %v398, 7
    %v400 = vsub.s32 %v397, %v399
    %v401 = vrot.slane %v387, %v400
    %v402 = vcombine.low %v394, %v401
    %v404 = vunpack.c.l.s4 1983009808
    %v405 = vunpack.c.0.s8 %v404
    %v406 = vlaneseq
    %v407 = vshrl.u32 %v406, 7
    %v408 = vsub.s32 %v405, %v407
    %v409 = vrot.slane %v359, %v408
    %410 = vrot.lane.b32.xlu0 %v385, 2
    %v411 = vpop.permute.xlu0 %410
    %412 = vrot.lane.b32.xlu0 %v402, 2
    %v413 = vpop.permute.xlu0 %412
    %414 = vrot.lane.b32.xlu0 %v409, 2
    %v415 = vpop.permute.xlu0 %414
    %v416 = vrot.slane %v411, 6
    %v417 = vrot.slane %v413, 6
    %v418 = vrot.slane %v415, 6
    %vm419 = vcmask 15360
    %v420 = vsel %vm419, %v416, %v411
    %vm421 = vcmask 1041408
    %v422 = vsel %vm421, %v416, %v417
    %v423 = vsel %vm419, %v422, %v413
    %v424 = vsel %vm421, %v417, %v418
    %v425 = vsel %vm419, %v424, %v415
    %v429 = vmul.bf16 %v257, %v420
    %v430 = vmul.bf16 %v258, %v423
    %v431 = vmul.bf16 %v259, %v425
    %v435 = vcombine.low %v429, %v429
    %v437 = vunpack.c.l.s4 1983009808
    %v438 = vunpack.c.0.s8 %v437
    %v439 = vlaneseq
    %v440 = vshrl.u32 %v439, 7
    %v441 = vsub.s32 %v438, %v440
    %v442 = vrot.slane %v435, %v441
    %v444 = vunpack.c.l.s4 1983009808
    %v445 = vunpack.c.0.s8 %v444
    %v446 = vlaneseq
    %v447 = vshrl.u32 %v446, 7
    %v448 = vsub.s32 %v445, %v447
    %v449 = vrot.slane %v429, %v448
    %v450 = vcombine.high %v442, %v442
    %v451 = vcombine.high %v449, %v449
    %v452 = vcombine.low %v430, %v430
    %v454 = vunpack.c.l.s4 1983009808
    %v455 = vunpack.c.0.s8 %v454
    %v456 = vlaneseq
    %v457 = vshrl.u32 %v456, 7
    %v458 = vsub.s32 %v455, %v457
    %v459 = vrot.slane %v452, %v458
    %v461 = vunpack.c.l.s4 1983009808
    %v462 = vunpack.c.0.s8 %v461
    %v463 = vlaneseq
    %v464 = vshrl.u32 %v463, 7
    %v465 = vsub.s32 %v462, %v464
    %v466 = vrot.slane %v430, %v465
    %v467 = vcombine.high %v459, %v459
    %v468 = vcombine.high %v466, %v466
    %v469 = vcombine.low %v431, %v431
    %v471 = vunpack.c.l.s4 1983009808
    %v472 = vunpack.c.0.s8 %v471
    %v473 = vlaneseq
    %v474 = vshrl.u32 %v473, 7
    %v475 = vsub.s32 %v472, %v474
    %v476 = vrot.slane %v469, %v475
    %v477 = vcombine.high %v476, %v476
    %478 = vrot.lane.b32.xlu0 %v442, 126
    %v479 = vpop.permute.xlu0 %478
    %480 = vrot.lane.b32.xlu0 %v450, 126
    %v481 = vpop.permute.xlu0 %480
    %482 = vrot.lane.b32.xlu0 %v449, 126
    %v483 = vpop.permute.xlu0 %482
    %484 = vrot.lane.b32.xlu0 %v451, 126
    %v485 = vpop.permute.xlu0 %484
    %486 = vrot.lane.b32.xlu0 %v459, 126
    %v487 = vpop.permute.xlu0 %486
    %488 = vrot.lane.b32.xlu0 %v467, 126
    %v489 = vpop.permute.xlu0 %488
    %490 = vrot.lane.b32.xlu0 %v466, 126
    %v491 = vpop.permute.xlu0 %490
    %492 = vrot.lane.b32.xlu0 %v468, 126
    %v493 = vpop.permute.xlu0 %492
    %494 = vrot.lane.b32.xlu0 %v476, 126
    %v495 = vpop.permute.xlu0 %494
    %496 = vrot.lane.b32.xlu0 %v477, 126
    %v497 = vpop.permute.xlu0 %496
    %vm498 = vcmask 1031168
    %v499 = vsel %vm498, %v479, %v481
    %v500 = vsel %vm498, %v481, %v483
    %v501 = vsel %vm498, %v483, %v485
    %v502 = vsel %vm498, %v485, %v487
    %v503 = vsel %vm498, %v487, %v489
    %v504 = vsel %vm498, %v489, %v491
    %v505 = vsel %vm498, %v491, %v493
    %v506 = vsel %vm498, %v493, %v495
    %v507 = vsel %vm498, %v495, %v497
    %517 = vst [vmem:[#allocation2] sm:$0xc] %v499
    %518 = vst [vmem:[#allocation2 + $0x8] sm:$0xc] %v500
    %519 = vst [vmem:[#allocation2 + $0x10] sm:$0xc] %v501
    %520 = vst [vmem:[#allocation2 + $0x18] sm:$0xc] %v502
    %521 = vst [vmem:[#allocation2 + $0x20] sm:$0xc] %v503
    %522 = vst [vmem:[#allocation2 + $0x28] sm:$0xc] %v504
    %523 = vst [vmem:[#allocation2 + $0x30] sm:$0xc] %v505
    %524 = vst [vmem:[#allocation2 + $0x38] sm:$0xc] %v506
    %525 = vst [vmem:[#allocation2 + $0x40] sm:$0xc] %v507
    %v526 = vld [vmem:[%s0] sm:$0xff]
    %v527 = vld [vmem:[%s0 + $0x8] sm:$0xff]
    %v528 = vld [vmem:[%s0 + $0x10] sm:$0xf]
    %v529 = vld [vmem:[%s3] sm:$0x22]
    %v530 = vld [vmem:[%s3 + $0x8] sm:$0x22]
    %v531 = vld [vmem:[%s3 + $0x10] sm:$0x22]
    %v532 = vld [vmem:[%s3 + $0x18] sm:$0x22]
    %v533 = vld [vmem:[%s3 + $0x20] sm:$0x2]
    %v539 = vunpack.c.l.b16 %v529
    %v540 = vunpack.c.h.b16 %v529
    %v541 = vunpack.c.l.b16 %v530
    %v542 = vunpack.c.h.b16 %v530
    %v543 = vunpack.c.l.b16 %v531
    %v544 = vunpack.c.h.b16 %v531
    %v545 = vunpack.c.l.b16 %v532
    %v546 = vunpack.c.h.b16 %v532
    %v547 = vunpack.c.l.b16 %v533
    %v548 = vpack.c.b16 %v539, %v539
    %v549 = vpack.c.b16 %v540, %v540
    %v550 = vpack.c.b16 %v541, %v541
    %v551 = vpack.c.b16 %v542, %v542
    %v552 = vpack.c.b16 %v543, %v543
    %v553 = vpack.c.b16 %v544, %v544
    %v554 = vpack.c.b16 %v545, %v545
    %v555 = vpack.c.b16 %v546, %v546
    %v556 = vpack.c.b16 %v547, %v547
    %v558 = vpack.i.b16 %v548, %v548
    %v560 = vlaneseq
    %v561 = vshrl.u32 %v560, 7
    %v562 = vsub.s32 1, %v561
    %v563 = vrot.slane %v558, %v562
    %v565 = vpack.i.b16 %v549, %v549
    %v567 = vlaneseq
    %v568 = vshrl.u32 %v567, 7
    %v569 = vsub.s32 1, %v568
    %v570 = vrot.slane %v565, %v569
    %v572 = vpack.i.b16 %v550, %v550
    %v574 = vlaneseq
    %v575 = vshrl.u32 %v574, 7
    %v576 = vsub.s32 1, %v575
    %v577 = vrot.slane %v572, %v576
    %v579 = vpack.i.b16 %v551, %v551
    %v581 = vlaneseq
    %v582 = vshrl.u32 %v581, 7
    %v583 = vsub.s32 1, %v582
    %v584 = vrot.slane %v579, %v583
    %v586 = vpack.i.b16 %v552, %v552
    %v588 = vlaneseq
    %v589 = vshrl.u32 %v588, 7
    %v590 = vsub.s32 1, %v589
    %v591 = vrot.slane %v586, %v590
    %v593 = vpack.i.b16 %v553, %v553
    %v595 = vlaneseq
    %v596 = vshrl.u32 %v595, 7
    %v597 = vsub.s32 1, %v596
    %v598 = vrot.slane %v593, %v597
    %v600 = vpack.i.b16 %v554, %v554
    %v602 = vlaneseq
    %v603 = vshrl.u32 %v602, 7
    %v604 = vsub.s32 1, %v603
    %v605 = vrot.slane %v600, %v604
    %v607 = vpack.i.b16 %v555, %v555
    %v609 = vlaneseq
    %v610 = vshrl.u32 %v609, 7
    %v611 = vsub.s32 1, %v610
    %v612 = vrot.slane %v607, %v611
    %v614 = vpack.i.b16 %v556, %v556
    %v616 = vlaneseq
    %v617 = vshrl.u32 %v616, 7
    %v618 = vsub.s32 1, %v617
    %v619 = vrot.slane %v614, %v618
    %v629 = vcombine.low %v563, %v570
    %v630 = vcombine.low %v577, %v584
    %v632 = vunpack.c.l.s4 1983009808
    %v633 = vunpack.c.0.s8 %v632
    %v634 = vlaneseq
    %v635 = vshrl.u32 %v634, 7
    %v636 = vsub.s32 %v633, %v635
    %v637 = vrot.slane %v629, %v636
    %v639 = vunpack.c.l.s4 1983009808
    %v640 = vunpack.c.0.s8 %v639
    %v641 = vlaneseq
    %v642 = vshrl.u32 %v641, 7
    %v643 = vsub.s32 %v640, %v642
    %v644 = vrot.slane %v630, %v643
    %v645 = vcombine.low %v637, %v644
    %v646 = vcombine.low %v591, %v598
    %v647 = vcombine.low %v605, %v612
    %v649 = vunpack.c.l.s4 1983009808
    %v650 = vunpack.c.0.s8 %v649
    %v651 = vlaneseq
    %v652 = vshrl.u32 %v651, 7
    %v653 = vsub.s32 %v650, %v652
    %v654 = vrot.slane %v646, %v653
    %v656 = vunpack.c.l.s4 1983009808
    %v657 = vunpack.c.0.s8 %v656
    %v658 = vlaneseq
    %v659 = vshrl.u32 %v658, 7
    %v660 = vsub.s32 %v657, %v659
    %v661 = vrot.slane %v647, %v660
    %v662 = vcombine.low %v654, %v661
    %v664 = vunpack.c.l.s4 1983009808
    %v665 = vunpack.c.0.s8 %v664
    %v666 = vlaneseq
    %v667 = vshrl.u32 %v666, 7
    %v668 = vsub.s32 %v665, %v667
    %v669 = vrot.slane %v619, %v668
    %670 = vrot.lane.b32.xlu0 %v645, 4
    %v671 = vpop.permute.xlu0 %670
    %672 = vrot.lane.b32.xlu0 %v662, 4
    %v673 = vpop.permute.xlu0 %672
    %674 = vrot.lane.b32.xlu0 %v669, 4
    %v675 = vpop.permute.xlu0 %674
    %v676 = vrot.slane %v671, 6
    %v677 = vrot.slane %v673, 6
    %v678 = vrot.slane %v675, 6
    %vm679 = vcmask 31744
    %v680 = vsel %vm679, %v676, %v671
    %v681 = vsel %vm421, %v676, %v677
    %v682 = vsel %vm679, %v681, %v673
    %v683 = vsel %vm421, %v677, %v678
    %v684 = vsel %vm679, %v683, %v675
    %v688 = vmul.bf16 %v526, %v680
    %v689 = vmul.bf16 %v527, %v682
    %v690 = vmul.bf16 %v528, %v684
    %v694 = vcombine.high %v688, %v688
    %v696 = vunpack.c.l.s4 1983009808
    %v697 = vunpack.c.0.s8 %v696
    %v698 = vlaneseq
    %v699 = vshrl.u32 %v698, 7
    %v700 = vsub.s32 %v697, %v699
    %v701 = vrot.slane %v688, %v700
    %v703 = vunpack.c.l.s4 1983009808
    %v704 = vunpack.c.0.s8 %v703
    %v705 = vlaneseq
    %v706 = vshrl.u32 %v705, 7
    %v707 = vsub.s32 %v704, %v706
    %v708 = vrot.slane %v694, %v707
    %v709 = vcombine.low %v701, %v701
    %v710 = vcombine.low %v708, %v708
    %v711 = vcombine.high %v689, %v689
    %v713 = vunpack.c.l.s4 1983009808
    %v714 = vunpack.c.0.s8 %v713
    %v715 = vlaneseq
    %v716 = vshrl.u32 %v715, 7
    %v717 = vsub.s32 %v714, %v716
    %v718 = vrot.slane %v689, %v717
    %v720 = vunpack.c.l.s4 1983009808
    %v721 = vunpack.c.0.s8 %v720
    %v722 = vlaneseq
    %v723 = vshrl.u32 %v722, 7
    %v724 = vsub.s32 %v721, %v723
    %v725 = vrot.slane %v711, %v724
    %v726 = vcombine.low %v718, %v718
    %v727 = vcombine.low %v725, %v725
    %v729 = vunpack.c.l.s4 1983009808
    %v730 = vunpack.c.0.s8 %v729
    %v731 = vlaneseq
    %v732 = vshrl.u32 %v731, 7
    %v733 = vsub.s32 %v730, %v732
    %v734 = vrot.slane %v690, %v733
    %v735 = vcombine.low %v734, %v734
    %736 = vrot.lane.b32.xlu0 %v709, 124
    %v737 = vpop.permute.xlu0 %736
    %738 = vrot.lane.b32.xlu0 %v701, 124
    %v739 = vpop.permute.xlu0 %738
    %740 = vrot.lane.b32.xlu0 %v710, 124
    %v741 = vpop.permute.xlu0 %740
    %742 = vrot.lane.b32.xlu0 %v708, 124
    %v743 = vpop.permute.xlu0 %742
    %744 = vrot.lane.b32.xlu0 %v726, 124
    %v745 = vpop.permute.xlu0 %744
    %746 = vrot.lane.b32.xlu0 %v718, 124
    %v747 = vpop.permute.xlu0 %746
    %748 = vrot.lane.b32.xlu0 %v727, 124
    %v749 = vpop.permute.xlu0 %748
    %750 = vrot.lane.b32.xlu0 %v725, 124
    %v751 = vpop.permute.xlu0 %750
    %752 = vrot.lane.b32.xlu0 %v735, 124
    %v753 = vpop.permute.xlu0 %752
    %754 = vrot.lane.b32.xlu0 %v734, 124
    %v755 = vpop.permute.xlu0 %754
    %vm756 = vcmask 1014784
    %v757 = vsel %vm756, %v737, %v739
    %v758 = vsel %vm756, %v739, %v741
    %v759 = vsel %vm756, %v741, %v743
    %v760 = vsel %vm756, %v743, %v745
    %v761 = vsel %vm756, %v745, %v747
    %v762 = vsel %vm756, %v747, %v749
    %v763 = vsel %vm756, %v749, %v751
    %v764 = vsel %vm756, %v751, %v753
    %v765 = vsel %vm756, %v753, %v755
    %775 = vst [vmem:[#allocation2] sm:$0x30] %v757
    %776 = vst [vmem:[#allocation2 + $0x8] sm:$0x30] %v758
    %777 = vst [vmem:[#allocation2 + $0x10] sm:$0x30] %v759
    %778 = vst [vmem:[#allocation2 + $0x18] sm:$0x30] %v760
    %779 = vst [vmem:[#allocation2 + $0x20] sm:$0x30] %v761
    %780 = vst [vmem:[#allocation2 + $0x28] sm:$0x30] %v762
    %781 = vst [vmem:[#allocation2 + $0x30] sm:$0x30] %v763
    %782 = vst [vmem:[#allocation2 + $0x38] sm:$0x30] %v764
    %783 = vst [vmem:[#allocation2 + $0x40] sm:$0x30] %v765
    %v784 = vld [vmem:[%s0] sm:$0xff]
    %v785 = vld [vmem:[%s0 + $0x8] sm:$0xff]
    %v786 = vld [vmem:[%s0 + $0x10] sm:$0xf]
    %v787 = vld [vmem:[%s3] sm:$0x22]
    %v788 = vld [vmem:[%s3 + $0x8] sm:$0x22]
    %v789 = vld [vmem:[%s3 + $0x10] sm:$0x22]
    %v790 = vld [vmem:[%s3 + $0x18] sm:$0x22]
    %v791 = vld [vmem:[%s3 + $0x20] sm:$0x2]
    %v797 = vunpack.c.l.b16 %v787
    %v798 = vunpack.c.h.b16 %v787
    %v799 = vunpack.c.l.b16 %v788
    %v800 = vunpack.c.h.b16 %v788
    %v801 = vunpack.c.l.b16 %v789
    %v802 = vunpack.c.h.b16 %v789
    %v803 = vunpack.c.l.b16 %v790
    %v804 = vunpack.c.h.b16 %v790
    %v805 = vunpack.c.l.b16 %v791
    %v806 = vpack.c.b16 %v797, %v797
    %v807 = vpack.c.b16 %v798, %v798
    %v808 = vpack.c.b16 %v799, %v799
    %v809 = vpack.c.b16 %v800, %v800
    %v810 = vpack.c.b16 %v801, %v801
    %v811 = vpack.c.b16 %v802, %v802
    %v812 = vpack.c.b16 %v803, %v803
    %v813 = vpack.c.b16 %v804, %v804
    %v814 = vpack.c.b16 %v805, %v805
    %v816 = vshrl.u32 %v806, 16
    %v817 = vpack.i.b16 %v816, %v816
    %v819 = vlaneseq
    %v820 = vshrl.u32 %v819, 7
    %v821 = vsub.s32 1, %v820
    %v822 = vrot.slane %v817, %v821
    %v824 = vshrl.u32 %v807, 16
    %v825 = vpack.i.b16 %v824, %v824
    %v827 = vlaneseq
    %v828 = vshrl.u32 %v827, 7
    %v829 = vsub.s32 1, %v828
    %v830 = vrot.slane %v825, %v829
    %v832 = vshrl.u32 %v808, 16
    %v833 = vpack.i.b16 %v832, %v832
    %v835 = vlaneseq
    %v836 = vshrl.u32 %v835, 7
    %v837 = vsub.s32 1, %v836
    %v838 = vrot.slane %v833, %v837
    %v840 = vshrl.u32 %v809, 16
    %v841 = vpack.i.b16 %v840, %v840
    %v843 = vlaneseq
    %v844 = vshrl.u32 %v843, 7
    %v845 = vsub.s32 1, %v844
    %v846 = vrot.slane %v841, %v845
    %v848 = vshrl.u32 %v810, 16
    %v849 = vpack.i.b16 %v848, %v848
    %v851 = vlaneseq
    %v852 = vshrl.u32 %v851, 7
    %v853 = vsub.s32 1, %v852
    %v854 = vrot.slane %v849, %v853
    %v856 = vshrl.u32 %v811, 16
    %v857 = vpack.i.b16 %v856, %v856
    %v859 = vlaneseq
    %v860 = vshrl.u32 %v859, 7
    %v861 = vsub.s32 1, %v860
    %v862 = vrot.slane %v857, %v861
    %v864 = vshrl.u32 %v812, 16
    %v865 = vpack.i.b16 %v864, %v864
    %v867 = vlaneseq
    %v868 = vshrl.u32 %v867, 7
    %v869 = vsub.s32 1, %v868
    %v870 = vrot.slane %v865, %v869
    %v872 = vshrl.u32 %v813, 16
    %v873 = vpack.i.b16 %v872, %v872
    %v875 = vlaneseq
    %v876 = vshrl.u32 %v875, 7
    %v877 = vsub.s32 1, %v876
    %v878 = vrot.slane %v873, %v877
    %v880 = vshrl.u32 %v814, 16
    %v881 = vpack.i.b16 %v880, %v880
    %v883 = vlaneseq
    %v884 = vshrl.u32 %v883, 7
    %v885 = vsub.s32 1, %v884
    %v886 = vrot.slane %v881, %v885
    %v896 = vcombine.low %v822, %v830
    %v897 = vcombine.low %v838, %v846
    %v899 = vunpack.c.l.s4 1983009808
    %v900 = vunpack.c.0.s8 %v899
    %v901 = vlaneseq
    %v902 = vshrl.u32 %v901, 7
    %v903 = vsub.s32 %v900, %v902
    %v904 = vrot.slane %v896, %v903
    %v906 = vunpack.c.l.s4 1983009808
    %v907 = vunpack.c.0.s8 %v906
    %v908 = vlaneseq
    %v909 = vshrl.u32 %v908, 7
    %v910 = vsub.s32 %v907, %v909
    %v911 = vrot.slane %v897, %v910
    %v912 = vcombine.low %v904, %v911
    %v913 = vcombine.low %v854, %v862
    %v914 = vcombine.low %v870, %v878
    %v916 = vunpack.c.l.s4 1983009808
    %v917 = vunpack.c.0.s8 %v916
    %v918 = vlaneseq
    %v919 = vshrl.u32 %v918, 7
    %v920 = vsub.s32 %v917, %v919
    %v921 = vrot.slane %v913, %v920
    %v923 = vunpack.c.l.s4 1983009808
    %v924 = vunpack.c.0.s8 %v923
    %v925 = vlaneseq
    %v926 = vshrl.u32 %v925, 7
    %v927 = vsub.s32 %v924, %v926
    %v928 = vrot.slane %v914, %v927
    %v929 = vcombine.low %v921, %v928
    %v931 = vunpack.c.l.s4 1983009808
    %v932 = vunpack.c.0.s8 %v931
    %v933 = vlaneseq
    %v934 = vshrl.u32 %v933, 7
    %v935 = vsub.s32 %v932, %v934
    %v936 = vrot.slane %v886, %v935
    %937 = vrot.lane.b32.xlu0 %v912, 6
    %v938 = vpop.permute.xlu0 %937
    %939 = vrot.lane.b32.xlu0 %v929, 6
    %v940 = vpop.permute.xlu0 %939
    %941 = vrot.lane.b32.xlu0 %v936, 6
    %v942 = vpop.permute.xlu0 %941
    %v943 = vrot.slane %v938, 6
    %v944 = vrot.slane %v940, 6
    %v945 = vrot.slane %v942, 6
    %vm946 = vcmask 48128
    %v947 = vsel %vm946, %v943, %v938
    %v948 = vsel %vm421, %v943, %v944
    %v949 = vsel %vm946, %v948, %v940
    %v950 = vsel %vm421, %v944, %v945
    %v951 = vsel %vm946, %v950, %v942
    %v955 = vmul.bf16 %v784, %v947
    %v956 = vmul.bf16 %v785, %v949
    %v957 = vmul.bf16 %v786, %v951
    %v961 = vcombine.low %v955, %v955
    %v963 = vunpack.c.l.s4 1983009808
    %v964 = vunpack.c.0.s8 %v963
    %v965 = vlaneseq
    %v966 = vshrl.u32 %v965, 7
    %v967 = vsub.s32 %v964, %v966
    %v968 = vrot.slane %v961, %v967
    %v970 = vunpack.c.l.s4 1983009808
    %v971 = vunpack.c.0.s8 %v970
    %v972 = vlaneseq
    %v973 = vshrl.u32 %v972, 7
    %v974 = vsub.s32 %v971, %v973
    %v975 = vrot.slane %v955, %v974
    %v976 = vcombine.low %v968, %v968
    %v977 = vcombine.low %v975, %v975
    %v978 = vcombine.low %v956, %v956
    %v980 = vunpack.c.l.s4 1983009808
    %v981 = vunpack.c.0.s8 %v980
    %v982 = vlaneseq
    %v983 = vshrl.u32 %v982, 7
    %v984 = vsub.s32 %v981, %v983
    %v985 = vrot.slane %v978, %v984
    %v987 = vunpack.c.l.s4 1983009808
    %v988 = vunpack.c.0.s8 %v987
    %v989 = vlaneseq
    %v990 = vshrl.u32 %v989, 7
    %v991 = vsub.s32 %v988, %v990
    %v992 = vrot.slane %v956, %v991
    %v993 = vcombine.low %v985, %v985
    %v994 = vcombine.low %v992, %v992
    %v995 = vcombine.low %v957, %v957
    %v997 = vunpack.c.l.s4 1983009808
    %v998 = vunpack.c.0.s8 %v997
    %v999 = vlaneseq
    %v1000 = vshrl.u32 %v999, 7
    %v1001 = vsub.s32 %v998, %v1000
    %v1002 = vrot.slane %v995, %v1001
    %v1003 = vcombine.low %v1002, %v1002
    %1004 = vrot.lane.b32.xlu0 %v976, 122
    %v1005 = vpop.permute.xlu0 %1004
    %1006 = vrot.lane.b32.xlu0 %v968, 122
    %v1007 = vpop.permute.xlu0 %1006
    %1008 = vrot.lane.b32.xlu0 %v977, 122
    %v1009 = vpop.permute.xlu0 %1008
    %1010 = vrot.lane.b32.xlu0 %v975, 122
    %v1011 = vpop.permute.xlu0 %1010
    %1012 = vrot.lane.b32.xlu0 %v993, 122
    %v1013 = vpop.permute.xlu0 %1012
    %1014 = vrot.lane.b32.xlu0 %v985, 122
    %v1015 = vpop.permute.xlu0 %1014
    %1016 = vrot.lane.b32.xlu0 %v994, 122
    %v1017 = vpop.permute.xlu0 %1016
    %1018 = vrot.lane.b32.xlu0 %v992, 122
    %v1019 = vpop.permute.xlu0 %1018
    %1020 = vrot.lane.b32.xlu0 %v1003, 122
    %v1021 = vpop.permute.xlu0 %1020
    %1022 = vrot.lane.b32.xlu0 %v1002, 122
    %v1023 = vpop.permute.xlu0 %1022
    %vm1024 = vcmask 998400
    %v1025 = vsel %vm1024, %v1005, %v1007
    %v1026 = vsel %vm1024, %v1007, %v1009
    %v1027 = vsel %vm1024, %v1009, %v1011
    %v1028 = vsel %vm1024, %v1011, %v1013
    %v1029 = vsel %vm1024, %v1013, %v1015
    %v1030 = vsel %vm1024, %v1015, %v1017
    %v1031 = vsel %vm1024, %v1017, %v1019
    %v1032 = vsel %vm1024, %v1019, %v1021
    %v1033 = vsel %vm1024, %v1021, %v1023
    %1043 = vst [vmem:[#allocation2] sm:$0xc0] %v1025
    %1044 = vst [vmem:[#allocation2 + $0x8] sm:$0xc0] %v1026
    %1045 = vst [vmem:[#allocation2 + $0x10] sm:$0xc0] %v1027
    %1046 = vst [vmem:[#allocation2 + $0x18] sm:$0xc0] %v1028
    %1047 = vst [vmem:[#allocation2 + $0x20] sm:$0xc0] %v1029
    %1048 = vst [vmem:[#allocation2 + $0x28] sm:$0xc0] %v1030
    %1049 = vst [vmem:[#allocation2 + $0x30] sm:$0xc0] %v1031
    %1050 = vst [vmem:[#allocation2 + $0x38] sm:$0xc0] %v1032
    %1051 = vst [vmem:[#allocation2 + $0x40] sm:$0xc0] %v1033
    %v1052 = vld [vmem:[%s0] sm:$0xff]
    %v1053 = vld [vmem:[%s0 + $0x8] sm:$0xff]
    %v1054 = vld [vmem:[%s0 + $0x10] sm:$0xf]
    %v1055 = vld [vmem:[%s3] sm:$0x44]
    %v1056 = vld [vmem:[%s3 + $0x8] sm:$0x44]
    %v1057 = vld [vmem:[%s3 + $0x10] sm:$0x44]
    %v1058 = vld [vmem:[%s3 + $0x18] sm:$0x44]
    %v1059 = vld [vmem:[%s3 + $0x20] sm:$0x4]
    %v1065 = vunpack.c.l.b16 %v1055
    %v1066 = vunpack.c.h.b16 %v1055
    %v1067 = vunpack.c.l.b16 %v1056
    %v1068 = vunpack.c.h.b16 %v1056
    %v1069 = vunpack.c.l.b16 %v1057
    %v1070 = vunpack.c.h.b16 %v1057
    %v1071 = vunpack.c.l.b16 %v1058
    %v1072 = vunpack.c.h.b16 %v1058
    %v1073 = vunpack.c.l.b16 %v1059
    %v1074 = vpack.c.b16 %v1065, %v1065
    %v1075 = vpack.c.b16 %v1066, %v1066
    %v1076 = vpack.c.b16 %v1067, %v1067
    %v1077 = vpack.c.b16 %v1068, %v1068
    %v1078 = vpack.c.b16 %v1069, %v1069
    %v1079 = vpack.c.b16 %v1070, %v1070
    %v1080 = vpack.c.b16 %v1071, %v1071
    %v1081 = vpack.c.b16 %v1072, %v1072
    %v1082 = vpack.c.b16 %v1073, %v1073
    %v1084 = vpack.i.b16 %v1074, %v1074
    %v1086 = vlaneseq
    %v1087 = vshrl.u32 %v1086, 7
    %v1088 = vsub.s32 2, %v1087
    %v1089 = vrot.slane %v1084, %v1088
    %v1091 = vpack.i.b16 %v1075, %v1075
    %v1093 = vlaneseq
    %v1094 = vshrl.u32 %v1093, 7
    %v1095 = vsub.s32 2, %v1094
    %v1096 = vrot.slane %v1091, %v1095
    %v1098 = vpack.i.b16 %v1076, %v1076
    %v1100 = vlaneseq
    %v1101 = vshrl.u32 %v1100, 7
    %v1102 = vsub.s32 2, %v1101
    %v1103 = vrot.slane %v1098, %v1102
    %v1105 = vpack.i.b16 %v1077, %v1077
    %v1107 = vlaneseq
    %v1108 = vshrl.u32 %v1107, 7
    %v1109 = vsub.s32 2, %v1108
    %v1110 = vrot.slane %v1105, %v1109
    %v1112 = vpack.i.b16 %v1078, %v1078
    %v1114 = vlaneseq
    %v1115 = vshrl.u32 %v1114, 7
    %v1116 = vsub.s32 2, %v1115
    %v1117 = vrot.slane %v1112, %v1116
    %v1119 = vpack.i.b16 %v1079, %v1079
    %v1121 = vlaneseq
    %v1122 = vshrl.u32 %v1121, 7
    %v1123 = vsub.s32 2, %v1122
    %v1124 = vrot.slane %v1119, %v1123
    %v1126 = vpack.i.b16 %v1080, %v1080
    %v1128 = vlaneseq
    %v1129 = vshrl.u32 %v1128, 7
    %v1130 = vsub.s32 2, %v1129
    %v1131 = vrot.slane %v1126, %v1130
    %v1133 = vpack.i.b16 %v1081, %v1081
    %v1135 = vlaneseq
    %v1136 = vshrl.u32 %v1135, 7
    %v1137 = vsub.s32 2, %v1136
    %v1138 = vrot.slane %v1133, %v1137
    %v1140 = vpack.i.b16 %v1082, %v1082
    %v1142 = vlaneseq
    %v1143 = vshrl.u32 %v1142, 7
    %v1144 = vsub.s32 2, %v1143
    %v1145 = vrot.slane %v1140, %v1144
    %v1155 = vcombine.low %v1089, %v1096
    %v1156 = vcombine.low %v1103, %v1110
    %v1158 = vunpack.c.l.s4 1983009808
    %v1159 = vunpack.c.0.s8 %v1158
    %v1160 = vlaneseq
    %v1161 = vshrl.u32 %v1160, 7
    %v1162 = vsub.s32 %v1159, %v1161
    %v1163 = vrot.slane %v1155, %v1162
    %v1165 = vunpack.c.l.s4 1983009808
    %v1166 = vunpack.c.0.s8 %v1165
    %v1167 = vlaneseq
    %v1168 = vshrl.u32 %v1167, 7
    %v1169 = vsub.s32 %v1166, %v1168
    %v1170 = vrot.slane %v1156, %v1169
    %v1171 = vcombine.low %v1163, %v1170
    %v1172 = vcombine.low %v1117, %v1124
    %v1173 = vcombine.low %v1131, %v1138
    %v1175 = vunpack.c.l.s4 1983009808
    %v1176 = vunpack.c.0.s8 %v1175
    %v1177 = vlaneseq
    %v1178 = vshrl.u32 %v1177, 7
    %v1179 = vsub.s32 %v1176, %v1178
    %v1180 = vrot.slane %v1172, %v1179
    %v1182 = vunpack.c.l.s4 1983009808
    %v1183 = vunpack.c.0.s8 %v1182
    %v1184 = vlaneseq
    %v1185 = vshrl.u32 %v1184, 7
    %v1186 = vsub.s32 %v1183, %v1185
    %v1187 = vrot.slane %v1173, %v1186
    %v1188 = vcombine.low %v1180, %v1187
    %v1190 = vunpack.c.l.s4 1983009808
    %v1191 = vunpack.c.0.s8 %v1190
    %v1192 = vlaneseq
    %v1193 = vshrl.u32 %v1192, 7
    %v1194 = vsub.s32 %v1191, %v1193
    %v1195 = vrot.slane %v1145, %v1194
    %1196 = vrot.lane.b32.xlu0 %v1171, 32
    %v1197 = vpop.permute.xlu0 %1196
    %1198 = vrot.lane.b32.xlu0 %v1188, 32
    %v1199 = vpop.permute.xlu0 %1198
    %1200 = vrot.lane.b32.xlu0 %v1195, 32
    %v1201 = vpop.permute.xlu0 %1200
    %v1202 = vrot.slane %v1197, 6
    %v1203 = vrot.slane %v1199, 6
    %v1204 = vrot.slane %v1201, 6
    %vm1205 = vcmask 261120
    %v1206 = vsel %vm1205, %v1202, %v1197
    %v1207 = vsel %vm421, %v1202, %v1203
    %v1208 = vsel %vm1205, %v1207, %v1199
    %v1209 = vsel %vm421, %v1203, %v1204
    %v1210 = vsel %vm1205, %v1209, %v1201
    %v1214 = vmul.bf16 %v1052, %v1206
    %v1215 = vmul.bf16 %v1053, %v1208
    %v1216 = vmul.bf16 %v1054, %v1210
    %v1220 = vcombine.high %v1214, %v1214
    %v1222 = vunpack.c.l.s4 1983009808
    %v1223 = vunpack.c.0.s8 %v1222
    %v1224 = vlaneseq
    %v1225 = vshrl.u32 %v1224, 7
    %v1226 = vsub.s32 %v1223, %v1225
    %v1227 = vrot.slane %v1214, %v1226
    %v1229 = vunpack.c.l.s4 1983009808
    %v1230 = vunpack.c.0.s8 %v1229
    %v1231 = vlaneseq
    %v1232 = vshrl.u32 %v1231, 7
    %v1233 = vsub.s32 %v1230, %v1232
    %v1234 = vrot.slane %v1220, %v1233
    %v1235 = vcombine.high %v1227, %v1227
    %v1236 = vcombine.high %v1234, %v1234
    %v1237 = vcombine.high %v1215, %v1215
    %v1239 = vunpack.c.l.s4 1983009808
    %v1240 = vunpack.c.0.s8 %v1239
    %v1241 = vlaneseq
    %v1242 = vshrl.u32 %v1241, 7
    %v1243 = vsub.s32 %v1240, %v1242
    %v1244 = vrot.slane %v1215, %v1243
    %v1246 = vunpack.c.l.s4 1983009808
    %v1247 = vunpack.c.0.s8 %v1246
    %v1248 = vlaneseq
    %v1249 = vshrl.u32 %v1248, 7
    %v1250 = vsub.s32 %v1247, %v1249
    %v1251 = vrot.slane %v1237, %v1250
    %v1252 = vcombine.high %v1244, %v1244
    %v1253 = vcombine.high %v1251, %v1251
    %v1255 = vunpack.c.l.s4 1983009808
    %v1256 = vunpack.c.0.s8 %v1255
    %v1257 = vlaneseq
    %v1258 = vshrl.u32 %v1257, 7
    %v1259 = vsub.s32 %v1256, %v1258
    %v1260 = vrot.slane %v1216, %v1259
    %v1261 = vcombine.high %v1260, %v1260
    %1262 = vrot.lane.b32.xlu0 %v1227, 96
    %v1263 = vpop.permute.xlu0 %1262
    %1264 = vrot.lane.b32.xlu0 %v1235, 96
    %v1265 = vpop.permute.xlu0 %1264
    %1266 = vrot.lane.b32.xlu0 %v1234, 96
    %v1267 = vpop.permute.xlu0 %1266
    %1268 = vrot.lane.b32.xlu0 %v1236, 96
    %v1269 = vpop.permute.xlu0 %1268
    %1270 = vrot.lane.b32.xlu0 %v1244, 96
    %v1271 = vpop.permute.xlu0 %1270
    %1272 = vrot.lane.b32.xlu0 %v1252, 96
    %v1273 = vpop.permute.xlu0 %1272
    %1274 = vrot.lane.b32.xlu0 %v1251, 96
    %v1275 = vpop.permute.xlu0 %1274
    %1276 = vrot.lane.b32.xlu0 %v1253, 96
    %v1277 = vpop.permute.xlu0 %1276
    %1278 = vrot.lane.b32.xlu0 %v1260, 96
    %v1279 = vpop.permute.xlu0 %1278
    %1280 = vrot.lane.b32.xlu0 %v1261, 96
    %v1281 = vpop.permute.xlu0 %1280
    %vm1282 = vcmask 785408
    %v1283 = vsel %vm1282, %v1263, %v1265
    %v1284 = vsel %vm1282, %v1265, %v1267
    %v1285 = vsel %vm1282, %v1267, %v1269
    %v1286 = vsel %vm1282, %v1269, %v1271
    %v1287 = vsel %vm1282, %v1271, %v1273
    %v1288 = vsel %vm1282, %v1273, %v1275
    %v1289 = vsel %vm1282, %v1275, %v1277
    %v1290 = vsel %vm1282, %v1277, %v1279
    %v1291 = vsel %vm1282, %v1279, %v1281
    %1301 = vst [vmem:[#allocation2 + $0x48] sm:$0x3] %v1283
    %1302 = vst [vmem:[#allocation2 + $0x50] sm:$0x3] %v1284
    %1303 = vst [vmem:[#allocation2 + $0x58] sm:$0x3] %v1285
    %1304 = vst [vmem:[#allocation2 + $0x60] sm:$0x3] %v1286
    %1305 = vst [vmem:[#allocation2 + $0x68] sm:$0x3] %v1287
    %1306 = vst [vmem:[#allocation2 + $0x70] sm:$0x3] %v1288
    %1307 = vst [vmem:[#allocation2 + $0x78] sm:$0x3] %v1289
    %1308 = vst [vmem:[#allocation2 + $0x80] sm:$0x3] %v1290
    %1309 = vst [vmem:[#allocation2 + $0x88] sm:$0x3] %v1291
    %v1310 = vld [vmem:[%s0] sm:$0xff]
    %v1311 = vld [vmem:[%s0 + $0x8] sm:$0xff]
    %v1312 = vld [vmem:[%s0 + $0x10] sm:$0xf]
    %v1313 = vld [vmem:[%s3] sm:$0x44]
    %v1314 = vld [vmem:[%s3 + $0x8] sm:$0x44]
    %v1315 = vld [vmem:[%s3 + $0x10] sm:$0x44]
    %v1316 = vld [vmem:[%s3 + $0x18] sm:$0x44]
    %v1317 = vld [vmem:[%s3 + $0x20] sm:$0x4]
    %v1323 = vunpack.c.l.b16 %v1313
    %v1324 = vunpack.c.h.b16 %v1313
    %v1325 = vunpack.c.l.b16 %v1314
    %v1326 = vunpack.c.h.b16 %v1314
    %v1327 = vunpack.c.l.b16 %v1315
    %v1328 = vunpack.c.h.b16 %v1315
    %v1329 = vunpack.c.l.b16 %v1316
    %v1330 = vunpack.c.h.b16 %v1316
    %v1331 = vunpack.c.l.b16 %v1317
    %v1332 = vpack.c.b16 %v1323, %v1323
    %v1333 = vpack.c.b16 %v1324, %v1324
    %v1334 = vpack.c.b16 %v1325, %v1325
    %v1335 = vpack.c.b16 %v1326, %v1326
    %v1336 = vpack.c.b16 %v1327, %v1327
    %v1337 = vpack.c.b16 %v1328, %v1328
    %v1338 = vpack.c.b16 %v1329, %v1329
    %v1339 = vpack.c.b16 %v1330, %v1330
    %v1340 = vpack.c.b16 %v1331, %v1331
    %v1342 = vshrl.u32 %v1332, 16
    %v1343 = vpack.i.b16 %v1342, %v1342
    %v1345 = vlaneseq
    %v1346 = vshrl.u32 %v1345, 7
    %v1347 = vsub.s32 2, %v1346
    %v1348 = vrot.slane %v1343, %v1347
    %v1350 = vshrl.u32 %v1333, 16
    %v1351 = vpack.i.b16 %v1350, %v1350
    %v1353 = vlaneseq
    %v1354 = vshrl.u32 %v1353, 7
    %v1355 = vsub.s32 2, %v1354
    %v1356 = vrot.slane %v1351, %v1355
    %v1358 = vshrl.u32 %v1334, 16
    %v1359 = vpack.i.b16 %v1358, %v1358
    %v1361 = vlaneseq
    %v1362 = vshrl.u32 %v1361, 7
    %v1363 = vsub.s32 2, %v1362
    %v1364 = vrot.slane %v1359, %v1363
    %v1366 = vshrl.u32 %v1335, 16
    %v1367 = vpack.i.b16 %v1366, %v1366
    %v1369 = vlaneseq
    %v1370 = vshrl.u32 %v1369, 7
    %v1371 = vsub.s32 2, %v1370
    %v1372 = vrot.slane %v1367, %v1371
    %v1374 = vshrl.u32 %v1336, 16
    %v1375 = vpack.i.b16 %v1374, %v1374
    %v1377 = vlaneseq
    %v1378 = vshrl.u32 %v1377, 7
    %v1379 = vsub.s32 2, %v1378
    %v1380 = vrot.slane %v1375, %v1379
    %v1382 = vshrl.u32 %v1337, 16
    %v1383 = vpack.i.b16 %v1382, %v1382
    %v1385 = vlaneseq
    %v1386 = vshrl.u32 %v1385, 7
    %v1387 = vsub.s32 2, %v1386
    %v1388 = vrot.slane %v1383, %v1387
    %v1390 = vshrl.u32 %v1338, 16
    %v1391 = vpack.i.b16 %v1390, %v1390
    %v1393 = vlaneseq
    %v1394 = vshrl.u32 %v1393, 7
    %v1395 = vsub.s32 2, %v1394
    %v1396 = vrot.slane %v1391, %v1395
    %v1398 = vshrl.u32 %v1339, 16
    %v1399 = vpack.i.b16 %v1398, %v1398
    %v1401 = vlaneseq
    %v1402 = vshrl.u32 %v1401, 7
    %v1403 = vsub.s32 2, %v1402
    %v1404 = vrot.slane %v1399, %v1403
    %v1406 = vshrl.u32 %v1340, 16
    %v1407 = vpack.i.b16 %v1406, %v1406
    %v1409 = vlaneseq
    %v1410 = vshrl.u32 %v1409, 7
    %v1411 = vsub.s32 2, %v1410
    %v1412 = vrot.slane %v1407, %v1411
    %v1422 = vcombine.low %v1348, %v1356
    %v1423 = vcombine.low %v1364, %v1372
    %v1425 = vunpack.c.l.s4 1983009808
    %v1426 = vunpack.c.0.s8 %v1425
    %v1427 = vlaneseq
    %v1428 = vshrl.u32 %v1427, 7
    %v1429 = vsub.s32 %v1426, %v1428
    %v1430 = vrot.slane %v1422, %v1429
    %v1432 = vunpack.c.l.s4 1983009808
    %v1433 = vunpack.c.0.s8 %v1432
    %v1434 = vlaneseq
    %v1435 = vshrl.u32 %v1434, 7
    %v1436 = vsub.s32 %v1433, %v1435
    %v1437 = vrot.slane %v1423, %v1436
    %v1438 = vcombine.low %v1430, %v1437
    %v1439 = vcombine.low %v1380, %v1388
    %v1440 = vcombine.low %v1396, %v1404
    %v1442 = vunpack.c.l.s4 1983009808
    %v1443 = vunpack.c.0.s8 %v1442
    %v1444 = vlaneseq
    %v1445 = vshrl.u32 %v1444, 7
    %v1446 = vsub.s32 %v1443, %v1445
    %v1447 = vrot.slane %v1439, %v1446
    %v1449 = vunpack.c.l.s4 1983009808
    %v1450 = vunpack.c.0.s8 %v1449
    %v1451 = vlaneseq
    %v1452 = vshrl.u32 %v1451, 7
    %v1453 = vsub.s32 %v1450, %v1452
    %v1454 = vrot.slane %v1440, %v1453
    %v1455 = vcombine.low %v1447, %v1454
    %v1457 = vunpack.c.l.s4 1983009808
    %v1458 = vunpack.c.0.s8 %v1457
    %v1459 = vlaneseq
    %v1460 = vshrl.u32 %v1459, 7
    %v1461 = vsub.s32 %v1458, %v1460
    %v1462 = vrot.slane %v1412, %v1461
    %1463 = vrot.lane.b32.xlu0 %v1438, 34
    %v1464 = vpop.permute.xlu0 %1463
    %1465 = vrot.lane.b32.xlu0 %v1455, 34
    %v1466 = vpop.permute.xlu0 %1465
    %1467 = vrot.lane.b32.xlu0 %v1462, 34
    %v1468 = vpop.permute.xlu0 %1467
    %v1469 = vrot.slane %v1464, 6
    %v1470 = vrot.slane %v1466, 6
    %v1471 = vrot.slane %v1468, 6
    %vm1472 = vcmask 277504
    %v1473 = vsel %vm1472, %v1469, %v1464
    %v1474 = vsel %vm421, %v1469, %v1470
    %v1475 = vsel %vm1472, %v1474, %v1466
    %v1476 = vsel %vm421, %v1470, %v1471
    %v1477 = vsel %vm1472, %v1476, %v1468
    %v1481 = vmul.bf16 %v1310, %v1473
    %v1482 = vmul.bf16 %v1311, %v1475
    %v1483 = vmul.bf16 %v1312, %v1477
    %v1487 = vcombine.low %v1481, %v1481
    %v1489 = vunpack.c.l.s4 1983009808
    %v1490 = vunpack.c.0.s8 %v1489
    %v1491 = vlaneseq
    %v1492 = vshrl.u32 %v1491, 7
    %v1493 = vsub.s32 %v1490, %v1492
    %v1494 = vrot.slane %v1487, %v1493
    %v1496 = vunpack.c.l.s4 1983009808
    %v1497 = vunpack.c.0.s8 %v1496
    %v1498 = vlaneseq
    %v1499 = vshrl.u32 %v1498, 7
    %v1500 = vsub.s32 %v1497, %v1499
    %v1501 = vrot.slane %v1481, %v1500
    %v1502 = vcombine.high %v1494, %v1494
    %v1503 = vcombine.high %v1501, %v1501
    %v1504 = vcombine.low %v1482, %v1482
    %v1506 = vunpack.c.l.s4 1983009808
    %v1507 = vunpack.c.0.s8 %v1506
    %v1508 = vlaneseq
    %v1509 = vshrl.u32 %v1508, 7
    %v1510 = vsub.s32 %v1507, %v1509
    %v1511 = vrot.slane %v1504, %v1510
    %v1513 = vunpack.c.l.s4 1983009808
    %v1514 = vunpack.c.0.s8 %v1513
    %v1515 = vlaneseq
    %v1516 = vshrl.u32 %v1515, 7
    %v1517 = vsub.s32 %v1514, %v1516
    %v1518 = vrot.slane %v1482, %v1517
    %v1519 = vcombine.high %v1511, %v1511
    %v1520 = vcombine.high %v1518, %v1518
    %v1521 = vcombine.low %v1483, %v1483
    %v1523 = vunpack.c.l.s4 1983009808
    %v1524 = vunpack.c.0.s8 %v1523
    %v1525 = vlaneseq
    %v1526 = vshrl.u32 %v1525, 7
    %v1527 = vsub.s32 %v1524, %v1526
    %v1528 = vrot.slane %v1521, %v1527
    %v1529 = vcombine.high %v1528, %v1528
    %1530 = vrot.lane.b32.xlu0 %v1494, 94
    %v1531 = vpop.permute.xlu0 %1530
    %1532 = vrot.lane.b32.xlu0 %v1502, 94
    %v1533 = vpop.permute.xlu0 %1532
    %1534 = vrot.lane.b32.xlu0 %v1501, 94
    %v1535 = vpop.permute.xlu0 %1534
    %1536 = vrot.lane.b32.xlu0 %v1503, 94
    %v1537 = vpop.permute.xlu0 %1536
    %1538 = vrot.lane.b32.xlu0 %v1511, 94
    %v1539 = vpop.permute.xlu0 %1538
    %1540 = vrot.lane.b32.xlu0 %v1519, 94
    %v1541 = vpop.permute.xlu0 %1540
    %1542 = vrot.lane.b32.xlu0 %v1518, 94
    %v1543 = vpop.permute.xlu0 %1542
    %1544 = vrot.lane.b32.xlu0 %v1520, 94
    %v1545 = vpop.permute.xlu0 %1544
    %1546 = vrot.lane.b32.xlu0 %v1528, 94
    %v1547 = vpop.permute.xlu0 %1546
    %1548 = vrot.lane.b32.xlu0 %v1529, 94
    %v1549 = vpop.permute.xlu0 %1548
    %vm1550 = vcmask 769024
    %v1551 = vsel %vm1550, %v1531, %v1533
    %v1552 = vsel %vm1550, %v1533, %v1535
    %v1553 = vsel %vm1550, %v1535, %v1537
    %v1554 = vsel %vm1550, %v1537, %v1539
    %v1555 = vsel %vm1550, %v1539, %v1541
    %v1556 = vsel %vm1550, %v1541, %v1543
    %v1557 = vsel %vm1550, %v1543, %v1545
    %v1558 = vsel %vm1550, %v1545, %v1547
    %v1559 = vsel %vm1550, %v1547, %v1549
    %1569 = vst [vmem:[#allocation2 + $0x48] sm:$0xc] %v1551
    %1570 = vst [vmem:[#allocation2 + $0x50] sm:$0xc] %v1552
    %1571 = vst [vmem:[#allocation2 + $0x58] sm:$0xc] %v1553
    %1572 = vst [vmem:[#allocation2 + $0x60] sm:$0xc] %v1554
    %1573 = vst [vmem:[#allocation2 + $0x68] sm:$0xc] %v1555
    %1574 = vst [vmem:[#allocation2 + $0x70] sm:$0xc] %v1556
    %1575 = vst [vmem:[#allocation2 + $0x78] sm:$0xc] %v1557
    %1576 = vst [vmem:[#allocation2 + $0x80] sm:$0xc] %v1558
    %1577 = vst [vmem:[#allocation2 + $0x88] sm:$0xc] %v1559
    %v1578 = vld [vmem:[%s0] sm:$0xff]
    %v1579 = vld [vmem:[%s0 + $0x8] sm:$0xff]
    %v1580 = vld [vmem:[%s0 + $0x10] sm:$0xf]
    %v1581 = vld [vmem:[%s3] sm:$0x88]
    %v1582 = vld [vmem:[%s3 + $0x8] sm:$0x88]
    %v1583 = vld [vmem:[%s3 + $0x10] sm:$0x88]
    %v1584 = vld [vmem:[%s3 + $0x18] sm:$0x88]
    %v1585 = vld [vmem:[%s3 + $0x20] sm:$0x8]
    %v1591 = vunpack.c.l.b16 %v1581
    %v1592 = vunpack.c.h.b16 %v1581
    %v1593 = vunpack.c.l.b16 %v1582
    %v1594 = vunpack.c.h.b16 %v1582
    %v1595 = vunpack.c.l.b16 %v1583
    %v1596 = vunpack.c.h.b16 %v1583
    %v1597 = vunpack.c.l.b16 %v1584
    %v1598 = vunpack.c.h.b16 %v1584
    %v1599 = vunpack.c.l.b16 %v1585
    %v1600 = vpack.c.b16 %v1591, %v1591
    %v1601 = vpack.c.b16 %v1592, %v1592
    %v1602 = vpack.c.b16 %v1593, %v1593
    %v1603 = vpack.c.b16 %v1594, %v1594
    %v1604 = vpack.c.b16 %v1595, %v1595
    %v1605 = vpack.c.b16 %v1596, %v1596
    %v1606 = vpack.c.b16 %v1597, %v1597
    %v1607 = vpack.c.b16 %v1598, %v1598
    %v1608 = vpack.c.b16 %v1599, %v1599
    %v1610 = vpack.i.b16 %v1600, %v1600
    %v1612 = vlaneseq
    %v1613 = vshrl.u32 %v1612, 7
    %v1614 = vsub.s32 3, %v1613
    %v1615 = vrot.slane %v1610, %v1614
    %v1617 = vpack.i.b16 %v1601, %v1601
    %v1619 = vlaneseq
    %v1620 = vshrl.u32 %v1619, 7
    %v1621 = vsub.s32 3, %v1620
    %v1622 = vrot.slane %v1617, %v1621
    %v1624 = vpack.i.b16 %v1602, %v1602
    %v1626 = vlaneseq
    %v1627 = vshrl.u32 %v1626, 7
    %v1628 = vsub.s32 3, %v1627
    %v1629 = vrot.slane %v1624, %v1628
    %v1631 = vpack.i.b16 %v1603, %v1603
    %v1633 = vlaneseq
    %v1634 = vshrl.u32 %v1633, 7
    %v1635 = vsub.s32 3, %v1634
    %v1636 = vrot.slane %v1631, %v1635
    %v1638 = vpack.i.b16 %v1604, %v1604
    %v1640 = vlaneseq
    %v1641 = vshrl.u32 %v1640, 7
    %v1642 = vsub.s32 3, %v1641
    %v1643 = vrot.slane %v1638, %v1642
    %v1645 = vpack.i.b16 %v1605, %v1605
    %v1647 = vlaneseq
    %v1648 = vshrl.u32 %v1647, 7
    %v1649 = vsub.s32 3, %v1648
    %v1650 = vrot.slane %v1645, %v1649
    %v1652 = vpack.i.b16 %v1606, %v1606
    %v1654 = vlaneseq
    %v1655 = vshrl.u32 %v1654, 7
    %v1656 = vsub.s32 3, %v1655
    %v1657 = vrot.slane %v1652, %v1656
    %v1659 = vpack.i.b16 %v1607, %v1607
    %v1661 = vlaneseq
    %v1662 = vshrl.u32 %v1661, 7
    %v1663 = vsub.s32 3, %v1662
    %v1664 = vrot.slane %v1659, %v1663
    %v1666 = vpack.i.b16 %v1608, %v1608
    %v1668 = vlaneseq
    %v1669 = vshrl.u32 %v1668, 7
    %v1670 = vsub.s32 3, %v1669
    %v1671 = vrot.slane %v1666, %v1670
    %v1681 = vcombine.low %v1615, %v1622
    %v1682 = vcombine.low %v1629, %v1636
    %v1684 = vunpack.c.l.s4 1983009808
    %v1685 = vunpack.c.0.s8 %v1684
    %v1686 = vlaneseq
    %v1687 = vshrl.u32 %v1686, 7
    %v1688 = vsub.s32 %v1685, %v1687
    %v1689 = vrot.slane %v1681, %v1688
    %v1691 = vunpack.c.l.s4 1983009808
    %v1692 = vunpack.c.0.s8 %v1691
    %v1693 = vlaneseq
    %v1694 = vshrl.u32 %v1693, 7
    %v1695 = vsub.s32 %v1692, %v1694
    %v1696 = vrot.slane %v1682, %v1695
    %v1697 = vcombine.low %v1689, %v1696
    %v1698 = vcombine.low %v1643, %v1650
    %v1699 = vcombine.low %v1657, %v1664
    %v1701 = vunpack.c.l.s4 1983009808
    %v1702 = vunpack.c.0.s8 %v1701
    %v1703 = vlaneseq
    %v1704 = vshrl.u32 %v1703, 7
    %v1705 = vsub.s32 %v1702, %v1704
    %v1706 = vrot.slane %v1698, %v1705
    %v1708 = vunpack.c.l.s4 1983009808
    %v1709 = vunpack.c.0.s8 %v1708
    %v1710 = vlaneseq
    %v1711 = vshrl.u32 %v1710, 7
    %v1712 = vsub.s32 %v1709, %v1711
    %v1713 = vrot.slane %v1699, %v1712
    %v1714 = vcombine.low %v1706, %v1713
    %v1716 = vunpack.c.l.s4 1983009808
    %v1717 = vunpack.c.0.s8 %v1716
    %v1718 = vlaneseq
    %v1719 = vshrl.u32 %v1718, 7
    %v1720 = vsub.s32 %v1717, %v1719
    %v1721 = vrot.slane %v1671, %v1720
    %1722 = vrot.lane.b32.xlu0 %v1697, 36
    %v1723 = vpop.permute.xlu0 %1722
    %1724 = vrot.lane.b32.xlu0 %v1714, 36
    %v1725 = vpop.permute.xlu0 %1724
    %1726 = vrot.lane.b32.xlu0 %v1721, 36
    %v1727 = vpop.permute.xlu0 %1726
    %v1728 = vrot.slane %v1723, 6
    %v1729 = vrot.slane %v1725, 6
    %v1730 = vrot.slane %v1727, 6
    %vm1731 = vcmask 293888
    %v1732 = vsel %vm1731, %v1728, %v1723
    %v1733 = vsel %vm421, %v1728, %v1729
    %v1734 = vsel %vm1731, %v1733, %v1725
    %v1735 = vsel %vm421, %v1729, %v1730
    %v1736 = vsel %vm1731, %v1735, %v1727
    %v1740 = vmul.bf16 %v1578, %v1732
    %v1741 = vmul.bf16 %v1579, %v1734
    %v1742 = vmul.bf16 %v1580, %v1736
    %v1746 = vcombine.high %v1740, %v1740
    %v1748 = vunpack.c.l.s4 1983009808
    %v1749 = vunpack.c.0.s8 %v1748
    %v1750 = vlaneseq
    %v1751 = vshrl.u32 %v1750, 7
    %v1752 = vsub.s32 %v1749, %v1751
    %v1753 = vrot.slane %v1740, %v1752
    %v1755 = vunpack.c.l.s4 1983009808
    %v1756 = vunpack.c.0.s8 %v1755
    %v1757 = vlaneseq
    %v1758 = vshrl.u32 %v1757, 7
    %v1759 = vsub.s32 %v1756, %v1758
    %v1760 = vrot.slane %v1746, %v1759
    %v1761 = vcombine.low %v1753, %v1753
    %v1762 = vcombine.low %v1760, %v1760
    %v1763 = vcombine.high %v1741, %v1741
    %v1765 = vunpack.c.l.s4 1983009808
    %v1766 = vunpack.c.0.s8 %v1765
    %v1767 = vlaneseq
    %v1768 = vshrl.u32 %v1767, 7
    %v1769 = vsub.s32 %v1766, %v1768
    %v1770 = vrot.slane %v1741, %v1769
    %v1772 = vunpack.c.l.s4 1983009808
    %v1773 = vunpack.c.0.s8 %v1772
    %v1774 = vlaneseq
    %v1775 = vshrl.u32 %v1774, 7
    %v1776 = vsub.s32 %v1773, %v1775
    %v1777 = vrot.slane %v1763, %v1776
    %v1778 = vcombine.low %v1770, %v1770
    %v1779 = vcombine.low %v1777, %v1777
    %v1781 = vunpack.c.l.s4 1983009808
    %v1782 = vunpack.c.0.s8 %v1781
    %v1783 = vlaneseq
    %v1784 = vshrl.u32 %v1783, 7
    %v1785 = vsub.s32 %v1782, %v1784
    %v1786 = vrot.slane %v1742, %v1785
    %v1787 = vcombine.low %v1786, %v1786
    %1788 = vrot.lane.b32.xlu0 %v1761, 92
    %v1789 = vpop.permute.xlu0 %1788
    %1790 = vrot.lane.b32.xlu0 %v1753, 92
    %v1791 = vpop.permute.xlu0 %1790
    %1792 = vrot.lane.b32.xlu0 %v1762, 92
    %v1793 = vpop.permute.xlu0 %1792
    %1794 = vrot.lane.b32.xlu0 %v1760, 92
    %v1795 = vpop.permute.xlu0 %1794
    %1796 = vrot.lane.b32.xlu0 %v1778, 92
    %v1797 = vpop.permute.xlu0 %1796
    %1798 = vrot.lane.b32.xlu0 %v1770, 92
    %v1799 = vpop.permute.xlu0 %1798
    %1800 = vrot.lane.b32.xlu0 %v1779, 92
    %v1801 = vpop.permute.xlu0 %1800
    %1802 = vrot.lane.b32.xlu0 %v1777, 92
    %v1803 = vpop.permute.xlu0 %1802
    %1804 = vrot.lane.b32.xlu0 %v1787, 92
    %v1805 = vpop.permute.xlu0 %1804
    %1806 = vrot.lane.b32.xlu0 %v1786, 92
    %v1807 = vpop.permute.xlu0 %1806
    %vm1808 = vcmask 752640
    %v1809 = vsel %vm1808, %v1789, %v1791
    %v1810 = vsel %vm1808, %v1791, %v1793
    %v1811 = vsel %vm1808, %v1793, %v1795
    %v1812 = vsel %vm1808, %v1795, %v1797
    %v1813 = vsel %vm1808, %v1797, %v1799
    %v1814 = vsel %vm1808, %v1799, %v1801
    %v1815 = vsel %vm1808, %v1801, %v1803
    %v1816 = vsel %vm1808, %v1803, %v1805
    %v1817 = vsel %vm1808, %v1805, %v1807
    %1827 = vst [vmem:[#allocation2 + $0x48] sm:$0x30] %v1809
    %1828 = vst [vmem:[#allocation2 + $0x50] sm:$0x30] %v1810
    %1829 = vst [vmem:[#allocation2 + $0x58] sm:$0x30] %v1811
    %1830 = vst [vmem:[#allocation2 + $0x60] sm:$0x30] %v1812
    %1831 = vst [vmem:[#allocation2 + $0x68] sm:$0x30] %v1813
    %1832 = vst [vmem:[#allocation2 + $0x70] sm:$0x30] %v1814
    %1833 = vst [vmem:[#allocation2 + $0x78] sm:$0x30] %v1815
    %1834 = vst [vmem:[#allocation2 + $0x80] sm:$0x30] %v1816
    %1835 = vst [vmem:[#allocation2 + $0x88] sm:$0x30] %v1817
    %v1836 = vld [vmem:[%s0] sm:$0xff]
    %v1837 = vld [vmem:[%s0 + $0x8] sm:$0xff]
    %v1838 = vld [vmem:[%s0 + $0x10] sm:$0xf]
    %v1839 = vld [vmem:[%s3] sm:$0x88]
    %v1840 = vld [vmem:[%s3 + $0x8] sm:$0x88]
    %v1841 = vld [vmem:[%s3 + $0x10] sm:$0x88]
    %v1842 = vld [vmem:[%s3 + $0x18] sm:$0x88]
    %v1843 = vld [vmem:[%s3 + $0x20] sm:$0x8]
    %v1849 = vunpack.c.l.b16 %v1839
    %v1850 = vunpack.c.h.b16 %v1839
    %v1851 = vunpack.c.l.b16 %v1840
    %v1852 = vunpack.c.h.b16 %v1840
    %v1853 = vunpack.c.l.b16 %v1841
    %v1854 = vunpack.c.h.b16 %v1841
    %v1855 = vunpack.c.l.b16 %v1842
    %v1856 = vunpack.c.h.b16 %v1842
    %v1857 = vunpack.c.l.b16 %v1843
    %v1858 = vpack.c.b16 %v1849, %v1849
    %v1859 = vpack.c.b16 %v1850, %v1850
    %v1860 = vpack.c.b16 %v1851, %v1851
    %v1861 = vpack.c.b16 %v1852, %v1852
    %v1862 = vpack.c.b16 %v1853, %v1853
    %v1863 = vpack.c.b16 %v1854, %v1854
    %v1864 = vpack.c.b16 %v1855, %v1855
    %v1865 = vpack.c.b16 %v1856, %v1856
    %v1866 = vpack.c.b16 %v1857, %v1857
    %v1868 = vshrl.u32 %v1858, 16
    %v1869 = vpack.i.b16 %v1868, %v1868
    %v1871 = vlaneseq
    %v1872 = vshrl.u32 %v1871, 7
    %v1873 = vsub.s32 3, %v1872
    %v1874 = vrot.slane %v1869, %v1873
    %v1876 = vshrl.u32 %v1859, 16
    %v1877 = vpack.i.b16 %v1876, %v1876
    %v1879 = vlaneseq
    %v1880 = vshrl.u32 %v1879, 7
    %v1881 = vsub.s32 3, %v1880
    %v1882 = vrot.slane %v1877, %v1881
    %v1884 = vshrl.u32 %v1860, 16
    %v1885 = vpack.i.b16 %v1884, %v1884
    %v1887 = vlaneseq
    %v1888 = vshrl.u32 %v1887, 7
    %v1889 = vsub.s32 3, %v1888
    %v1890 = vrot.slane %v1885, %v1889
    %v1892 = vshrl.u32 %v1861, 16
    %v1893 = vpack.i.b16 %v1892, %v1892
    %v1895 = vlaneseq
    %v1896 = vshrl.u32 %v1895, 7
    %v1897 = vsub.s32 3, %v1896
    %v1898 = vrot.slane %v1893, %v1897
    %v1900 = vshrl.u32 %v1862, 16
    %v1901 = vpack.i.b16 %v1900, %v1900
    %v1903 = vlaneseq
    %v1904 = vshrl.u32 %v1903, 7
    %v1905 = vsub.s32 3, %v1904
    %v1906 = vrot.slane %v1901, %v1905
    %v1908 = vshrl.u32 %v1863, 16
    %v1909 = vpack.i.b16 %v1908, %v1908
    %v1911 = vlaneseq
    %v1912 = vshrl.u32 %v1911, 7
    %v1913 = vsub.s32 3, %v1912
    %v1914 = vrot.slane %v1909, %v1913
    %v1916 = vshrl.u32 %v1864, 16
    %v1917 = vpack.i.b16 %v1916, %v1916
    %v1919 = vlaneseq
    %v1920 = vshrl.u32 %v1919, 7
    %v1921 = vsub.s32 3, %v1920
    %v1922 = vrot.slane %v1917, %v1921
    %v1924 = vshrl.u32 %v1865, 16
    %v1925 = vpack.i.b16 %v1924, %v1924
    %v1927 = vlaneseq
    %v1928 = vshrl.u32 %v1927, 7
    %v1929 = vsub.s32 3, %v1928
    %v1930 = vrot.slane %v1925, %v1929
    %v1932 = vshrl.u32 %v1866, 16
    %v1933 = vpack.i.b16 %v1932, %v1932
    %v1935 = vlaneseq
    %v1936 = vshrl.u32 %v1935, 7
    %v1937 = vsub.s32 3, %v1936
    %v1938 = vrot.slane %v1933, %v1937
    %v1948 = vcombine.low %v1874, %v1882
    %v1949 = vcombine.low %v1890, %v1898
    %v1951 = vunpack.c.l.s4 1983009808
    %v1952 = vunpack.c.0.s8 %v1951
    %v1953 = vlaneseq
    %v1954 = vshrl.u32 %v1953, 7
    %v1955 = vsub.s32 %v1952, %v1954
    %v1956 = vrot.slane %v1948, %v1955
    %v1958 = vunpack.c.l.s4 1983009808
    %v1959 = vunpack.c.0.s8 %v1958
    %v1960 = vlaneseq
    %v1961 = vshrl.u32 %v1960, 7
    %v1962 = vsub.s32 %v1959, %v1961
    %v1963 = vrot.slane %v1949, %v1962
    %v1964 = vcombine.low %v1956, %v1963
    %v1965 = vcombine.low %v1906, %v1914
    %v1966 = vcombine.low %v1922, %v1930
    %v1968 = vunpack.c.l.s4 1983009808
    %v1969 = vunpack.c.0.s8 %v1968
    %v1970 = vlaneseq
    %v1971 = vshrl.u32 %v1970, 7
    %v1972 = vsub.s32 %v1969, %v1971
    %v1973 = vrot.slane %v1965, %v1972
    %v1975 = vunpack.c.l.s4 1983009808
    %v1976 = vunpack.c.0.s8 %v1975
    %v1977 = vlaneseq
    %v1978 = vshrl.u32 %v1977, 7
    %v1979 = vsub.s32 %v1976, %v1978
    %v1980 = vrot.slane %v1966, %v1979
    %v1981 = vcombine.low %v1973, %v1980
    %v1983 = vunpack.c.l.s4 1983009808
    %v1984 = vunpack.c.0.s8 %v1983
    %v1985 = vlaneseq
    %v1986 = vshrl.u32 %v1985, 7
    %v1987 = vsub.s32 %v1984, %v1986
    %v1988 = vrot.slane %v1938, %v1987
    %1989 = vrot.lane.b32.xlu0 %v1964, 38
    %v1990 = vpop.permute.xlu0 %1989
    %1991 = vrot.lane.b32.xlu0 %v1981, 38
    %v1992 = vpop.permute.xlu0 %1991
    %1993 = vrot.lane.b32.xlu0 %v1988, 38
    %v1994 = vpop.permute.xlu0 %1993
    %v1995 = vrot.slane %v1990, 6
    %v1996 = vrot.slane %v1992, 6
    %v1997 = vrot.slane %v1994, 6
    %vm1998 = vcmask 310272
    %v1999 = vsel %vm1998, %v1995, %v1990
    %v2000 = vsel %vm421, %v1995, %v1996
    %v2001 = vsel %vm1998, %v2000, %v1992
    %v2002 = vsel %vm421, %v1996, %v1997
    %v2003 = vsel %vm1998, %v2002, %v1994
    %v2007 = vmul.bf16 %v1836, %v1999
    %v2008 = vmul.bf16 %v1837, %v2001
    %v2009 = vmul.bf16 %v1838, %v2003
    %v2013 = vcombine.low %v2007, %v2007
    %v2015 = vunpack.c.l.s4 1983009808
    %v2016 = vunpack.c.0.s8 %v2015
    %v2017 = vlaneseq
    %v2018 = vshrl.u32 %v2017, 7
    %v2019 = vsub.s32 %v2016, %v2018
    %v2020 = vrot.slane %v2013, %v2019
    %v2022 = vunpack.c.l.s4 1983009808
    %v2023 = vunpack.c.0.s8 %v2022
    %v2024 = vlaneseq
    %v2025 = vshrl.u32 %v2024, 7
    %v2026 = vsub.s32 %v2023, %v2025
    %v2027 = vrot.slane %v2007, %v2026
    %v2028 = vcombine.low %v2020, %v2020
    %v2029 = vcombine.low %v2027, %v2027
    %v2030 = vcombine.low %v2008, %v2008
    %v2032 = vunpack.c.l.s4 1983009808
    %v2033 = vunpack.c.0.s8 %v2032
    %v2034 = vlaneseq
    %v2035 = vshrl.u32 %v2034, 7
    %v2036 = vsub.s32 %v2033, %v2035
    %v2037 = vrot.slane %v2030, %v2036
    %v2039 = vunpack.c.l.s4 1983009808
    %v2040 = vunpack.c.0.s8 %v2039
    %v2041 = vlaneseq
    %v2042 = vshrl.u32 %v2041, 7
    %v2043 = vsub.s32 %v2040, %v2042
    %v2044 = vrot.slane %v2008, %v2043
    %v2045 = vcombine.low %v2037, %v2037
    %v2046 = vcombine.low %v2044, %v2044
    %v2047 = vcombine.low %v2009, %v2009
    %v2049 = vunpack.c.l.s4 1983009808
    %v2050 = vunpack.c.0.s8 %v2049
    %v2051 = vlaneseq
    %v2052 = vshrl.u32 %v2051, 7
    %v2053 = vsub.s32 %v2050, %v2052
    %v2054 = vrot.slane %v2047, %v2053
    %v2055 = vcombine.low %v2054, %v2054
    %2056 = vrot.lane.b32.xlu0 %v2028, 90
    %v2057 = vpop.permute.xlu0 %2056
    %2058 = vrot.lane.b32.xlu0 %v2020, 90
    %v2059 = vpop.permute.xlu0 %2058
    %2060 = vrot.lane.b32.xlu0 %v2029, 90
    %v2061 = vpop.permute.xlu0 %2060
    %2062 = vrot.lane.b32.xlu0 %v2027, 90
    %v2063 = vpop.permute.xlu0 %2062
    %2064 = vrot.lane.b32.xlu0 %v2045, 90
    %v2065 = vpop.permute.xlu0 %2064
    %2066 = vrot.lane.b32.xlu0 %v2037, 90
    %v2067 = vpop.permute.xlu0 %2066
    %2068 = vrot.lane.b32.xlu0 %v2046, 90
    %v2069 = vpop.permute.xlu0 %2068
    %2070 = vrot.lane.b32.xlu0 %v2044, 90
    %v2071 = vpop.permute.xlu0 %2070
    %2072 = vrot.lane.b32.xlu0 %v2055, 90
    %v2073 = vpop.permute.xlu0 %2072
    %2074 = vrot.lane.b32.xlu0 %v2054, 90
    %v2075 = vpop.permute.xlu0 %2074
    %vm2076 = vcmask 736256
    %v2077 = vsel %vm2076, %v2057, %v2059
    %v2078 = vsel %vm2076, %v2059, %v2061
    %v2079 = vsel %vm2076, %v2061, %v2063
    %v2080 = vsel %vm2076, %v2063, %v2065
    %v2081 = vsel %vm2076, %v2065, %v2067
    %v2082 = vsel %vm2076, %v2067, %v2069
    %v2083 = vsel %vm2076, %v2069, %v2071
    %v2084 = vsel %vm2076, %v2071, %v2073
    %v2085 = vsel %vm2076, %v2073, %v2075
    %2095 = vst [vmem:[#allocation2 + $0x48] sm:$0xc0] %v2077
    %2096 = vst [vmem:[#allocation2 + $0x50] sm:$0xc0] %v2078
    %2097 = vst [vmem:[#allocation2 + $0x58] sm:$0xc0] %v2079
    %2098 = vst [vmem:[#allocation2 + $0x60] sm:$0xc0] %v2080
    %2099 = vst [vmem:[#allocation2 + $0x68] sm:$0xc0] %v2081
    %2100 = vst [vmem:[#allocation2 + $0x70] sm:$0xc0] %v2082
    %2101 = vst [vmem:[#allocation2 + $0x78] sm:$0xc0] %v2083
    %2102 = vst [vmem:[#allocation2 + $0x80] sm:$0xc0] %v2084
    %2103 = vst [vmem:[#allocation2 + $0x88] sm:$0xc0] %v2085
    %v2104 = vld [vmem:[%s0] sm:$0xff]
    %v2105 = vld [vmem:[%s0 + $0x8] sm:$0xff]
    %v2106 = vld [vmem:[%s0 + $0x10] sm:$0xf]
    %v2107 = vld [vmem:[%s3 + $0x24] sm:$0x11]
    %v2108 = vld [vmem:[%s3 + $0x2c] sm:$0x11]
    %v2109 = vld [vmem:[%s3 + $0x34] sm:$0x11]
    %v2110 = vld [vmem:[%s3 + $0x3c] sm:$0x11]
    %v2111 = vld [vmem:[%s3 + $0x44] sm:$0x1]
    %v2117 = vunpack.c.l.b16 %v2107
    %v2118 = vunpack.c.h.b16 %v2107
    %v2119 = vunpack.c.l.b16 %v2108
    %v2120 = vunpack.c.h.b16 %v2108
    %v2121 = vunpack.c.l.b16 %v2109
    %v2122 = vunpack.c.h.b16 %v2109
    %v2123 = vunpack.c.l.b16 %v2110
    %v2124 = vunpack.c.h.b16 %v2110
    %v2125 = vunpack.c.l.b16 %v2111
    %v2126 = vpack.c.b16 %v2117, %v2117
    %v2127 = vpack.c.b16 %v2118, %v2118
    %v2128 = vpack.c.b16 %v2119, %v2119
    %v2129 = vpack.c.b16 %v2120, %v2120
    %v2130 = vpack.c.b16 %v2121, %v2121
    %v2131 = vpack.c.b16 %v2122, %v2122
    %v2132 = vpack.c.b16 %v2123, %v2123
    %v2133 = vpack.c.b16 %v2124, %v2124
    %v2134 = vpack.c.b16 %v2125, %v2125
    %v2136 = vpack.i.b16 %v2126, %v2126
    %v2138 = vlaneseq
    %v2139 = vshrl.u32 %v2138, 7
    %v2140 = vsub.s32 0, %v2139
    %v2141 = vrot.slane %v2136, %v2140
    %v2143 = vpack.i.b16 %v2127, %v2127
    %v2145 = vlaneseq
    %v2146 = vshrl.u32 %v2145, 7
    %v2147 = vsub.s32 0, %v2146
    %v2148 = vrot.slane %v2143, %v2147
    %v2150 = vpack.i.b16 %v2128, %v2128
    %v2152 = vlaneseq
    %v2153 = vshrl.u32 %v2152, 7
    %v2154 = vsub.s32 0, %v2153
    %v2155 = vrot.slane %v2150, %v2154
    %v2157 = vpack.i.b16 %v2129, %v2129
    %v2159 = vlaneseq
    %v2160 = vshrl.u32 %v2159, 7
    %v2161 = vsub.s32 0, %v2160
    %v2162 = vrot.slane %v2157, %v2161
    %v2164 = vpack.i.b16 %v2130, %v2130
    %v2166 = vlaneseq
    %v2167 = vshrl.u32 %v2166, 7
    %v2168 = vsub.s32 0, %v2167
    %v2169 = vrot.slane %v2164, %v2168
    %v2171 = vpack.i.b16 %v2131, %v2131
    %v2173 = vlaneseq
    %v2174 = vshrl.u32 %v2173, 7
    %v2175 = vsub.s32 0, %v2174
    %v2176 = vrot.slane %v2171, %v2175
    %v2178 = vpack.i.b16 %v2132, %v2132
    %v2180 = vlaneseq
    %v2181 = vshrl.u32 %v2180, 7
    %v2182 = vsub.s32 0, %v2181
    %v2183 = vrot.slane %v2178, %v2182
    %v2185 = vpack.i.b16 %v2133, %v2133
    %v2187 = vlaneseq
    %v2188 = vshrl.u32 %v2187, 7
    %v2189 = vsub.s32 0, %v2188
    %v2190 = vrot.slane %v2185, %v2189
    %v2192 = vpack.i.b16 %v2134, %v2134
    %v2194 = vlaneseq
    %v2195 = vshrl.u32 %v2194, 7
    %v2196 = vsub.s32 0, %v2195
    %v2197 = vrot.slane %v2192, %v2196
    %v2207 = vcombine.low %v2141, %v2148
    %v2208 = vcombine.low %v2155, %v2162
    %v2210 = vunpack.c.l.s4 1983009808
    %v2211 = vunpack.c.0.s8 %v2210
    %v2212 = vlaneseq
    %v2213 = vshrl.u32 %v2212, 7
    %v2214 = vsub.s32 %v2211, %v2213
    %v2215 = vrot.slane %v2207, %v2214
    %v2217 = vunpack.c.l.s4 1983009808
    %v2218 = vunpack.c.0.s8 %v2217
    %v2219 = vlaneseq
    %v2220 = vshrl.u32 %v2219, 7
    %v2221 = vsub.s32 %v2218, %v2220
    %v2222 = vrot.slane %v2208, %v2221
    %v2223 = vcombine.low %v2215, %v2222
    %v2224 = vcombine.low %v2169, %v2176
    %v2225 = vcombine.low %v2183, %v2190
    %v2227 = vunpack.c.l.s4 1983009808
    %v2228 = vunpack.c.0.s8 %v2227
    %v2229 = vlaneseq
    %v2230 = vshrl.u32 %v2229, 7
    %v2231 = vsub.s32 %v2228, %v2230
    %v2232 = vrot.slane %v2224, %v2231
    %v2234 = vunpack.c.l.s4 1983009808
    %v2235 = vunpack.c.0.s8 %v2234
    %v2236 = vlaneseq
    %v2237 = vshrl.u32 %v2236, 7
    %v2238 = vsub.s32 %v2235, %v2237
    %v2239 = vrot.slane %v2225, %v2238
    %v2240 = vcombine.low %v2232, %v2239
    %v2242 = vunpack.c.l.s4 1983009808
    %v2243 = vunpack.c.0.s8 %v2242
    %v2244 = vlaneseq
    %v2245 = vshrl.u32 %v2244, 7
    %v2246 = vsub.s32 %v2243, %v2245
    %v2247 = vrot.slane %v2197, %v2246
    %2248 = vrot.lane.b32.xlu0 %v2223, 64
    %v2249 = vpop.permute.xlu0 %2248
    %2250 = vrot.lane.b32.xlu0 %v2240, 64
    %v2251 = vpop.permute.xlu0 %2250
    %2252 = vrot.lane.b32.xlu0 %v2247, 64
    %v2253 = vpop.permute.xlu0 %2252
    %v2254 = vrot.slane %v2249, 6
    %v2255 = vrot.slane %v2251, 6
    %v2256 = vrot.slane %v2253, 6
    %vm2257 = vcmask 523264
    %v2258 = vsel %vm2257, %v2254, %v2249
    %v2259 = vsel %vm421, %v2254, %v2255
    %v2260 = vsel %vm2257, %v2259, %v2251
    %v2261 = vsel %vm421, %v2255, %v2256
    %v2262 = vsel %vm2257, %v2261, %v2253
    %v2266 = vmul.bf16 %v2104, %v2258
    %v2267 = vmul.bf16 %v2105, %v2260
    %v2268 = vmul.bf16 %v2106, %v2262
    %v2272 = vcombine.high %v2266, %v2266
    %v2274 = vunpack.c.l.s4 1983009808
    %v2275 = vunpack.c.0.s8 %v2274
    %v2276 = vlaneseq
    %v2277 = vshrl.u32 %v2276, 7
    %v2278 = vsub.s32 %v2275, %v2277
    %v2279 = vrot.slane %v2266, %v2278
    %v2281 = vunpack.c.l.s4 1983009808
    %v2282 = vunpack.c.0.s8 %v2281
    %v2283 = vlaneseq
    %v2284 = vshrl.u32 %v2283, 7
    %v2285 = vsub.s32 %v2282, %v2284
    %v2286 = vrot.slane %v2272, %v2285
    %v2287 = vcombine.high %v2279, %v2279
    %v2288 = vcombine.high %v2286, %v2286
    %v2289 = vcombine.high %v2267, %v2267
    %v2291 = vunpack.c.l.s4 1983009808
    %v2292 = vunpack.c.0.s8 %v2291
    %v2293 = vlaneseq
    %v2294 = vshrl.u32 %v2293, 7
    %v2295 = vsub.s32 %v2292, %v2294
    %v2296 = vrot.slane %v2267, %v2295
    %v2298 = vunpack.c.l.s4 1983009808
    %v2299 = vunpack.c.0.s8 %v2298
    %v2300 = vlaneseq
    %v2301 = vshrl.u32 %v2300, 7
    %v2302 = vsub.s32 %v2299, %v2301
    %v2303 = vrot.slane %v2289, %v2302
    %v2304 = vcombine.high %v2296, %v2296
    %v2305 = vcombine.high %v2303, %v2303
    %v2307 = vunpack.c.l.s4 1983009808
    %v2308 = vunpack.c.0.s8 %v2307
    %v2309 = vlaneseq
    %v2310 = vshrl.u32 %v2309, 7
    %v2311 = vsub.s32 %v2308, %v2310
    %v2312 = vrot.slane %v2268, %v2311
    %v2313 = vcombine.high %v2312, %v2312
    %2314 = vrot.lane.b32.xlu0 %v2279, 64
    %v2315 = vpop.permute.xlu0 %2314
    %2316 = vrot.lane.b32.xlu0 %v2287, 64
    %v2317 = vpop.permute.xlu0 %2316
    %2318 = vrot.lane.b32.xlu0 %v2286, 64
    %v2319 = vpop.permute.xlu0 %2318
    %2320 = vrot.lane.b32.xlu0 %v2288, 64
    %v2321 = vpop.permute.xlu0 %2320
    %2322 = vrot.lane.b32.xlu0 %v2296, 64
    %v2323 = vpop.permute.xlu0 %2322
    %2324 = vrot.lane.b32.xlu0 %v2304, 64
    %v2325 = vpop.permute.xlu0 %2324
    %2326 = vrot.lane.b32.xlu0 %v2303, 64
    %v2327 = vpop.permute.xlu0 %2326
    %2328 = vrot.lane.b32.xlu0 %v2305, 64
    %v2329 = vpop.permute.xlu0 %2328
    %2330 = vrot.lane.b32.xlu0 %v2312, 64
    %v2331 = vpop.permute.xlu0 %2330
    %2332 = vrot.lane.b32.xlu0 %v2313, 64
    %v2333 = vpop.permute.xlu0 %2332
    %v2334 = vsel %vm2257, %v2315, %v2317
    %v2335 = vsel %vm2257, %v2317, %v2319
    %v2336 = vsel %vm2257, %v2319, %v2321
    %v2337 = vsel %vm2257, %v2321, %v2323
    %v2338 = vsel %vm2257, %v2323, %v2325
    %v2339 = vsel %vm2257, %v2325, %v2327
    %v2340 = vsel %vm2257, %v2327, %v2329
    %v2341 = vsel %vm2257, %v2329, %v2331
    %v2342 = vsel %vm2257, %v2331, %v2333
    %2352 = vst [vmem:[#allocation2 + $0x90] sm:$0x3] %v2334
    %2353 = vst [vmem:[#allocation2 + $0x98] sm:$0x3] %v2335
    %2354 = vst [vmem:[#allocation2 + $0xa0] sm:$0x3] %v2336
    %2355 = vst [vmem:[#allocation2 + $0xa8] sm:$0x3] %v2337
    %2356 = vst [vmem:[#allocation2 + $0xb0] sm:$0x3] %v2338
    %2357 = vst [vmem:[#allocation2 + $0xb8] sm:$0x3] %v2339
    %2358 = vst [vmem:[#allocation2 + $0xc0] sm:$0x3] %v2340
    %2359 = vst [vmem:[#allocation2 + $0xc8] sm:$0x3] %v2341
    %2360 = vst [vmem:[#allocation2 + $0xd0] sm:$0x3] %v2342
    %v2361 = vld [vmem:[%s0] sm:$0xff]
    %v2362 = vld [vmem:[%s0 + $0x8] sm:$0xff]
    %v2363 = vld [vmem:[%s0 + $0x10] sm:$0xf]
    %v2364 = vld [vmem:[%s3 + $0x24] sm:$0x11]
    %v2365 = vld [vmem:[%s3 + $0x2c] sm:$0x11]
    %v2366 = vld [vmem:[%s3 + $0x34] sm:$0x11]
    %v2367 = vld [vmem:[%s3 + $0x3c] sm:$0x11]
    %v2368 = vld [vmem:[%s3 + $0x44] sm:$0x1]
    %v2374 = vunpack.c.l.b16 %v2364
    %v2375 = vunpack.c.h.b16 %v2364
    %v2376 = vunpack.c.l.b16 %v2365
    %v2377 = vunpack.c.h.b16 %v2365
    %v2378 = vunpack.c.l.b16 %v2366
    %v2379 = vunpack.c.h.b16 %v2366
    %v2380 = vunpack.c.l.b16 %v2367
    %v2381 = vunpack.c.h.b16 %v2367
    %v2382 = vunpack.c.l.b16 %v2368
    %v2383 = vpack.c.b16 %v2374, %v2374
    %v2384 = vpack.c.b16 %v2375, %v2375
    %v2385 = vpack.c.b16 %v2376, %v2376
    %v2386 = vpack.c.b16 %v2377, %v2377
    %v2387 = vpack.c.b16 %v2378, %v2378
    %v2388 = vpack.c.b16 %v2379, %v2379
    %v2389 = vpack.c.b16 %v2380, %v2380
    %v2390 = vpack.c.b16 %v2381, %v2381
    %v2391 = vpack.c.b16 %v2382, %v2382
    %v2393 = vshrl.u32 %v2383, 16
    %v2394 = vpack.i.b16 %v2393, %v2393
    %v2396 = vlaneseq
    %v2397 = vshrl.u32 %v2396, 7
    %v2398 = vsub.s32 0, %v2397
    %v2399 = vrot.slane %v2394, %v2398
    %v2401 = vshrl.u32 %v2384, 16
    %v2402 = vpack.i.b16 %v2401, %v2401
    %v2404 = vlaneseq
    %v2405 = vshrl.u32 %v2404, 7
    %v2406 = vsub.s32 0, %v2405
    %v2407 = vrot.slane %v2402, %v2406
    %v2409 = vshrl.u32 %v2385, 16
    %v2410 = vpack.i.b16 %v2409, %v2409
    %v2412 = vlaneseq
    %v2413 = vshrl.u32 %v2412, 7
    %v2414 = vsub.s32 0, %v2413
    %v2415 = vrot.slane %v2410, %v2414
    %v2417 = vshrl.u32 %v2386, 16
    %v2418 = vpack.i.b16 %v2417, %v2417
    %v2420 = vlaneseq
    %v2421 = vshrl.u32 %v2420, 7
    %v2422 = vsub.s32 0, %v2421
    %v2423 = vrot.slane %v2418, %v2422
    %v2425 = vshrl.u32 %v2387, 16
    %v2426 = vpack.i.b16 %v2425, %v2425
    %v2428 = vlaneseq
    %v2429 = vshrl.u32 %v2428, 7
    %v2430 = vsub.s32 0, %v2429
    %v2431 = vrot.slane %v2426, %v2430
    %v2433 = vshrl.u32 %v2388, 16
    %v2434 = vpack.i.b16 %v2433, %v2433
    %v2436 = vlaneseq
    %v2437 = vshrl.u32 %v2436, 7
    %v2438 = vsub.s32 0, %v2437
    %v2439 = vrot.slane %v2434, %v2438
    %v2441 = vshrl.u32 %v2389, 16
    %v2442 = vpack.i.b16 %v2441, %v2441
    %v2444 = vlaneseq
    %v2445 = vshrl.u32 %v2444, 7
    %v2446 = vsub.s32 0, %v2445
    %v2447 = vrot.slane %v2442, %v2446
    %v2449 = vshrl.u32 %v2390, 16
    %v2450 = vpack.i.b16 %v2449, %v2449
    %v2452 = vlaneseq
    %v2453 = vshrl.u32 %v2452, 7
    %v2454 = vsub.s32 0, %v2453
    %v2455 = vrot.slane %v2450, %v2454
    %v2457 = vshrl.u32 %v2391, 16
    %v2458 = vpack.i.b16 %v2457, %v2457
    %v2460 = vlaneseq
    %v2461 = vshrl.u32 %v2460, 7
    %v2462 = vsub.s32 0, %v2461
    %v2463 = vrot.slane %v2458, %v2462
    %v2473 = vcombine.low %v2399, %v2407
    %v2474 = vcombine.low %v2415, %v2423
    %v2476 = vunpack.c.l.s4 1983009808
    %v2477 = vunpack.c.0.s8 %v2476
    %v2478 = vlaneseq
    %v2479 = vshrl.u32 %v2478, 7
    %v2480 = vsub.s32 %v2477, %v2479
    %v2481 = vrot.slane %v2473, %v2480
    %v2483 = vunpack.c.l.s4 1983009808
    %v2484 = vunpack.c.0.s8 %v2483
    %v2485 = vlaneseq
    %v2486 = vshrl.u32 %v2485, 7
    %v2487 = vsub.s32 %v2484, %v2486
    %v2488 = vrot.slane %v2474, %v2487
    %v2489 = vcombine.low %v2481, %v2488
    %v2490 = vcombine.low %v2431, %v2439
    %v2491 = vcombine.low %v2447, %v2455
    %v2493 = vunpack.c.l.s4 1983009808
    %v2494 = vunpack.c.0.s8 %v2493
    %v2495 = vlaneseq
    %v2496 = vshrl.u32 %v2495, 7
    %v2497 = vsub.s32 %v2494, %v2496
    %v2498 = vrot.slane %v2490, %v2497
    %v2500 = vunpack.c.l.s4 1983009808
    %v2501 = vunpack.c.0.s8 %v2500
    %v2502 = vlaneseq
    %v2503 = vshrl.u32 %v2502, 7
    %v2504 = vsub.s32 %v2501, %v2503
    %v2505 = vrot.slane %v2491, %v2504
    %v2506 = vcombine.low %v2498, %v2505
    %v2508 = vunpack.c.l.s4 1983009808
    %v2509 = vunpack.c.0.s8 %v2508
    %v2510 = vlaneseq
    %v2511 = vshrl.u32 %v2510, 7
    %v2512 = vsub.s32 %v2509, %v2511
    %v2513 = vrot.slane %v2463, %v2512
    %2514 = vrot.lane.b32.xlu0 %v2489, 66
    %v2515 = vpop.permute.xlu0 %2514
    %2516 = vrot.lane.b32.xlu0 %v2506, 66
    %v2517 = vpop.permute.xlu0 %2516
    %2518 = vrot.lane.b32.xlu0 %v2513, 66
    %v2519 = vpop.permute.xlu0 %2518
    %v2520 = vrot.slane %v2515, 6
    %v2521 = vrot.slane %v2517, 6
    %v2522 = vrot.slane %v2519, 6
    %vm2523 = vcmask 539648
    %v2524 = vsel %vm2523, %v2520, %v2515
    %v2525 = vsel %vm421, %v2520, %v2521
    %v2526 = vsel %vm2523, %v2525, %v2517
    %v2527 = vsel %vm421, %v2521, %v2522
    %v2528 = vsel %vm2523, %v2527, %v2519
    %v2532 = vmul.bf16 %v2361, %v2524
    %v2533 = vmul.bf16 %v2362, %v2526
    %v2534 = vmul.bf16 %v2363, %v2528
    %v2538 = vcombine.low %v2532, %v2532
    %v2540 = vunpack.c.l.s4 1983009808
    %v2541 = vunpack.c.0.s8 %v2540
    %v2542 = vlaneseq
    %v2543 = vshrl.u32 %v2542, 7
    %v2544 = vsub.s32 %v2541, %v2543
    %v2545 = vrot.slane %v2538, %v2544
    %v2547 = vunpack.c.l.s4 1983009808
    %v2548 = vunpack.c.0.s8 %v2547
    %v2549 = vlaneseq
    %v2550 = vshrl.u32 %v2549, 7
    %v2551 = vsub.s32 %v2548, %v2550
    %v2552 = vrot.slane %v2532, %v2551
    %v2553 = vcombine.high %v2545, %v2545
    %v2554 = vcombine.high %v2552, %v2552
    %v2555 = vcombine.low %v2533, %v2533
    %v2557 = vunpack.c.l.s4 1983009808
    %v2558 = vunpack.c.0.s8 %v2557
    %v2559 = vlaneseq
    %v2560 = vshrl.u32 %v2559, 7
    %v2561 = vsub.s32 %v2558, %v2560
    %v2562 = vrot.slane %v2555, %v2561
    %v2564 = vunpack.c.l.s4 1983009808
    %v2565 = vunpack.c.0.s8 %v2564
    %v2566 = vlaneseq
    %v2567 = vshrl.u32 %v2566, 7
    %v2568 = vsub.s32 %v2565, %v2567
    %v2569 = vrot.slane %v2533, %v2568
    %v2570 = vcombine.high %v2562, %v2562
    %v2571 = vcombine.high %v2569, %v2569
    %v2572 = vcombine.low %v2534, %v2534
    %v2574 = vunpack.c.l.s4 1983009808
    %v2575 = vunpack.c.0.s8 %v2574
    %v2576 = vlaneseq
    %v2577 = vshrl.u32 %v2576, 7
    %v2578 = vsub.s32 %v2575, %v2577
    %v2579 = vrot.slane %v2572, %v2578
    %v2580 = vcombine.high %v2579, %v2579
    %2581 = vrot.lane.b32.xlu0 %v2545, 62
    %v2582 = vpop.permute.xlu0 %2581
    %2583 = vrot.lane.b32.xlu0 %v2553, 62
    %v2584 = vpop.permute.xlu0 %2583
    %2585 = vrot.lane.b32.xlu0 %v2552, 62
    %v2586 = vpop.permute.xlu0 %2585
    %2587 = vrot.lane.b32.xlu0 %v2554, 62
    %v2588 = vpop.permute.xlu0 %2587
    %2589 = vrot.lane.b32.xlu0 %v2562, 62
    %v2590 = vpop.permute.xlu0 %2589
    %2591 = vrot.lane.b32.xlu0 %v2570, 62
    %v2592 = vpop.permute.xlu0 %2591
    %2593 = vrot.lane.b32.xlu0 %v2569, 62
    %v2594 = vpop.permute.xlu0 %2593
    %2595 = vrot.lane.b32.xlu0 %v2571, 62
    %v2596 = vpop.permute.xlu0 %2595
    %2597 = vrot.lane.b32.xlu0 %v2579, 62
    %v2598 = vpop.permute.xlu0 %2597
    %2599 = vrot.lane.b32.xlu0 %v2580, 62
    %v2600 = vpop.permute.xlu0 %2599
    %vm2601 = vcmask 506880
    %v2602 = vsel %vm2601, %v2582, %v2584
    %v2603 = vsel %vm2601, %v2584, %v2586
    %v2604 = vsel %vm2601, %v2586, %v2588
    %v2605 = vsel %vm2601, %v2588, %v2590
    %v2606 = vsel %vm2601, %v2590, %v2592
    %v2607 = vsel %vm2601, %v2592, %v2594
    %v2608 = vsel %vm2601, %v2594, %v2596
    %v2609 = vsel %vm2601, %v2596, %v2598
    %v2610 = vsel %vm2601, %v2598, %v2600
    %2620 = vst [vmem:[#allocation2 + $0x90] sm:$0xc] %v2602
    %2621 = vst [vmem:[#allocation2 + $0x98] sm:$0xc] %v2603
    %2622 = vst [vmem:[#allocation2 + $0xa0] sm:$0xc] %v2604
    %2623 = vst [vmem:[#allocation2 + $0xa8] sm:$0xc] %v2605
    %2624 = vst [vmem:[#allocation2 + $0xb0] sm:$0xc] %v2606
    %2625 = vst [vmem:[#allocation2 + $0xb8] sm:$0xc] %v2607
    %2626 = vst [vmem:[#allocation2 + $0xc0] sm:$0xc] %v2608
    %2627 = vst [vmem:[#allocation2 + $0xc8] sm:$0xc] %v2609
    %2628 = vst [vmem:[#allocation2 + $0xd0] sm:$0xc] %v2610
    %v2629 = vld [vmem:[%s0] sm:$0xff]
    %v2630 = vld [vmem:[%s0 + $0x8] sm:$0xff]
    %v2631 = vld [vmem:[%s0 + $0x10] sm:$0xf]
    %v2632 = vld [vmem:[%s3 + $0x24] sm:$0x22]
    %v2633 = vld [vmem:[%s3 + $0x2c] sm:$0x22]
    %v2634 = vld [vmem:[%s3 + $0x34] sm:$0x22]
    %v2635 = vld [vmem:[%s3 + $0x3c] sm:$0x22]
    %v2636 = vld [vmem:[%s3 + $0x44] sm:$0x2]
    %v2642 = vunpack.c.l.b16 %v2632
    %v2643 = vunpack.c.h.b16 %v2632
    %v2644 = vunpack.c.l.b16 %v2633
    %v2645 = vunpack.c.h.b16 %v2633
    %v2646 = vunpack.c.l.b16 %v2634
    %v2647 = vunpack.c.h.b16 %v2634
    %v2648 = vunpack.c.l.b16 %v2635
    %v2649 = vunpack.c.h.b16 %v2635
    %v2650 = vunpack.c.l.b16 %v2636
    %v2651 = vpack.c.b16 %v2642, %v2642
    %v2652 = vpack.c.b16 %v2643, %v2643
    %v2653 = vpack.c.b16 %v2644, %v2644
    %v2654 = vpack.c.b16 %v2645, %v2645
    %v2655 = vpack.c.b16 %v2646, %v2646
    %v2656 = vpack.c.b16 %v2647, %v2647
    %v2657 = vpack.c.b16 %v2648, %v2648
    %v2658 = vpack.c.b16 %v2649, %v2649
    %v2659 = vpack.c.b16 %v2650, %v2650
    %v2661 = vpack.i.b16 %v2651, %v2651
    %v2663 = vlaneseq
    %v2664 = vshrl.u32 %v2663, 7
    %v2665 = vsub.s32 1, %v2664
    %v2666 = vrot.slane %v2661, %v2665
    %v2668 = vpack.i.b16 %v2652, %v2652
    %v2670 = vlaneseq
    %v2671 = vshrl.u32 %v2670, 7
    %v2672 = vsub.s32 1, %v2671
    %v2673 = vrot.slane %v2668, %v2672
    %v2675 = vpack.i.b16 %v2653, %v2653
    %v2677 = vlaneseq
    %v2678 = vshrl.u32 %v2677, 7
    %v2679 = vsub.s32 1, %v2678
    %v2680 = vrot.slane %v2675, %v2679
    %v2682 = vpack.i.b16 %v2654, %v2654
    %v2684 = vlaneseq
    %v2685 = vshrl.u32 %v2684, 7
    %v2686 = vsub.s32 1, %v2685
    %v2687 = vrot.slane %v2682, %v2686
    %v2689 = vpack.i.b16 %v2655, %v2655
    %v2691 = vlaneseq
    %v2692 = vshrl.u32 %v2691, 7
    %v2693 = vsub.s32 1, %v2692
    %v2694 = vrot.slane %v2689, %v2693
    %v2696 = vpack.i.b16 %v2656, %v2656
    %v2698 = vlaneseq
    %v2699 = vshrl.u32 %v2698, 7
    %v2700 = vsub.s32 1, %v2699
    %v2701 = vrot.slane %v2696, %v2700
    %v2703 = vpack.i.b16 %v2657, %v2657
    %v2705 = vlaneseq
    %v2706 = vshrl.u32 %v2705, 7
    %v2707 = vsub.s32 1, %v2706
    %v2708 = vrot.slane %v2703, %v2707
    %v2710 = vpack.i.b16 %v2658, %v2658
    %v2712 = vlaneseq
    %v2713 = vshrl.u32 %v2712, 7
    %v2714 = vsub.s32 1, %v2713
    %v2715 = vrot.slane %v2710, %v2714
    %v2717 = vpack.i.b16 %v2659, %v2659
    %v2719 = vlaneseq
    %v2720 = vshrl.u32 %v2719, 7
    %v2721 = vsub.s32 1, %v2720
    %v2722 = vrot.slane %v2717, %v2721
    %v2732 = vcombine.low %v2666, %v2673
    %v2733 = vcombine.low %v2680, %v2687
    %v2735 = vunpack.c.l.s4 1983009808
    %v2736 = vunpack.c.0.s8 %v2735
    %v2737 = vlaneseq
    %v2738 = vshrl.u32 %v2737, 7
    %v2739 = vsub.s32 %v2736, %v2738
    %v2740 = vrot.slane %v2732, %v2739
    %v2742 = vunpack.c.l.s4 1983009808
    %v2743 = vunpack.c.0.s8 %v2742
    %v2744 = vlaneseq
    %v2745 = vshrl.u32 %v2744, 7
    %v2746 = vsub.s32 %v2743, %v2745
    %v2747 = vrot.slane %v2733, %v2746
    %v2748 = vcombine.low %v2740, %v2747
    %v2749 = vcombine.low %v2694, %v2701
    %v2750 = vcombine.low %v2708, %v2715
    %v2752 = vunpack.c.l.s4 1983009808
    %v2753 = vunpack.c.0.s8 %v2752
    %v2754 = vlaneseq
    %v2755 = vshrl.u32 %v2754, 7
    %v2756 = vsub.s32 %v2753, %v2755
    %v2757 = vrot.slane %v2749, %v2756
    %v2759 = vunpack.c.l.s4 1983009808
    %v2760 = vunpack.c.0.s8 %v2759
    %v2761 = vlaneseq
    %v2762 = vshrl.u32 %v2761, 7
    %v2763 = vsub.s32 %v2760, %v2762
    %v2764 = vrot.slane %v2750, %v2763
    %v2765 = vcombine.low %v2757, %v2764
    %v2767 = vunpack.c.l.s4 1983009808
    %v2768 = vunpack.c.0.s8 %v2767
    %v2769 = vlaneseq
    %v2770 = vshrl.u32 %v2769, 7
    %v2771 = vsub.s32 %v2768, %v2770
    %v2772 = vrot.slane %v2722, %v2771
    %2773 = vrot.lane.b32.xlu0 %v2748, 68
    %v2774 = vpop.permute.xlu0 %2773
    %2775 = vrot.lane.b32.xlu0 %v2765, 68
    %v2776 = vpop.permute.xlu0 %2775
    %2777 = vrot.lane.b32.xlu0 %v2772, 68
    %v2778 = vpop.permute.xlu0 %2777
    %v2779 = vrot.slane %v2774, 6
    %v2780 = vrot.slane %v2776, 6
    %v2781 = vrot.slane %v2778, 6
    %vm2782 = vcmask 556032
    %v2783 = vsel %vm2782, %v2779, %v2774
    %v2784 = vsel %vm421, %v2779, %v2780
    %v2785 = vsel %vm2782, %v2784, %v2776
    %v2786 = vsel %vm421, %v2780, %v2781
    %v2787 = vsel %vm2782, %v2786, %v2778
    %v2791 = vmul.bf16 %v2629, %v2783
    %v2792 = vmul.bf16 %v2630, %v2785
    %v2793 = vmul.bf16 %v2631, %v2787
    %v2797 = vcombine.high %v2791, %v2791
    %v2799 = vunpack.c.l.s4 1983009808
    %v2800 = vunpack.c.0.s8 %v2799
    %v2801 = vlaneseq
    %v2802 = vshrl.u32 %v2801, 7
    %v2803 = vsub.s32 %v2800, %v2802
    %v2804 = vrot.slane %v2791, %v2803
    %v2806 = vunpack.c.l.s4 1983009808
    %v2807 = vunpack.c.0.s8 %v2806
    %v2808 = vlaneseq
    %v2809 = vshrl.u32 %v2808, 7
    %v2810 = vsub.s32 %v2807, %v2809
    %v2811 = vrot.slane %v2797, %v2810
    %v2812 = vcombine.low %v2804, %v2804
    %v2813 = vcombine.low %v2811, %v2811
    %v2814 = vcombine.high %v2792, %v2792
    %v2816 = vunpack.c.l.s4 1983009808
    %v2817 = vunpack.c.0.s8 %v2816
    %v2818 = vlaneseq
    %v2819 = vshrl.u32 %v2818, 7
    %v2820 = vsub.s32 %v2817, %v2819
    %v2821 = vrot.slane %v2792, %v2820
    %v2823 = vunpack.c.l.s4 1983009808
    %v2824 = vunpack.c.0.s8 %v2823
    %v2825 = vlaneseq
    %v2826 = vshrl.u32 %v2825, 7
    %v2827 = vsub.s32 %v2824, %v2826
    %v2828 = vrot.slane %v2814, %v2827
    %v2829 = vcombine.low %v2821, %v2821
    %v2830 = vcombine.low %v2828, %v2828
    %v2832 = vunpack.c.l.s4 1983009808
    %v2833 = vunpack.c.0.s8 %v2832
    %v2834 = vlaneseq
    %v2835 = vshrl.u32 %v2834, 7
    %v2836 = vsub.s32 %v2833, %v2835
    %v2837 = vrot.slane %v2793, %v2836
    %v2838 = vcombine.low %v2837, %v2837
    %2839 = vrot.lane.b32.xlu0 %v2812, 60
    %v2840 = vpop.permute.xlu0 %2839
    %2841 = vrot.lane.b32.xlu0 %v2804, 60
    %v2842 = vpop.permute.xlu0 %2841
    %2843 = vrot.lane.b32.xlu0 %v2813, 60
    %v2844 = vpop.permute.xlu0 %2843
    %2845 = vrot.lane.b32.xlu0 %v2811, 60
    %v2846 = vpop.permute.xlu0 %2845
    %2847 = vrot.lane.b32.xlu0 %v2829, 60
    %v2848 = vpop.permute.xlu0 %2847
    %2849 = vrot.lane.b32.xlu0 %v2821, 60
    %v2850 = vpop.permute.xlu0 %2849
    %2851 = vrot.lane.b32.xlu0 %v2830, 60
    %v2852 = vpop.permute.xlu0 %2851
    %2853 = vrot.lane.b32.xlu0 %v2828, 60
    %v2854 = vpop.permute.xlu0 %2853
    %2855 = vrot.lane.b32.xlu0 %v2838, 60
    %v2856 = vpop.permute.xlu0 %2855
    %2857 = vrot.lane.b32.xlu0 %v2837, 60
    %v2858 = vpop.permute.xlu0 %2857
    %vm2859 = vcmask 490496
    %v2860 = vsel %vm2859, %v2840, %v2842
    %v2861 = vsel %vm2859, %v2842, %v2844
    %v2862 = vsel %vm2859, %v2844, %v2846
    %v2863 = vsel %vm2859, %v2846, %v2848
    %v2864 = vsel %vm2859, %v2848, %v2850
    %v2865 = vsel %vm2859, %v2850, %v2852
    %v2866 = vsel %vm2859, %v2852, %v2854
    %v2867 = vsel %vm2859, %v2854, %v2856
    %v2868 = vsel %vm2859, %v2856, %v2858
    %2878 = vst [vmem:[#allocation2 + $0x90] sm:$0x30] %v2860
    %2879 = vst [vmem:[#allocation2 + $0x98] sm:$0x30] %v2861
    %2880 = vst [vmem:[#allocation2 + $0xa0] sm:$0x30] %v2862
    %2881 = vst [vmem:[#allocation2 + $0xa8] sm:$0x30] %v2863
    %2882 = vst [vmem:[#allocation2 + $0xb0] sm:$0x30] %v2864
    %2883 = vst [vmem:[#allocation2 + $0xb8] sm:$0x30] %v2865
    %2884 = vst [vmem:[#allocation2 + $0xc0] sm:$0x30] %v2866
    %2885 = vst [vmem:[#allocation2 + $0xc8] sm:$0x30] %v2867
    %2886 = vst [vmem:[#allocation2 + $0xd0] sm:$0x30] %v2868
    %v2887 = vld [vmem:[%s0] sm:$0xff]
    %v2888 = vld [vmem:[%s0 + $0x8] sm:$0xff]
    %v2889 = vld [vmem:[%s0 + $0x10] sm:$0xf]
    %v2890 = vld [vmem:[%s3 + $0x24] sm:$0x22]
    %v2891 = vld [vmem:[%s3 + $0x2c] sm:$0x22]
    %v2892 = vld [vmem:[%s3 + $0x34] sm:$0x22]
    %v2893 = vld [vmem:[%s3 + $0x3c] sm:$0x22]
    %v2894 = vld [vmem:[%s3 + $0x44] sm:$0x2]
    %v2900 = vunpack.c.l.b16 %v2890
    %v2901 = vunpack.c.h.b16 %v2890
    %v2902 = vunpack.c.l.b16 %v2891
    %v2903 = vunpack.c.h.b16 %v2891
    %v2904 = vunpack.c.l.b16 %v2892
    %v2905 = vunpack.c.h.b16 %v2892
    %v2906 = vunpack.c.l.b16 %v2893
    %v2907 = vunpack.c.h.b16 %v2893
    %v2908 = vunpack.c.l.b16 %v2894
    %v2909 = vpack.c.b16 %v2900, %v2900
    %v2910 = vpack.c.b16 %v2901, %v2901
    %v2911 = vpack.c.b16 %v2902, %v2902
    %v2912 = vpack.c.b16 %v2903, %v2903
    %v2913 = vpack.c.b16 %v2904, %v2904
    %v2914 = vpack.c.b16 %v2905, %v2905
    %v2915 = vpack.c.b16 %v2906, %v2906
    %v2916 = vpack.c.b16 %v2907, %v2907
    %v2917 = vpack.c.b16 %v2908, %v2908
    %v2919 = vshrl.u32 %v2909, 16
    %v2920 = vpack.i.b16 %v2919, %v2919
    %v2922 = vlaneseq
    %v2923 = vshrl.u32 %v2922, 7
    %v2924 = vsub.s32 1, %v2923
    %v2925 = vrot.slane %v2920, %v2924
    %v2927 = vshrl.u32 %v2910, 16
    %v2928 = vpack.i.b16 %v2927, %v2927
    %v2930 = vlaneseq
    %v2931 = vshrl.u32 %v2930, 7
    %v2932 = vsub.s32 1, %v2931
    %v2933 = vrot.slane %v2928, %v2932
    %v2935 = vshrl.u32 %v2911, 16
    %v2936 = vpack.i.b16 %v2935, %v2935
    %v2938 = vlaneseq
    %v2939 = vshrl.u32 %v2938, 7
    %v2940 = vsub.s32 1, %v2939
    %v2941 = vrot.slane %v2936, %v2940
    %v2943 = vshrl.u32 %v2912, 16
    %v2944 = vpack.i.b16 %v2943, %v2943
    %v2946 = vlaneseq
    %v2947 = vshrl.u32 %v2946, 7
    %v2948 = vsub.s32 1, %v2947
    %v2949 = vrot.slane %v2944, %v2948
    %v2951 = vshrl.u32 %v2913, 16
    %v2952 = vpack.i.b16 %v2951, %v2951
    %v2954 = vlaneseq
    %v2955 = vshrl.u32 %v2954, 7
    %v2956 = vsub.s32 1, %v2955
    %v2957 = vrot.slane %v2952, %v2956
    %v2959 = vshrl.u32 %v2914, 16
    %v2960 = vpack.i.b16 %v2959, %v2959
    %v2962 = vlaneseq
    %v2963 = vshrl.u32 %v2962, 7
    %v2964 = vsub.s32 1, %v2963
    %v2965 = vrot.slane %v2960, %v2964
    %v2967 = vshrl.u32 %v2915, 16
    %v2968 = vpack.i.b16 %v2967, %v2967
    %v2970 = vlaneseq
    %v2971 = vshrl.u32 %v2970, 7
    %v2972 = vsub.s32 1, %v2971
    %v2973 = vrot.slane %v2968, %v2972
    %v2975 = vshrl.u32 %v2916, 16
    %v2976 = vpack.i.b16 %v2975, %v2975
    %v2978 = vlaneseq
    %v2979 = vshrl.u32 %v2978, 7
    %v2980 = vsub.s32 1, %v2979
    %v2981 = vrot.slane %v2976, %v2980
    %v2983 = vshrl.u32 %v2917, 16
    %v2984 = vpack.i.b16 %v2983, %v2983
    %v2986 = vlaneseq
    %v2987 = vshrl.u32 %v2986, 7
    %v2988 = vsub.s32 1, %v2987
    %v2989 = vrot.slane %v2984, %v2988
    %v2999 = vcombine.low %v2925, %v2933
    %v3000 = vcombine.low %v2941, %v2949
    %v3002 = vunpack.c.l.s4 1983009808
    %v3003 = vunpack.c.0.s8 %v3002
    %v3004 = vlaneseq
    %v3005 = vshrl.u32 %v3004, 7
    %v3006 = vsub.s32 %v3003, %v3005
    %v3007 = vrot.slane %v2999, %v3006
    %v3009 = vunpack.c.l.s4 1983009808
    %v3010 = vunpack.c.0.s8 %v3009
    %v3011 = vlaneseq
    %v3012 = vshrl.u32 %v3011, 7
    %v3013 = vsub.s32 %v3010, %v3012
    %v3014 = vrot.slane %v3000, %v3013
    %v3015 = vcombine.low %v3007, %v3014
    %v3016 = vcombine.low %v2957, %v2965
    %v3017 = vcombine.low %v2973, %v2981
    %v3019 = vunpack.c.l.s4 1983009808
    %v3020 = vunpack.c.0.s8 %v3019
    %v3021 = vlaneseq
    %v3022 = vshrl.u32 %v3021, 7
    %v3023 = vsub.s32 %v3020, %v3022
    %v3024 = vrot.slane %v3016, %v3023
    %v3026 = vunpack.c.l.s4 1983009808
    %v3027 = vunpack.c.0.s8 %v3026
    %v3028 = vlaneseq
    %v3029 = vshrl.u32 %v3028, 7
    %v3030 = vsub.s32 %v3027, %v3029
    %v3031 = vrot.slane %v3017, %v3030
    %v3032 = vcombine.low %v3024, %v3031
    %v3034 = vunpack.c.l.s4 1983009808
    %v3035 = vunpack.c.0.s8 %v3034
    %v3036 = vlaneseq
    %v3037 = vshrl.u32 %v3036, 7
    %v3038 = vsub.s32 %v3035, %v3037
    %v3039 = vrot.slane %v2989, %v3038
    %3040 = vrot.lane.b32.xlu0 %v3015, 70
    %v3041 = vpop.permute.xlu0 %3040
    %3042 = vrot.lane.b32.xlu0 %v3032, 70
    %v3043 = vpop.permute.xlu0 %3042
    %3044 = vrot.lane.b32.xlu0 %v3039, 70
    %v3045 = vpop.permute.xlu0 %3044
    %v3046 = vrot.slane %v3041, 6
    %v3047 = vrot.slane %v3043, 6
    %v3048 = vrot.slane %v3045, 6
    %vm3049 = vcmask 572416
    %v3050 = vsel %vm3049, %v3046, %v3041
    %v3051 = vsel %vm421, %v3046, %v3047
    %v3052 = vsel %vm3049, %v3051, %v3043
    %v3053 = vsel %vm421, %v3047, %v3048
    %v3054 = vsel %vm3049, %v3053, %v3045
    %v3058 = vmul.bf16 %v2887, %v3050
    %v3059 = vmul.bf16 %v2888, %v3052
    %v3060 = vmul.bf16 %v2889, %v3054
    %v3064 = vcombine.low %v3058, %v3058
    %v3066 = vunpack.c.l.s4 1983009808
    %v3067 = vunpack.c.0.s8 %v3066
    %v3068 = vlaneseq
    %v3069 = vshrl.u32 %v3068, 7
    %v3070 = vsub.s32 %v3067, %v3069
    %v3071 = vrot.slane %v3064, %v3070
    %v3073 = vunpack.c.l.s4 1983009808
    %v3074 = vunpack.c.0.s8 %v3073
    %v3075 = vlaneseq
    %v3076 = vshrl.u32 %v3075, 7
    %v3077 = vsub.s32 %v3074, %v3076
    %v3078 = vrot.slane %v3058, %v3077
    %v3079 = vcombine.low %v3071, %v3071
    %v3080 = vcombine.low %v3078, %v3078
    %v3081 = vcombine.low %v3059, %v3059
    %v3083 = vunpack.c.l.s4 1983009808
    %v3084 = vunpack.c.0.s8 %v3083
    %v3085 = vlaneseq
    %v3086 = vshrl.u32 %v3085, 7
    %v3087 = vsub.s32 %v3084, %v3086
    %v3088 = vrot.slane %v3081, %v3087
    %v3090 = vunpack.c.l.s4 1983009808
    %v3091 = vunpack.c.0.s8 %v3090
    %v3092 = vlaneseq
    %v3093 = vshrl.u32 %v3092, 7
    %v3094 = vsub.s32 %v3091, %v3093
    %v3095 = vrot.slane %v3059, %v3094
    %v3096 = vcombine.low %v3088, %v3088
    %v3097 = vcombine.low %v3095, %v3095
    %v3098 = vcombine.low %v3060, %v3060
    %v3100 = vunpack.c.l.s4 1983009808
    %v3101 = vunpack.c.0.s8 %v3100
    %v3102 = vlaneseq
    %v3103 = vshrl.u32 %v3102, 7
    %v3104 = vsub.s32 %v3101, %v3103
    %v3105 = vrot.slane %v3098, %v3104
    %v3106 = vcombine.low %v3105, %v3105
    %3107 = vrot.lane.b32.xlu0 %v3079, 58
    %v3108 = vpop.permute.xlu0 %3107
    %3109 = vrot.lane.b32.xlu0 %v3071, 58
    %v3110 = vpop.permute.xlu0 %3109
    %3111 = vrot.lane.b32.xlu0 %v3080, 58
    %v3112 = vpop.permute.xlu0 %3111
    %3113 = vrot.lane.b32.xlu0 %v3078, 58
    %v3114 = vpop.permute.xlu0 %3113
    %3115 = vrot.lane.b32.xlu0 %v3096, 58
    %v3116 = vpop.permute.xlu0 %3115
    %3117 = vrot.lane.b32.xlu0 %v3088, 58
    %v3118 = vpop.permute.xlu0 %3117
    %3119 = vrot.lane.b32.xlu0 %v3097, 58
    %v3120 = vpop.permute.xlu0 %3119
    %3121 = vrot.lane.b32.xlu0 %v3095, 58
    %v3122 = vpop.permute.xlu0 %3121
    %3123 = vrot.lane.b32.xlu0 %v3106, 58
    %v3124 = vpop.permute.xlu0 %3123
    %3125 = vrot.lane.b32.xlu0 %v3105, 58
    %v3126 = vpop.permute.xlu0 %3125
    %vm3127 = vcmask 474112
    %v3128 = vsel %vm3127, %v3108, %v3110
    %v3129 = vsel %vm3127, %v3110, %v3112
    %v3130 = vsel %vm3127, %v3112, %v3114
    %v3131 = vsel %vm3127, %v3114, %v3116
    %v3132 = vsel %vm3127, %v3116, %v3118
    %v3133 = vsel %vm3127, %v3118, %v3120
    %v3134 = vsel %vm3127, %v3120, %v3122
    %v3135 = vsel %vm3127, %v3122, %v3124
    %v3136 = vsel %vm3127, %v3124, %v3126
    %3146 = vst [vmem:[#allocation2 + $0x90] sm:$0xc0] %v3128
    %3147 = vst [vmem:[#allocation2 + $0x98] sm:$0xc0] %v3129
    %3148 = vst [vmem:[#allocation2 + $0xa0] sm:$0xc0] %v3130
    %3149 = vst [vmem:[#allocation2 + $0xa8] sm:$0xc0] %v3131
    %3150 = vst [vmem:[#allocation2 + $0xb0] sm:$0xc0] %v3132
    %3151 = vst [vmem:[#allocation2 + $0xb8] sm:$0xc0] %v3133
    %3152 = vst [vmem:[#allocation2 + $0xc0] sm:$0xc0] %v3134
    %3153 = vst [vmem:[#allocation2 + $0xc8] sm:$0xc0] %v3135
    %3154 = vst [vmem:[#allocation2 + $0xd0] sm:$0xc0] %v3136
    %v3155 = vld [vmem:[%s0] sm:$0xff]
    %v3156 = vld [vmem:[%s0 + $0x8] sm:$0xff]
    %v3157 = vld [vmem:[%s0 + $0x10] sm:$0xf]
    %v3158 = vld [vmem:[%s3 + $0x24] sm:$0x44]
    %v3159 = vld [vmem:[%s3 + $0x2c] sm:$0x44]
    %v3160 = vld [vmem:[%s3 + $0x34] sm:$0x44]
    %v3161 = vld [vmem:[%s3 + $0x3c] sm:$0x44]
    %v3162 = vld [vmem:[%s3 + $0x44] sm:$0x4]
    %v3168 = vunpack.c.l.b16 %v3158
    %v3169 = vunpack.c.h.b16 %v3158
    %v3170 = vunpack.c.l.b16 %v3159
    %v3171 = vunpack.c.h.b16 %v3159
    %v3172 = vunpack.c.l.b16 %v3160
    %v3173 = vunpack.c.h.b16 %v3160
    %v3174 = vunpack.c.l.b16 %v3161
    %v3175 = vunpack.c.h.b16 %v3161
    %v3176 = vunpack.c.l.b16 %v3162
    %v3177 = vpack.c.b16 %v3168, %v3168
    %v3178 = vpack.c.b16 %v3169, %v3169
    %v3179 = vpack.c.b16 %v3170, %v3170
    %v3180 = vpack.c.b16 %v3171, %v3171
    %v3181 = vpack.c.b16 %v3172, %v3172
    %v3182 = vpack.c.b16 %v3173, %v3173
    %v3183 = vpack.c.b16 %v3174, %v3174
    %v3184 = vpack.c.b16 %v3175, %v3175
    %v3185 = vpack.c.b16 %v3176, %v3176
    %v3187 = vpack.i.b16 %v3177, %v3177
    %v3189 = vlaneseq
    %v3190 = vshrl.u32 %v3189, 7
    %v3191 = vsub.s32 2, %v3190
    %v3192 = vrot.slane %v3187, %v3191
    %v3194 = vpack.i.b16 %v3178, %v3178
    %v3196 = vlaneseq
    %v3197 = vshrl.u32 %v3196, 7
    %v3198 = vsub.s32 2, %v3197
    %v3199 = vrot.slane %v3194, %v3198
    %v3201 = vpack.i.b16 %v3179, %v3179
    %v3203 = vlaneseq
    %v3204 = vshrl.u32 %v3203, 7
    %v3205 = vsub.s32 2, %v3204
    %v3206 = vrot.slane %v3201, %v3205
    %v3208 = vpack.i.b16 %v3180, %v3180
    %v3210 = vlaneseq
    %v3211 = vshrl.u32 %v3210, 7
    %v3212 = vsub.s32 2, %v3211
    %v3213 = vrot.slane %v3208, %v3212
    %v3215 = vpack.i.b16 %v3181, %v3181
    %v3217 = vlaneseq
    %v3218 = vshrl.u32 %v3217, 7
    %v3219 = vsub.s32 2, %v3218
    %v3220 = vrot.slane %v3215, %v3219
    %v3222 = vpack.i.b16 %v3182, %v3182
    %v3224 = vlaneseq
    %v3225 = vshrl.u32 %v3224, 7
    %v3226 = vsub.s32 2, %v3225
    %v3227 = vrot.slane %v3222, %v3226
    %v3229 = vpack.i.b16 %v3183, %v3183
    %v3231 = vlaneseq
    %v3232 = vshrl.u32 %v3231, 7
    %v3233 = vsub.s32 2, %v3232
    %v3234 = vrot.slane %v3229, %v3233
    %v3236 = vpack.i.b16 %v3184, %v3184
    %v3238 = vlaneseq
    %v3239 = vshrl.u32 %v3238, 7
    %v3240 = vsub.s32 2, %v3239
    %v3241 = vrot.slane %v3236, %v3240
    %v3243 = vpack.i.b16 %v3185, %v3185
    %v3245 = vlaneseq
    %v3246 = vshrl.u32 %v3245, 7
    %v3247 = vsub.s32 2, %v3246
    %v3248 = vrot.slane %v3243, %v3247
    %v3258 = vcombine.low %v3192, %v3199
    %v3259 = vcombine.low %v3206, %v3213
    %v3261 = vunpack.c.l.s4 1983009808
    %v3262 = vunpack.c.0.s8 %v3261
    %v3263 = vlaneseq
    %v3264 = vshrl.u32 %v3263, 7
    %v3265 = vsub.s32 %v3262, %v3264
    %v3266 = vrot.slane %v3258, %v3265
    %v3268 = vunpack.c.l.s4 1983009808
    %v3269 = vunpack.c.0.s8 %v3268
    %v3270 = vlaneseq
    %v3271 = vshrl.u32 %v3270, 7
    %v3272 = vsub.s32 %v3269, %v3271
    %v3273 = vrot.slane %v3259, %v3272
    %v3274 = vcombine.low %v3266, %v3273
    %v3275 = vcombine.low %v3220, %v3227
    %v3276 = vcombine.low %v3234, %v3241
    %v3278 = vunpack.c.l.s4 1983009808
    %v3279 = vunpack.c.0.s8 %v3278
    %v3280 = vlaneseq
    %v3281 = vshrl.u32 %v3280, 7
    %v3282 = vsub.s32 %v3279, %v3281
    %v3283 = vrot.slane %v3275, %v3282
    %v3285 = vunpack.c.l.s4 1983009808
    %v3286 = vunpack.c.0.s8 %v3285
    %v3287 = vlaneseq
    %v3288 = vshrl.u32 %v3287, 7
    %v3289 = vsub.s32 %v3286, %v3288
    %v3290 = vrot.slane %v3276, %v3289
    %v3291 = vcombine.low %v3283, %v3290
    %v3293 = vunpack.c.l.s4 1983009808
    %v3294 = vunpack.c.0.s8 %v3293
    %v3295 = vlaneseq
    %v3296 = vshrl.u32 %v3295, 7
    %v3297 = vsub.s32 %v3294, %v3296
    %v3298 = vrot.slane %v3248, %v3297
    %3299 = vrot.lane.b32.xlu0 %v3274, 96
    %v3300 = vpop.permute.xlu0 %3299
    %3301 = vrot.lane.b32.xlu0 %v3291, 96
    %v3302 = vpop.permute.xlu0 %3301
    %3303 = vrot.lane.b32.xlu0 %v3298, 96
    %v3304 = vpop.permute.xlu0 %3303
    %v3305 = vrot.slane %v3300, 6
    %v3306 = vrot.slane %v3302, 6
    %v3307 = vrot.slane %v3304, 6
    %v3308 = vsel %vm1282, %v3305, %v3300
    %v3309 = vsel %vm421, %v3305, %v3306
    %v3310 = vsel %vm1282, %v3309, %v3302
    %v3311 = vsel %vm421, %v3306, %v3307
    %v3312 = vsel %vm1282, %v3311, %v3304
    %v3316 = vmul.bf16 %v3155, %v3308
    %v3317 = vmul.bf16 %v3156, %v3310
    %v3318 = vmul.bf16 %v3157, %v3312
    %v3322 = vcombine.high %v3316, %v3316
    %v3324 = vunpack.c.l.s4 1983009808
    %v3325 = vunpack.c.0.s8 %v3324
    %v3326 = vlaneseq
    %v3327 = vshrl.u32 %v3326, 7
    %v3328 = vsub.s32 %v3325, %v3327
    %v3329 = vrot.slane %v3316, %v3328
    %v3331 = vunpack.c.l.s4 1983009808
    %v3332 = vunpack.c.0.s8 %v3331
    %v3333 = vlaneseq
    %v3334 = vshrl.u32 %v3333, 7
    %v3335 = vsub.s32 %v3332, %v3334
    %v3336 = vrot.slane %v3322, %v3335
    %v3337 = vcombine.high %v3329, %v3329
    %v3338 = vcombine.high %v3336, %v3336
    %v3339 = vcombine.high %v3317, %v3317
    %v3341 = vunpack.c.l.s4 1983009808
    %v3342 = vunpack.c.0.s8 %v3341
    %v3343 = vlaneseq
    %v3344 = vshrl.u32 %v3343, 7
    %v3345 = vsub.s32 %v3342, %v3344
    %v3346 = vrot.slane %v3317, %v3345
    %v3348 = vunpack.c.l.s4 1983009808
    %v3349 = vunpack.c.0.s8 %v3348
    %v3350 = vlaneseq
    %v3351 = vshrl.u32 %v3350, 7
    %v3352 = vsub.s32 %v3349, %v3351
    %v3353 = vrot.slane %v3339, %v3352
    %v3354 = vcombine.high %v3346, %v3346
    %v3355 = vcombine.high %v3353, %v3353
    %v3357 = vunpack.c.l.s4 1983009808
    %v3358 = vunpack.c.0.s8 %v3357
    %v3359 = vlaneseq
    %v3360 = vshrl.u32 %v3359, 7
    %v3361 = vsub.s32 %v3358, %v3360
    %v3362 = vrot.slane %v3318, %v3361
    %v3363 = vcombine.high %v3362, %v3362
    %3364 = vrot.lane.b32.xlu0 %v3329, 32
    %v3365 = vpop.permute.xlu0 %3364
    %3366 = vrot.lane.b32.xlu0 %v3337, 32
    %v3367 = vpop.permute.xlu0 %3366
    %3368 = vrot.lane.b32.xlu0 %v3336, 32
    %v3369 = vpop.permute.xlu0 %3368
    %3370 = vrot.lane.b32.xlu0 %v3338, 32
    %v3371 = vpop.permute.xlu0 %3370
    %3372 = vrot.lane.b32.xlu0 %v3346, 32
    %v3373 = vpop.permute.xlu0 %3372
    %3374 = vrot.lane.b32.xlu0 %v3354, 32
    %v3375 = vpop.permute.xlu0 %3374
    %3376 = vrot.lane.b32.xlu0 %v3353, 32
    %v3377 = vpop.permute.xlu0 %3376
    %3378 = vrot.lane.b32.xlu0 %v3355, 32
    %v3379 = vpop.permute.xlu0 %3378
    %3380 = vrot.lane.b32.xlu0 %v3362, 32
    %v3381 = vpop.permute.xlu0 %3380
    %3382 = vrot.lane.b32.xlu0 %v3363, 32
    %v3383 = vpop.permute.xlu0 %3382
    %v3384 = vsel %vm1205, %v3365, %v3367
    %v3385 = vsel %vm1205, %v3367, %v3369
    %v3386 = vsel %vm1205, %v3369, %v3371
    %v3387 = vsel %vm1205, %v3371, %v3373
    %v3388 = vsel %vm1205, %v3373, %v3375
    %v3389 = vsel %vm1205, %v3375, %v3377
    %v3390 = vsel %vm1205, %v3377, %v3379
    %v3391 = vsel %vm1205, %v3379, %v3381
    %v3392 = vsel %vm1205, %v3381, %v3383
    %3402 = vst [vmem:[#allocation2 + $0xd8] sm:$0x3] %v3384
    %3403 = vst [vmem:[#allocation2 + $0xe0] sm:$0x3] %v3385
    %3404 = vst [vmem:[#allocation2 + $0xe8] sm:$0x3] %v3386
    %3405 = vst [vmem:[#allocation2 + $0xf0] sm:$0x3] %v3387
    %3406 = vst [vmem:[#allocation2 + $0xf8] sm:$0x3] %v3388
    %3407 = vst [vmem:[#allocation2 + $0x100] sm:$0x3] %v3389
    %3408 = vst [vmem:[#allocation2 + $0x108] sm:$0x3] %v3390
    %3409 = vst [vmem:[#allocation2 + $0x110] sm:$0x3] %v3391
    %3410 = vst [vmem:[#allocation2 + $0x118] sm:$0x3] %v3392
    %v3411 = vld [vmem:[%s0] sm:$0xff]
    %v3412 = vld [vmem:[%s0 + $0x8] sm:$0xff]
    %v3413 = vld [vmem:[%s0 + $0x10] sm:$0xf]
    %v3414 = vld [vmem:[%s3 + $0x24] sm:$0x44]
    %v3415 = vld [vmem:[%s3 + $0x2c] sm:$0x44]
    %v3416 = vld [vmem:[%s3 + $0x34] sm:$0x44]
    %v3417 = vld [vmem:[%s3 + $0x3c] sm:$0x44]
    %v3418 = vld [vmem:[%s3 + $0x44] sm:$0x4]
    %v3424 = vunpack.c.l.b16 %v3414
    %v3425 = vunpack.c.h.b16 %v3414
    %v3426 = vunpack.c.l.b16 %v3415
    %v3427 = vunpack.c.h.b16 %v3415
    %v3428 = vunpack.c.l.b16 %v3416
    %v3429 = vunpack.c.h.b16 %v3416
    %v3430 = vunpack.c.l.b16 %v3417
    %v3431 = vunpack.c.h.b16 %v3417
    %v3432 = vunpack.c.l.b16 %v3418
    %v3433 = vpack.c.b16 %v3424, %v3424
    %v3434 = vpack.c.b16 %v3425, %v3425
    %v3435 = vpack.c.b16 %v3426, %v3426
    %v3436 = vpack.c.b16 %v3427, %v3427
    %v3437 = vpack.c.b16 %v3428, %v3428
    %v3438 = vpack.c.b16 %v3429, %v3429
    %v3439 = vpack.c.b16 %v3430, %v3430
    %v3440 = vpack.c.b16 %v3431, %v3431
    %v3441 = vpack.c.b16 %v3432, %v3432
    %v3443 = vshrl.u32 %v3433, 16
    %v3444 = vpack.i.b16 %v3443, %v3443
    %v3446 = vlaneseq
    %v3447 = vshrl.u32 %v3446, 7
    %v3448 = vsub.s32 2, %v3447
    %v3449 = vrot.slane %v3444, %v3448
    %v3451 = vshrl.u32 %v3434, 16
    %v3452 = vpack.i.b16 %v3451, %v3451
    %v3454 = vlaneseq
    %v3455 = vshrl.u32 %v3454, 7
    %v3456 = vsub.s32 2, %v3455
    %v3457 = vrot.slane %v3452, %v3456
    %v3459 = vshrl.u32 %v3435, 16
    %v3460 = vpack.i.b16 %v3459, %v3459
    %v3462 = vlaneseq
    %v3463 = vshrl.u32 %v3462, 7
    %v3464 = vsub.s32 2, %v3463
    %v3465 = vrot.slane %v3460, %v3464
    %v3467 = vshrl.u32 %v3436, 16
    %v3468 = vpack.i.b16 %v3467, %v3467
    %v3470 = vlaneseq
    %v3471 = vshrl.u32 %v3470, 7
    %v3472 = vsub.s32 2, %v3471
    %v3473 = vrot.slane %v3468, %v3472
    %v3475 = vshrl.u32 %v3437, 16
    %v3476 = vpack.i.b16 %v3475, %v3475
    %v3478 = vlaneseq
    %v3479 = vshrl.u32 %v3478, 7
    %v3480 = vsub.s32 2, %v3479
    %v3481 = vrot.slane %v3476, %v3480
    %v3483 = vshrl.u32 %v3438, 16
    %v3484 = vpack.i.b16 %v3483, %v3483
    %v3486 = vlaneseq
    %v3487 = vshrl.u32 %v3486, 7
    %v3488 = vsub.s32 2, %v3487
    %v3489 = vrot.slane %v3484, %v3488
    %v3491 = vshrl.u32 %v3439, 16
    %v3492 = vpack.i.b16 %v3491, %v3491
    %v3494 = vlaneseq
    %v3495 = vshrl.u32 %v3494, 7
    %v3496 = vsub.s32 2, %v3495
    %v3497 = vrot.slane %v3492, %v3496
    %v3499 = vshrl.u32 %v3440, 16
    %v3500 = vpack.i.b16 %v3499, %v3499
    %v3502 = vlaneseq
    %v3503 = vshrl.u32 %v3502, 7
    %v3504 = vsub.s32 2, %v3503
    %v3505 = vrot.slane %v3500, %v3504
    %v3507 = vshrl.u32 %v3441, 16
    %v3508 = vpack.i.b16 %v3507, %v3507
    %v3510 = vlaneseq
    %v3511 = vshrl.u32 %v3510, 7
    %v3512 = vsub.s32 2, %v3511
    %v3513 = vrot.slane %v3508, %v3512
    %v3523 = vcombine.low %v3449, %v3457
    %v3524 = vcombine.low %v3465, %v3473
    %v3526 = vunpack.c.l.s4 1983009808
    %v3527 = vunpack.c.0.s8 %v3526
    %v3528 = vlaneseq
    %v3529 = vshrl.u32 %v3528, 7
    %v3530 = vsub.s32 %v3527, %v3529
    %v3531 = vrot.slane %v3523, %v3530
    %v3533 = vunpack.c.l.s4 1983009808
    %v3534 = vunpack.c.0.s8 %v3533
    %v3535 = vlaneseq
    %v3536 = vshrl.u32 %v3535, 7
    %v3537 = vsub.s32 %v3534, %v3536
    %v3538 = vrot.slane %v3524, %v3537
    %v3539 = vcombine.low %v3531, %v3538
    %v3540 = vcombine.low %v3481, %v3489
    %v3541 = vcombine.low %v3497, %v3505
    %v3543 = vunpack.c.l.s4 1983009808
    %v3544 = vunpack.c.0.s8 %v3543
    %v3545 = vlaneseq
    %v3546 = vshrl.u32 %v3545, 7
    %v3547 = vsub.s32 %v3544, %v3546
    %v3548 = vrot.slane %v3540, %v3547
    %v3550 = vunpack.c.l.s4 1983009808
    %v3551 = vunpack.c.0.s8 %v3550
    %v3552 = vlaneseq
    %v3553 = vshrl.u32 %v3552, 7
    %v3554 = vsub.s32 %v3551, %v3553
    %v3555 = vrot.slane %v3541, %v3554
    %v3556 = vcombine.low %v3548, %v3555
    %v3558 = vunpack.c.l.s4 1983009808
    %v3559 = vunpack.c.0.s8 %v3558
    %v3560 = vlaneseq
    %v3561 = vshrl.u32 %v3560, 7
    %v3562 = vsub.s32 %v3559, %v3561
    %v3563 = vrot.slane %v3513, %v3562
    %3564 = vrot.lane.b32.xlu0 %v3539, 98
    %v3565 = vpop.permute.xlu0 %3564
    %3566 = vrot.lane.b32.xlu0 %v3556, 98
    %v3567 = vpop.permute.xlu0 %3566
    %3568 = vrot.lane.b32.xlu0 %v3563, 98
    %v3569 = vpop.permute.xlu0 %3568
    %v3570 = vrot.slane %v3565, 6
    %v3571 = vrot.slane %v3567, 6
    %v3572 = vrot.slane %v3569, 6
    %vm3573 = vcmask 801792
    %v3574 = vsel %vm3573, %v3570, %v3565
    %v3575 = vsel %vm421, %v3570, %v3571
    %v3576 = vsel %vm3573, %v3575, %v3567
    %v3577 = vsel %vm421, %v3571, %v3572
    %v3578 = vsel %vm3573, %v3577, %v3569
    %v3582 = vmul.bf16 %v3411, %v3574
    %v3583 = vmul.bf16 %v3412, %v3576
    %v3584 = vmul.bf16 %v3413, %v3578
    %v3588 = vcombine.low %v3582, %v3582
    %v3590 = vunpack.c.l.s4 1983009808
    %v3591 = vunpack.c.0.s8 %v3590
    %v3592 = vlaneseq
    %v3593 = vshrl.u32 %v3592, 7
    %v3594 = vsub.s32 %v3591, %v3593
    %v3595 = vrot.slane %v3588, %v3594
    %v3597 = vunpack.c.l.s4 1983009808
    %v3598 = vunpack.c.0.s8 %v3597
    %v3599 = vlaneseq
    %v3600 = vshrl.u32 %v3599, 7
    %v3601 = vsub.s32 %v3598, %v3600
    %v3602 = vrot.slane %v3582, %v3601
    %v3603 = vcombine.high %v3595, %v3595
    %v3604 = vcombine.high %v3602, %v3602
    %v3605 = vcombine.low %v3583, %v3583
    %v3607 = vunpack.c.l.s4 1983009808
    %v3608 = vunpack.c.0.s8 %v3607
    %v3609 = vlaneseq
    %v3610 = vshrl.u32 %v3609, 7
    %v3611 = vsub.s32 %v3608, %v3610
    %v3612 = vrot.slane %v3605, %v3611
    %v3614 = vunpack.c.l.s4 1983009808
    %v3615 = vunpack.c.0.s8 %v3614
    %v3616 = vlaneseq
    %v3617 = vshrl.u32 %v3616, 7
    %v3618 = vsub.s32 %v3615, %v3617
    %v3619 = vrot.slane %v3583, %v3618
    %v3620 = vcombine.high %v3612, %v3612
    %v3621 = vcombine.high %v3619, %v3619
    %v3622 = vcombine.low %v3584, %v3584
    %v3624 = vunpack.c.l.s4 1983009808
    %v3625 = vunpack.c.0.s8 %v3624
    %v3626 = vlaneseq
    %v3627 = vshrl.u32 %v3626, 7
    %v3628 = vsub.s32 %v3625, %v3627
    %v3629 = vrot.slane %v3622, %v3628
    %v3630 = vcombine.high %v3629, %v3629
    %3631 = vrot.lane.b32.xlu0 %v3595, 30
    %v3632 = vpop.permute.xlu0 %3631
    %3633 = vrot.lane.b32.xlu0 %v3603, 30
    %v3634 = vpop.permute.xlu0 %3633
    %3635 = vrot.lane.b32.xlu0 %v3602, 30
    %v3636 = vpop.permute.xlu0 %3635
    %3637 = vrot.lane.b32.xlu0 %v3604, 30
    %v3638 = vpop.permute.xlu0 %3637
    %3639 = vrot.lane.b32.xlu0 %v3612, 30
    %v3640 = vpop.permute.xlu0 %3639
    %3641 = vrot.lane.b32.xlu0 %v3620, 30
    %v3642 = vpop.permute.xlu0 %3641
    %3643 = vrot.lane.b32.xlu0 %v3619, 30
    %v3644 = vpop.permute.xlu0 %3643
    %3645 = vrot.lane.b32.xlu0 %v3621, 30
    %v3646 = vpop.permute.xlu0 %3645
    %3647 = vrot.lane.b32.xlu0 %v3629, 30
    %v3648 = vpop.permute.xlu0 %3647
    %3649 = vrot.lane.b32.xlu0 %v3630, 30
    %v3650 = vpop.permute.xlu0 %3649
    %vm3651 = vcmask 244736
    %v3652 = vsel %vm3651, %v3632, %v3634
    %v3653 = vsel %vm3651, %v3634, %v3636
    %v3654 = vsel %vm3651, %v3636, %v3638
    %v3655 = vsel %vm3651, %v3638, %v3640
    %v3656 = vsel %vm3651, %v3640, %v3642
    %v3657 = vsel %vm3651, %v3642, %v3644
    %v3658 = vsel %vm3651, %v3644, %v3646
    %v3659 = vsel %vm3651, %v3646, %v3648
    %v3660 = vsel %vm3651, %v3648, %v3650
    %3670 = vst [vmem:[#allocation2 + $0xd8] sm:$0xc] %v3652
    %3671 = vst [vmem:[#allocation2 + $0xe0] sm:$0xc] %v3653
    %3672 = vst [vmem:[#allocation2 + $0xe8] sm:$0xc] %v3654
    %3673 = vst [vmem:[#allocation2 + $0xf0] sm:$0xc] %v3655
    %3674 = vst [vmem:[#allocation2 + $0xf8] sm:$0xc] %v3656
    %3675 = vst [vmem:[#allocation2 + $0x100] sm:$0xc] %v3657
    %3676 = vst [vmem:[#allocation2 + $0x108] sm:$0xc] %v3658
    %3677 = vst [vmem:[#allocation2 + $0x110] sm:$0xc] %v3659
    %3678 = vst [vmem:[#allocation2 + $0x118] sm:$0xc] %v3660
    %v3679 = vld [vmem:[%s0] sm:$0xff]
    %v3680 = vld [vmem:[%s0 + $0x8] sm:$0xff]
    %v3681 = vld [vmem:[%s0 + $0x10] sm:$0xf]
    %v3682 = vld [vmem:[%s3 + $0x24] sm:$0x88]
    %v3683 = vld [vmem:[%s3 + $0x2c] sm:$0x88]
    %v3684 = vld [vmem:[%s3 + $0x34] sm:$0x88]
    %v3685 = vld [vmem:[%s3 + $0x3c] sm:$0x88]
    %v3686 = vld [vmem:[%s3 + $0x44] sm:$0x8]
    %v3692 = vunpack.c.l.b16 %v3682
    %v3693 = vunpack.c.h.b16 %v3682
    %v3694 = vunpack.c.l.b16 %v3683
    %v3695 = vunpack.c.h.b16 %v3683
    %v3696 = vunpack.c.l.b16 %v3684
    %v3697 = vunpack.c.h.b16 %v3684
    %v3698 = vunpack.c.l.b16 %v3685
    %v3699 = vunpack.c.h.b16 %v3685
    %v3700 = vunpack.c.l.b16 %v3686
    %v3701 = vpack.c.b16 %v3692, %v3692
    %v3702 = vpack.c.b16 %v3693, %v3693
    %v3703 = vpack.c.b16 %v3694, %v3694
    %v3704 = vpack.c.b16 %v3695, %v3695
    %v3705 = vpack.c.b16 %v3696, %v3696
    %v3706 = vpack.c.b16 %v3697, %v3697
    %v3707 = vpack.c.b16 %v3698, %v3698
    %v3708 = vpack.c.b16 %v3699, %v3699
    %v3709 = vpack.c.b16 %v3700, %v3700
    %v3711 = vpack.i.b16 %v3701, %v3701
    %v3713 = vlaneseq
    %v3714 = vshrl.u32 %v3713, 7
    %v3715 = vsub.s32 3, %v3714
    %v3716 = vrot.slane %v3711, %v3715
    %v3718 = vpack.i.b16 %v3702, %v3702
    %v3720 = vlaneseq
    %v3721 = vshrl.u32 %v3720, 7
    %v3722 = vsub.s32 3, %v3721
    %v3723 = vrot.slane %v3718, %v3722
    %v3725 = vpack.i.b16 %v3703, %v3703
    %v3727 = vlaneseq
    %v3728 = vshrl.u32 %v3727, 7
    %v3729 = vsub.s32 3, %v3728
    %v3730 = vrot.slane %v3725, %v3729
    %v3732 = vpack.i.b16 %v3704, %v3704
    %v3734 = vlaneseq
    %v3735 = vshrl.u32 %v3734, 7
    %v3736 = vsub.s32 3, %v3735
    %v3737 = vrot.slane %v3732, %v3736
    %v3739 = vpack.i.b16 %v3705, %v3705
    %v3741 = vlaneseq
    %v3742 = vshrl.u32 %v3741, 7
    %v3743 = vsub.s32 3, %v3742
    %v3744 = vrot.slane %v3739, %v3743
    %v3746 = vpack.i.b16 %v3706, %v3706
    %v3748 = vlaneseq
    %v3749 = vshrl.u32 %v3748, 7
    %v3750 = vsub.s32 3, %v3749
    %v3751 = vrot.slane %v3746, %v3750
    %v3753 = vpack.i.b16 %v3707, %v3707
    %v3755 = vlaneseq
    %v3756 = vshrl.u32 %v3755, 7
    %v3757 = vsub.s32 3, %v3756
    %v3758 = vrot.slane %v3753, %v3757
    %v3760 = vpack.i.b16 %v3708, %v3708
    %v3762 = vlaneseq
    %v3763 = vshrl.u32 %v3762, 7
    %v3764 = vsub.s32 3, %v3763
    %v3765 = vrot.slane %v3760, %v3764
    %v3767 = vpack.i.b16 %v3709, %v3709
    %v3769 = vlaneseq
    %v3770 = vshrl.u32 %v3769, 7
    %v3771 = vsub.s32 3, %v3770
    %v3772 = vrot.slane %v3767, %v3771
    %v3782 = vcombine.low %v3716, %v3723
    %v3783 = vcombine.low %v3730, %v3737
    %v3785 = vunpack.c.l.s4 1983009808
    %v3786 = vunpack.c.0.s8 %v3785
    %v3787 = vlaneseq
    %v3788 = vshrl.u32 %v3787, 7
    %v3789 = vsub.s32 %v3786, %v3788
    %v3790 = vrot.slane %v3782, %v3789
    %v3792 = vunpack.c.l.s4 1983009808
    %v3793 = vunpack.c.0.s8 %v3792
    %v3794 = vlaneseq
    %v3795 = vshrl.u32 %v3794, 7
    %v3796 = vsub.s32 %v3793, %v3795
    %v3797 = vrot.slane %v3783, %v3796
    %v3798 = vcombine.low %v3790, %v3797
    %v3799 = vcombine.low %v3744, %v3751
    %v3800 = vcombine.low %v3758, %v3765
    %v3802 = vunpack.c.l.s4 1983009808
    %v3803 = vunpack.c.0.s8 %v3802
    %v3804 = vlaneseq
    %v3805 = vshrl.u32 %v3804, 7
    %v3806 = vsub.s32 %v3803, %v3805
    %v3807 = vrot.slane %v3799, %v3806
    %v3809 = vunpack.c.l.s4 1983009808
    %v3810 = vunpack.c.0.s8 %v3809
    %v3811 = vlaneseq
    %v3812 = vshrl.u32 %v3811, 7
    %v3813 = vsub.s32 %v3810, %v3812
    %v3814 = vrot.slane %v3800, %v3813
    %v3815 = vcombine.low %v3807, %v3814
    %v3817 = vunpack.c.l.s4 1983009808
    %v3818 = vunpack.c.0.s8 %v3817
    %v3819 = vlaneseq
    %v3820 = vshrl.u32 %v3819, 7
    %v3821 = vsub.s32 %v3818, %v3820
    %v3822 = vrot.slane %v3772, %v3821
    %3823 = vrot.lane.b32.xlu0 %v3798, 100
    %v3824 = vpop.permute.xlu0 %3823
    %3825 = vrot.lane.b32.xlu0 %v3815, 100
    %v3826 = vpop.permute.xlu0 %3825
    %3827 = vrot.lane.b32.xlu0 %v3822, 100
    %v3828 = vpop.permute.xlu0 %3827
    %v3829 = vrot.slane %v3824, 6
    %v3830 = vrot.slane %v3826, 6
    %v3831 = vrot.slane %v3828, 6
    %vm3832 = vcmask 818176
    %v3833 = vsel %vm3832, %v3829, %v3824
    %v3834 = vsel %vm421, %v3829, %v3830
    %v3835 = vsel %vm3832, %v3834, %v3826
    %v3836 = vsel %vm421, %v3830, %v3831
    %v3837 = vsel %vm3832, %v3836, %v3828
    %v3841 = vmul.bf16 %v3679, %v3833
    %v3842 = vmul.bf16 %v3680, %v3835
    %v3843 = vmul.bf16 %v3681, %v3837
    %v3847 = vcombine.high %v3841, %v3841
    %v3849 = vunpack.c.l.s4 1983009808
    %v3850 = vunpack.c.0.s8 %v3849
    %v3851 = vlaneseq
    %v3852 = vshrl.u32 %v3851, 7
    %v3853 = vsub.s32 %v3850, %v3852
    %v3854 = vrot.slane %v3841, %v3853
    %v3856 = vunpack.c.l.s4 1983009808
    %v3857 = vunpack.c.0.s8 %v3856
    %v3858 = vlaneseq
    %v3859 = vshrl.u32 %v3858, 7
    %v3860 = vsub.s32 %v3857, %v3859
    %v3861 = vrot.slane %v3847, %v3860
    %v3862 = vcombine.low %v3854, %v3854
    %v3863 = vcombine.low %v3861, %v3861
    %v3864 = vcombine.high %v3842, %v3842
    %v3866 = vunpack.c.l.s4 1983009808
    %v3867 = vunpack.c.0.s8 %v3866
    %v3868 = vlaneseq
    %v3869 = vshrl.u32 %v3868, 7
    %v3870 = vsub.s32 %v3867, %v3869
    %v3871 = vrot.slane %v3842, %v3870
    %v3873 = vunpack.c.l.s4 1983009808
    %v3874 = vunpack.c.0.s8 %v3873
    %v3875 = vlaneseq
    %v3876 = vshrl.u32 %v3875, 7
    %v3877 = vsub.s32 %v3874, %v3876
    %v3878 = vrot.slane %v3864, %v3877
    %v3879 = vcombine.low %v3871, %v3871
    %v3880 = vcombine.low %v3878, %v3878
    %v3882 = vunpack.c.l.s4 1983009808
    %v3883 = vunpack.c.0.s8 %v3882
    %v3884 = vlaneseq
    %v3885 = vshrl.u32 %v3884, 7
    %v3886 = vsub.s32 %v3883, %v3885
    %v3887 = vrot.slane %v3843, %v3886
    %v3888 = vcombine.low %v3887, %v3887
    %3889 = vrot.lane.b32.xlu0 %v3862, 28
    %v3890 = vpop.permute.xlu0 %3889
    %3891 = vrot.lane.b32.xlu0 %v3854, 28
    %v3892 = vpop.permute.xlu0 %3891
    %3893 = vrot.lane.b32.xlu0 %v3863, 28
    %v3894 = vpop.permute.xlu0 %3893
    %3895 = vrot.lane.b32.xlu0 %v3861, 28
    %v3896 = vpop.permute.xlu0 %3895
    %3897 = vrot.lane.b32.xlu0 %v3879, 28
    %v3898 = vpop.permute.xlu0 %3897
    %3899 = vrot.lane.b32.xlu0 %v3871, 28
    %v3900 = vpop.permute.xlu0 %3899
    %3901 = vrot.lane.b32.xlu0 %v3880, 28
    %v3902 = vpop.permute.xlu0 %3901
    %3903 = vrot.lane.b32.xlu0 %v3878, 28
    %v3904 = vpop.permute.xlu0 %3903
    %3905 = vrot.lane.b32.xlu0 %v3888, 28
    %v3906 = vpop.permute.xlu0 %3905
    %3907 = vrot.lane.b32.xlu0 %v3887, 28
    %v3908 = vpop.permute.xlu0 %3907
    %vm3909 = vcmask 228352
    %v3910 = vsel %vm3909, %v3890, %v3892
    %v3911 = vsel %vm3909, %v3892, %v3894
    %v3912 = vsel %vm3909, %v3894, %v3896
    %v3913 = vsel %vm3909, %v3896, %v3898
    %v3914 = vsel %vm3909, %v3898, %v3900
    %v3915 = vsel %vm3909, %v3900, %v3902
    %v3916 = vsel %vm3909, %v3902, %v3904
    %v3917 = vsel %vm3909, %v3904, %v3906
    %v3918 = vsel %vm3909, %v3906, %v3908
    %3928 = vst [vmem:[#allocation2 + $0xd8] sm:$0x30] %v3910
    %3929 = vst [vmem:[#allocation2 + $0xe0] sm:$0x30] %v3911
    %3930 = vst [vmem:[#allocation2 + $0xe8] sm:$0x30] %v3912
    %3931 = vst [vmem:[#allocation2 + $0xf0] sm:$0x30] %v3913
    %3932 = vst [vmem:[#allocation2 + $0xf8] sm:$0x30] %v3914
    %3933 = vst [vmem:[#allocation2 + $0x100] sm:$0x30] %v3915
    %3934 = vst [vmem:[#allocation2 + $0x108] sm:$0x30] %v3916
    %3935 = vst [vmem:[#allocation2 + $0x110] sm:$0x30] %v3917
    %3936 = vst [vmem:[#allocation2 + $0x118] sm:$0x30] %v3918
    %v3937 = vld [vmem:[%s0] sm:$0xff]
    %v3938 = vld [vmem:[%s0 + $0x8] sm:$0xff]
    %v3939 = vld [vmem:[%s0 + $0x10] sm:$0xf]
    %v3940 = vld [vmem:[%s3 + $0x24] sm:$0x88]
    %v3941 = vld [vmem:[%s3 + $0x2c] sm:$0x88]
    %v3942 = vld [vmem:[%s3 + $0x34] sm:$0x88]
    %v3943 = vld [vmem:[%s3 + $0x3c] sm:$0x88]
    %v3944 = vld [vmem:[%s3 + $0x44] sm:$0x8]
    %v3950 = vunpack.c.l.b16 %v3940
    %v3951 = vunpack.c.h.b16 %v3940
    %v3952 = vunpack.c.l.b16 %v3941
    %v3953 = vunpack.c.h.b16 %v3941
    %v3954 = vunpack.c.l.b16 %v3942
    %v3955 = vunpack.c.h.b16 %v3942
    %v3956 = vunpack.c.l.b16 %v3943
    %v3957 = vunpack.c.h.b16 %v3943
    %v3958 = vunpack.c.l.b16 %v3944
    %v3959 = vpack.c.b16 %v3950, %v3950
    %v3960 = vpack.c.b16 %v3951, %v3951
    %v3961 = vpack.c.b16 %v3952, %v3952
    %v3962 = vpack.c.b16 %v3953, %v3953
    %v3963 = vpack.c.b16 %v3954, %v3954
    %v3964 = vpack.c.b16 %v3955, %v3955
    %v3965 = vpack.c.b16 %v3956, %v3956
    %v3966 = vpack.c.b16 %v3957, %v3957
    %v3967 = vpack.c.b16 %v3958, %v3958
    %v3969 = vshrl.u32 %v3959, 16
    %v3970 = vpack.i.b16 %v3969, %v3969
    %v3972 = vlaneseq
    %v3973 = vshrl.u32 %v3972, 7
    %v3974 = vsub.s32 3, %v3973
    %v3975 = vrot.slane %v3970, %v3974
    %v3977 = vshrl.u32 %v3960, 16
    %v3978 = vpack.i.b16 %v3977, %v3977
    %v3980 = vlaneseq
    %v3981 = vshrl.u32 %v3980, 7
    %v3982 = vsub.s32 3, %v3981
    %v3983 = vrot.slane %v3978, %v3982
    %v3985 = vshrl.u32 %v3961, 16
    %v3986 = vpack.i.b16 %v3985, %v3985
    %v3988 = vlaneseq
    %v3989 = vshrl.u32 %v3988, 7
    %v3990 = vsub.s32 3, %v3989
    %v3991 = vrot.slane %v3986, %v3990
    %v3993 = vshrl.u32 %v3962, 16
    %v3994 = vpack.i.b16 %v3993, %v3993
    %v3996 = vlaneseq
    %v3997 = vshrl.u32 %v3996, 7
    %v3998 = vsub.s32 3, %v3997
    %v3999 = vrot.slane %v3994, %v3998
    %v4001 = vshrl.u32 %v3963, 16
    %v4002 = vpack.i.b16 %v4001, %v4001
    %v4004 = vlaneseq
    %v4005 = vshrl.u32 %v4004, 7
    %v4006 = vsub.s32 3, %v4005
    %v4007 = vrot.slane %v4002, %v4006
    %v4009 = vshrl.u32 %v3964, 16
    %v4010 = vpack.i.b16 %v4009, %v4009
    %v4012 = vlaneseq
    %v4013 = vshrl.u32 %v4012, 7
    %v4014 = vsub.s32 3, %v4013
    %v4015 = vrot.slane %v4010, %v4014
    %v4017 = vshrl.u32 %v3965, 16
    %v4018 = vpack.i.b16 %v4017, %v4017
    %v4020 = vlaneseq
    %v4021 = vshrl.u32 %v4020, 7
    %v4022 = vsub.s32 3, %v4021
    %v4023 = vrot.slane %v4018, %v4022
    %v4025 = vshrl.u32 %v3966, 16
    %v4026 = vpack.i.b16 %v4025, %v4025
    %v4028 = vlaneseq
    %v4029 = vshrl.u32 %v4028, 7
    %v4030 = vsub.s32 3, %v4029
    %v4031 = vrot.slane %v4026, %v4030
    %v4033 = vshrl.u32 %v3967, 16
    %v4034 = vpack.i.b16 %v4033, %v4033
    %v4036 = vlaneseq
    %v4037 = vshrl.u32 %v4036, 7
    %v4038 = vsub.s32 3, %v4037
    %v4039 = vrot.slane %v4034, %v4038
    %v4049 = vcombine.low %v3975, %v3983
    %v4050 = vcombine.low %v3991, %v3999
    %v4052 = vunpack.c.l.s4 1983009808
    %v4053 = vunpack.c.0.s8 %v4052
    %v4054 = vlaneseq
    %v4055 = vshrl.u32 %v4054, 7
    %v4056 = vsub.s32 %v4053, %v4055
    %v4057 = vrot.slane %v4049, %v4056
    %v4059 = vunpack.c.l.s4 1983009808
    %v4060 = vunpack.c.0.s8 %v4059
    %v4061 = vlaneseq
    %v4062 = vshrl.u32 %v4061, 7
    %v4063 = vsub.s32 %v4060, %v4062
    %v4064 = vrot.slane %v4050, %v4063
    %v4065 = vcombine.low %v4057, %v4064
    %v4066 = vcombine.low %v4007, %v4015
    %v4067 = vcombine.low %v4023, %v4031
    %v4069 = vunpack.c.l.s4 1983009808
    %v4070 = vunpack.c.0.s8 %v4069
    %v4071 = vlaneseq
    %v4072 = vshrl.u32 %v4071, 7
    %v4073 = vsub.s32 %v4070, %v4072
    %v4074 = vrot.slane %v4066, %v4073
    %v4076 = vunpack.c.l.s4 1983009808
    %v4077 = vunpack.c.0.s8 %v4076
    %v4078 = vlaneseq
    %v4079 = vshrl.u32 %v4078, 7
    %v4080 = vsub.s32 %v4077, %v4079
    %v4081 = vrot.slane %v4067, %v4080
    %v4082 = vcombine.low %v4074, %v4081
    %v4084 = vunpack.c.l.s4 1983009808
    %v4085 = vunpack.c.0.s8 %v4084
    %v4086 = vlaneseq
    %v4087 = vshrl.u32 %v4086, 7
    %v4088 = vsub.s32 %v4085, %v4087
    %v4089 = vrot.slane %v4039, %v4088
    %4090 = vrot.lane.b32.xlu0 %v4065, 102
    %v4091 = vpop.permute.xlu0 %4090
    %4092 = vrot.lane.b32.xlu0 %v4082, 102
    %v4093 = vpop.permute.xlu0 %4092
    %4094 = vrot.lane.b32.xlu0 %v4089, 102
    %v4095 = vpop.permute.xlu0 %4094
    %v4096 = vrot.slane %v4091, 6
    %v4097 = vrot.slane %v4093, 6
    %v4098 = vrot.slane %v4095, 6
    %vm4099 = vcmask 834560
    %v4100 = vsel %vm4099, %v4096, %v4091
    %v4101 = vsel %vm421, %v4096, %v4097
    %v4102 = vsel %vm4099, %v4101, %v4093
    %v4103 = vsel %vm421, %v4097, %v4098
    %v4104 = vsel %vm4099, %v4103, %v4095
    %v4108 = vmul.bf16 %v3937, %v4100
    %v4109 = vmul.bf16 %v3938, %v4102
    %v4110 = vmul.bf16 %v3939, %v4104
    %v4114 = vcombine.low %v4108, %v4108
    %v4116 = vunpack.c.l.s4 1983009808
    %v4117 = vunpack.c.0.s8 %v4116
    %v4118 = vlaneseq
    %v4119 = vshrl.u32 %v4118, 7
    %v4120 = vsub.s32 %v4117, %v4119
    %v4121 = vrot.slane %v4114, %v4120
    %v4123 = vunpack.c.l.s4 1983009808
    %v4124 = vunpack.c.0.s8 %v4123
    %v4125 = vlaneseq
    %v4126 = vshrl.u32 %v4125, 7
    %v4127 = vsub.s32 %v4124, %v4126
    %v4128 = vrot.slane %v4108, %v4127
    %v4129 = vcombine.low %v4121, %v4121
    %v4130 = vcombine.low %v4128, %v4128
    %v4131 = vcombine.low %v4109, %v4109
    %v4133 = vunpack.c.l.s4 1983009808
    %v4134 = vunpack.c.0.s8 %v4133
    %v4135 = vlaneseq
    %v4136 = vshrl.u32 %v4135, 7
    %v4137 = vsub.s32 %v4134, %v4136
    %v4138 = vrot.slane %v4131, %v4137
    %v4140 = vunpack.c.l.s4 1983009808
    %v4141 = vunpack.c.0.s8 %v4140
    %v4142 = vlaneseq
    %v4143 = vshrl.u32 %v4142, 7
    %v4144 = vsub.s32 %v4141, %v4143
    %v4145 = vrot.slane %v4109, %v4144
    %v4146 = vcombine.low %v4138, %v4138
    %v4147 = vcombine.low %v4145, %v4145
    %v4148 = vcombine.low %v4110, %v4110
    %v4150 = vunpack.c.l.s4 1983009808
    %v4151 = vunpack.c.0.s8 %v4150
    %v4152 = vlaneseq
    %v4153 = vshrl.u32 %v4152, 7
    %v4154 = vsub.s32 %v4151, %v4153
    %v4155 = vrot.slane %v4148, %v4154
    %v4156 = vcombine.low %v4155, %v4155
    %4157 = vrot.lane.b32.xlu0 %v4129, 26
    %v4158 = vpop.permute.xlu0 %4157
    %4159 = vrot.lane.b32.xlu0 %v4121, 26
    %v4160 = vpop.permute.xlu0 %4159
    %4161 = vrot.lane.b32.xlu0 %v4130, 26
    %v4162 = vpop.permute.xlu0 %4161
    %4163 = vrot.lane.b32.xlu0 %v4128, 26
    %v4164 = vpop.permute.xlu0 %4163
    %4165 = vrot.lane.b32.xlu0 %v4146, 26
    %v4166 = vpop.permute.xlu0 %4165
    %4167 = vrot.lane.b32.xlu0 %v4138, 26
    %v4168 = vpop.permute.xlu0 %4167
    %4169 = vrot.lane.b32.xlu0 %v4147, 26
    %v4170 = vpop.permute.xlu0 %4169
    %4171 = vrot.lane.b32.xlu0 %v4145, 26
    %v4172 = vpop.permute.xlu0 %4171
    %4173 = vrot.lane.b32.xlu0 %v4156, 26
    %v4174 = vpop.permute.xlu0 %4173
    %4175 = vrot.lane.b32.xlu0 %v4155, 26
    %v4176 = vpop.permute.xlu0 %4175
    %vm4177 = vcmask 211968
    %v4178 = vsel %vm4177, %v4158, %v4160
    %v4179 = vsel %vm4177, %v4160, %v4162
    %v4180 = vsel %vm4177, %v4162, %v4164
    %v4181 = vsel %vm4177, %v4164, %v4166
    %v4182 = vsel %vm4177, %v4166, %v4168
    %v4183 = vsel %vm4177, %v4168, %v4170
    %v4184 = vsel %vm4177, %v4170, %v4172
    %v4185 = vsel %vm4177, %v4172, %v4174
    %v4186 = vsel %vm4177, %v4174, %v4176
    %4196 = vst [vmem:[#allocation2 + $0xd8] sm:$0xc0] %v4178
    %4197 = vst [vmem:[#allocation2 + $0xe0] sm:$0xc0] %v4179
    %4198 = vst [vmem:[#allocation2 + $0xe8] sm:$0xc0] %v4180
    %4199 = vst [vmem:[#allocation2 + $0xf0] sm:$0xc0] %v4181
    %4200 = vst [vmem:[#allocation2 + $0xf8] sm:$0xc0] %v4182
    %4201 = vst [vmem:[#allocation2 + $0x100] sm:$0xc0] %v4183
    %4202 = vst [vmem:[#allocation2 + $0x108] sm:$0xc0] %v4184
    %4203 = vst [vmem:[#allocation2 + $0x110] sm:$0xc0] %v4185
    %4204 = vst [vmem:[#allocation2 + $0x118] sm:$0xc0] %v4186
    %v4205 = vld [vmem:[%s1] sm:$0xf]
    %v4206 = vld [vmem:[#allocation2] sm:$0xff]
    %v4207 = vld [vmem:[#allocation2 + $0x8] sm:$0xff]
    %v4208 = vld [vmem:[#allocation2 + $0x10] sm:$0xff]
    %v4209 = vld [vmem:[#allocation2 + $0x18] sm:$0xff]
    %v4210 = vld [vmem:[#allocation2 + $0x20] sm:$0xff]
    %v4211 = vld [vmem:[#allocation2 + $0x28] sm:$0xff]
    %v4212 = vld [vmem:[#allocation2 + $0x30] sm:$0xff]
    %v4213 = vld [vmem:[#allocation2 + $0x38] sm:$0xff]
    %v4214 = vld [vmem:[#allocation2 + $0x40] sm:$0xff]
    %v4215 = vld [vmem:[#allocation2 + $0x48] sm:$0xff]
    %v4216 = vld [vmem:[#allocation2 + $0x50] sm:$0xff]
    %v4217 = vld [vmem:[#allocation2 + $0x58] sm:$0xff]
    %v4218 = vld [vmem:[#allocation2 + $0x60] sm:$0xff]
    %v4219 = vld [vmem:[#allocation2 + $0x68] sm:$0xff]
    %v4220 = vld [vmem:[#allocation2 + $0x70] sm:$0xff]
    %v4221 = vld [vmem:[#allocation2 + $0x78] sm:$0xff]
    %v4222 = vld [vmem:[#allocation2 + $0x80] sm:$0xff]
    %v4223 = vld [vmem:[#allocation2 + $0x88] sm:$0xff]
    %v4224 = vld [vmem:[#allocation2 + $0x90] sm:$0xff]
    %v4225 = vld [vmem:[#allocation2 + $0x98] sm:$0xff]
    %v4226 = vld [vmem:[#allocation2 + $0xa0] sm:$0xff]
    %v4227 = vld [vmem:[#allocation2 + $0xa8] sm:$0xff]
    %v4228 = vld [vmem:[#allocation2 + $0xb0] sm:$0xff]
    %v4229 = vld [vmem:[#allocation2 + $0xb8] sm:$0xff]
    %v4230 = vld [vmem:[#allocation2 + $0xc0] sm:$0xff]
    %v4231 = vld [vmem:[#allocation2 + $0xc8] sm:$0xff]
    %v4232 = vld [vmem:[#allocation2 + $0xd0] sm:$0xff]
    %v4233 = vld [vmem:[#allocation2 + $0xd8] sm:$0xff]
    %v4234 = vld [vmem:[#allocation2 + $0xe0] sm:$0xff]
    %v4235 = vld [vmem:[#allocation2 + $0xe8] sm:$0xff]
    %v4236 = vld [vmem:[#allocation2 + $0xf0] sm:$0xff]
    %v4237 = vld [vmem:[#allocation2 + $0xf8] sm:$0xff]
    %v4238 = vld [vmem:[#allocation2 + $0x100] sm:$0xff]
    %v4239 = vld [vmem:[#allocation2 + $0x108] sm:$0xff]
    %v4240 = vld [vmem:[#allocation2 + $0x110] sm:$0xff]
    %v4241 = vld [vmem:[#allocation2 + $0x118] sm:$0xff]
    %v4242 = vld [vmem:[%s2] sm:$0xff]
    %4244 = vset.pattern.permute.xlu0 0
    %4245 = vperm.xlu0 %4244, %v4242
    %v4246 = vpop.permute.xlu0 %4245
    %vm4248 = vcmask 523264
    %v4250 = vsel %vm4248, %v4205, 0
    %4252 = vmatprep.subr.bf16.mxu0 %v4207
    %4253 = vmatpush1.bf16.msra.mxu0 %v4206
    %4254 = vmatprep.subr.bf16.mxu0 %v4216
    %4255 = vmatpush1.bf16.msra.mxu0 %v4215
    %4256 = vmatprep.subr.bf16.mxu0 %v4225
    %4257 = vmatpush1.bf16.msra.mxu0 %v4224
    %4258 = vmatprep.subr.bf16.mxu0 %v4234
    %4259 = vmatpush1.bf16.msra.mxu0 %v4233
    %4260 = vmatprep.subr.bf16.mxu0 0
    %4261 = vmatpush1.bf16.msra.mxu0 0
    %4262 = vmatprep.subr.bf16.mxu0 0
    %4263 = vmatpush1.bf16.msra.mxu0 0
    %4264 = vmatprep.subr.bf16.mxu0 0
    %4265 = vmatpush1.bf16.msra.mxu0 0
    %4266 = vmatprep.subr.bf16.mxu0 0
    %4267 = vmatpush1.bf16.msra.mxu0 0
    %4268 = vmatprep.subr.bf16.mxu0 0
    %4269 = vmatpush1.bf16.msra.mxu0 0
    %4270 = vmatprep.subr.bf16.mxu0 0
    %4271 = vmatpush1.bf16.msra.mxu0 0
    %4272 = vmatprep.subr.bf16.mxu0 0
    %4273 = vmatpush1.bf16.msra.mxu0 0
    %4274 = vmatprep.subr.bf16.mxu0 0
    %4275 = vmatpush1.bf16.msra.mxu0 0
    %4276 = vmatprep.subr.bf16.mxu0 0
    %4277 = vmatpush1.bf16.msra.mxu0 0
    %4278 = vmatprep.subr.bf16.mxu0 0
    %4279 = vmatpush1.bf16.msra.mxu0 0
    %4280 = vmatprep.subr.bf16.mxu0 0
    %4281 = vmatpush1.bf16.msra.mxu0 0
    %4282 = vmatprep.subr.bf16.mxu0 0
    %4283 = vmatpush1.bf16.msra.mxu0 0
    %4284 = vmatprep.mubr.bf16.mxu0 0
    %4285 = vmatmul.mubr.bf16.gmra.mrb[0].mxu0 %v4250
    %v4286 = vpop.f32.mrb[0].mxu0
    %v4287 = vadd.f32 %v4246, %v4286
    %v4288 = vpop.f32.mrb[0].mxu0
    %v4289 = vadd.f32 %v4246, %v4288
    %v4290 = vpop.f32.mrb[0].mxu0
    %v4291 = vpop.f32.mrb[0].mxu0
    %4292 = vdwg.mxu0
    %4293 = vmatprep.subr.bf16.mxu0 %v4209
    %4294 = vmatpush1.bf16.msra.mxu0 %v4208
    %4295 = vmatprep.subr.bf16.mxu0 %v4218
    %4296 = vmatpush1.bf16.msra.mxu0 %v4217
    %4297 = vmatprep.subr.bf16.mxu0 %v4227
    %4298 = vmatpush1.bf16.msra.mxu0 %v4226
    %4299 = vmatprep.subr.bf16.mxu0 %v4236
    %4300 = vmatpush1.bf16.msra.mxu0 %v4235
    %4301 = vmatprep.subr.bf16.mxu0 0
    %4302 = vmatpush1.bf16.msra.mxu0 0
    %4303 = vmatprep.subr.bf16.mxu0 0
    %4304 = vmatpush1.bf16.msra.mxu0 0
    %4305 = vmatprep.subr.bf16.mxu0 0
    %4306 = vmatpush1.bf16.msra.mxu0 0
    %4307 = vmatprep.subr.bf16.mxu0 0
    %4308 = vmatpush1.bf16.msra.mxu0 0
    %4309 = vmatprep.subr.bf16.mxu0 0
    %4310 = vmatpush1.bf16.msra.mxu0 0
    %4311 = vmatprep.subr.bf16.mxu0 0
    %4312 = vmatpush1.bf16.msra.mxu0 0
    %4313 = vmatprep.subr.bf16.mxu0 0
    %4314 = vmatpush1.bf16.msra.mxu0 0
    %4315 = vmatprep.subr.bf16.mxu0 0
    %4316 = vmatpush1.bf16.msra.mxu0 0
    %4317 = vmatprep.subr.bf16.mxu0 0
    %4318 = vmatpush1.bf16.msra.mxu0 0
    %4319 = vmatprep.subr.bf16.mxu0 0
    %4320 = vmatpush1.bf16.msra.mxu0 0
    %4321 = vmatprep.subr.bf16.mxu0 0
    %4322 = vmatpush1.bf16.msra.mxu0 0
    %4323 = vmatprep.subr.bf16.mxu0 0
    %4324 = vmatpush1.bf16.msra.mxu0 0
    %4325 = vmatprep.mubr.bf16.mxu0 0
    %4326 = vmatmul.mubr.bf16.gmra.mrb[0].mxu0 %v4250
    %v4327 = vpop.f32.mrb[0].mxu0
    %v4328 = vadd.f32 %v4246, %v4327
    %v4329 = vpop.f32.mrb[0].mxu0
    %v4330 = vadd.f32 %v4246, %v4329
    %v4331 = vpop.f32.mrb[0].mxu0
    %v4332 = vpop.f32.mrb[0].mxu0
    %4333 = vdwg.mxu0
    %4334 = vmatprep.subr.bf16.mxu0 %v4211
    %4335 = vmatpush1.bf16.msra.mxu0 %v4210
    %4336 = vmatprep.subr.bf16.mxu0 %v4220
    %4337 = vmatpush1.bf16.msra.mxu0 %v4219
    %4338 = vmatprep.subr.bf16.mxu0 %v4229
    %4339 = vmatpush1.bf16.msra.mxu0 %v4228
    %4340 = vmatprep.subr.bf16.mxu0 %v4238
    %4341 = vmatpush1.bf16.msra.mxu0 %v4237
    %4342 = vmatprep.subr.bf16.mxu0 0
    %4343 = vmatpush1.bf16.msra.mxu0 0
    %4344 = vmatprep.subr.bf16.mxu0 0
    %4345 = vmatpush1.bf16.msra.mxu0 0
    %4346 = vmatprep.subr.bf16.mxu0 0
    %4347 = vmatpush1.bf16.msra.mxu0 0
    %4348 = vmatprep.subr.bf16.mxu0 0
    %4349 = vmatpush1.bf16.msra.mxu0 0
    %4350 = vmatprep.subr.bf16.mxu0 0
    %4351 = vmatpush1.bf16.msra.mxu0 0
    %4352 = vmatprep.subr.bf16.mxu0 0
    %4353 = vmatpush1.bf16.msra.mxu0 0
    %4354 = vmatprep.subr.bf16.mxu0 0
    %4355 = vmatpush1.bf16.msra.mxu0 0
    %4356 = vmatprep.subr.bf16.mxu0 0
    %4357 = vmatpush1.bf16.msra.mxu0 0
    %4358 = vmatprep.subr.bf16.mxu0 0
    %4359 = vmatpush1.bf16.msra.mxu0 0
    %4360 = vmatprep.subr.bf16.mxu0 0
    %4361 = vmatpush1.bf16.msra.mxu0 0
    %4362 = vmatprep.subr.bf16.mxu0 0
    %4363 = vmatpush1.bf16.msra.mxu0 0
    %4364 = vmatprep.subr.bf16.mxu0 0
    %4365 = vmatpush1.bf16.msra.mxu0 0
    %4366 = vmatprep.mubr.bf16.mxu0 0
    %4367 = vmatmul.mubr.bf16.gmra.mrb[0].mxu0 %v4250
    %v4368 = vpop.f32.mrb[0].mxu0
    %v4369 = vadd.f32 %v4246, %v4368
    %v4370 = vpop.f32.mrb[0].mxu0
    %v4371 = vadd.f32 %v4246, %v4370
    %v4372 = vpop.f32.mrb[0].mxu0
    %v4373 = vpop.f32.mrb[0].mxu0
    %4374 = vdwg.mxu0
    %4375 = vmatprep.subr.bf16.mxu0 %v4213
    %4376 = vmatpush1.bf16.msra.mxu0 %v4212
    %4377 = vmatprep.subr.bf16.mxu0 %v4222
    %4378 = vmatpush1.bf16.msra.mxu0 %v4221
    %4379 = vmatprep.subr.bf16.mxu0 %v4231
    %4380 = vmatpush1.bf16.msra.mxu0 %v4230
    %4381 = vmatprep.subr.bf16.mxu0 %v4240
    %4382 = vmatpush1.bf16.msra.mxu0 %v4239
    %4383 = vmatprep.subr.bf16.mxu0 0
    %4384 = vmatpush1.bf16.msra.mxu0 0
    %4385 = vmatprep.subr.bf16.mxu0 0
    %4386 = vmatpush1.bf16.msra.mxu0 0
    %4387 = vmatprep.subr.bf16.mxu0 0
    %4388 = vmatpush1.bf16.msra.mxu0 0
    %4389 = vmatprep.subr.bf16.mxu0 0
    %4390 = vmatpush1.bf16.msra.mxu0 0
    %4391 = vmatprep.subr.bf16.mxu0 0
    %4392 = vmatpush1.bf16.msra.mxu0 0
    %4393 = vmatprep.subr.bf16.mxu0 0
    %4394 = vmatpush1.bf16.msra.mxu0 0
    %4395 = vmatprep.subr.bf16.mxu0 0
    %4396 = vmatpush1.bf16.msra.mxu0 0
    %4397 = vmatprep.subr.bf16.mxu0 0
    %4398 = vmatpush1.bf16.msra.mxu0 0
    %4399 = vmatprep.subr.bf16.mxu0 0
    %4400 = vmatpush1.bf16.msra.mxu0 0
    %4401 = vmatprep.subr.bf16.mxu0 0
    %4402 = vmatpush1.bf16.msra.mxu0 0
    %4403 = vmatprep.subr.bf16.mxu0 0
    %4404 = vmatpush1.bf16.msra.mxu0 0
    %4405 = vmatprep.subr.bf16.mxu0 0
    %4406 = vmatpush1.bf16.msra.mxu0 0
    %4407 = vmatprep.mubr.bf16.mxu0 0
    %4408 = vmatmul.mubr.bf16.gmra.mrb[0].mxu0 %v4250
    %v4409 = vpop.f32.mrb[0].mxu0
    %v4410 = vadd.f32 %v4246, %v4409
    %v4411 = vpop.f32.mrb[0].mxu0
    %v4412 = vadd.f32 %v4246, %v4411
    %v4413 = vpop.f32.mrb[0].mxu0
    %v4414 = vpop.f32.mrb[0].mxu0
    %4415 = vdwg.mxu0
    %4416 = vmatprep.subr.bf16.mxu0 0
    %4417 = vmatpush1.bf16.msra.mxu0 %v4214
    %4418 = vmatprep.subr.bf16.mxu0 0
    %4419 = vmatpush1.bf16.msra.mxu0 %v4223
    %4420 = vmatprep.subr.bf16.mxu0 0
    %4421 = vmatpush1.bf16.msra.mxu0 %v4232
    %4422 = vmatprep.subr.bf16.mxu0 0
    %4423 = vmatpush1.bf16.msra.mxu0 %v4241
    %4424 = vmatprep.subr.bf16.mxu0 0
    %4425 = vmatpush1.bf16.msra.mxu0 0
    %4426 = vmatprep.subr.bf16.mxu0 0
    %4427 = vmatpush1.bf16.msra.mxu0 0
    %4428 = vmatprep.subr.bf16.mxu0 0
    %4429 = vmatpush1.bf16.msra.mxu0 0
    %4430 = vmatprep.subr.bf16.mxu0 0
    %4431 = vmatpush1.bf16.msra.mxu0 0
    %4432 = vmatprep.subr.bf16.mxu0 0
    %4433 = vmatpush1.bf16.msra.mxu0 0
    %4434 = vmatprep.subr.bf16.mxu0 0
    %4435 = vmatpush1.bf16.msra.mxu0 0
    %4436 = vmatprep.subr.bf16.mxu0 0
    %4437 = vmatpush1.bf16.msra.mxu0 0
    %4438 = vmatprep.subr.bf16.mxu0 0
    %4439 = vmatpush1.bf16.msra.mxu0 0
    %4440 = vmatprep.subr.bf16.mxu0 0
    %4441 = vmatpush1.bf16.msra.mxu0 0
    %4442 = vmatprep.subr.bf16.mxu0 0
    %4443 = vmatpush1.bf16.msra.mxu0 0
    %4444 = vmatprep.subr.bf16.mxu0 0
    %4445 = vmatpush1.bf16.msra.mxu0 0
    %4446 = vmatprep.subr.bf16.mxu0 0
    %4447 = vmatpush1.bf16.msra.mxu0 0
    %4448 = vmatprep.mubr.bf16.mxu0 0
    %4449 = vmatmul.mubr.bf16.gmra.mrb[0].mxu0 %v4250
    %v4450 = vpop.f32.mrb[0].mxu0
    %v4451 = vadd.f32 %v4246, %v4450
    %v4452 = vpop.f32.mrb[0].mxu0
    %v4453 = vpop.f32.mrb[0].mxu0
    %v4454 = vpop.f32.mrb[0].mxu0
    %4455 = vdwg.mxu0
    %vm4456 = vcmp.ge.f32.partialorder %v4287, 0.0
    %vm4457 = vcmp.ge.f32.partialorder %v4289, 0.0
    %vm4458 = vcmp.ge.f32.partialorder %v4328, 0.0
    %vm4459 = vcmp.ge.f32.partialorder %v4330, 0.0
    %vm4460 = vcmp.ge.f32.partialorder %v4369, 0.0
    %vm4461 = vcmp.ge.f32.partialorder %v4371, 0.0
    %vm4462 = vcmp.ge.f32.partialorder %v4410, 0.0
    %vm4463 = vcmp.ge.f32.partialorder %v4412, 0.0
    %vm4464 = vcmp.ge.f32.partialorder %v4451, 0.0
    %v4465 = vmul.f32 %v4287, 0.01
    %v4466 = vmul.f32 %v4289, 0.01
    %v4467 = vmul.f32 %v4328, 0.01
    %v4468 = vmul.f32 %v4330, 0.01
    %v4469 = vmul.f32 %v4369, 0.01
    %v4470 = vmul.f32 %v4371, 0.01
    %v4471 = vmul.f32 %v4410, 0.01
    %v4472 = vmul.f32 %v4412, 0.01
    %v4473 = vmul.f32 %v4451, 0.01
    %v4474 = vsel %vm4456, %v4287, %v4465
    %v4475 = vsel %vm4457, %v4289, %v4466
    %v4476 = vsel %vm4458, %v4328, %v4467
    %v4477 = vsel %vm4459, %v4330, %v4468
    %v4478 = vsel %vm4460, %v4369, %v4469
    %v4479 = vsel %vm4461, %v4371, %v4470
    %v4480 = vsel %vm4462, %v4410, %v4471
    %v4481 = vsel %vm4463, %v4412, %v4472
    %v4482 = vsel %vm4464, %v4451, %v4473
    %v4483 = vpack.c.bf16 %v4474, %v4474
    %v4484 = vpack.c.bf16 %v4475, %v4475
    %v4485 = vpack.c.bf16 %v4476, %v4476
    %v4486 = vpack.c.bf16 %v4477, %v4477
    %v4487 = vpack.c.bf16 %v4478, %v4478
    %v4488 = vpack.c.bf16 %v4479, %v4479
    %v4489 = vpack.c.bf16 %v4480, %v4480
    %v4490 = vpack.c.bf16 %v4481, %v4481
    %v4491 = vpack.c.bf16 %v4482, %v4482
    %v4501 = vunpack.c.l.b16 %v4483
    %v4502 = vunpack.c.l.b16 %v4484
    %v4503 = vunpack.c.l.b16 %v4485
    %v4504 = vunpack.c.l.b16 %v4486
    %v4505 = vunpack.c.l.b16 %v4487
    %v4506 = vunpack.c.l.b16 %v4488
    %v4507 = vunpack.c.l.b16 %v4489
    %v4508 = vunpack.c.l.b16 %v4490
    %v4509 = vunpack.c.l.b16 %v4491
    %v4510 = vpack.c.b16 %v4502, %v4501
    %v4511 = vpack.c.b16 %v4504, %v4503
    %v4512 = vpack.c.b16 %v4506, %v4505
    %v4513 = vpack.c.b16 %v4508, %v4507
    %v4514 = vpack.c.b16 %v4509, %v4509
    %4520 = vst [vmem:[#allocation5] sm:$0xff] %v4510
    %4521 = vst [vmem:[#allocation5 + $0x8] sm:$0xff] %v4511
    %4522 = vst [vmem:[#allocation5 + $0x10] sm:$0xff] %v4512
    %4523 = vst [vmem:[#allocation5 + $0x18] sm:$0xff] %v4513
    %4524 = vst [vmem:[#allocation5 + $0x20] sm:$0xf] %v4514
    %v4525 = vld [vmem:[#allocation5] sm:$0xff]
    %v4526 = vld [vmem:[#allocation5 + $0x8] sm:$0xff]
    %v4527 = vld [vmem:[#allocation5 + $0x10] sm:$0xff]
    %v4528 = vld [vmem:[#allocation5 + $0x18] sm:$0xf]
    %v4529 = vld [vmem:[%s6] sm:$0x11]
    %v4530 = vld [vmem:[%s6 + $0x8] sm:$0x11]
    %v4531 = vld [vmem:[%s6 + $0x10] sm:$0x11]
    %v4532 = vld [vmem:[%s6 + $0x18] sm:$0x1]
    %v4537 = vunpack.c.l.b16 %v4529
    %v4538 = vunpack.c.h.b16 %v4529
    %v4539 = vunpack.c.l.b16 %v4530
    %v4540 = vunpack.c.h.b16 %v4530
    %v4541 = vunpack.c.l.b16 %v4531
    %v4542 = vunpack.c.h.b16 %v4531
    %v4543 = vunpack.c.l.b16 %v4532
    %v4544 = vpack.c.b16 %v4537, %v4537
    %v4545 = vpack.c.b16 %v4538, %v4538
    %v4546 = vpack.c.b16 %v4539, %v4539
    %v4547 = vpack.c.b16 %v4540, %v4540
    %v4548 = vpack.c.b16 %v4541, %v4541
    %v4549 = vpack.c.b16 %v4542, %v4542
    %v4550 = vpack.c.b16 %v4543, %v4543
    %v4552 = vpack.i.b16 %v4544, %v4544
    %v4554 = vlaneseq
    %v4555 = vshrl.u32 %v4554, 7
    %v4556 = vsub.s32 0, %v4555
    %v4557 = vrot.slane %v4552, %v4556
    %v4559 = vpack.i.b16 %v4545, %v4545
    %v4561 = vlaneseq
    %v4562 = vshrl.u32 %v4561, 7
    %v4563 = vsub.s32 0, %v4562
    %v4564 = vrot.slane %v4559, %v4563
    %v4566 = vpack.i.b16 %v4546, %v4546
    %v4568 = vlaneseq
    %v4569 = vshrl.u32 %v4568, 7
    %v4570 = vsub.s32 0, %v4569
    %v4571 = vrot.slane %v4566, %v4570
    %v4573 = vpack.i.b16 %v4547, %v4547
    %v4575 = vlaneseq
    %v4576 = vshrl.u32 %v4575, 7
    %v4577 = vsub.s32 0, %v4576
    %v4578 = vrot.slane %v4573, %v4577
    %v4580 = vpack.i.b16 %v4548, %v4548
    %v4582 = vlaneseq
    %v4583 = vshrl.u32 %v4582, 7
    %v4584 = vsub.s32 0, %v4583
    %v4585 = vrot.slane %v4580, %v4584
    %v4587 = vpack.i.b16 %v4549, %v4549
    %v4589 = vlaneseq
    %v4590 = vshrl.u32 %v4589, 7
    %v4591 = vsub.s32 0, %v4590
    %v4592 = vrot.slane %v4587, %v4591
    %v4594 = vpack.i.b16 %v4550, %v4550
    %v4596 = vlaneseq
    %v4597 = vshrl.u32 %v4596, 7
    %v4598 = vsub.s32 0, %v4597
    %v4599 = vrot.slane %v4594, %v4598
    %v4607 = vunpack.c.l.b16 %v4557
    %v4608 = vunpack.c.l.b16 %v4564
    %v4609 = vunpack.c.l.b16 %v4571
    %v4610 = vunpack.c.l.b16 %v4578
    %v4611 = vunpack.c.l.b16 %v4585
    %v4612 = vunpack.c.l.b16 %v4592
    %v4613 = vunpack.c.l.b16 %v4599
    %v4614 = vpack.c.b16 %v4608, %v4607
    %v4615 = vpack.c.b16 %v4610, %v4609
    %v4616 = vpack.c.b16 %v4612, %v4611
    %v4617 = vpack.c.b16 %v4613, %v4613
    %v4622 = vmul.bf16 %v4525, %v4614
    %v4623 = vmul.bf16 %v4526, %v4615
    %v4624 = vmul.bf16 %v4527, %v4616
    %v4625 = vmul.bf16 %v4528, %v4617
    %v4630 = vunpack.c.l.b16 %v4622
    %v4631 = vunpack.c.h.b16 %v4622
    %v4632 = vunpack.c.l.b16 %v4623
    %v4633 = vunpack.c.h.b16 %v4623
    %v4634 = vunpack.c.l.b16 %v4624
    %v4635 = vunpack.c.h.b16 %v4624
    %v4636 = vunpack.c.l.b16 %v4625
    %v4637 = vpack.c.b16 %v4630, %v4630
    %v4638 = vpack.c.b16 %v4631, %v4631
    %v4639 = vpack.c.b16 %v4632, %v4632
    %v4640 = vpack.c.b16 %v4633, %v4633
    %v4641 = vpack.c.b16 %v4634, %v4634
    %v4642 = vpack.c.b16 %v4635, %v4635
    %v4643 = vpack.c.b16 %v4636, %v4636
    %4651 = vst [vmem:[#allocation3] sm:$0xf] %v4637
    %4652 = vst [vmem:[#allocation3 + $0x8] sm:$0xf] %v4638
    %4653 = vst [vmem:[#allocation3 + $0x10] sm:$0xf] %v4639
    %4654 = vst [vmem:[#allocation3 + $0x18] sm:$0xf] %v4640
    %4655 = vst [vmem:[#allocation3 + $0x20] sm:$0xf] %v4641
    %4656 = vst [vmem:[#allocation3 + $0x28] sm:$0xf] %v4642
    %4657 = vst [vmem:[#allocation3 + $0x30] sm:$0xf] %v4643
    %v4658 = vld [vmem:[#allocation5] sm:$0xff]
    %v4659 = vld [vmem:[#allocation5 + $0x8] sm:$0xff]
    %v4660 = vld [vmem:[#allocation5 + $0x10] sm:$0xff]
    %v4661 = vld [vmem:[#allocation5 + $0x18] sm:$0xff]
    %v4662 = vld [vmem:[%s6] sm:$0x11]
    %v4663 = vld [vmem:[%s6 + $0x8] sm:$0x11]
    %v4664 = vld [vmem:[%s6 + $0x10] sm:$0x11]
    %v4665 = vld [vmem:[%s6 + $0x18] sm:$0x1]
    %v4670 = vunpack.c.l.b16 %v4662
    %v4671 = vunpack.c.h.b16 %v4662
    %v4672 = vunpack.c.l.b16 %v4663
    %v4673 = vunpack.c.h.b16 %v4663
    %v4674 = vunpack.c.l.b16 %v4664
    %v4675 = vunpack.c.h.b16 %v4664
    %v4676 = vunpack.c.l.b16 %v4665
    %v4677 = vpack.c.b16 %v4670, %v4670
    %v4678 = vpack.c.b16 %v4671, %v4671
    %v4679 = vpack.c.b16 %v4672, %v4672
    %v4680 = vpack.c.b16 %v4673, %v4673
    %v4681 = vpack.c.b16 %v4674, %v4674
    %v4682 = vpack.c.b16 %v4675, %v4675
    %v4683 = vpack.c.b16 %v4676, %v4676
    %v4685 = vshrl.u32 %v4677, 16
    %v4686 = vpack.i.b16 %v4685, %v4685
    %v4688 = vlaneseq
    %v4689 = vshrl.u32 %v4688, 7
    %v4690 = vsub.s32 0, %v4689
    %v4691 = vrot.slane %v4686, %v4690
    %v4693 = vshrl.u32 %v4678, 16
    %v4694 = vpack.i.b16 %v4693, %v4693
    %v4696 = vlaneseq
    %v4697 = vshrl.u32 %v4696, 7
    %v4698 = vsub.s32 0, %v4697
    %v4699 = vrot.slane %v4694, %v4698
    %v4701 = vshrl.u32 %v4679, 16
    %v4702 = vpack.i.b16 %v4701, %v4701
    %v4704 = vlaneseq
    %v4705 = vshrl.u32 %v4704, 7
    %v4706 = vsub.s32 0, %v4705
    %v4707 = vrot.slane %v4702, %v4706
    %v4709 = vshrl.u32 %v4680, 16
    %v4710 = vpack.i.b16 %v4709, %v4709
    %v4712 = vlaneseq
    %v4713 = vshrl.u32 %v4712, 7
    %v4714 = vsub.s32 0, %v4713
    %v4715 = vrot.slane %v4710, %v4714
    %v4717 = vshrl.u32 %v4681, 16
    %v4718 = vpack.i.b16 %v4717, %v4717
    %v4720 = vlaneseq
    %v4721 = vshrl.u32 %v4720, 7
    %v4722 = vsub.s32 0, %v4721
    %v4723 = vrot.slane %v4718, %v4722
    %v4725 = vshrl.u32 %v4682, 16
    %v4726 = vpack.i.b16 %v4725, %v4725
    %v4728 = vlaneseq
    %v4729 = vshrl.u32 %v4728, 7
    %v4730 = vsub.s32 0, %v4729
    %v4731 = vrot.slane %v4726, %v4730
    %v4733 = vshrl.u32 %v4683, 16
    %v4734 = vpack.i.b16 %v4733, %v4733
    %v4736 = vlaneseq
    %v4737 = vshrl.u32 %v4736, 7
    %v4738 = vsub.s32 0, %v4737
    %v4739 = vrot.slane %v4734, %v4738
    %v4747 = vunpack.c.l.b16 %v4691
    %v4748 = vunpack.c.l.b16 %v4699
    %v4749 = vunpack.c.l.b16 %v4707
    %v4750 = vunpack.c.l.b16 %v4715
    %v4751 = vunpack.c.l.b16 %v4723
    %v4752 = vunpack.c.l.b16 %v4731
    %v4753 = vunpack.c.l.b16 %v4739
    %v4754 = vpack.c.b16 %v4748, %v4747
    %v4755 = vpack.c.b16 %v4750, %v4749
    %v4756 = vpack.c.b16 %v4752, %v4751
    %v4757 = vpack.c.b16 %v4753, %v4753
    %4758 = vrot.lane.b32.xlu0 %v4754, 4
    %v4759 = vpop.permute.xlu0 %4758
    %4760 = vrot.lane.b32.xlu0 %v4755, 4
    %v4761 = vpop.permute.xlu0 %4760
    %4762 = vrot.lane.b32.xlu0 %v4756, 4
    %v4763 = vpop.permute.xlu0 %4762
    %4764 = vrot.lane.b32.xlu0 %v4757, 4
    %v4765 = vpop.permute.xlu0 %4764
    %v4766 = vrot.slane %v4759, 4
    %v4767 = vrot.slane %v4761, 4
    %v4768 = vrot.slane %v4763, 4
    %v4769 = vrot.slane %v4765, 4
    %v4770 = vsel %vm679, %v4766, %v4759
    %vm4771 = vcmask 1043456
    %v4772 = vsel %vm4771, %v4766, %v4767
    %v4773 = vsel %vm679, %v4772, %v4761
    %v4774 = vsel %vm4771, %v4767, %v4768
    %v4775 = vsel %vm679, %v4774, %v4763
    %v4776 = vsel %vm4771, %v4768, %v4769
    %v4777 = vsel %vm679, %v4776, %v4765
    %v4782 = vmul.bf16 %v4658, %v4770
    %v4783 = vmul.bf16 %v4659, %v4773
    %v4784 = vmul.bf16 %v4660, %v4775
    %v4785 = vmul.bf16 %v4661, %v4777
    %v4790 = vunpack.c.l.b16 %v4782
    %v4791 = vunpack.c.h.b16 %v4782
    %v4792 = vunpack.c.l.b16 %v4783
    %v4793 = vunpack.c.h.b16 %v4783
    %v4794 = vunpack.c.l.b16 %v4784
    %v4795 = vunpack.c.h.b16 %v4784
    %v4796 = vunpack.c.l.b16 %v4785
    %v4797 = vunpack.c.h.b16 %v4785
    %v4798 = vpack.c.b16 %v4790, %v4790
    %v4799 = vpack.c.b16 %v4791, %v4791
    %v4800 = vpack.c.b16 %v4792, %v4792
    %v4801 = vpack.c.b16 %v4793, %v4793
    %v4802 = vpack.c.b16 %v4794, %v4794
    %v4803 = vpack.c.b16 %v4795, %v4795
    %v4804 = vpack.c.b16 %v4796, %v4796
    %v4805 = vpack.c.b16 %v4797, %v4797
    %4806 = vrot.lane.b32.xlu0 %v4798, 124
    %v4807 = vpop.permute.xlu0 %4806
    %4808 = vrot.lane.b32.xlu0 %v4799, 124
    %v4809 = vpop.permute.xlu0 %4808
    %4810 = vrot.lane.b32.xlu0 %v4800, 124
    %v4811 = vpop.permute.xlu0 %4810
    %4812 = vrot.lane.b32.xlu0 %v4801, 124
    %v4813 = vpop.permute.xlu0 %4812
    %4814 = vrot.lane.b32.xlu0 %v4802, 124
    %v4815 = vpop.permute.xlu0 %4814
    %4816 = vrot.lane.b32.xlu0 %v4803, 124
    %v4817 = vpop.permute.xlu0 %4816
    %4818 = vrot.lane.b32.xlu0 %v4804, 124
    %v4819 = vpop.permute.xlu0 %4818
    %4820 = vrot.lane.b32.xlu0 %v4805, 124
    %v4821 = vpop.permute.xlu0 %4820
    %v4822 = vsel %vm756, %v4807, %v4809
    %v4823 = vsel %vm756, %v4809, %v4811
    %v4824 = vsel %vm756, %v4811, %v4813
    %v4825 = vsel %vm756, %v4813, %v4815
    %v4826 = vsel %vm756, %v4815, %v4817
    %v4827 = vsel %vm756, %v4817, %v4819
    %v4828 = vsel %vm756, %v4819, %v4821
    %4836 = vst [vmem:[#allocation3] sm:$0xf0] %v4822
    %4837 = vst [vmem:[#allocation3 + $0x8] sm:$0xf0] %v4823
    %4838 = vst [vmem:[#allocation3 + $0x10] sm:$0xf0] %v4824
    %4839 = vst [vmem:[#allocation3 + $0x18] sm:$0xf0] %v4825
    %4840 = vst [vmem:[#allocation3 + $0x20] sm:$0xf0] %v4826
    %4841 = vst [vmem:[#allocation3 + $0x28] sm:$0xf0] %v4827
    %4842 = vst [vmem:[#allocation3 + $0x30] sm:$0xf0] %v4828
    %v4843 = vld [vmem:[#allocation5] sm:$0xff]
    %v4844 = vld [vmem:[#allocation5 + $0x8] sm:$0xff]
    %v4845 = vld [vmem:[#allocation5 + $0x10] sm:$0xff]
    %v4846 = vld [vmem:[#allocation5 + $0x18] sm:$0xff]
    %v4847 = vld [vmem:[%s6] sm:$0x22]
    %v4848 = vld [vmem:[%s6 + $0x8] sm:$0x22]
    %v4849 = vld [vmem:[%s6 + $0x10] sm:$0x22]
    %v4850 = vld [vmem:[%s6 + $0x18] sm:$0x2]
    %v4855 = vunpack.c.l.b16 %v4847
    %v4856 = vunpack.c.h.b16 %v4847
    %v4857 = vunpack.c.l.b16 %v4848
    %v4858 = vunpack.c.h.b16 %v4848
    %v4859 = vunpack.c.l.b16 %v4849
    %v4860 = vunpack.c.h.b16 %v4849
    %v4861 = vunpack.c.l.b16 %v4850
    %v4862 = vpack.c.b16 %v4855, %v4855
    %v4863 = vpack.c.b16 %v4856, %v4856
    %v4864 = vpack.c.b16 %v4857, %v4857
    %v4865 = vpack.c.b16 %v4858, %v4858
    %v4866 = vpack.c.b16 %v4859, %v4859
    %v4867 = vpack.c.b16 %v4860, %v4860
    %v4868 = vpack.c.b16 %v4861, %v4861
    %v4870 = vpack.i.b16 %v4862, %v4862
    %v4872 = vlaneseq
    %v4873 = vshrl.u32 %v4872, 7
    %v4874 = vsub.s32 1, %v4873
    %v4875 = vrot.slane %v4870, %v4874
    %v4877 = vpack.i.b16 %v4863, %v4863
    %v4879 = vlaneseq
    %v4880 = vshrl.u32 %v4879, 7
    %v4881 = vsub.s32 1, %v4880
    %v4882 = vrot.slane %v4877, %v4881
    %v4884 = vpack.i.b16 %v4864, %v4864
    %v4886 = vlaneseq
    %v4887 = vshrl.u32 %v4886, 7
    %v4888 = vsub.s32 1, %v4887
    %v4889 = vrot.slane %v4884, %v4888
    %v4891 = vpack.i.b16 %v4865, %v4865
    %v4893 = vlaneseq
    %v4894 = vshrl.u32 %v4893, 7
    %v4895 = vsub.s32 1, %v4894
    %v4896 = vrot.slane %v4891, %v4895
    %v4898 = vpack.i.b16 %v4866, %v4866
    %v4900 = vlaneseq
    %v4901 = vshrl.u32 %v4900, 7
    %v4902 = vsub.s32 1, %v4901
    %v4903 = vrot.slane %v4898, %v4902
    %v4905 = vpack.i.b16 %v4867, %v4867
    %v4907 = vlaneseq
    %v4908 = vshrl.u32 %v4907, 7
    %v4909 = vsub.s32 1, %v4908
    %v4910 = vrot.slane %v4905, %v4909
    %v4912 = vpack.i.b16 %v4868, %v4868
    %v4914 = vlaneseq
    %v4915 = vshrl.u32 %v4914, 7
    %v4916 = vsub.s32 1, %v4915
    %v4917 = vrot.slane %v4912, %v4916
    %v4925 = vunpack.c.l.b16 %v4875
    %v4926 = vunpack.c.l.b16 %v4882
    %v4927 = vunpack.c.l.b16 %v4889
    %v4928 = vunpack.c.l.b16 %v4896
    %v4929 = vunpack.c.l.b16 %v4903
    %v4930 = vunpack.c.l.b16 %v4910
    %v4931 = vunpack.c.l.b16 %v4917
    %v4932 = vpack.c.b16 %v4926, %v4925
    %v4933 = vpack.c.b16 %v4928, %v4927
    %v4934 = vpack.c.b16 %v4930, %v4929
    %v4935 = vpack.c.b16 %v4931, %v4931
    %4936 = vrot.lane.b32.xlu0 %v4932, 8
    %v4937 = vpop.permute.xlu0 %4936
    %4938 = vrot.lane.b32.xlu0 %v4933, 8
    %v4939 = vpop.permute.xlu0 %4938
    %4940 = vrot.lane.b32.xlu0 %v4934, 8
    %v4941 = vpop.permute.xlu0 %4940
    %4942 = vrot.lane.b32.xlu0 %v4935, 8
    %v4943 = vpop.permute.xlu0 %4942
    %v4944 = vrot.slane %v4937, 4
    %v4945 = vrot.slane %v4939, 4
    %v4946 = vrot.slane %v4941, 4
    %v4947 = vrot.slane %v4943, 4
    %vm4948 = vcmask 64512
    %v4949 = vsel %vm4948, %v4944, %v4937
    %v4950 = vsel %vm4771, %v4944, %v4945
    %v4951 = vsel %vm4948, %v4950, %v4939
    %v4952 = vsel %vm4771, %v4945, %v4946
    %v4953 = vsel %vm4948, %v4952, %v4941
    %v4954 = vsel %vm4771, %v4946, %v4947
    %v4955 = vsel %vm4948, %v4954, %v4943
    %v4960 = vmul.bf16 %v4843, %v4949
    %v4961 = vmul.bf16 %v4844, %v4951
    %v4962 = vmul.bf16 %v4845, %v4953
    %v4963 = vmul.bf16 %v4846, %v4955
    %v4968 = vunpack.c.l.b16 %v4960
    %v4969 = vunpack.c.h.b16 %v4960
    %v4970 = vunpack.c.l.b16 %v4961
    %v4971 = vunpack.c.h.b16 %v4961
    %v4972 = vunpack.c.l.b16 %v4962
    %v4973 = vunpack.c.h.b16 %v4962
    %v4974 = vunpack.c.l.b16 %v4963
    %v4975 = vunpack.c.h.b16 %v4963
    %v4976 = vpack.c.b16 %v4968, %v4968
    %v4977 = vpack.c.b16 %v4969, %v4969
    %v4978 = vpack.c.b16 %v4970, %v4970
    %v4979 = vpack.c.b16 %v4971, %v4971
    %v4980 = vpack.c.b16 %v4972, %v4972
    %v4981 = vpack.c.b16 %v4973, %v4973
    %v4982 = vpack.c.b16 %v4974, %v4974
    %v4983 = vpack.c.b16 %v4975, %v4975
    %4984 = vrot.lane.b32.xlu0 %v4976, 120
    %v4985 = vpop.permute.xlu0 %4984
    %4986 = vrot.lane.b32.xlu0 %v4977, 120
    %v4987 = vpop.permute.xlu0 %4986
    %4988 = vrot.lane.b32.xlu0 %v4978, 120
    %v4989 = vpop.permute.xlu0 %4988
    %4990 = vrot.lane.b32.xlu0 %v4979, 120
    %v4991 = vpop.permute.xlu0 %4990
    %4992 = vrot.lane.b32.xlu0 %v4980, 120
    %v4993 = vpop.permute.xlu0 %4992
    %4994 = vrot.lane.b32.xlu0 %v4981, 120
    %v4995 = vpop.permute.xlu0 %4994
    %4996 = vrot.lane.b32.xlu0 %v4982, 120
    %v4997 = vpop.permute.xlu0 %4996
    %4998 = vrot.lane.b32.xlu0 %v4983, 120
    %v4999 = vpop.permute.xlu0 %4998
    %vm5000 = vcmask 982016
    %v5001 = vsel %vm5000, %v4985, %v4987
    %v5002 = vsel %vm5000, %v4987, %v4989
    %v5003 = vsel %vm5000, %v4989, %v4991
    %v5004 = vsel %vm5000, %v4991, %v4993
    %v5005 = vsel %vm5000, %v4993, %v4995
    %v5006 = vsel %vm5000, %v4995, %v4997
    %v5007 = vsel %vm5000, %v4997, %v4999
    %5015 = vst [vmem:[#allocation3 + $0x38] sm:$0xf] %v5001
    %5016 = vst [vmem:[#allocation3 + $0x40] sm:$0xf] %v5002
    %5017 = vst [vmem:[#allocation3 + $0x48] sm:$0xf] %v5003
    %5018 = vst [vmem:[#allocation3 + $0x50] sm:$0xf] %v5004
    %5019 = vst [vmem:[#allocation3 + $0x58] sm:$0xf] %v5005
    %5020 = vst [vmem:[#allocation3 + $0x60] sm:$0xf] %v5006
    %5021 = vst [vmem:[#allocation3 + $0x68] sm:$0xf] %v5007
    %v5022 = vld [vmem:[#allocation5] sm:$0xff]
    %v5023 = vld [vmem:[#allocation5 + $0x8] sm:$0xff]
    %v5024 = vld [vmem:[#allocation5 + $0x10] sm:$0xff]
    %v5025 = vld [vmem:[#allocation5 + $0x18] sm:$0xff]
    %v5026 = vld [vmem:[%s6] sm:$0x22]
    %v5027 = vld [vmem:[%s6 + $0x8] sm:$0x22]
    %v5028 = vld [vmem:[%s6 + $0x10] sm:$0x22]
    %v5029 = vld [vmem:[%s6 + $0x18] sm:$0x2]
    %v5034 = vunpack.c.l.b16 %v5026
    %v5035 = vunpack.c.h.b16 %v5026
    %v5036 = vunpack.c.l.b16 %v5027
    %v5037 = vunpack.c.h.b16 %v5027
    %v5038 = vunpack.c.l.b16 %v5028
    %v5039 = vunpack.c.h.b16 %v5028
    %v5040 = vunpack.c.l.b16 %v5029
    %v5041 = vpack.c.b16 %v5034, %v5034
    %v5042 = vpack.c.b16 %v5035, %v5035
    %v5043 = vpack.c.b16 %v5036, %v5036
    %v5044 = vpack.c.b16 %v5037, %v5037
    %v5045 = vpack.c.b16 %v5038, %v5038
    %v5046 = vpack.c.b16 %v5039, %v5039
    %v5047 = vpack.c.b16 %v5040, %v5040
    %v5049 = vshrl.u32 %v5041, 16
    %v5050 = vpack.i.b16 %v5049, %v5049
    %v5052 = vlaneseq
    %v5053 = vshrl.u32 %v5052, 7
    %v5054 = vsub.s32 1, %v5053
    %v5055 = vrot.slane %v5050, %v5054
    %v5057 = vshrl.u32 %v5042, 16
    %v5058 = vpack.i.b16 %v5057, %v5057
    %v5060 = vlaneseq
    %v5061 = vshrl.u32 %v5060, 7
    %v5062 = vsub.s32 1, %v5061
    %v5063 = vrot.slane %v5058, %v5062
    %v5065 = vshrl.u32 %v5043, 16
    %v5066 = vpack.i.b16 %v5065, %v5065
    %v5068 = vlaneseq
    %v5069 = vshrl.u32 %v5068, 7
    %v5070 = vsub.s32 1, %v5069
    %v5071 = vrot.slane %v5066, %v5070
    %v5073 = vshrl.u32 %v5044, 16
    %v5074 = vpack.i.b16 %v5073, %v5073
    %v5076 = vlaneseq
    %v5077 = vshrl.u32 %v5076, 7
    %v5078 = vsub.s32 1, %v5077
    %v5079 = vrot.slane %v5074, %v5078
    %v5081 = vshrl.u32 %v5045, 16
    %v5082 = vpack.i.b16 %v5081, %v5081
    %v5084 = vlaneseq
    %v5085 = vshrl.u32 %v5084, 7
    %v5086 = vsub.s32 1, %v5085
    %v5087 = vrot.slane %v5082, %v5086
    %v5089 = vshrl.u32 %v5046, 16
    %v5090 = vpack.i.b16 %v5089, %v5089
    %v5092 = vlaneseq
    %v5093 = vshrl.u32 %v5092, 7
    %v5094 = vsub.s32 1, %v5093
    %v5095 = vrot.slane %v5090, %v5094
    %v5097 = vshrl.u32 %v5047, 16
    %v5098 = vpack.i.b16 %v5097, %v5097
    %v5100 = vlaneseq
    %v5101 = vshrl.u32 %v5100, 7
    %v5102 = vsub.s32 1, %v5101
    %v5103 = vrot.slane %v5098, %v5102
    %v5111 = vunpack.c.l.b16 %v5055
    %v5112 = vunpack.c.l.b16 %v5063
    %v5113 = vunpack.c.l.b16 %v5071
    %v5114 = vunpack.c.l.b16 %v5079
    %v5115 = vunpack.c.l.b16 %v5087
    %v5116 = vunpack.c.l.b16 %v5095
    %v5117 = vunpack.c.l.b16 %v5103
    %v5118 = vpack.c.b16 %v5112, %v5111
    %v5119 = vpack.c.b16 %v5114, %v5113
    %v5120 = vpack.c.b16 %v5116, %v5115
    %v5121 = vpack.c.b16 %v5117, %v5117
    %5122 = vrot.lane.b32.xlu0 %v5118, 12
    %v5123 = vpop.permute.xlu0 %5122
    %5124 = vrot.lane.b32.xlu0 %v5119, 12
    %v5125 = vpop.permute.xlu0 %5124
    %5126 = vrot.lane.b32.xlu0 %v5120, 12
    %v5127 = vpop.permute.xlu0 %5126
    %5128 = vrot.lane.b32.xlu0 %v5121, 12
    %v5129 = vpop.permute.xlu0 %5128
    %v5130 = vrot.slane %v5123, 4
    %v5131 = vrot.slane %v5125, 4
    %v5132 = vrot.slane %v5127, 4
    %v5133 = vrot.slane %v5129, 4
    %vm5134 = vcmask 97280
    %v5135 = vsel %vm5134, %v5130, %v5123
    %v5136 = vsel %vm4771, %v5130, %v5131
    %v5137 = vsel %vm5134, %v5136, %v5125
    %v5138 = vsel %vm4771, %v5131, %v5132
    %v5139 = vsel %vm5134, %v5138, %v5127
    %v5140 = vsel %vm4771, %v5132, %v5133
    %v5141 = vsel %vm5134, %v5140, %v5129
    %v5146 = vmul.bf16 %v5022, %v5135
    %v5147 = vmul.bf16 %v5023, %v5137
    %v5148 = vmul.bf16 %v5024, %v5139
    %v5149 = vmul.bf16 %v5025, %v5141
    %v5154 = vunpack.c.l.b16 %v5146
    %v5155 = vunpack.c.h.b16 %v5146
    %v5156 = vunpack.c.l.b16 %v5147
    %v5157 = vunpack.c.h.b16 %v5147
    %v5158 = vunpack.c.l.b16 %v5148
    %v5159 = vunpack.c.h.b16 %v5148
    %v5160 = vunpack.c.l.b16 %v5149
    %v5161 = vunpack.c.h.b16 %v5149
    %v5162 = vpack.c.b16 %v5154, %v5154
    %v5163 = vpack.c.b16 %v5155, %v5155
    %v5164 = vpack.c.b16 %v5156, %v5156
    %v5165 = vpack.c.b16 %v5157, %v5157
    %v5166 = vpack.c.b16 %v5158, %v5158
    %v5167 = vpack.c.b16 %v5159, %v5159
    %v5168 = vpack.c.b16 %v5160, %v5160
    %v5169 = vpack.c.b16 %v5161, %v5161
    %5170 = vrot.lane.b32.xlu0 %v5162, 116
    %v5171 = vpop.permute.xlu0 %5170
    %5172 = vrot.lane.b32.xlu0 %v5163, 116
    %v5173 = vpop.permute.xlu0 %5172
    %5174 = vrot.lane.b32.xlu0 %v5164, 116
    %v5175 = vpop.permute.xlu0 %5174
    %5176 = vrot.lane.b32.xlu0 %v5165, 116
    %v5177 = vpop.permute.xlu0 %5176
    %5178 = vrot.lane.b32.xlu0 %v5166, 116
    %v5179 = vpop.permute.xlu0 %5178
    %5180 = vrot.lane.b32.xlu0 %v5167, 116
    %v5181 = vpop.permute.xlu0 %5180
    %5182 = vrot.lane.b32.xlu0 %v5168, 116
    %v5183 = vpop.permute.xlu0 %5182
    %5184 = vrot.lane.b32.xlu0 %v5169, 116
    %v5185 = vpop.permute.xlu0 %5184
    %vm5186 = vcmask 949248
    %v5187 = vsel %vm5186, %v5171, %v5173
    %v5188 = vsel %vm5186, %v5173, %v5175
    %v5189 = vsel %vm5186, %v5175, %v5177
    %v5190 = vsel %vm5186, %v5177, %v5179
    %v5191 = vsel %vm5186, %v5179, %v5181
    %v5192 = vsel %vm5186, %v5181, %v5183
    %v5193 = vsel %vm5186, %v5183, %v5185
    %5201 = vst [vmem:[#allocation3 + $0x38] sm:$0xf0] %v5187
    %5202 = vst [vmem:[#allocation3 + $0x40] sm:$0xf0] %v5188
    %5203 = vst [vmem:[#allocation3 + $0x48] sm:$0xf0] %v5189
    %5204 = vst [vmem:[#allocation3 + $0x50] sm:$0xf0] %v5190
    %5205 = vst [vmem:[#allocation3 + $0x58] sm:$0xf0] %v5191
    %5206 = vst [vmem:[#allocation3 + $0x60] sm:$0xf0] %v5192
    %5207 = vst [vmem:[#allocation3 + $0x68] sm:$0xf0] %v5193
    %v5208 = vld [vmem:[#allocation5] sm:$0xff]
    %v5209 = vld [vmem:[#allocation5 + $0x8] sm:$0xff]
    %v5210 = vld [vmem:[#allocation5 + $0x10] sm:$0xff]
    %v5211 = vld [vmem:[#allocation5 + $0x18] sm:$0xff]
    %v5212 = vld [vmem:[%s6] sm:$0x44]
    %v5213 = vld [vmem:[%s6 + $0x8] sm:$0x44]
    %v5214 = vld [vmem:[%s6 + $0x10] sm:$0x44]
    %v5215 = vld [vmem:[%s6 + $0x18] sm:$0x4]
    %v5220 = vunpack.c.l.b16 %v5212
    %v5221 = vunpack.c.h.b16 %v5212
    %v5222 = vunpack.c.l.b16 %v5213
    %v5223 = vunpack.c.h.b16 %v5213
    %v5224 = vunpack.c.l.b16 %v5214
    %v5225 = vunpack.c.h.b16 %v5214
    %v5226 = vunpack.c.l.b16 %v5215
    %v5227 = vpack.c.b16 %v5220, %v5220
    %v5228 = vpack.c.b16 %v5221, %v5221
    %v5229 = vpack.c.b16 %v5222, %v5222
    %v5230 = vpack.c.b16 %v5223, %v5223
    %v5231 = vpack.c.b16 %v5224, %v5224
    %v5232 = vpack.c.b16 %v5225, %v5225
    %v5233 = vpack.c.b16 %v5226, %v5226
    %v5235 = vpack.i.b16 %v5227, %v5227
    %v5237 = vlaneseq
    %v5238 = vshrl.u32 %v5237, 7
    %v5239 = vsub.s32 2, %v5238
    %v5240 = vrot.slane %v5235, %v5239
    %v5242 = vpack.i.b16 %v5228, %v5228
    %v5244 = vlaneseq
    %v5245 = vshrl.u32 %v5244, 7
    %v5246 = vsub.s32 2, %v5245
    %v5247 = vrot.slane %v5242, %v5246
    %v5249 = vpack.i.b16 %v5229, %v5229
    %v5251 = vlaneseq
    %v5252 = vshrl.u32 %v5251, 7
    %v5253 = vsub.s32 2, %v5252
    %v5254 = vrot.slane %v5249, %v5253
    %v5256 = vpack.i.b16 %v5230, %v5230
    %v5258 = vlaneseq
    %v5259 = vshrl.u32 %v5258, 7
    %v5260 = vsub.s32 2, %v5259
    %v5261 = vrot.slane %v5256, %v5260
    %v5263 = vpack.i.b16 %v5231, %v5231
    %v5265 = vlaneseq
    %v5266 = vshrl.u32 %v5265, 7
    %v5267 = vsub.s32 2, %v5266
    %v5268 = vrot.slane %v5263, %v5267
    %v5270 = vpack.i.b16 %v5232, %v5232
    %v5272 = vlaneseq
    %v5273 = vshrl.u32 %v5272, 7
    %v5274 = vsub.s32 2, %v5273
    %v5275 = vrot.slane %v5270, %v5274
    %v5277 = vpack.i.b16 %v5233, %v5233
    %v5279 = vlaneseq
    %v5280 = vshrl.u32 %v5279, 7
    %v5281 = vsub.s32 2, %v5280
    %v5282 = vrot.slane %v5277, %v5281
    %v5290 = vunpack.c.l.b16 %v5240
    %v5291 = vunpack.c.l.b16 %v5247
    %v5292 = vunpack.c.l.b16 %v5254
    %v5293 = vunpack.c.l.b16 %v5261
    %v5294 = vunpack.c.l.b16 %v5268
    %v5295 = vunpack.c.l.b16 %v5275
    %v5296 = vunpack.c.l.b16 %v5282
    %v5297 = vpack.c.b16 %v5291, %v5290
    %v5298 = vpack.c.b16 %v5293, %v5292
    %v5299 = vpack.c.b16 %v5295, %v5294
    %v5300 = vpack.c.b16 %v5296, %v5296
    %5301 = vrot.lane.b32.xlu0 %v5297, 64
    %v5302 = vpop.permute.xlu0 %5301
    %5303 = vrot.lane.b32.xlu0 %v5298, 64
    %v5304 = vpop.permute.xlu0 %5303
    %5305 = vrot.lane.b32.xlu0 %v5299, 64
    %v5306 = vpop.permute.xlu0 %5305
    %5307 = vrot.lane.b32.xlu0 %v5300, 64
    %v5308 = vpop.permute.xlu0 %5307
    %v5309 = vrot.slane %v5302, 4
    %v5310 = vrot.slane %v5304, 4
    %v5311 = vrot.slane %v5306, 4
    %v5312 = vrot.slane %v5308, 4
    %v5313 = vsel %vm2257, %v5309, %v5302
    %v5314 = vsel %vm4771, %v5309, %v5310
    %v5315 = vsel %vm2257, %v5314, %v5304
    %v5316 = vsel %vm4771, %v5310, %v5311
    %v5317 = vsel %vm2257, %v5316, %v5306
    %v5318 = vsel %vm4771, %v5311, %v5312
    %v5319 = vsel %vm2257, %v5318, %v5308
    %v5324 = vmul.bf16 %v5208, %v5313
    %v5325 = vmul.bf16 %v5209, %v5315
    %v5326 = vmul.bf16 %v5210, %v5317
    %v5327 = vmul.bf16 %v5211, %v5319
    %v5332 = vunpack.c.l.b16 %v5324
    %v5333 = vunpack.c.h.b16 %v5324
    %v5334 = vunpack.c.l.b16 %v5325
    %v5335 = vunpack.c.h.b16 %v5325
    %v5336 = vunpack.c.l.b16 %v5326
    %v5337 = vunpack.c.h.b16 %v5326
    %v5338 = vunpack.c.l.b16 %v5327
    %v5339 = vunpack.c.h.b16 %v5327
    %v5340 = vpack.c.b16 %v5332, %v5332
    %v5341 = vpack.c.b16 %v5333, %v5333
    %v5342 = vpack.c.b16 %v5334, %v5334
    %v5343 = vpack.c.b16 %v5335, %v5335
    %v5344 = vpack.c.b16 %v5336, %v5336
    %v5345 = vpack.c.b16 %v5337, %v5337
    %v5346 = vpack.c.b16 %v5338, %v5338
    %v5347 = vpack.c.b16 %v5339, %v5339
    %5348 = vrot.lane.b32.xlu0 %v5340, 64
    %v5349 = vpop.permute.xlu0 %5348
    %5350 = vrot.lane.b32.xlu0 %v5341, 64
    %v5351 = vpop.permute.xlu0 %5350
    %5352 = vrot.lane.b32.xlu0 %v5342, 64
    %v5353 = vpop.permute.xlu0 %5352
    %5354 = vrot.lane.b32.xlu0 %v5343, 64
    %v5355 = vpop.permute.xlu0 %5354
    %5356 = vrot.lane.b32.xlu0 %v5344, 64
    %v5357 = vpop.permute.xlu0 %5356
    %5358 = vrot.lane.b32.xlu0 %v5345, 64
    %v5359 = vpop.permute.xlu0 %5358
    %5360 = vrot.lane.b32.xlu0 %v5346, 64
    %v5361 = vpop.permute.xlu0 %5360
    %5362 = vrot.lane.b32.xlu0 %v5347, 64
    %v5363 = vpop.permute.xlu0 %5362
    %v5364 = vsel %vm2257, %v5349, %v5351
    %v5365 = vsel %vm2257, %v5351, %v5353
    %v5366 = vsel %vm2257, %v5353, %v5355
    %v5367 = vsel %vm2257, %v5355, %v5357
    %v5368 = vsel %vm2257, %v5357, %v5359
    %v5369 = vsel %vm2257, %v5359, %v5361
    %v5370 = vsel %vm2257, %v5361, %v5363
    %5378 = vst [vmem:[#allocation3 + $0x70] sm:$0xf] %v5364
    %5379 = vst [vmem:[#allocation3 + $0x78] sm:$0xf] %v5365
    %5380 = vst [vmem:[#allocation3 + $0x80] sm:$0xf] %v5366
    %5381 = vst [vmem:[#allocation3 + $0x88] sm:$0xf] %v5367
    %5382 = vst [vmem:[#allocation3 + $0x90] sm:$0xf] %v5368
    %5383 = vst [vmem:[#allocation3 + $0x98] sm:$0xf] %v5369
    %5384 = vst [vmem:[#allocation3 + $0xa0] sm:$0xf] %v5370
    %v5385 = vld [vmem:[#allocation5] sm:$0xff]
    %v5386 = vld [vmem:[#allocation5 + $0x8] sm:$0xff]
    %v5387 = vld [vmem:[#allocation5 + $0x10] sm:$0xff]
    %v5388 = vld [vmem:[#allocation5 + $0x18] sm:$0xff]
    %v5389 = vld [vmem:[%s6] sm:$0x44]
    %v5390 = vld [vmem:[%s6 + $0x8] sm:$0x44]
    %v5391 = vld [vmem:[%s6 + $0x10] sm:$0x44]
    %v5392 = vld [vmem:[%s6 + $0x18] sm:$0x4]
    %v5397 = vunpack.c.l.b16 %v5389
    %v5398 = vunpack.c.h.b16 %v5389
    %v5399 = vunpack.c.l.b16 %v5390
    %v5400 = vunpack.c.h.b16 %v5390
    %v5401 = vunpack.c.l.b16 %v5391
    %v5402 = vunpack.c.h.b16 %v5391
    %v5403 = vunpack.c.l.b16 %v5392
    %v5404 = vpack.c.b16 %v5397, %v5397
    %v5405 = vpack.c.b16 %v5398, %v5398
    %v5406 = vpack.c.b16 %v5399, %v5399
    %v5407 = vpack.c.b16 %v5400, %v5400
    %v5408 = vpack.c.b16 %v5401, %v5401
    %v5409 = vpack.c.b16 %v5402, %v5402
    %v5410 = vpack.c.b16 %v5403, %v5403
    %v5412 = vshrl.u32 %v5404, 16
    %v5413 = vpack.i.b16 %v5412, %v5412
    %v5415 = vlaneseq
    %v5416 = vshrl.u32 %v5415, 7
    %v5417 = vsub.s32 2, %v5416
    %v5418 = vrot.slane %v5413, %v5417
    %v5420 = vshrl.u32 %v5405, 16
    %v5421 = vpack.i.b16 %v5420, %v5420
    %v5423 = vlaneseq
    %v5424 = vshrl.u32 %v5423, 7
    %v5425 = vsub.s32 2, %v5424
    %v5426 = vrot.slane %v5421, %v5425
    %v5428 = vshrl.u32 %v5406, 16
    %v5429 = vpack.i.b16 %v5428, %v5428
    %v5431 = vlaneseq
    %v5432 = vshrl.u32 %v5431, 7
    %v5433 = vsub.s32 2, %v5432
    %v5434 = vrot.slane %v5429, %v5433
    %v5436 = vshrl.u32 %v5407, 16
    %v5437 = vpack.i.b16 %v5436, %v5436
    %v5439 = vlaneseq
    %v5440 = vshrl.u32 %v5439, 7
    %v5441 = vsub.s32 2, %v5440
    %v5442 = vrot.slane %v5437, %v5441
    %v5444 = vshrl.u32 %v5408, 16
    %v5445 = vpack.i.b16 %v5444, %v5444
    %v5447 = vlaneseq
    %v5448 = vshrl.u32 %v5447, 7
    %v5449 = vsub.s32 2, %v5448
    %v5450 = vrot.slane %v5445, %v5449
    %v5452 = vshrl.u32 %v5409, 16
    %v5453 = vpack.i.b16 %v5452, %v5452
    %v5455 = vlaneseq
    %v5456 = vshrl.u32 %v5455, 7
    %v5457 = vsub.s32 2, %v5456
    %v5458 = vrot.slane %v5453, %v5457
    %v5460 = vshrl.u32 %v5410, 16
    %v5461 = vpack.i.b16 %v5460, %v5460
    %v5463 = vlaneseq
    %v5464 = vshrl.u32 %v5463, 7
    %v5465 = vsub.s32 2, %v5464
    %v5466 = vrot.slane %v5461, %v5465
    %v5474 = vunpack.c.l.b16 %v5418
    %v5475 = vunpack.c.l.b16 %v5426
    %v5476 = vunpack.c.l.b16 %v5434
    %v5477 = vunpack.c.l.b16 %v5442
    %v5478 = vunpack.c.l.b16 %v5450
    %v5479 = vunpack.c.l.b16 %v5458
    %v5480 = vunpack.c.l.b16 %v5466
    %v5481 = vpack.c.b16 %v5475, %v5474
    %v5482 = vpack.c.b16 %v5477, %v5476
    %v5483 = vpack.c.b16 %v5479, %v5478
    %v5484 = vpack.c.b16 %v5480, %v5480
    %5485 = vrot.lane.b32.xlu0 %v5481, 68
    %v5486 = vpop.permute.xlu0 %5485
    %5487 = vrot.lane.b32.xlu0 %v5482, 68
    %v5488 = vpop.permute.xlu0 %5487
    %5489 = vrot.lane.b32.xlu0 %v5483, 68
    %v5490 = vpop.permute.xlu0 %5489
    %5491 = vrot.lane.b32.xlu0 %v5484, 68
    %v5492 = vpop.permute.xlu0 %5491
    %v5493 = vrot.slane %v5486, 4
    %v5494 = vrot.slane %v5488, 4
    %v5495 = vrot.slane %v5490, 4
    %v5496 = vrot.slane %v5492, 4
    %v5497 = vsel %vm2782, %v5493, %v5486
    %v5498 = vsel %vm4771, %v5493, %v5494
    %v5499 = vsel %vm2782, %v5498, %v5488
    %v5500 = vsel %vm4771, %v5494, %v5495
    %v5501 = vsel %vm2782, %v5500, %v5490
    %v5502 = vsel %vm4771, %v5495, %v5496
    %v5503 = vsel %vm2782, %v5502, %v5492
    %v5508 = vmul.bf16 %v5385, %v5497
    %v5509 = vmul.bf16 %v5386, %v5499
    %v5510 = vmul.bf16 %v5387, %v5501
    %v5511 = vmul.bf16 %v5388, %v5503
    %v5516 = vunpack.c.l.b16 %v5508
    %v5517 = vunpack.c.h.b16 %v5508
    %v5518 = vunpack.c.l.b16 %v5509
    %v5519 = vunpack.c.h.b16 %v5509
    %v5520 = vunpack.c.l.b16 %v5510
    %v5521 = vunpack.c.h.b16 %v5510
    %v5522 = vunpack.c.l.b16 %v5511
    %v5523 = vunpack.c.h.b16 %v5511
    %v5524 = vpack.c.b16 %v5516, %v5516
    %v5525 = vpack.c.b16 %v5517, %v5517
    %v5526 = vpack.c.b16 %v5518, %v5518
    %v5527 = vpack.c.b16 %v5519, %v5519
    %v5528 = vpack.c.b16 %v5520, %v5520
    %v5529 = vpack.c.b16 %v5521, %v5521
    %v5530 = vpack.c.b16 %v5522, %v5522
    %v5531 = vpack.c.b16 %v5523, %v5523
    %5532 = vrot.lane.b32.xlu0 %v5524, 60
    %v5533 = vpop.permute.xlu0 %5532
    %5534 = vrot.lane.b32.xlu0 %v5525, 60
    %v5535 = vpop.permute.xlu0 %5534
    %5536 = vrot.lane.b32.xlu0 %v5526, 60
    %v5537 = vpop.permute.xlu0 %5536
    %5538 = vrot.lane.b32.xlu0 %v5527, 60
    %v5539 = vpop.permute.xlu0 %5538
    %5540 = vrot.lane.b32.xlu0 %v5528, 60
    %v5541 = vpop.permute.xlu0 %5540
    %5542 = vrot.lane.b32.xlu0 %v5529, 60
    %v5543 = vpop.permute.xlu0 %5542
    %5544 = vrot.lane.b32.xlu0 %v5530, 60
    %v5545 = vpop.permute.xlu0 %5544
    %5546 = vrot.lane.b32.xlu0 %v5531, 60
    %v5547 = vpop.permute.xlu0 %5546
    %v5548 = vsel %vm2859, %v5533, %v5535
    %v5549 = vsel %vm2859, %v5535, %v5537
    %v5550 = vsel %vm2859, %v5537, %v5539
    %v5551 = vsel %vm2859, %v5539, %v5541
    %v5552 = vsel %vm2859, %v5541, %v5543
    %v5553 = vsel %vm2859, %v5543, %v5545
    %v5554 = vsel %vm2859, %v5545, %v5547
    %5562 = vst [vmem:[#allocation3 + $0x70] sm:$0xf0] %v5548
    %5563 = vst [vmem:[#allocation3 + $0x78] sm:$0xf0] %v5549
    %5564 = vst [vmem:[#allocation3 + $0x80] sm:$0xf0] %v5550
    %5565 = vst [vmem:[#allocation3 + $0x88] sm:$0xf0] %v5551
    %5566 = vst [vmem:[#allocation3 + $0x90] sm:$0xf0] %v5552
    %5567 = vst [vmem:[#allocation3 + $0x98] sm:$0xf0] %v5553
    %5568 = vst [vmem:[#allocation3 + $0xa0] sm:$0xf0] %v5554
    %v5569 = vld [vmem:[#allocation5] sm:$0xff]
    %v5570 = vld [vmem:[#allocation5 + $0x8] sm:$0xff]
    %v5571 = vld [vmem:[#allocation5 + $0x10] sm:$0xff]
    %v5572 = vld [vmem:[#allocation5 + $0x18] sm:$0xff]
    %v5573 = vld [vmem:[%s6] sm:$0x88]
    %v5574 = vld [vmem:[%s6 + $0x8] sm:$0x88]
    %v5575 = vld [vmem:[%s6 + $0x10] sm:$0x88]
    %v5576 = vld [vmem:[%s6 + $0x18] sm:$0x8]
    %v5581 = vunpack.c.l.b16 %v5573
    %v5582 = vunpack.c.h.b16 %v5573
    %v5583 = vunpack.c.l.b16 %v5574
    %v5584 = vunpack.c.h.b16 %v5574
    %v5585 = vunpack.c.l.b16 %v5575
    %v5586 = vunpack.c.h.b16 %v5575
    %v5587 = vunpack.c.l.b16 %v5576
    %v5588 = vpack.c.b16 %v5581, %v5581
    %v5589 = vpack.c.b16 %v5582, %v5582
    %v5590 = vpack.c.b16 %v5583, %v5583
    %v5591 = vpack.c.b16 %v5584, %v5584
    %v5592 = vpack.c.b16 %v5585, %v5585
    %v5593 = vpack.c.b16 %v5586, %v5586
    %v5594 = vpack.c.b16 %v5587, %v5587
    %v5596 = vpack.i.b16 %v5588, %v5588
    %v5598 = vlaneseq
    %v5599 = vshrl.u32 %v5598, 7
    %v5600 = vsub.s32 3, %v5599
    %v5601 = vrot.slane %v5596, %v5600
    %v5603 = vpack.i.b16 %v5589, %v5589
    %v5605 = vlaneseq
    %v5606 = vshrl.u32 %v5605, 7
    %v5607 = vsub.s32 3, %v5606
    %v5608 = vrot.slane %v5603, %v5607
    %v5610 = vpack.i.b16 %v5590, %v5590
    %v5612 = vlaneseq
    %v5613 = vshrl.u32 %v5612, 7
    %v5614 = vsub.s32 3, %v5613
    %v5615 = vrot.slane %v5610, %v5614
    %v5617 = vpack.i.b16 %v5591, %v5591
    %v5619 = vlaneseq
    %v5620 = vshrl.u32 %v5619, 7
    %v5621 = vsub.s32 3, %v5620
    %v5622 = vrot.slane %v5617, %v5621
    %v5624 = vpack.i.b16 %v5592, %v5592
    %v5626 = vlaneseq
    %v5627 = vshrl.u32 %v5626, 7
    %v5628 = vsub.s32 3, %v5627
    %v5629 = vrot.slane %v5624, %v5628
    %v5631 = vpack.i.b16 %v5593, %v5593
    %v5633 = vlaneseq
    %v5634 = vshrl.u32 %v5633, 7
    %v5635 = vsub.s32 3, %v5634
    %v5636 = vrot.slane %v5631, %v5635
    %v5638 = vpack.i.b16 %v5594, %v5594
    %v5640 = vlaneseq
    %v5641 = vshrl.u32 %v5640, 7
    %v5642 = vsub.s32 3, %v5641
    %v5643 = vrot.slane %v5638, %v5642
    %v5651 = vunpack.c.l.b16 %v5601
    %v5652 = vunpack.c.l.b16 %v5608
    %v5653 = vunpack.c.l.b16 %v5615
    %v5654 = vunpack.c.l.b16 %v5622
    %v5655 = vunpack.c.l.b16 %v5629
    %v5656 = vunpack.c.l.b16 %v5636
    %v5657 = vunpack.c.l.b16 %v5643
    %v5658 = vpack.c.b16 %v5652, %v5651
    %v5659 = vpack.c.b16 %v5654, %v5653
    %v5660 = vpack.c.b16 %v5656, %v5655
    %v5661 = vpack.c.b16 %v5657, %v5657
    %5662 = vrot.lane.b32.xlu0 %v5658, 72
    %v5663 = vpop.permute.xlu0 %5662
    %5664 = vrot.lane.b32.xlu0 %v5659, 72
    %v5665 = vpop.permute.xlu0 %5664
    %5666 = vrot.lane.b32.xlu0 %v5660, 72
    %v5667 = vpop.permute.xlu0 %5666
    %5668 = vrot.lane.b32.xlu0 %v5661, 72
    %v5669 = vpop.permute.xlu0 %5668
    %v5670 = vrot.slane %v5663, 4
    %v5671 = vrot.slane %v5665, 4
    %v5672 = vrot.slane %v5667, 4
    %v5673 = vrot.slane %v5669, 4
    %vm5674 = vcmask 588800
    %v5675 = vsel %vm5674, %v5670, %v5663
    %v5676 = vsel %vm4771, %v5670, %v5671
    %v5677 = vsel %vm5674, %v5676, %v5665
    %v5678 = vsel %vm4771, %v5671, %v5672
    %v5679 = vsel %vm5674, %v5678, %v5667
    %v5680 = vsel %vm4771, %v5672, %v5673
    %v5681 = vsel %vm5674, %v5680, %v5669
    %v5686 = vmul.bf16 %v5569, %v5675
    %v5687 = vmul.bf16 %v5570, %v5677
    %v5688 = vmul.bf16 %v5571, %v5679
    %v5689 = vmul.bf16 %v5572, %v5681
    %v5694 = vunpack.c.l.b16 %v5686
    %v5695 = vunpack.c.h.b16 %v5686
    %v5696 = vunpack.c.l.b16 %v5687
    %v5697 = vunpack.c.h.b16 %v5687
    %v5698 = vunpack.c.l.b16 %v5688
    %v5699 = vunpack.c.h.b16 %v5688
    %v5700 = vunpack.c.l.b16 %v5689
    %v5701 = vunpack.c.h.b16 %v5689
    %v5702 = vpack.c.b16 %v5694, %v5694
    %v5703 = vpack.c.b16 %v5695, %v5695
    %v5704 = vpack.c.b16 %v5696, %v5696
    %v5705 = vpack.c.b16 %v5697, %v5697
    %v5706 = vpack.c.b16 %v5698, %v5698
    %v5707 = vpack.c.b16 %v5699, %v5699
    %v5708 = vpack.c.b16 %v5700, %v5700
    %v5709 = vpack.c.b16 %v5701, %v5701
    %5710 = vrot.lane.b32.xlu0 %v5702, 56
    %v5711 = vpop.permute.xlu0 %5710
    %5712 = vrot.lane.b32.xlu0 %v5703, 56
    %v5713 = vpop.permute.xlu0 %5712
    %5714 = vrot.lane.b32.xlu0 %v5704, 56
    %v5715 = vpop.permute.xlu0 %5714
    %5716 = vrot.lane.b32.xlu0 %v5705, 56
    %v5717 = vpop.permute.xlu0 %5716
    %5718 = vrot.lane.b32.xlu0 %v5706, 56
    %v5719 = vpop.permute.xlu0 %5718
    %5720 = vrot.lane.b32.xlu0 %v5707, 56
    %v5721 = vpop.permute.xlu0 %5720
    %5722 = vrot.lane.b32.xlu0 %v5708, 56
    %v5723 = vpop.permute.xlu0 %5722
    %5724 = vrot.lane.b32.xlu0 %v5709, 56
    %v5725 = vpop.permute.xlu0 %5724
    %vm5726 = vcmask 457728
    %v5727 = vsel %vm5726, %v5711, %v5713
    %v5728 = vsel %vm5726, %v5713, %v5715
    %v5729 = vsel %vm5726, %v5715, %v5717
    %v5730 = vsel %vm5726, %v5717, %v5719
    %v5731 = vsel %vm5726, %v5719, %v5721
    %v5732 = vsel %vm5726, %v5721, %v5723
    %v5733 = vsel %vm5726, %v5723, %v5725
    %5741 = vst [vmem:[#allocation3 + $0xa8] sm:$0xf] %v5727
    %5742 = vst [vmem:[#allocation3 + $0xb0] sm:$0xf] %v5728
    %5743 = vst [vmem:[#allocation3 + $0xb8] sm:$0xf] %v5729
    %5744 = vst [vmem:[#allocation3 + $0xc0] sm:$0xf] %v5730
    %5745 = vst [vmem:[#allocation3 + $0xc8] sm:$0xf] %v5731
    %5746 = vst [vmem:[#allocation3 + $0xd0] sm:$0xf] %v5732
    %5747 = vst [vmem:[#allocation3 + $0xd8] sm:$0xf] %v5733
    %v5748 = vld [vmem:[#allocation5] sm:$0xff]
    %v5749 = vld [vmem:[#allocation5 + $0x8] sm:$0xff]
    %v5750 = vld [vmem:[#allocation5 + $0x10] sm:$0xff]
    %v5751 = vld [vmem:[#allocation5 + $0x18] sm:$0xff]
    %v5752 = vld [vmem:[%s6] sm:$0x88]
    %v5753 = vld [vmem:[%s6 + $0x8] sm:$0x88]
    %v5754 = vld [vmem:[%s6 + $0x10] sm:$0x88]
    %v5755 = vld [vmem:[%s6 + $0x18] sm:$0x8]
    %v5760 = vunpack.c.l.b16 %v5752
    %v5761 = vunpack.c.h.b16 %v5752
    %v5762 = vunpack.c.l.b16 %v5753
    %v5763 = vunpack.c.h.b16 %v5753
    %v5764 = vunpack.c.l.b16 %v5754
    %v5765 = vunpack.c.h.b16 %v5754
    %v5766 = vunpack.c.l.b16 %v5755
    %v5767 = vpack.c.b16 %v5760, %v5760
    %v5768 = vpack.c.b16 %v5761, %v5761
    %v5769 = vpack.c.b16 %v5762, %v5762
    %v5770 = vpack.c.b16 %v5763, %v5763
    %v5771 = vpack.c.b16 %v5764, %v5764
    %v5772 = vpack.c.b16 %v5765, %v5765
    %v5773 = vpack.c.b16 %v5766, %v5766
    %v5775 = vshrl.u32 %v5767, 16
    %v5776 = vpack.i.b16 %v5775, %v5775
    %v5778 = vlaneseq
    %v5779 = vshrl.u32 %v5778, 7
    %v5780 = vsub.s32 3, %v5779
    %v5781 = vrot.slane %v5776, %v5780
    %v5783 = vshrl.u32 %v5768, 16
    %v5784 = vpack.i.b16 %v5783, %v5783
    %v5786 = vlaneseq
    %v5787 = vshrl.u32 %v5786, 7
    %v5788 = vsub.s32 3, %v5787
    %v5789 = vrot.slane %v5784, %v5788
    %v5791 = vshrl.u32 %v5769, 16
    %v5792 = vpack.i.b16 %v5791, %v5791
    %v5794 = vlaneseq
    %v5795 = vshrl.u32 %v5794, 7
    %v5796 = vsub.s32 3, %v5795
    %v5797 = vrot.slane %v5792, %v5796
    %v5799 = vshrl.u32 %v5770, 16
    %v5800 = vpack.i.b16 %v5799, %v5799
    %v5802 = vlaneseq
    %v5803 = vshrl.u32 %v5802, 7
    %v5804 = vsub.s32 3, %v5803
    %v5805 = vrot.slane %v5800, %v5804
    %v5807 = vshrl.u32 %v5771, 16
    %v5808 = vpack.i.b16 %v5807, %v5807
    %v5810 = vlaneseq
    %v5811 = vshrl.u32 %v5810, 7
    %v5812 = vsub.s32 3, %v5811
    %v5813 = vrot.slane %v5808, %v5812
    %v5815 = vshrl.u32 %v5772, 16
    %v5816 = vpack.i.b16 %v5815, %v5815
    %v5818 = vlaneseq
    %v5819 = vshrl.u32 %v5818, 7
    %v5820 = vsub.s32 3, %v5819
    %v5821 = vrot.slane %v5816, %v5820
    %v5823 = vshrl.u32 %v5773, 16
    %v5824 = vpack.i.b16 %v5823, %v5823
    %v5826 = vlaneseq
    %v5827 = vshrl.u32 %v5826, 7
    %v5828 = vsub.s32 3, %v5827
    %v5829 = vrot.slane %v5824, %v5828
    %v5837 = vunpack.c.l.b16 %v5781
    %v5838 = vunpack.c.l.b16 %v5789
    %v5839 = vunpack.c.l.b16 %v5797
    %v5840 = vunpack.c.l.b16 %v5805
    %v5841 = vunpack.c.l.b16 %v5813
    %v5842 = vunpack.c.l.b16 %v5821
    %v5843 = vunpack.c.l.b16 %v5829
    %v5844 = vpack.c.b16 %v5838, %v5837
    %v5845 = vpack.c.b16 %v5840, %v5839
    %v5846 = vpack.c.b16 %v5842, %v5841
    %v5847 = vpack.c.b16 %v5843, %v5843
    %5848 = vrot.lane.b32.xlu0 %v5844, 76
    %v5849 = vpop.permute.xlu0 %5848
    %5850 = vrot.lane.b32.xlu0 %v5845, 76
    %v5851 = vpop.permute.xlu0 %5850
    %5852 = vrot.lane.b32.xlu0 %v5846, 76
    %v5853 = vpop.permute.xlu0 %5852
    %5854 = vrot.lane.b32.xlu0 %v5847, 76
    %v5855 = vpop.permute.xlu0 %5854
    %v5856 = vrot.slane %v5849, 4
    %v5857 = vrot.slane %v5851, 4
    %v5858 = vrot.slane %v5853, 4
    %v5859 = vrot.slane %v5855, 4
    %vm5860 = vcmask 621568
    %v5861 = vsel %vm5860, %v5856, %v5849
    %v5862 = vsel %vm4771, %v5856, %v5857
    %v5863 = vsel %vm5860, %v5862, %v5851
    %v5864 = vsel %vm4771, %v5857, %v5858
    %v5865 = vsel %vm5860, %v5864, %v5853
    %v5866 = vsel %vm4771, %v5858, %v5859
    %v5867 = vsel %vm5860, %v5866, %v5855
    %v5872 = vmul.bf16 %v5748, %v5861
    %v5873 = vmul.bf16 %v5749, %v5863
    %v5874 = vmul.bf16 %v5750, %v5865
    %v5875 = vmul.bf16 %v5751, %v5867
    %v5880 = vunpack.c.l.b16 %v5872
    %v5881 = vunpack.c.h.b16 %v5872
    %v5882 = vunpack.c.l.b16 %v5873
    %v5883 = vunpack.c.h.b16 %v5873
    %v5884 = vunpack.c.l.b16 %v5874
    %v5885 = vunpack.c.h.b16 %v5874
    %v5886 = vunpack.c.l.b16 %v5875
    %v5887 = vunpack.c.h.b16 %v5875
    %v5888 = vpack.c.b16 %v5880, %v5880
    %v5889 = vpack.c.b16 %v5881, %v5881
    %v5890 = vpack.c.b16 %v5882, %v5882
    %v5891 = vpack.c.b16 %v5883, %v5883
    %v5892 = vpack.c.b16 %v5884, %v5884
    %v5893 = vpack.c.b16 %v5885, %v5885
    %v5894 = vpack.c.b16 %v5886, %v5886
    %v5895 = vpack.c.b16 %v5887, %v5887
    %5896 = vrot.lane.b32.xlu0 %v5888, 52
    %v5897 = vpop.permute.xlu0 %5896
    %5898 = vrot.lane.b32.xlu0 %v5889, 52
    %v5899 = vpop.permute.xlu0 %5898
    %5900 = vrot.lane.b32.xlu0 %v5890, 52
    %v5901 = vpop.permute.xlu0 %5900
    %5902 = vrot.lane.b32.xlu0 %v5891, 52
    %v5903 = vpop.permute.xlu0 %5902
    %5904 = vrot.lane.b32.xlu0 %v5892, 52
    %v5905 = vpop.permute.xlu0 %5904
    %5906 = vrot.lane.b32.xlu0 %v5893, 52
    %v5907 = vpop.permute.xlu0 %5906
    %5908 = vrot.lane.b32.xlu0 %v5894, 52
    %v5909 = vpop.permute.xlu0 %5908
    %5910 = vrot.lane.b32.xlu0 %v5895, 52
    %v5911 = vpop.permute.xlu0 %5910
    %vm5912 = vcmask 424960
    %v5913 = vsel %vm5912, %v5897, %v5899
    %v5914 = vsel %vm5912, %v5899, %v5901
    %v5915 = vsel %vm5912, %v5901, %v5903
    %v5916 = vsel %vm5912, %v5903, %v5905
    %v5917 = vsel %vm5912, %v5905, %v5907
    %v5918 = vsel %vm5912, %v5907, %v5909
    %v5919 = vsel %vm5912, %v5909, %v5911
    %5927 = vst [vmem:[#allocation3 + $0xa8] sm:$0xf0] %v5913
    %5928 = vst [vmem:[#allocation3 + $0xb0] sm:$0xf0] %v5914
    %5929 = vst [vmem:[#allocation3 + $0xb8] sm:$0xf0] %v5915
    %5930 = vst [vmem:[#allocation3 + $0xc0] sm:$0xf0] %v5916
    %5931 = vst [vmem:[#allocation3 + $0xc8] sm:$0xf0] %v5917
    %5932 = vst [vmem:[#allocation3 + $0xd0] sm:$0xf0] %v5918
    %5933 = vst [vmem:[#allocation3 + $0xd8] sm:$0xf0] %v5919
    %v5934 = vld [vmem:[#allocation5 + $0x4] sm:$0xff]
    %v5935 = vld [vmem:[#allocation5 + $0xc] sm:$0xff]
    %v5936 = vld [vmem:[#allocation5 + $0x14] sm:$0xff]
    %v5937 = vld [vmem:[#allocation5 + $0x1c] sm:$0xf]
    %v5938 = vld [vmem:[%s6 + $0x1c] sm:$0x11]
    %v5939 = vld [vmem:[%s6 + $0x24] sm:$0x11]
    %v5940 = vld [vmem:[%s6 + $0x2c] sm:$0x11]
    %v5941 = vld [vmem:[%s6 + $0x34] sm:$0x1]
    %v5946 = vunpack.c.l.b16 %v5938
    %v5947 = vunpack.c.h.b16 %v5938
    %v5948 = vunpack.c.l.b16 %v5939
    %v5949 = vunpack.c.h.b16 %v5939
    %v5950 = vunpack.c.l.b16 %v5940
    %v5951 = vunpack.c.h.b16 %v5940
    %v5952 = vunpack.c.l.b16 %v5941
    %v5953 = vpack.c.b16 %v5946, %v5946
    %v5954 = vpack.c.b16 %v5947, %v5947
    %v5955 = vpack.c.b16 %v5948, %v5948
    %v5956 = vpack.c.b16 %v5949, %v5949
    %v5957 = vpack.c.b16 %v5950, %v5950
    %v5958 = vpack.c.b16 %v5951, %v5951
    %v5959 = vpack.c.b16 %v5952, %v5952
    %v5961 = vpack.i.b16 %v5953, %v5953
    %v5963 = vlaneseq
    %v5964 = vshrl.u32 %v5963, 7
    %v5965 = vsub.s32 0, %v5964
    %v5966 = vrot.slane %v5961, %v5965
    %v5968 = vpack.i.b16 %v5954, %v5954
    %v5970 = vlaneseq
    %v5971 = vshrl.u32 %v5970, 7
    %v5972 = vsub.s32 0, %v5971
    %v5973 = vrot.slane %v5968, %v5972
    %v5975 = vpack.i.b16 %v5955, %v5955
    %v5977 = vlaneseq
    %v5978 = vshrl.u32 %v5977, 7
    %v5979 = vsub.s32 0, %v5978
    %v5980 = vrot.slane %v5975, %v5979
    %v5982 = vpack.i.b16 %v5956, %v5956
    %v5984 = vlaneseq
    %v5985 = vshrl.u32 %v5984, 7
    %v5986 = vsub.s32 0, %v5985
    %v5987 = vrot.slane %v5982, %v5986
    %v5989 = vpack.i.b16 %v5957, %v5957
    %v5991 = vlaneseq
    %v5992 = vshrl.u32 %v5991, 7
    %v5993 = vsub.s32 0, %v5992
    %v5994 = vrot.slane %v5989, %v5993
    %v5996 = vpack.i.b16 %v5958, %v5958
    %v5998 = vlaneseq
    %v5999 = vshrl.u32 %v5998, 7
    %v6000 = vsub.s32 0, %v5999
    %v6001 = vrot.slane %v5996, %v6000
    %v6003 = vpack.i.b16 %v5959, %v5959
    %v6005 = vlaneseq
    %v6006 = vshrl.u32 %v6005, 7
    %v6007 = vsub.s32 0, %v6006
    %v6008 = vrot.slane %v6003, %v6007
    %v6016 = vunpack.c.l.b16 %v5966
    %v6017 = vunpack.c.l.b16 %v5973
    %v6018 = vunpack.c.l.b16 %v5980
    %v6019 = vunpack.c.l.b16 %v5987
    %v6020 = vunpack.c.l.b16 %v5994
    %v6021 = vunpack.c.l.b16 %v6001
    %v6022 = vunpack.c.l.b16 %v6008
    %v6023 = vpack.c.b16 %v6017, %v6016
    %v6024 = vpack.c.b16 %v6019, %v6018
    %v6025 = vpack.c.b16 %v6021, %v6020
    %v6026 = vpack.c.b16 %v6022, %v6022
    %v6031 = vmul.bf16 %v5934, %v6023
    %v6032 = vmul.bf16 %v5935, %v6024
    %v6033 = vmul.bf16 %v5936, %v6025
    %v6034 = vmul.bf16 %v5937, %v6026
    %v6039 = vunpack.c.l.b16 %v6031
    %v6040 = vunpack.c.h.b16 %v6031
    %v6041 = vunpack.c.l.b16 %v6032
    %v6042 = vunpack.c.h.b16 %v6032
    %v6043 = vunpack.c.l.b16 %v6033
    %v6044 = vunpack.c.h.b16 %v6033
    %v6045 = vunpack.c.l.b16 %v6034
    %v6046 = vpack.c.b16 %v6039, %v6039
    %v6047 = vpack.c.b16 %v6040, %v6040
    %v6048 = vpack.c.b16 %v6041, %v6041
    %v6049 = vpack.c.b16 %v6042, %v6042
    %v6050 = vpack.c.b16 %v6043, %v6043
    %v6051 = vpack.c.b16 %v6044, %v6044
    %v6052 = vpack.c.b16 %v6045, %v6045
    %6060 = vst [vmem:[#allocation3 + $0xe0] sm:$0xf] %v6046
    %6061 = vst [vmem:[#allocation3 + $0xe8] sm:$0xf] %v6047
    %6062 = vst [vmem:[#allocation3 + $0xf0] sm:$0xf] %v6048
    %6063 = vst [vmem:[#allocation3 + $0xf8] sm:$0xf] %v6049
    %6064 = vst [vmem:[#allocation3 + $0x100] sm:$0xf] %v6050
    %6065 = vst [vmem:[#allocation3 + $0x108] sm:$0xf] %v6051
    %6066 = vst [vmem:[#allocation3 + $0x110] sm:$0xf] %v6052
    %v6067 = vld [vmem:[#allocation5 + $0x4] sm:$0xff]
    %v6068 = vld [vmem:[#allocation5 + $0xc] sm:$0xff]
    %v6069 = vld [vmem:[#allocation5 + $0x14] sm:$0xff]
    %v6070 = vld [vmem:[#allocation5 + $0x1c] sm:$0xff]
    %v6071 = vld [vmem:[%s6 + $0x1c] sm:$0x11]
    %v6072 = vld [vmem:[%s6 + $0x24] sm:$0x11]
    %v6073 = vld [vmem:[%s6 + $0x2c] sm:$0x11]
    %v6074 = vld [vmem:[%s6 + $0x34] sm:$0x1]
    %v6079 = vunpack.c.l.b16 %v6071
    %v6080 = vunpack.c.h.b16 %v6071
    %v6081 = vunpack.c.l.b16 %v6072
    %v6082 = vunpack.c.h.b16 %v6072
    %v6083 = vunpack.c.l.b16 %v6073
    %v6084 = vunpack.c.h.b16 %v6073
    %v6085 = vunpack.c.l.b16 %v6074
    %v6086 = vpack.c.b16 %v6079, %v6079
    %v6087 = vpack.c.b16 %v6080, %v6080
    %v6088 = vpack.c.b16 %v6081, %v6081
    %v6089 = vpack.c.b16 %v6082, %v6082
    %v6090 = vpack.c.b16 %v6083, %v6083
    %v6091 = vpack.c.b16 %v6084, %v6084
    %v6092 = vpack.c.b16 %v6085, %v6085
    %v6094 = vshrl.u32 %v6086, 16
    %v6095 = vpack.i.b16 %v6094, %v6094
    %v6097 = vlaneseq
    %v6098 = vshrl.u32 %v6097, 7
    %v6099 = vsub.s32 0, %v6098
    %v6100 = vrot.slane %v6095, %v6099
    %v6102 = vshrl.u32 %v6087, 16
    %v6103 = vpack.i.b16 %v6102, %v6102
    %v6105 = vlaneseq
    %v6106 = vshrl.u32 %v6105, 7
    %v6107 = vsub.s32 0, %v6106
    %v6108 = vrot.slane %v6103, %v6107
    %v6110 = vshrl.u32 %v6088, 16
    %v6111 = vpack.i.b16 %v6110, %v6110
    %v6113 = vlaneseq
    %v6114 = vshrl.u32 %v6113, 7
    %v6115 = vsub.s32 0, %v6114
    %v6116 = vrot.slane %v6111, %v6115
    %v6118 = vshrl.u32 %v6089, 16
    %v6119 = vpack.i.b16 %v6118, %v6118
    %v6121 = vlaneseq
    %v6122 = vshrl.u32 %v6121, 7
    %v6123 = vsub.s32 0, %v6122
    %v6124 = vrot.slane %v6119, %v6123
    %v6126 = vshrl.u32 %v6090, 16
    %v6127 = vpack.i.b16 %v6126, %v6126
    %v6129 = vlaneseq
    %v6130 = vshrl.u32 %v6129, 7
    %v6131 = vsub.s32 0, %v6130
    %v6132 = vrot.slane %v6127, %v6131
    %v6134 = vshrl.u32 %v6091, 16
    %v6135 = vpack.i.b16 %v6134, %v6134
    %v6137 = vlaneseq
    %v6138 = vshrl.u32 %v6137, 7
    %v6139 = vsub.s32 0, %v6138
    %v6140 = vrot.slane %v6135, %v6139
    %v6142 = vshrl.u32 %v6092, 16
    %v6143 = vpack.i.b16 %v6142, %v6142
    %v6145 = vlaneseq
    %v6146 = vshrl.u32 %v6145, 7
    %v6147 = vsub.s32 0, %v6146
    %v6148 = vrot.slane %v6143, %v6147
    %v6156 = vunpack.c.l.b16 %v6100
    %v6157 = vunpack.c.l.b16 %v6108
    %v6158 = vunpack.c.l.b16 %v6116
    %v6159 = vunpack.c.l.b16 %v6124
    %v6160 = vunpack.c.l.b16 %v6132
    %v6161 = vunpack.c.l.b16 %v6140
    %v6162 = vunpack.c.l.b16 %v6148
    %v6163 = vpack.c.b16 %v6157, %v6156
    %v6164 = vpack.c.b16 %v6159, %v6158
    %v6165 = vpack.c.b16 %v6161, %v6160
    %v6166 = vpack.c.b16 %v6162, %v6162
    %6167 = vrot.lane.b32.xlu0 %v6163, 4
    %v6168 = vpop.permute.xlu0 %6167
    %6169 = vrot.lane.b32.xlu0 %v6164, 4
    %v6170 = vpop.permute.xlu0 %6169
    %6171 = vrot.lane.b32.xlu0 %v6165, 4
    %v6172 = vpop.permute.xlu0 %6171
    %6173 = vrot.lane.b32.xlu0 %v6166, 4
    %v6174 = vpop.permute.xlu0 %6173
    %v6175 = vrot.slane %v6168, 4
    %v6176 = vrot.slane %v6170, 4
    %v6177 = vrot.slane %v6172, 4
    %v6178 = vrot.slane %v6174, 4
    %v6179 = vsel %vm679, %v6175, %v6168
    %v6180 = vsel %vm4771, %v6175, %v6176
    %v6181 = vsel %vm679, %v6180, %v6170
    %v6182 = vsel %vm4771, %v6176, %v6177
    %v6183 = vsel %vm679, %v6182, %v6172
    %v6184 = vsel %vm4771, %v6177, %v6178
    %v6185 = vsel %vm679, %v6184, %v6174
    %v6190 = vmul.bf16 %v6067, %v6179
    %v6191 = vmul.bf16 %v6068, %v6181
    %v6192 = vmul.bf16 %v6069, %v6183
    %v6193 = vmul.bf16 %v6070, %v6185
    %v6198 = vunpack.c.l.b16 %v6190
    %v6199 = vunpack.c.h.b16 %v6190
    %v6200 = vunpack.c.l.b16 %v6191
    %v6201 = vunpack.c.h.b16 %v6191
    %v6202 = vunpack.c.l.b16 %v6192
    %v6203 = vunpack.c.h.b16 %v6192
    %v6204 = vunpack.c.l.b16 %v6193
    %v6205 = vunpack.c.h.b16 %v6193
    %v6206 = vpack.c.b16 %v6198, %v6198
    %v6207 = vpack.c.b16 %v6199, %v6199
    %v6208 = vpack.c.b16 %v6200, %v6200
    %v6209 = vpack.c.b16 %v6201, %v6201
    %v6210 = vpack.c.b16 %v6202, %v6202
    %v6211 = vpack.c.b16 %v6203, %v6203
    %v6212 = vpack.c.b16 %v6204, %v6204
    %v6213 = vpack.c.b16 %v6205, %v6205
    %6214 = vrot.lane.b32.xlu0 %v6206, 124
    %v6215 = vpop.permute.xlu0 %6214
    %6216 = vrot.lane.b32.xlu0 %v6207, 124
    %v6217 = vpop.permute.xlu0 %6216
    %6218 = vrot.lane.b32.xlu0 %v6208, 124
    %v6219 = vpop.permute.xlu0 %6218
    %6220 = vrot.lane.b32.xlu0 %v6209, 124
    %v6221 = vpop.permute.xlu0 %6220
    %6222 = vrot.lane.b32.xlu0 %v6210, 124
    %v6223 = vpop.permute.xlu0 %6222
    %6224 = vrot.lane.b32.xlu0 %v6211, 124
    %v6225 = vpop.permute.xlu0 %6224
    %6226 = vrot.lane.b32.xlu0 %v6212, 124
    %v6227 = vpop.permute.xlu0 %6226
    %6228 = vrot.lane.b32.xlu0 %v6213, 124
    %v6229 = vpop.permute.xlu0 %6228
    %v6230 = vsel %vm756, %v6215, %v6217
    %v6231 = vsel %vm756, %v6217, %v6219
    %v6232 = vsel %vm756, %v6219, %v6221
    %v6233 = vsel %vm756, %v6221, %v6223
    %v6234 = vsel %vm756, %v6223, %v6225
    %v6235 = vsel %vm756, %v6225, %v6227
    %v6236 = vsel %vm756, %v6227, %v6229
    %6244 = vst [vmem:[#allocation3 + $0xe0] sm:$0xf0] %v6230
    %6245 = vst [vmem:[#allocation3 + $0xe8] sm:$0xf0] %v6231
    %6246 = vst [vmem:[#allocation3 + $0xf0] sm:$0xf0] %v6232
    %6247 = vst [vmem:[#allocation3 + $0xf8] sm:$0xf0] %v6233
    %6248 = vst [vmem:[#allocation3 + $0x100] sm:$0xf0] %v6234
    %6249 = vst [vmem:[#allocation3 + $0x108] sm:$0xf0] %v6235
    %6250 = vst [vmem:[#allocation3 + $0x110] sm:$0xf0] %v6236
    %v6251 = vld [vmem:[#allocation5 + $0x4] sm:$0xff]
    %v6252 = vld [vmem:[#allocation5 + $0xc] sm:$0xff]
    %v6253 = vld [vmem:[#allocation5 + $0x14] sm:$0xff]
    %v6254 = vld [vmem:[#allocation5 + $0x1c] sm:$0xff]
    %v6255 = vld [vmem:[%s6 + $0x1c] sm:$0x22]
    %v6256 = vld [vmem:[%s6 + $0x24] sm:$0x22]
    %v6257 = vld [vmem:[%s6 + $0x2c] sm:$0x22]
    %v6258 = vld [vmem:[%s6 + $0x34] sm:$0x2]
    %v6263 = vunpack.c.l.b16 %v6255
    %v6264 = vunpack.c.h.b16 %v6255
    %v6265 = vunpack.c.l.b16 %v6256
    %v6266 = vunpack.c.h.b16 %v6256
    %v6267 = vunpack.c.l.b16 %v6257
    %v6268 = vunpack.c.h.b16 %v6257
    %v6269 = vunpack.c.l.b16 %v6258
    %v6270 = vpack.c.b16 %v6263, %v6263
    %v6271 = vpack.c.b16 %v6264, %v6264
    %v6272 = vpack.c.b16 %v6265, %v6265
    %v6273 = vpack.c.b16 %v6266, %v6266
    %v6274 = vpack.c.b16 %v6267, %v6267
    %v6275 = vpack.c.b16 %v6268, %v6268
    %v6276 = vpack.c.b16 %v6269, %v6269
    %v6278 = vpack.i.b16 %v6270, %v6270
    %v6280 = vlaneseq
    %v6281 = vshrl.u32 %v6280, 7
    %v6282 = vsub.s32 1, %v6281
    %v6283 = vrot.slane %v6278, %v6282
    %v6285 = vpack.i.b16 %v6271, %v6271
    %v6287 = vlaneseq
    %v6288 = vshrl.u32 %v6287, 7
    %v6289 = vsub.s32 1, %v6288
    %v6290 = vrot.slane %v6285, %v6289
    %v6292 = vpack.i.b16 %v6272, %v6272
    %v6294 = vlaneseq
    %v6295 = vshrl.u32 %v6294, 7
    %v6296 = vsub.s32 1, %v6295
    %v6297 = vrot.slane %v6292, %v6296
    %v6299 = vpack.i.b16 %v6273, %v6273
    %v6301 = vlaneseq
    %v6302 = vshrl.u32 %v6301, 7
    %v6303 = vsub.s32 1, %v6302
    %v6304 = vrot.slane %v6299, %v6303
    %v6306 = vpack.i.b16 %v6274, %v6274
    %v6308 = vlaneseq
    %v6309 = vshrl.u32 %v6308, 7
    %v6310 = vsub.s32 1, %v6309
    %v6311 = vrot.slane %v6306, %v6310
    %v6313 = vpack.i.b16 %v6275, %v6275
    %v6315 = vlaneseq
    %v6316 = vshrl.u32 %v6315, 7
    %v6317 = vsub.s32 1, %v6316
    %v6318 = vrot.slane %v6313, %v6317
    %v6320 = vpack.i.b16 %v6276, %v6276
    %v6322 = vlaneseq
    %v6323 = vshrl.u32 %v6322, 7
    %v6324 = vsub.s32 1, %v6323
    %v6325 = vrot.slane %v6320, %v6324
    %v6333 = vunpack.c.l.b16 %v6283
    %v6334 = vunpack.c.l.b16 %v6290
    %v6335 = vunpack.c.l.b16 %v6297
    %v6336 = vunpack.c.l.b16 %v6304
    %v6337 = vunpack.c.l.b16 %v6311
    %v6338 = vunpack.c.l.b16 %v6318
    %v6339 = vunpack.c.l.b16 %v6325
    %v6340 = vpack.c.b16 %v6334, %v6333
    %v6341 = vpack.c.b16 %v6336, %v6335
    %v6342 = vpack.c.b16 %v6338, %v6337
    %v6343 = vpack.c.b16 %v6339, %v6339
    %6344 = vrot.lane.b32.xlu0 %v6340, 8
    %v6345 = vpop.permute.xlu0 %6344
    %6346 = vrot.lane.b32.xlu0 %v6341, 8
    %v6347 = vpop.permute.xlu0 %6346
    %6348 = vrot.lane.b32.xlu0 %v6342, 8
    %v6349 = vpop.permute.xlu0 %6348
    %6350 = vrot.lane.b32.xlu0 %v6343, 8
    %v6351 = vpop.permute.xlu0 %6350
    %v6352 = vrot.slane %v6345, 4
    %v6353 = vrot.slane %v6347, 4
    %v6354 = vrot.slane %v6349, 4
    %v6355 = vrot.slane %v6351, 4
    %v6356 = vsel %vm4948, %v6352, %v6345
    %v6357 = vsel %vm4771, %v6352, %v6353
    %v6358 = vsel %vm4948, %v6357, %v6347
    %v6359 = vsel %vm4771, %v6353, %v6354
    %v6360 = vsel %vm4948, %v6359, %v6349
    %v6361 = vsel %vm4771, %v6354, %v6355
    %v6362 = vsel %vm4948, %v6361, %v6351
    %v6367 = vmul.bf16 %v6251, %v6356
    %v6368 = vmul.bf16 %v6252, %v6358
    %v6369 = vmul.bf16 %v6253, %v6360
    %v6370 = vmul.bf16 %v6254, %v6362
    %v6375 = vunpack.c.l.b16 %v6367
    %v6376 = vunpack.c.h.b16 %v6367
    %v6377 = vunpack.c.l.b16 %v6368
    %v6378 = vunpack.c.h.b16 %v6368
    %v6379 = vunpack.c.l.b16 %v6369
    %v6380 = vunpack.c.h.b16 %v6369
    %v6381 = vunpack.c.l.b16 %v6370
    %v6382 = vunpack.c.h.b16 %v6370
    %v6383 = vpack.c.b16 %v6375, %v6375
    %v6384 = vpack.c.b16 %v6376, %v6376
    %v6385 = vpack.c.b16 %v6377, %v6377
    %v6386 = vpack.c.b16 %v6378, %v6378
    %v6387 = vpack.c.b16 %v6379, %v6379
    %v6388 = vpack.c.b16 %v6380, %v6380
    %v6389 = vpack.c.b16 %v6381, %v6381
    %v6390 = vpack.c.b16 %v6382, %v6382
    %6391 = vrot.lane.b32.xlu0 %v6383, 120
    %v6392 = vpop.permute.xlu0 %6391
    %6393 = vrot.lane.b32.xlu0 %v6384, 120
    %v6394 = vpop.permute.xlu0 %6393
    %6395 = vrot.lane.b32.xlu0 %v6385, 120
    %v6396 = vpop.permute.xlu0 %6395
    %6397 = vrot.lane.b32.xlu0 %v6386, 120
    %v6398 = vpop.permute.xlu0 %6397
    %6399 = vrot.lane.b32.xlu0 %v6387, 120
    %v6400 = vpop.permute.xlu0 %6399
    %6401 = vrot.lane.b32.xlu0 %v6388, 120
    %v6402 = vpop.permute.xlu0 %6401
    %6403 = vrot.lane.b32.xlu0 %v6389, 120
    %v6404 = vpop.permute.xlu0 %6403
    %6405 = vrot.lane.b32.xlu0 %v6390, 120
    %v6406 = vpop.permute.xlu0 %6405
    %v6407 = vsel %vm5000, %v6392, %v6394
    %v6408 = vsel %vm5000, %v6394, %v6396
    %v6409 = vsel %vm5000, %v6396, %v6398
    %v6410 = vsel %vm5000, %v6398, %v6400
    %v6411 = vsel %vm5000, %v6400, %v6402
    %v6412 = vsel %vm5000, %v6402, %v6404
    %v6413 = vsel %vm5000, %v6404, %v6406
    %6421 = vst [vmem:[#allocation3 + $0x118] sm:$0xf] %v6407
    %6422 = vst [vmem:[#allocation3 + $0x120] sm:$0xf] %v6408
    %6423 = vst [vmem:[#allocation3 + $0x128] sm:$0xf] %v6409
    %6424 = vst [vmem:[#allocation3 + $0x130] sm:$0xf] %v6410
    %6425 = vst [vmem:[#allocation3 + $0x138] sm:$0xf] %v6411
    %6426 = vst [vmem:[#allocation3 + $0x140] sm:$0xf] %v6412
    %6427 = vst [vmem:[#allocation3 + $0x148] sm:$0xf] %v6413
    %v6428 = vld [vmem:[#allocation5 + $0x4] sm:$0xff]
    %v6429 = vld [vmem:[#allocation5 + $0xc] sm:$0xff]
    %v6430 = vld [vmem:[#allocation5 + $0x14] sm:$0xff]
    %v6431 = vld [vmem:[#allocation5 + $0x1c] sm:$0xff]
    %v6432 = vld [vmem:[%s6 + $0x1c] sm:$0x22]
    %v6433 = vld [vmem:[%s6 + $0x24] sm:$0x22]
    %v6434 = vld [vmem:[%s6 + $0x2c] sm:$0x22]
    %v6435 = vld [vmem:[%s6 + $0x34] sm:$0x2]
    %v6440 = vunpack.c.l.b16 %v6432
    %v6441 = vunpack.c.h.b16 %v6432
    %v6442 = vunpack.c.l.b16 %v6433
    %v6443 = vunpack.c.h.b16 %v6433
    %v6444 = vunpack.c.l.b16 %v6434
    %v6445 = vunpack.c.h.b16 %v6434
    %v6446 = vunpack.c.l.b16 %v6435
    %v6447 = vpack.c.b16 %v6440, %v6440
    %v6448 = vpack.c.b16 %v6441, %v6441
    %v6449 = vpack.c.b16 %v6442, %v6442
    %v6450 = vpack.c.b16 %v6443, %v6443
    %v6451 = vpack.c.b16 %v6444, %v6444
    %v6452 = vpack.c.b16 %v6445, %v6445
    %v6453 = vpack.c.b16 %v6446, %v6446
    %v6455 = vshrl.u32 %v6447, 16
    %v6456 = vpack.i.b16 %v6455, %v6455
    %v6458 = vlaneseq
    %v6459 = vshrl.u32 %v6458, 7
    %v6460 = vsub.s32 1, %v6459
    %v6461 = vrot.slane %v6456, %v6460
    %v6463 = vshrl.u32 %v6448, 16
    %v6464 = vpack.i.b16 %v6463, %v6463
    %v6466 = vlaneseq
    %v6467 = vshrl.u32 %v6466, 7
    %v6468 = vsub.s32 1, %v6467
    %v6469 = vrot.slane %v6464, %v6468
    %v6471 = vshrl.u32 %v6449, 16
    %v6472 = vpack.i.b16 %v6471, %v6471
    %v6474 = vlaneseq
    %v6475 = vshrl.u32 %v6474, 7
    %v6476 = vsub.s32 1, %v6475
    %v6477 = vrot.slane %v6472, %v6476
    %v6479 = vshrl.u32 %v6450, 16
    %v6480 = vpack.i.b16 %v6479, %v6479
    %v6482 = vlaneseq
    %v6483 = vshrl.u32 %v6482, 7
    %v6484 = vsub.s32 1, %v6483
    %v6485 = vrot.slane %v6480, %v6484
    %v6487 = vshrl.u32 %v6451, 16
    %v6488 = vpack.i.b16 %v6487, %v6487
    %v6490 = vlaneseq
    %v6491 = vshrl.u32 %v6490, 7
    %v6492 = vsub.s32 1, %v6491
    %v6493 = vrot.slane %v6488, %v6492
    %v6495 = vshrl.u32 %v6452, 16
    %v6496 = vpack.i.b16 %v6495, %v6495
    %v6498 = vlaneseq
    %v6499 = vshrl.u32 %v6498, 7
    %v6500 = vsub.s32 1, %v6499
    %v6501 = vrot.slane %v6496, %v6500
    %v6503 = vshrl.u32 %v6453, 16
    %v6504 = vpack.i.b16 %v6503, %v6503
    %v6506 = vlaneseq
    %v6507 = vshrl.u32 %v6506, 7
    %v6508 = vsub.s32 1, %v6507
    %v6509 = vrot.slane %v6504, %v6508
    %v6517 = vunpack.c.l.b16 %v6461
    %v6518 = vunpack.c.l.b16 %v6469
    %v6519 = vunpack.c.l.b16 %v6477
    %v6520 = vunpack.c.l.b16 %v6485
    %v6521 = vunpack.c.l.b16 %v6493
    %v6522 = vunpack.c.l.b16 %v6501
    %v6523 = vunpack.c.l.b16 %v6509
    %v6524 = vpack.c.b16 %v6518, %v6517
    %v6525 = vpack.c.b16 %v6520, %v6519
    %v6526 = vpack.c.b16 %v6522, %v6521
    %v6527 = vpack.c.b16 %v6523, %v6523
    %6528 = vrot.lane.b32.xlu0 %v6524, 12
    %v6529 = vpop.permute.xlu0 %6528
    %6530 = vrot.lane.b32.xlu0 %v6525, 12
    %v6531 = vpop.permute.xlu0 %6530
    %6532 = vrot.lane.b32.xlu0 %v6526, 12
    %v6533 = vpop.permute.xlu0 %6532
    %6534 = vrot.lane.b32.xlu0 %v6527, 12
    %v6535 = vpop.permute.xlu0 %6534
    %v6536 = vrot.slane %v6529, 4
    %v6537 = vrot.slane %v6531, 4
    %v6538 = vrot.slane %v6533, 4
    %v6539 = vrot.slane %v6535, 4
    %v6540 = vsel %vm5134, %v6536, %v6529
    %v6541 = vsel %vm4771, %v6536, %v6537
    %v6542 = vsel %vm5134, %v6541, %v6531
    %v6543 = vsel %vm4771, %v6537, %v6538
    %v6544 = vsel %vm5134, %v6543, %v6533
    %v6545 = vsel %vm4771, %v6538, %v6539
    %v6546 = vsel %vm5134, %v6545, %v6535
    %v6551 = vmul.bf16 %v6428, %v6540
    %v6552 = vmul.bf16 %v6429, %v6542
    %v6553 = vmul.bf16 %v6430, %v6544
    %v6554 = vmul.bf16 %v6431, %v6546
    %v6559 = vunpack.c.l.b16 %v6551
    %v6560 = vunpack.c.h.b16 %v6551
    %v6561 = vunpack.c.l.b16 %v6552
    %v6562 = vunpack.c.h.b16 %v6552
    %v6563 = vunpack.c.l.b16 %v6553
    %v6564 = vunpack.c.h.b16 %v6553
    %v6565 = vunpack.c.l.b16 %v6554
    %v6566 = vunpack.c.h.b16 %v6554
    %v6567 = vpack.c.b16 %v6559, %v6559
    %v6568 = vpack.c.b16 %v6560, %v6560
    %v6569 = vpack.c.b16 %v6561, %v6561
    %v6570 = vpack.c.b16 %v6562, %v6562
    %v6571 = vpack.c.b16 %v6563, %v6563
    %v6572 = vpack.c.b16 %v6564, %v6564
    %v6573 = vpack.c.b16 %v6565, %v6565
    %v6574 = vpack.c.b16 %v6566, %v6566
    %6575 = vrot.lane.b32.xlu0 %v6567, 116
    %v6576 = vpop.permute.xlu0 %6575
    %6577 = vrot.lane.b32.xlu0 %v6568, 116
    %v6578 = vpop.permute.xlu0 %6577
    %6579 = vrot.lane.b32.xlu0 %v6569, 116
    %v6580 = vpop.permute.xlu0 %6579
    %6581 = vrot.lane.b32.xlu0 %v6570, 116
    %v6582 = vpop.permute.xlu0 %6581
    %6583 = vrot.lane.b32.xlu0 %v6571, 116
    %v6584 = vpop.permute.xlu0 %6583
    %6585 = vrot.lane.b32.xlu0 %v6572, 116
    %v6586 = vpop.permute.xlu0 %6585
    %6587 = vrot.lane.b32.xlu0 %v6573, 116
    %v6588 = vpop.permute.xlu0 %6587
    %6589 = vrot.lane.b32.xlu0 %v6574, 116
    %v6590 = vpop.permute.xlu0 %6589
    %v6591 = vsel %vm5186, %v6576, %v6578
    %v6592 = vsel %vm5186, %v6578, %v6580
    %v6593 = vsel %vm5186, %v6580, %v6582
    %v6594 = vsel %vm5186, %v6582, %v6584
    %v6595 = vsel %vm5186, %v6584, %v6586
    %v6596 = vsel %vm5186, %v6586, %v6588
    %v6597 = vsel %vm5186, %v6588, %v6590
    %6605 = vst [vmem:[#allocation3 + $0x118] sm:$0xf0] %v6591
    %6606 = vst [vmem:[#allocation3 + $0x120] sm:$0xf0] %v6592
    %6607 = vst [vmem:[#allocation3 + $0x128] sm:$0xf0] %v6593
    %6608 = vst [vmem:[#allocation3 + $0x130] sm:$0xf0] %v6594
    %6609 = vst [vmem:[#allocation3 + $0x138] sm:$0xf0] %v6595
    %6610 = vst [vmem:[#allocation3 + $0x140] sm:$0xf0] %v6596
    %6611 = vst [vmem:[#allocation3 + $0x148] sm:$0xf0] %v6597
    %v6612 = vld [vmem:[#allocation5 + $0x4] sm:$0xff]
    %v6613 = vld [vmem:[#allocation5 + $0xc] sm:$0xff]
    %v6614 = vld [vmem:[#allocation5 + $0x14] sm:$0xff]
    %v6615 = vld [vmem:[#allocation5 + $0x1c] sm:$0xff]
    %v6616 = vld [vmem:[%s6 + $0x1c] sm:$0x44]
    %v6617 = vld [vmem:[%s6 + $0x24] sm:$0x44]
    %v6618 = vld [vmem:[%s6 + $0x2c] sm:$0x44]
    %v6619 = vld [vmem:[%s6 + $0x34] sm:$0x4]
    %v6624 = vunpack.c.l.b16 %v6616
    %v6625 = vunpack.c.h.b16 %v6616
    %v6626 = vunpack.c.l.b16 %v6617
    %v6627 = vunpack.c.h.b16 %v6617
    %v6628 = vunpack.c.l.b16 %v6618
    %v6629 = vunpack.c.h.b16 %v6618
    %v6630 = vunpack.c.l.b16 %v6619
    %v6631 = vpack.c.b16 %v6624, %v6624
    %v6632 = vpack.c.b16 %v6625, %v6625
    %v6633 = vpack.c.b16 %v6626, %v6626
    %v6634 = vpack.c.b16 %v6627, %v6627
    %v6635 = vpack.c.b16 %v6628, %v6628
    %v6636 = vpack.c.b16 %v6629, %v6629
    %v6637 = vpack.c.b16 %v6630, %v6630
    %v6639 = vpack.i.b16 %v6631, %v6631
    %v6641 = vlaneseq
    %v6642 = vshrl.u32 %v6641, 7
    %v6643 = vsub.s32 2, %v6642
    %v6644 = vrot.slane %v6639, %v6643
    %v6646 = vpack.i.b16 %v6632, %v6632
    %v6648 = vlaneseq
    %v6649 = vshrl.u32 %v6648, 7
    %v6650 = vsub.s32 2, %v6649
    %v6651 = vrot.slane %v6646, %v6650
    %v6653 = vpack.i.b16 %v6633, %v6633
    %v6655 = vlaneseq
    %v6656 = vshrl.u32 %v6655, 7
    %v6657 = vsub.s32 2, %v6656
    %v6658 = vrot.slane %v6653, %v6657
    %v6660 = vpack.i.b16 %v6634, %v6634
    %v6662 = vlaneseq
    %v6663 = vshrl.u32 %v6662, 7
    %v6664 = vsub.s32 2, %v6663
    %v6665 = vrot.slane %v6660, %v6664
    %v6667 = vpack.i.b16 %v6635, %v6635
    %v6669 = vlaneseq
    %v6670 = vshrl.u32 %v6669, 7
    %v6671 = vsub.s32 2, %v6670
    %v6672 = vrot.slane %v6667, %v6671
    %v6674 = vpack.i.b16 %v6636, %v6636
    %v6676 = vlaneseq
    %v6677 = vshrl.u32 %v6676, 7
    %v6678 = vsub.s32 2, %v6677
    %v6679 = vrot.slane %v6674, %v6678
    %v6681 = vpack.i.b16 %v6637, %v6637
    %v6683 = vlaneseq
    %v6684 = vshrl.u32 %v6683, 7
    %v6685 = vsub.s32 2, %v6684
    %v6686 = vrot.slane %v6681, %v6685
    %v6694 = vunpack.c.l.b16 %v6644
    %v6695 = vunpack.c.l.b16 %v6651
    %v6696 = vunpack.c.l.b16 %v6658
    %v6697 = vunpack.c.l.b16 %v6665
    %v6698 = vunpack.c.l.b16 %v6672
    %v6699 = vunpack.c.l.b16 %v6679
    %v6700 = vunpack.c.l.b16 %v6686
    %v6701 = vpack.c.b16 %v6695, %v6694
    %v6702 = vpack.c.b16 %v6697, %v6696
    %v6703 = vpack.c.b16 %v6699, %v6698
    %v6704 = vpack.c.b16 %v6700, %v6700
    %6705 = vrot.lane.b32.xlu0 %v6701, 64
    %v6706 = vpop.permute.xlu0 %6705
    %6707 = vrot.lane.b32.xlu0 %v6702, 64
    %v6708 = vpop.permute.xlu0 %6707
    %6709 = vrot.lane.b32.xlu0 %v6703, 64
    %v6710 = vpop.permute.xlu0 %6709
    %6711 = vrot.lane.b32.xlu0 %v6704, 64
    %v6712 = vpop.permute.xlu0 %6711
    %v6713 = vrot.slane %v6706, 4
    %v6714 = vrot.slane %v6708, 4
    %v6715 = vrot.slane %v6710, 4
    %v6716 = vrot.slane %v6712, 4
    %v6717 = vsel %vm2257, %v6713, %v6706
    %v6718 = vsel %vm4771, %v6713, %v6714
    %v6719 = vsel %vm2257, %v6718, %v6708
    %v6720 = vsel %vm4771, %v6714, %v6715
    %v6721 = vsel %vm2257, %v6720, %v6710
    %v6722 = vsel %vm4771, %v6715, %v6716
    %v6723 = vsel %vm2257, %v6722, %v6712
    %v6728 = vmul.bf16 %v6612, %v6717
    %v6729 = vmul.bf16 %v6613, %v6719
    %v6730 = vmul.bf16 %v6614, %v6721
    %v6731 = vmul.bf16 %v6615, %v6723
    %v6736 = vunpack.c.l.b16 %v6728
    %v6737 = vunpack.c.h.b16 %v6728
    %v6738 = vunpack.c.l.b16 %v6729
    %v6739 = vunpack.c.h.b16 %v6729
    %v6740 = vunpack.c.l.b16 %v6730
    %v6741 = vunpack.c.h.b16 %v6730
    %v6742 = vunpack.c.l.b16 %v6731
    %v6743 = vunpack.c.h.b16 %v6731
    %v6744 = vpack.c.b16 %v6736, %v6736
    %v6745 = vpack.c.b16 %v6737, %v6737
    %v6746 = vpack.c.b16 %v6738, %v6738
    %v6747 = vpack.c.b16 %v6739, %v6739
    %v6748 = vpack.c.b16 %v6740, %v6740
    %v6749 = vpack.c.b16 %v6741, %v6741
    %v6750 = vpack.c.b16 %v6742, %v6742
    %v6751 = vpack.c.b16 %v6743, %v6743
    %6752 = vrot.lane.b32.xlu0 %v6744, 64
    %v6753 = vpop.permute.xlu0 %6752
    %6754 = vrot.lane.b32.xlu0 %v6745, 64
    %v6755 = vpop.permute.xlu0 %6754
    %6756 = vrot.lane.b32.xlu0 %v6746, 64
    %v6757 = vpop.permute.xlu0 %6756
    %6758 = vrot.lane.b32.xlu0 %v6747, 64
    %v6759 = vpop.permute.xlu0 %6758
    %6760 = vrot.lane.b32.xlu0 %v6748, 64
    %v6761 = vpop.permute.xlu0 %6760
    %6762 = vrot.lane.b32.xlu0 %v6749, 64
    %v6763 = vpop.permute.xlu0 %6762
    %6764 = vrot.lane.b32.xlu0 %v6750, 64
    %v6765 = vpop.permute.xlu0 %6764
    %6766 = vrot.lane.b32.xlu0 %v6751, 64
    %v6767 = vpop.permute.xlu0 %6766
    %v6768 = vsel %vm2257, %v6753, %v6755
    %v6769 = vsel %vm2257, %v6755, %v6757
    %v6770 = vsel %vm2257, %v6757, %v6759
    %v6771 = vsel %vm2257, %v6759, %v6761
    %v6772 = vsel %vm2257, %v6761, %v6763
    %v6773 = vsel %vm2257, %v6763, %v6765
    %v6774 = vsel %vm2257, %v6765, %v6767
    %6782 = vst [vmem:[#allocation3 + $0x150] sm:$0xf] %v6768
    %6783 = vst [vmem:[#allocation3 + $0x158] sm:$0xf] %v6769
    %6784 = vst [vmem:[#allocation3 + $0x160] sm:$0xf] %v6770
    %6785 = vst [vmem:[#allocation3 + $0x168] sm:$0xf] %v6771
    %6786 = vst [vmem:[#allocation3 + $0x170] sm:$0xf] %v6772
    %6787 = vst [vmem:[#allocation3 + $0x178] sm:$0xf] %v6773
    %6788 = vst [vmem:[#allocation3 + $0x180] sm:$0xf] %v6774
    %v6789 = vld [vmem:[#allocation5 + $0x4] sm:$0xff]
    %v6790 = vld [vmem:[#allocation5 + $0xc] sm:$0xff]
    %v6791 = vld [vmem:[#allocation5 + $0x14] sm:$0xff]
    %v6792 = vld [vmem:[#allocation5 + $0x1c] sm:$0xff]
    %v6793 = vld [vmem:[%s6 + $0x1c] sm:$0x44]
    %v6794 = vld [vmem:[%s6 + $0x24] sm:$0x44]
    %v6795 = vld [vmem:[%s6 + $0x2c] sm:$0x44]
    %v6796 = vld [vmem:[%s6 + $0x34] sm:$0x4]
    %v6801 = vunpack.c.l.b16 %v6793
    %v6802 = vunpack.c.h.b16 %v6793
    %v6803 = vunpack.c.l.b16 %v6794
    %v6804 = vunpack.c.h.b16 %v6794
    %v6805 = vunpack.c.l.b16 %v6795
    %v6806 = vunpack.c.h.b16 %v6795
    %v6807 = vunpack.c.l.b16 %v6796
    %v6808 = vpack.c.b16 %v6801, %v6801
    %v6809 = vpack.c.b16 %v6802, %v6802
    %v6810 = vpack.c.b16 %v6803, %v6803
    %v6811 = vpack.c.b16 %v6804, %v6804
    %v6812 = vpack.c.b16 %v6805, %v6805
    %v6813 = vpack.c.b16 %v6806, %v6806
    %v6814 = vpack.c.b16 %v6807, %v6807
    %v6816 = vshrl.u32 %v6808, 16
    %v6817 = vpack.i.b16 %v6816, %v6816
    %v6819 = vlaneseq
    %v6820 = vshrl.u32 %v6819, 7
    %v6821 = vsub.s32 2, %v6820
    %v6822 = vrot.slane %v6817, %v6821
    %v6824 = vshrl.u32 %v6809, 16
    %v6825 = vpack.i.b16 %v6824, %v6824
    %v6827 = vlaneseq
    %v6828 = vshrl.u32 %v6827, 7
    %v6829 = vsub.s32 2, %v6828
    %v6830 = vrot.slane %v6825, %v6829
    %v6832 = vshrl.u32 %v6810, 16
    %v6833 = vpack.i.b16 %v6832, %v6832
    %v6835 = vlaneseq
    %v6836 = vshrl.u32 %v6835, 7
    %v6837 = vsub.s32 2, %v6836
    %v6838 = vrot.slane %v6833, %v6837
    %v6840 = vshrl.u32 %v6811, 16
    %v6841 = vpack.i.b16 %v6840, %v6840
    %v6843 = vlaneseq
    %v6844 = vshrl.u32 %v6843, 7
    %v6845 = vsub.s32 2, %v6844
    %v6846 = vrot.slane %v6841, %v6845
    %v6848 = vshrl.u32 %v6812, 16
    %v6849 = vpack.i.b16 %v6848, %v6848
    %v6851 = vlaneseq
    %v6852 = vshrl.u32 %v6851, 7
    %v6853 = vsub.s32 2, %v6852
    %v6854 = vrot.slane %v6849, %v6853
    %v6856 = vshrl.u32 %v6813, 16
    %v6857 = vpack.i.b16 %v6856, %v6856
    %v6859 = vlaneseq
    %v6860 = vshrl.u32 %v6859, 7
    %v6861 = vsub.s32 2, %v6860
    %v6862 = vrot.slane %v6857, %v6861
    %v6864 = vshrl.u32 %v6814, 16
    %v6865 = vpack.i.b16 %v6864, %v6864
    %v6867 = vlaneseq
    %v6868 = vshrl.u32 %v6867, 7
    %v6869 = vsub.s32 2, %v6868
    %v6870 = vrot.slane %v6865, %v6869
    %v6878 = vunpack.c.l.b16 %v6822
    %v6879 = vunpack.c.l.b16 %v6830
    %v6880 = vunpack.c.l.b16 %v6838
    %v6881 = vunpack.c.l.b16 %v6846
    %v6882 = vunpack.c.l.b16 %v6854
    %v6883 = vunpack.c.l.b16 %v6862
    %v6884 = vunpack.c.l.b16 %v6870
    %v6885 = vpack.c.b16 %v6879, %v6878
    %v6886 = vpack.c.b16 %v6881, %v6880
    %v6887 = vpack.c.b16 %v6883, %v6882
    %v6888 = vpack.c.b16 %v6884, %v6884
    %6889 = vrot.lane.b32.xlu0 %v6885, 68
    %v6890 = vpop.permute.xlu0 %6889
    %6891 = vrot.lane.b32.xlu0 %v6886, 68
    %v6892 = vpop.permute.xlu0 %6891
    %6893 = vrot.lane.b32.xlu0 %v6887, 68
    %v6894 = vpop.permute.xlu0 %6893
    %6895 = vrot.lane.b32.xlu0 %v6888, 68
    %v6896 = vpop.permute.xlu0 %6895
    %v6897 = vrot.slane %v6890, 4
    %v6898 = vrot.slane %v6892, 4
    %v6899 = vrot.slane %v6894, 4
    %v6900 = vrot.slane %v6896, 4
    %v6901 = vsel %vm2782, %v6897, %v6890
    %v6902 = vsel %vm4771, %v6897, %v6898
    %v6903 = vsel %vm2782, %v6902, %v6892
    %v6904 = vsel %vm4771, %v6898, %v6899
    %v6905 = vsel %vm2782, %v6904, %v6894
    %v6906 = vsel %vm4771, %v6899, %v6900
    %v6907 = vsel %vm2782, %v6906, %v6896
    %v6912 = vmul.bf16 %v6789, %v6901
    %v6913 = vmul.bf16 %v6790, %v6903
    %v6914 = vmul.bf16 %v6791, %v6905
    %v6915 = vmul.bf16 %v6792, %v6907
    %v6920 = vunpack.c.l.b16 %v6912
    %v6921 = vunpack.c.h.b16 %v6912
    %v6922 = vunpack.c.l.b16 %v6913
    %v6923 = vunpack.c.h.b16 %v6913
    %v6924 = vunpack.c.l.b16 %v6914
    %v6925 = vunpack.c.h.b16 %v6914
    %v6926 = vunpack.c.l.b16 %v6915
    %v6927 = vunpack.c.h.b16 %v6915
    %v6928 = vpack.c.b16 %v6920, %v6920
    %v6929 = vpack.c.b16 %v6921, %v6921
    %v6930 = vpack.c.b16 %v6922, %v6922
    %v6931 = vpack.c.b16 %v6923, %v6923
    %v6932 = vpack.c.b16 %v6924, %v6924
    %v6933 = vpack.c.b16 %v6925, %v6925
    %v6934 = vpack.c.b16 %v6926, %v6926
    %v6935 = vpack.c.b16 %v6927, %v6927
    %6936 = vrot.lane.b32.xlu0 %v6928, 60
    %v6937 = vpop.permute.xlu0 %6936
    %6938 = vrot.lane.b32.xlu0 %v6929, 60
    %v6939 = vpop.permute.xlu0 %6938
    %6940 = vrot.lane.b32.xlu0 %v6930, 60
    %v6941 = vpop.permute.xlu0 %6940
    %6942 = vrot.lane.b32.xlu0 %v6931, 60
    %v6943 = vpop.permute.xlu0 %6942
    %6944 = vrot.lane.b32.xlu0 %v6932, 60
    %v6945 = vpop.permute.xlu0 %6944
    %6946 = vrot.lane.b32.xlu0 %v6933, 60
    %v6947 = vpop.permute.xlu0 %6946
    %6948 = vrot.lane.b32.xlu0 %v6934, 60
    %v6949 = vpop.permute.xlu0 %6948
    %6950 = vrot.lane.b32.xlu0 %v6935, 60
    %v6951 = vpop.permute.xlu0 %6950
    %v6952 = vsel %vm2859, %v6937, %v6939
    %v6953 = vsel %vm2859, %v6939, %v6941
    %v6954 = vsel %vm2859, %v6941, %v6943
    %v6955 = vsel %vm2859, %v6943, %v6945
    %v6956 = vsel %vm2859, %v6945, %v6947
    %v6957 = vsel %vm2859, %v6947, %v6949
    %v6958 = vsel %vm2859, %v6949, %v6951
    %6966 = vst [vmem:[#allocation3 + $0x150] sm:$0xf0] %v6952
    %6967 = vst [vmem:[#allocation3 + $0x158] sm:$0xf0] %v6953
    %6968 = vst [vmem:[#allocation3 + $0x160] sm:$0xf0] %v6954
    %6969 = vst [vmem:[#allocation3 + $0x168] sm:$0xf0] %v6955
    %6970 = vst [vmem:[#allocation3 + $0x170] sm:$0xf0] %v6956
    %6971 = vst [vmem:[#allocation3 + $0x178] sm:$0xf0] %v6957
    %6972 = vst [vmem:[#allocation3 + $0x180] sm:$0xf0] %v6958
    %v6973 = vld [vmem:[#allocation5 + $0x4] sm:$0xff]
    %v6974 = vld [vmem:[#allocation5 + $0xc] sm:$0xff]
    %v6975 = vld [vmem:[#allocation5 + $0x14] sm:$0xff]
    %v6976 = vld [vmem:[#allocation5 + $0x1c] sm:$0xff]
    %v6977 = vld [vmem:[%s6 + $0x1c] sm:$0x88]
    %v6978 = vld [vmem:[%s6 + $0x24] sm:$0x88]
    %v6979 = vld [vmem:[%s6 + $0x2c] sm:$0x88]
    %v6980 = vld [vmem:[%s6 + $0x34] sm:$0x8]
    %v6985 = vunpack.c.l.b16 %v6977
    %v6986 = vunpack.c.h.b16 %v6977
    %v6987 = vunpack.c.l.b16 %v6978
    %v6988 = vunpack.c.h.b16 %v6978
    %v6989 = vunpack.c.l.b16 %v6979
    %v6990 = vunpack.c.h.b16 %v6979
    %v6991 = vunpack.c.l.b16 %v6980
    %v6992 = vpack.c.b16 %v6985, %v6985
    %v6993 = vpack.c.b16 %v6986, %v6986
    %v6994 = vpack.c.b16 %v6987, %v6987
    %v6995 = vpack.c.b16 %v6988, %v6988
    %v6996 = vpack.c.b16 %v6989, %v6989
    %v6997 = vpack.c.b16 %v6990, %v6990
    %v6998 = vpack.c.b16 %v6991, %v6991
    %v7000 = vpack.i.b16 %v6992, %v6992
    %v7002 = vlaneseq
    %v7003 = vshrl.u32 %v7002, 7
    %v7004 = vsub.s32 3, %v7003
    %v7005 = vrot.slane %v7000, %v7004
    %v7007 = vpack.i.b16 %v6993, %v6993
    %v7009 = vlaneseq
    %v7010 = vshrl.u32 %v7009, 7
    %v7011 = vsub.s32 3, %v7010
    %v7012 = vrot.slane %v7007, %v7011
    %v7014 = vpack.i.b16 %v6994, %v6994
    %v7016 = vlaneseq
    %v7017 = vshrl.u32 %v7016, 7
    %v7018 = vsub.s32 3, %v7017
    %v7019 = vrot.slane %v7014, %v7018
    %v7021 = vpack.i.b16 %v6995, %v6995
    %v7023 = vlaneseq
    %v7024 = vshrl.u32 %v7023, 7
    %v7025 = vsub.s32 3, %v7024
    %v7026 = vrot.slane %v7021, %v7025
    %v7028 = vpack.i.b16 %v6996, %v6996
    %v7030 = vlaneseq
    %v7031 = vshrl.u32 %v7030, 7
    %v7032 = vsub.s32 3, %v7031
    %v7033 = vrot.slane %v7028, %v7032
    %v7035 = vpack.i.b16 %v6997, %v6997
    %v7037 = vlaneseq
    %v7038 = vshrl.u32 %v7037, 7
    %v7039 = vsub.s32 3, %v7038
    %v7040 = vrot.slane %v7035, %v7039
    %v7042 = vpack.i.b16 %v6998, %v6998
    %v7044 = vlaneseq
    %v7045 = vshrl.u32 %v7044, 7
    %v7046 = vsub.s32 3, %v7045
    %v7047 = vrot.slane %v7042, %v7046
    %v7055 = vunpack.c.l.b16 %v7005
    %v7056 = vunpack.c.l.b16 %v7012
    %v7057 = vunpack.c.l.b16 %v7019
    %v7058 = vunpack.c.l.b16 %v7026
    %v7059 = vunpack.c.l.b16 %v7033
    %v7060 = vunpack.c.l.b16 %v7040
    %v7061 = vunpack.c.l.b16 %v7047
    %v7062 = vpack.c.b16 %v7056, %v7055
    %v7063 = vpack.c.b16 %v7058, %v7057
    %v7064 = vpack.c.b16 %v7060, %v7059
    %v7065 = vpack.c.b16 %v7061, %v7061
    %7066 = vrot.lane.b32.xlu0 %v7062, 72
    %v7067 = vpop.permute.xlu0 %7066
    %7068 = vrot.lane.b32.xlu0 %v7063, 72
    %v7069 = vpop.permute.xlu0 %7068
    %7070 = vrot.lane.b32.xlu0 %v7064, 72
    %v7071 = vpop.permute.xlu0 %7070
    %7072 = vrot.lane.b32.xlu0 %v7065, 72
    %v7073 = vpop.permute.xlu0 %7072
    %v7074 = vrot.slane %v7067, 4
    %v7075 = vrot.slane %v7069, 4
    %v7076 = vrot.slane %v7071, 4
    %v7077 = vrot.slane %v7073, 4
    %v7078 = vsel %vm5674, %v7074, %v7067
    %v7079 = vsel %vm4771, %v7074, %v7075
    %v7080 = vsel %vm5674, %v7079, %v7069
    %v7081 = vsel %vm4771, %v7075, %v7076
    %v7082 = vsel %vm5674, %v7081, %v7071
    %v7083 = vsel %vm4771, %v7076, %v7077
    %v7084 = vsel %vm5674, %v7083, %v7073
    %v7089 = vmul.bf16 %v6973, %v7078
    %v7090 = vmul.bf16 %v6974, %v7080
    %v7091 = vmul.bf16 %v6975, %v7082
    %v7092 = vmul.bf16 %v6976, %v7084
    %v7097 = vunpack.c.l.b16 %v7089
    %v7098 = vunpack.c.h.b16 %v7089
    %v7099 = vunpack.c.l.b16 %v7090
    %v7100 = vunpack.c.h.b16 %v7090
    %v7101 = vunpack.c.l.b16 %v7091
    %v7102 = vunpack.c.h.b16 %v7091
    %v7103 = vunpack.c.l.b16 %v7092
    %v7104 = vunpack.c.h.b16 %v7092
    %v7105 = vpack.c.b16 %v7097, %v7097
    %v7106 = vpack.c.b16 %v7098, %v7098
    %v7107 = vpack.c.b16 %v7099, %v7099
    %v7108 = vpack.c.b16 %v7100, %v7100
    %v7109 = vpack.c.b16 %v7101, %v7101
    %v7110 = vpack.c.b16 %v7102, %v7102
    %v7111 = vpack.c.b16 %v7103, %v7103
    %v7112 = vpack.c.b16 %v7104, %v7104
    %7113 = vrot.lane.b32.xlu0 %v7105, 56
    %v7114 = vpop.permute.xlu0 %7113
    %7115 = vrot.lane.b32.xlu0 %v7106, 56
    %v7116 = vpop.permute.xlu0 %7115
    %7117 = vrot.lane.b32.xlu0 %v7107, 56
    %v7118 = vpop.permute.xlu0 %7117
    %7119 = vrot.lane.b32.xlu0 %v7108, 56
    %v7120 = vpop.permute.xlu0 %7119
    %7121 = vrot.lane.b32.xlu0 %v7109, 56
    %v7122 = vpop.permute.xlu0 %7121
    %7123 = vrot.lane.b32.xlu0 %v7110, 56
    %v7124 = vpop.permute.xlu0 %7123
    %7125 = vrot.lane.b32.xlu0 %v7111, 56
    %v7126 = vpop.permute.xlu0 %7125
    %7127 = vrot.lane.b32.xlu0 %v7112, 56
    %v7128 = vpop.permute.xlu0 %7127
    %v7129 = vsel %vm5726, %v7114, %v7116
    %v7130 = vsel %vm5726, %v7116, %v7118
    %v7131 = vsel %vm5726, %v7118, %v7120
    %v7132 = vsel %vm5726, %v7120, %v7122
    %v7133 = vsel %vm5726, %v7122, %v7124
    %v7134 = vsel %vm5726, %v7124, %v7126
    %v7135 = vsel %vm5726, %v7126, %v7128
    %7143 = vst [vmem:[#allocation3 + $0x188] sm:$0xf] %v7129
    %7144 = vst [vmem:[#allocation3 + $0x190] sm:$0xf] %v7130
    %7145 = vst [vmem:[#allocation3 + $0x198] sm:$0xf] %v7131
    %7146 = vst [vmem:[#allocation3 + $0x1a0] sm:$0xf] %v7132
    %7147 = vst [vmem:[#allocation3 + $0x1a8] sm:$0xf] %v7133
    %7148 = vst [vmem:[#allocation3 + $0x1b0] sm:$0xf] %v7134
    %7149 = vst [vmem:[#allocation3 + $0x1b8] sm:$0xf] %v7135
    %v7150 = vld [vmem:[#allocation5 + $0x4] sm:$0xff]
    %v7151 = vld [vmem:[#allocation5 + $0xc] sm:$0xff]
    %v7152 = vld [vmem:[#allocation5 + $0x14] sm:$0xff]
    %v7153 = vld [vmem:[#allocation5 + $0x1c] sm:$0xff]
    %v7154 = vld [vmem:[%s6 + $0x1c] sm:$0x88]
    %v7155 = vld [vmem:[%s6 + $0x24] sm:$0x88]
    %v7156 = vld [vmem:[%s6 + $0x2c] sm:$0x88]
    %v7157 = vld [vmem:[%s6 + $0x34] sm:$0x8]
    %v7162 = vunpack.c.l.b16 %v7154
    %v7163 = vunpack.c.h.b16 %v7154
    %v7164 = vunpack.c.l.b16 %v7155
    %v7165 = vunpack.c.h.b16 %v7155
    %v7166 = vunpack.c.l.b16 %v7156
    %v7167 = vunpack.c.h.b16 %v7156
    %v7168 = vunpack.c.l.b16 %v7157
    %v7169 = vpack.c.b16 %v7162, %v7162
    %v7170 = vpack.c.b16 %v7163, %v7163
    %v7171 = vpack.c.b16 %v7164, %v7164
    %v7172 = vpack.c.b16 %v7165, %v7165
    %v7173 = vpack.c.b16 %v7166, %v7166
    %v7174 = vpack.c.b16 %v7167, %v7167
    %v7175 = vpack.c.b16 %v7168, %v7168
    %v7177 = vshrl.u32 %v7169, 16
    %v7178 = vpack.i.b16 %v7177, %v7177
    %v7180 = vlaneseq
    %v7181 = vshrl.u32 %v7180, 7
    %v7182 = vsub.s32 3, %v7181
    %v7183 = vrot.slane %v7178, %v7182
    %v7185 = vshrl.u32 %v7170, 16
    %v7186 = vpack.i.b16 %v7185, %v7185
    %v7188 = vlaneseq
    %v7189 = vshrl.u32 %v7188, 7
    %v7190 = vsub.s32 3, %v7189
    %v7191 = vrot.slane %v7186, %v7190
    %v7193 = vshrl.u32 %v7171, 16
    %v7194 = vpack.i.b16 %v7193, %v7193
    %v7196 = vlaneseq
    %v7197 = vshrl.u32 %v7196, 7
    %v7198 = vsub.s32 3, %v7197
    %v7199 = vrot.slane %v7194, %v7198
    %v7201 = vshrl.u32 %v7172, 16
    %v7202 = vpack.i.b16 %v7201, %v7201
    %v7204 = vlaneseq
    %v7205 = vshrl.u32 %v7204, 7
    %v7206 = vsub.s32 3, %v7205
    %v7207 = vrot.slane %v7202, %v7206
    %v7209 = vshrl.u32 %v7173, 16
    %v7210 = vpack.i.b16 %v7209, %v7209
    %v7212 = vlaneseq
    %v7213 = vshrl.u32 %v7212, 7
    %v7214 = vsub.s32 3, %v7213
    %v7215 = vrot.slane %v7210, %v7214
    %v7217 = vshrl.u32 %v7174, 16
    %v7218 = vpack.i.b16 %v7217, %v7217
    %v7220 = vlaneseq
    %v7221 = vshrl.u32 %v7220, 7
    %v7222 = vsub.s32 3, %v7221
    %v7223 = vrot.slane %v7218, %v7222
    %v7225 = vshrl.u32 %v7175, 16
    %v7226 = vpack.i.b16 %v7225, %v7225
    %v7228 = vlaneseq
    %v7229 = vshrl.u32 %v7228, 7
    %v7230 = vsub.s32 3, %v7229
    %v7231 = vrot.slane %v7226, %v7230
    %v7239 = vunpack.c.l.b16 %v7183
    %v7240 = vunpack.c.l.b16 %v7191
    %v7241 = vunpack.c.l.b16 %v7199
    %v7242 = vunpack.c.l.b16 %v7207
    %v7243 = vunpack.c.l.b16 %v7215
    %v7244 = vunpack.c.l.b16 %v7223
    %v7245 = vunpack.c.l.b16 %v7231
    %v7246 = vpack.c.b16 %v7240, %v7239
    %v7247 = vpack.c.b16 %v7242, %v7241
    %v7248 = vpack.c.b16 %v7244, %v7243
    %v7249 = vpack.c.b16 %v7245, %v7245
    %7250 = vrot.lane.b32.xlu0 %v7246, 76
    %v7251 = vpop.permute.xlu0 %7250
    %7252 = vrot.lane.b32.xlu0 %v7247, 76
    %v7253 = vpop.permute.xlu0 %7252
    %7254 = vrot.lane.b32.xlu0 %v7248, 76
    %v7255 = vpop.permute.xlu0 %7254
    %7256 = vrot.lane.b32.xlu0 %v7249, 76
    %v7257 = vpop.permute.xlu0 %7256
    %v7258 = vrot.slane %v7251, 4
    %v7259 = vrot.slane %v7253, 4
    %v7260 = vrot.slane %v7255, 4
    %v7261 = vrot.slane %v7257, 4
    %v7262 = vsel %vm5860, %v7258, %v7251
    %v7263 = vsel %vm4771, %v7258, %v7259
    %v7264 = vsel %vm5860, %v7263, %v7253
    %v7265 = vsel %vm4771, %v7259, %v7260
    %v7266 = vsel %vm5860, %v7265, %v7255
    %v7267 = vsel %vm4771, %v7260, %v7261
    %v7268 = vsel %vm5860, %v7267, %v7257
    %v7273 = vmul.bf16 %v7150, %v7262
    %v7274 = vmul.bf16 %v7151, %v7264
    %v7275 = vmul.bf16 %v7152, %v7266
    %v7276 = vmul.bf16 %v7153, %v7268
    %v7281 = vunpack.c.l.b16 %v7273
    %v7282 = vunpack.c.h.b16 %v7273
    %v7283 = vunpack.c.l.b16 %v7274
    %v7284 = vunpack.c.h.b16 %v7274
    %v7285 = vunpack.c.l.b16 %v7275
    %v7286 = vunpack.c.h.b16 %v7275
    %v7287 = vunpack.c.l.b16 %v7276
    %v7288 = vunpack.c.h.b16 %v7276
    %v7289 = vpack.c.b16 %v7281, %v7281
    %v7290 = vpack.c.b16 %v7282, %v7282
    %v7291 = vpack.c.b16 %v7283, %v7283
    %v7292 = vpack.c.b16 %v7284, %v7284
    %v7293 = vpack.c.b16 %v7285, %v7285
    %v7294 = vpack.c.b16 %v7286, %v7286
    %v7295 = vpack.c.b16 %v7287, %v7287
    %v7296 = vpack.c.b16 %v7288, %v7288
    %7297 = vrot.lane.b32.xlu0 %v7289, 52
    %v7298 = vpop.permute.xlu0 %7297
    %7299 = vrot.lane.b32.xlu0 %v7290, 52
    %v7300 = vpop.permute.xlu0 %7299
    %7301 = vrot.lane.b32.xlu0 %v7291, 52
    %v7302 = vpop.permute.xlu0 %7301
    %7303 = vrot.lane.b32.xlu0 %v7292, 52
    %v7304 = vpop.permute.xlu0 %7303
    %7305 = vrot.lane.b32.xlu0 %v7293, 52
    %v7306 = vpop.permute.xlu0 %7305
    %7307 = vrot.lane.b32.xlu0 %v7294, 52
    %v7308 = vpop.permute.xlu0 %7307
    %7309 = vrot.lane.b32.xlu0 %v7295, 52
    %v7310 = vpop.permute.xlu0 %7309
    %7311 = vrot.lane.b32.xlu0 %v7296, 52
    %v7312 = vpop.permute.xlu0 %7311
    %v7313 = vsel %vm5912, %v7298, %v7300
    %v7314 = vsel %vm5912, %v7300, %v7302
    %v7315 = vsel %vm5912, %v7302, %v7304
    %v7316 = vsel %vm5912, %v7304, %v7306
    %v7317 = vsel %vm5912, %v7306, %v7308
    %v7318 = vsel %vm5912, %v7308, %v7310
    %v7319 = vsel %vm5912, %v7310, %v7312
    %7327 = vst [vmem:[#allocation3 + $0x188] sm:$0xf0] %v7313
    %7328 = vst [vmem:[#allocation3 + $0x190] sm:$0xf0] %v7314
    %7329 = vst [vmem:[#allocation3 + $0x198] sm:$0xf0] %v7315
    %7330 = vst [vmem:[#allocation3 + $0x1a0] sm:$0xf0] %v7316
    %7331 = vst [vmem:[#allocation3 + $0x1a8] sm:$0xf0] %v7317
    %7332 = vst [vmem:[#allocation3 + $0x1b0] sm:$0xf0] %v7318
    %7333 = vst [vmem:[#allocation3 + $0x1b8] sm:$0xf0] %v7319
    %v7334 = vld [vmem:[%s4] sm:$0xf]
    %v7335 = vld [vmem:[%s4 + $0x4] sm:$0xf]
    %v7336 = vld [vmem:[#allocation3] sm:$0xff]
    %v7337 = vld [vmem:[#allocation3 + $0x8] sm:$0xff]
    %v7338 = vld [vmem:[#allocation3 + $0x10] sm:$0xff]
    %v7339 = vld [vmem:[#allocation3 + $0x18] sm:$0xff]
    %v7340 = vld [vmem:[#allocation3 + $0x20] sm:$0xff]
    %v7341 = vld [vmem:[#allocation3 + $0x28] sm:$0xff]
    %v7342 = vld [vmem:[#allocation3 + $0x30] sm:$0xff]
    %v7343 = vld [vmem:[#allocation3 + $0x38] sm:$0xff]
    %v7344 = vld [vmem:[#allocation3 + $0x40] sm:$0xff]
    %v7345 = vld [vmem:[#allocation3 + $0x48] sm:$0xff]
    %v7346 = vld [vmem:[#allocation3 + $0x50] sm:$0xff]
    %v7347 = vld [vmem:[#allocation3 + $0x58] sm:$0xff]
    %v7348 = vld [vmem:[#allocation3 + $0x60] sm:$0xff]
    %v7349 = vld [vmem:[#allocation3 + $0x68] sm:$0xff]
    %v7350 = vld [vmem:[#allocation3 + $0x70] sm:$0xff]
    %v7351 = vld [vmem:[#allocation3 + $0x78] sm:$0xff]
    %v7352 = vld [vmem:[#allocation3 + $0x80] sm:$0xff]
    %v7353 = vld [vmem:[#allocation3 + $0x88] sm:$0xff]
    %v7354 = vld [vmem:[#allocation3 + $0x90] sm:$0xff]
    %v7355 = vld [vmem:[#allocation3 + $0x98] sm:$0xff]
    %v7356 = vld [vmem:[#allocation3 + $0xa0] sm:$0xff]
    %v7357 = vld [vmem:[#allocation3 + $0xa8] sm:$0xff]
    %v7358 = vld [vmem:[#allocation3 + $0xb0] sm:$0xff]
    %v7359 = vld [vmem:[#allocation3 + $0xb8] sm:$0xff]
    %v7360 = vld [vmem:[#allocation3 + $0xc0] sm:$0xff]
    %v7361 = vld [vmem:[#allocation3 + $0xc8] sm:$0xff]
    %v7362 = vld [vmem:[#allocation3 + $0xd0] sm:$0xff]
    %v7363 = vld [vmem:[#allocation3 + $0xd8] sm:$0xff]
    %v7364 = vld [vmem:[#allocation3 + $0xe0] sm:$0xff]
    %v7365 = vld [vmem:[#allocation3 + $0xe8] sm:$0xff]
    %v7366 = vld [vmem:[#allocation3 + $0xf0] sm:$0xff]
    %v7367 = vld [vmem:[#allocation3 + $0xf8] sm:$0xff]
    %v7368 = vld [vmem:[#allocation3 + $0x100] sm:$0xff]
    %v7369 = vld [vmem:[#allocation3 + $0x108] sm:$0xff]
    %v7370 = vld [vmem:[#allocation3 + $0x110] sm:$0xff]
    %v7371 = vld [vmem:[#allocation3 + $0x118] sm:$0xff]
    %v7372 = vld [vmem:[#allocation3 + $0x120] sm:$0xff]
    %v7373 = vld [vmem:[#allocation3 + $0x128] sm:$0xff]
    %v7374 = vld [vmem:[#allocation3 + $0x130] sm:$0xff]
    %v7375 = vld [vmem:[#allocation3 + $0x138] sm:$0xff]
    %v7376 = vld [vmem:[#allocation3 + $0x140] sm:$0xff]
    %v7377 = vld [vmem:[#allocation3 + $0x148] sm:$0xff]
    %v7378 = vld [vmem:[#allocation3 + $0x150] sm:$0xff]
    %v7379 = vld [vmem:[#allocation3 + $0x158] sm:$0xff]
    %v7380 = vld [vmem:[#allocation3 + $0x160] sm:$0xff]
    %v7381 = vld [vmem:[#allocation3 + $0x168] sm:$0xff]
    %v7382 = vld [vmem:[#allocation3 + $0x170] sm:$0xff]
    %v7383 = vld [vmem:[#allocation3 + $0x178] sm:$0xff]
    %v7384 = vld [vmem:[#allocation3 + $0x180] sm:$0xff]
    %v7385 = vld [vmem:[#allocation3 + $0x188] sm:$0xff]
    %v7386 = vld [vmem:[#allocation3 + $0x190] sm:$0xff]
    %v7387 = vld [vmem:[#allocation3 + $0x198] sm:$0xff]
    %v7388 = vld [vmem:[#allocation3 + $0x1a0] sm:$0xff]
    %v7389 = vld [vmem:[#allocation3 + $0x1a8] sm:$0xff]
    %v7390 = vld [vmem:[#allocation3 + $0x1b0] sm:$0xff]
    %v7391 = vld [vmem:[#allocation3 + $0x1b8] sm:$0xff]
    %v7392 = vld [vmem:[%s5] sm:$0xff]
    %v7393 = vld [vmem:[%s5 + $0x8] sm:$0xff]
    %7395 = vset.pattern.permute.xlu0 0
    %7396 = vperm.xlu0 %7395, %v7392
    %v7397 = vpop.permute.xlu0 %7396
    %7400 = vset.pattern.permute.xlu0 0
    %7401 = vperm.xlu0 %7400, %v7393
    %v7402 = vpop.permute.xlu0 %7401
    %v7406 = vunpack.c.l.b16 %v7334
    %v7407 = vunpack.c.l.b16 %v7335
    %v7408 = vpack.c.b16 %v7407, %v7406
    %7410 = vmatprep.subr.bf16.mxu0 %v7337
    %7411 = vmatpush1.bf16.msra.mxu0 %v7336
    %7412 = vmatprep.subr.bf16.mxu0 %v7344
    %7413 = vmatpush1.bf16.msra.mxu0 %v7343
    %7414 = vmatprep.subr.bf16.mxu0 %v7351
    %7415 = vmatpush1.bf16.msra.mxu0 %v7350
    %7416 = vmatprep.subr.bf16.mxu0 %v7358
    %7417 = vmatpush1.bf16.msra.mxu0 %v7357
    %7418 = vmatprep.subr.bf16.mxu0 %v7365
    %7419 = vmatpush1.bf16.msra.mxu0 %v7364
    %7420 = vmatprep.subr.bf16.mxu0 %v7372
    %7421 = vmatpush1.bf16.msra.mxu0 %v7371
    %7422 = vmatprep.subr.bf16.mxu0 %v7379
    %7423 = vmatpush1.bf16.msra.mxu0 %v7378
    %7424 = vmatprep.subr.bf16.mxu0 %v7386
    %7425 = vmatpush1.bf16.msra.mxu0 %v7385
    %7426 = vmatprep.subr.bf16.mxu0 0
    %7427 = vmatpush1.bf16.msra.mxu0 0
    %7428 = vmatprep.subr.bf16.mxu0 0
    %7429 = vmatpush1.bf16.msra.mxu0 0
    %7430 = vmatprep.subr.bf16.mxu0 0
    %7431 = vmatpush1.bf16.msra.mxu0 0
    %7432 = vmatprep.subr.bf16.mxu0 0
    %7433 = vmatpush1.bf16.msra.mxu0 0
    %7434 = vmatprep.subr.bf16.mxu0 0
    %7435 = vmatpush1.bf16.msra.mxu0 0
    %7436 = vmatprep.subr.bf16.mxu0 0
    %7437 = vmatpush1.bf16.msra.mxu0 0
    %7438 = vmatprep.subr.bf16.mxu0 0
    %7439 = vmatpush1.bf16.msra.mxu0 0
    %7440 = vmatprep.subr.bf16.mxu0 0
    %7441 = vmatpush1.bf16.msra.mxu0 0
    %7442 = vmatprep.mubr.bf16.mxu0 0
    %7443 = vmatmul.mubr.bf16.gmra.mrb[0].mxu0 %v7408
    %v7444 = vpop.f32.mrb[0].mxu0
    %v7445 = vadd.f32 %v7397, %v7444
    %v7446 = vpop.f32.mrb[0].mxu0
    %v7447 = vadd.f32 %v7397, %v7446
    %v7448 = vpop.f32.mrb[0].mxu0
    %v7449 = vadd.f32 %v7402, %v7448
    %v7450 = vpop.f32.mrb[0].mxu0
    %v7451 = vadd.f32 %v7402, %v7450
    %7452 = vdwg.mxu0
    %7453 = vmatprep.subr.bf16.mxu0 %v7339
    %7454 = vmatpush1.bf16.msra.mxu0 %v7338
    %7455 = vmatprep.subr.bf16.mxu0 %v7346
    %7456 = vmatpush1.bf16.msra.mxu0 %v7345
    %7457 = vmatprep.subr.bf16.mxu0 %v7353
    %7458 = vmatpush1.bf16.msra.mxu0 %v7352
    %7459 = vmatprep.subr.bf16.mxu0 %v7360
    %7460 = vmatpush1.bf16.msra.mxu0 %v7359
    %7461 = vmatprep.subr.bf16.mxu0 %v7367
    %7462 = vmatpush1.bf16.msra.mxu0 %v7366
    %7463 = vmatprep.subr.bf16.mxu0 %v7374
    %7464 = vmatpush1.bf16.msra.mxu0 %v7373
    %7465 = vmatprep.subr.bf16.mxu0 %v7381
    %7466 = vmatpush1.bf16.msra.mxu0 %v7380
    %7467 = vmatprep.subr.bf16.mxu0 %v7388
    %7468 = vmatpush1.bf16.msra.mxu0 %v7387
    %7469 = vmatprep.subr.bf16.mxu0 0
    %7470 = vmatpush1.bf16.msra.mxu0 0
    %7471 = vmatprep.subr.bf16.mxu0 0
    %7472 = vmatpush1.bf16.msra.mxu0 0
    %7473 = vmatprep.subr.bf16.mxu0 0
    %7474 = vmatpush1.bf16.msra.mxu0 0
    %7475 = vmatprep.subr.bf16.mxu0 0
    %7476 = vmatpush1.bf16.msra.mxu0 0
    %7477 = vmatprep.subr.bf16.mxu0 0
    %7478 = vmatpush1.bf16.msra.mxu0 0
    %7479 = vmatprep.subr.bf16.mxu0 0
    %7480 = vmatpush1.bf16.msra.mxu0 0
    %7481 = vmatprep.subr.bf16.mxu0 0
    %7482 = vmatpush1.bf16.msra.mxu0 0
    %7483 = vmatprep.subr.bf16.mxu0 0
    %7484 = vmatpush1.bf16.msra.mxu0 0
    %7485 = vmatprep.mubr.bf16.mxu0 0
    %7486 = vmatmul.mubr.bf16.gmra.mrb[0].mxu0 %v7408
    %v7487 = vpop.f32.mrb[0].mxu0
    %v7488 = vadd.f32 %v7397, %v7487
    %v7489 = vpop.f32.mrb[0].mxu0
    %v7490 = vadd.f32 %v7397, %v7489
    %v7491 = vpop.f32.mrb[0].mxu0
    %v7492 = vadd.f32 %v7402, %v7491
    %v7493 = vpop.f32.mrb[0].mxu0
    %v7494 = vadd.f32 %v7402, %v7493
    %7495 = vdwg.mxu0
    %7496 = vmatprep.subr.bf16.mxu0 %v7341
    %7497 = vmatpush1.bf16.msra.mxu0 %v7340
    %7498 = vmatprep.subr.bf16.mxu0 %v7348
    %7499 = vmatpush1.bf16.msra.mxu0 %v7347
    %7500 = vmatprep.subr.bf16.mxu0 %v7355
    %7501 = vmatpush1.bf16.msra.mxu0 %v7354
    %7502 = vmatprep.subr.bf16.mxu0 %v7362
    %7503 = vmatpush1.bf16.msra.mxu0 %v7361
    %7504 = vmatprep.subr.bf16.mxu0 %v7369
    %7505 = vmatpush1.bf16.msra.mxu0 %v7368
    %7506 = vmatprep.subr.bf16.mxu0 %v7376
    %7507 = vmatpush1.bf16.msra.mxu0 %v7375
    %7508 = vmatprep.subr.bf16.mxu0 %v7383
    %7509 = vmatpush1.bf16.msra.mxu0 %v7382
    %7510 = vmatprep.subr.bf16.mxu0 %v7390
    %7511 = vmatpush1.bf16.msra.mxu0 %v7389
    %7512 = vmatprep.subr.bf16.mxu0 0
    %7513 = vmatpush1.bf16.msra.mxu0 0
    %7514 = vmatprep.subr.bf16.mxu0 0
    %7515 = vmatpush1.bf16.msra.mxu0 0
    %7516 = vmatprep.subr.bf16.mxu0 0
    %7517 = vmatpush1.bf16.msra.mxu0 0
    %7518 = vmatprep.subr.bf16.mxu0 0
    %7519 = vmatpush1.bf16.msra.mxu0 0
    %7520 = vmatprep.subr.bf16.mxu0 0
    %7521 = vmatpush1.bf16.msra.mxu0 0
    %7522 = vmatprep.subr.bf16.mxu0 0
    %7523 = vmatpush1.bf16.msra.mxu0 0
    %7524 = vmatprep.subr.bf16.mxu0 0
    %7525 = vmatpush1.bf16.msra.mxu0 0
    %7526 = vmatprep.subr.bf16.mxu0 0
    %7527 = vmatpush1.bf16.msra.mxu0 0
    %7528 = vmatprep.mubr.bf16.mxu0 0
    %7529 = vmatmul.mubr.bf16.gmra.mrb[0].mxu0 %v7408
    %v7530 = vpop.f32.mrb[0].mxu0
    %v7531 = vadd.f32 %v7397, %v7530
    %v7532 = vpop.f32.mrb[0].mxu0
    %v7533 = vadd.f32 %v7397, %v7532
    %v7534 = vpop.f32.mrb[0].mxu0
    %v7535 = vadd.f32 %v7402, %v7534
    %v7536 = vpop.f32.mrb[0].mxu0
    %v7537 = vadd.f32 %v7402, %v7536
    %7538 = vdwg.mxu0
    %7539 = vmatprep.subr.bf16.mxu0 0
    %7540 = vmatpush1.bf16.msra.mxu0 %v7342
    %7541 = vmatprep.subr.bf16.mxu0 0
    %7542 = vmatpush1.bf16.msra.mxu0 %v7349
    %7543 = vmatprep.subr.bf16.mxu0 0
    %7544 = vmatpush1.bf16.msra.mxu0 %v7356
    %7545 = vmatprep.subr.bf16.mxu0 0
    %7546 = vmatpush1.bf16.msra.mxu0 %v7363
    %7547 = vmatprep.subr.bf16.mxu0 0
    %7548 = vmatpush1.bf16.msra.mxu0 %v7370
    %7549 = vmatprep.subr.bf16.mxu0 0
    %7550 = vmatpush1.bf16.msra.mxu0 %v7377
    %7551 = vmatprep.subr.bf16.mxu0 0
    %7552 = vmatpush1.bf16.msra.mxu0 %v7384
    %7553 = vmatprep.subr.bf16.mxu0 0
    %7554 = vmatpush1.bf16.msra.mxu0 %v7391
    %7555 = vmatprep.subr.bf16.mxu0 0
    %7556 = vmatpush1.bf16.msra.mxu0 0
    %7557 = vmatprep.subr.bf16.mxu0 0
    %7558 = vmatpush1.bf16.msra.mxu0 0
    %7559 = vmatprep.subr.bf16.mxu0 0
    %7560 = vmatpush1.bf16.msra.mxu0 0
    %7561 = vmatprep.subr.bf16.mxu0 0
    %7562 = vmatpush1.bf16.msra.mxu0 0
    %7563 = vmatprep.subr.bf16.mxu0 0
    %7564 = vmatpush1.bf16.msra.mxu0 0
    %7565 = vmatprep.subr.bf16.mxu0 0
    %7566 = vmatpush1.bf16.msra.mxu0 0
    %7567 = vmatprep.subr.bf16.mxu0 0
    %7568 = vmatpush1.bf16.msra.mxu0 0
    %7569 = vmatprep.subr.bf16.mxu0 0
    %7570 = vmatpush1.bf16.msra.mxu0 0
    %7571 = vmatprep.mubr.bf16.mxu0 0
    %7572 = vmatmul.mubr.bf16.gmra.mrb[0].mxu0 %v7408
    %v7573 = vpop.f32.mrb[0].mxu0
    %v7574 = vadd.f32 %v7397, %v7573
    %v7575 = vpop.f32.mrb[0].mxu0
    %v7576 = vpop.f32.mrb[0].mxu0
    %v7577 = vadd.f32 %v7402, %v7576
    %v7578 = vpop.f32.mrb[0].mxu0
    %7579 = vdwg.mxu0
    %vm7580 = vcmp.ge.f32.partialorder %v7445, 0.0
    %vm7581 = vcmp.ge.f32.partialorder %v7447, 0.0
    %vm7582 = vcmp.ge.f32.partialorder %v7488, 0.0
    %vm7583 = vcmp.ge.f32.partialorder %v7490, 0.0
    %vm7584 = vcmp.ge.f32.partialorder %v7531, 0.0
    %vm7585 = vcmp.ge.f32.partialorder %v7533, 0.0
    %vm7586 = vcmp.ge.f32.partialorder %v7574, 0.0
    %vm7587 = vcmp.ge.f32.partialorder %v7449, 0.0
    %vm7588 = vcmp.ge.f32.partialorder %v7451, 0.0
    %vm7589 = vcmp.ge.f32.partialorder %v7492, 0.0
    %vm7590 = vcmp.ge.f32.partialorder %v7494, 0.0
    %vm7591 = vcmp.ge.f32.partialorder %v7535, 0.0
    %vm7592 = vcmp.ge.f32.partialorder %v7537, 0.0
    %vm7593 = vcmp.ge.f32.partialorder %v7577, 0.0
    %v7594 = vmul.f32 %v7445, 0.01
    %v7595 = vmul.f32 %v7447, 0.01
    %v7596 = vmul.f32 %v7488, 0.01
    %v7597 = vmul.f32 %v7490, 0.01
    %v7598 = vmul.f32 %v7531, 0.01
    %v7599 = vmul.f32 %v7533, 0.01
    %v7600 = vmul.f32 %v7574, 0.01
    %v7601 = vmul.f32 %v7449, 0.01
    %v7602 = vmul.f32 %v7451, 0.01
    %v7603 = vmul.f32 %v7492, 0.01
    %v7604 = vmul.f32 %v7494, 0.01
    %v7605 = vmul.f32 %v7535, 0.01
    %v7606 = vmul.f32 %v7537, 0.01
    %v7607 = vmul.f32 %v7577, 0.01
    %v7608 = vsel %vm7580, %v7445, %v7594
    %v7609 = vsel %vm7581, %v7447, %v7595
    %v7610 = vsel %vm7582, %v7488, %v7596
    %v7611 = vsel %vm7583, %v7490, %v7597
    %v7612 = vsel %vm7584, %v7531, %v7598
    %v7613 = vsel %vm7585, %v7533, %v7599
    %v7614 = vsel %vm7586, %v7574, %v7600
    %v7615 = vsel %vm7587, %v7449, %v7601
    %v7616 = vsel %vm7588, %v7451, %v7602
    %v7617 = vsel %vm7589, %v7492, %v7603
    %v7618 = vsel %vm7590, %v7494, %v7604
    %v7619 = vsel %vm7591, %v7535, %v7605
    %v7620 = vsel %vm7592, %v7537, %v7606
    %v7621 = vsel %vm7593, %v7577, %v7607
    %v7622 = vpack.c.bf16 %v7615, %v7608
    %v7623 = vpack.c.bf16 %v7616, %v7609
    %v7624 = vpack.c.bf16 %v7617, %v7610
    %v7625 = vpack.c.bf16 %v7618, %v7611
    %v7626 = vpack.c.bf16 %v7619, %v7612
    %v7627 = vpack.c.bf16 %v7620, %v7613
    %v7628 = vpack.c.bf16 %v7621, %v7614
    %7629 = vst [vmem:[#allocation6] sm:$0xff] %v7622
    %7630 = vst [vmem:[#allocation6 + $0x8] sm:$0xff] %v7623
    %7631 = vst [vmem:[#allocation6 + $0x10] sm:$0xff] %v7624
    %7632 = vst [vmem:[#allocation6 + $0x18] sm:$0xff] %v7625
    %7633 = vst [vmem:[#allocation6 + $0x20] sm:$0xff] %v7626
    %7634 = vst [vmem:[#allocation6 + $0x28] sm:$0xff] %v7627
    %7635 = vst [vmem:[#allocation6 + $0x30] sm:$0xff] %v7628
    %v7636 = vld [vmem:[#allocation6] sm:$0xff]
    %v7637 = vld [vmem:[#allocation6 + $0x8] sm:$0xff]
    %v7638 = vld [vmem:[#allocation6 + $0x10] sm:$0xff]
    %v7639 = vld [vmem:[%s9] sm:$0x11]
    %v7640 = vld [vmem:[%s9 + $0x8] sm:$0x1]
    %v7643 = vunpack.c.l.b16 %v7639
    %v7644 = vunpack.c.h.b16 %v7639
    %v7645 = vunpack.c.l.b16 %v7640
    %v7646 = vpack.c.b16 %v7643, %v7643
    %v7647 = vpack.c.b16 %v7644, %v7644
    %v7648 = vpack.c.b16 %v7645, %v7645
    %v7650 = vpack.i.b16 %v7646, %v7646
    %v7652 = vlaneseq
    %v7653 = vshrl.u32 %v7652, 7
    %v7654 = vsub.s32 0, %v7653
    %v7655 = vrot.slane %v7650, %v7654
    %v7657 = vpack.i.b16 %v7647, %v7647
    %v7659 = vlaneseq
    %v7660 = vshrl.u32 %v7659, 7
    %v7661 = vsub.s32 0, %v7660
    %v7662 = vrot.slane %v7657, %v7661
    %v7664 = vpack.i.b16 %v7648, %v7648
    %v7666 = vlaneseq
    %v7667 = vshrl.u32 %v7666, 7
    %v7668 = vsub.s32 0, %v7667
    %v7669 = vrot.slane %v7664, %v7668
    %v7670 = vmul.bf16 %v7636, %v7655
    %v7671 = vmul.bf16 %v7637, %v7662
    %v7672 = vmul.bf16 %v7638, %v7669
    %7673 = vst [vmem:[#allocation4] sm:$0xff] %v7670
    %7674 = vst [vmem:[#allocation4 + $0x8] sm:$0xff] %v7671
    %7675 = vst [vmem:[#allocation4 + $0x10] sm:$0xff] %v7672
    %v7676 = vld [vmem:[#allocation6] sm:$0xff]
    %v7677 = vld [vmem:[#allocation6 + $0x8] sm:$0xff]
    %v7678 = vld [vmem:[#allocation6 + $0x10] sm:$0xff]
    %v7679 = vld [vmem:[#allocation6 + $0x18] sm:$0xff]
    %v7680 = vld [vmem:[%s9] sm:$0x11]
    %v7681 = vld [vmem:[%s9 + $0x8] sm:$0x1]
    %v7684 = vunpack.c.l.b16 %v7680
    %v7685 = vunpack.c.h.b16 %v7680
    %v7686 = vunpack.c.l.b16 %v7681
    %v7687 = vpack.c.b16 %v7684, %v7684
    %v7688 = vpack.c.b16 %v7685, %v7685
    %v7689 = vpack.c.b16 %v7686, %v7686
    %v7691 = vshrl.u32 %v7687, 16
    %v7692 = vpack.i.b16 %v7691, %v7691
    %v7694 = vlaneseq
    %v7695 = vshrl.u32 %v7694, 7
    %v7696 = vsub.s32 0, %v7695
    %v7697 = vrot.slane %v7692, %v7696
    %v7699 = vshrl.u32 %v7688, 16
    %v7700 = vpack.i.b16 %v7699, %v7699
    %v7702 = vlaneseq
    %v7703 = vshrl.u32 %v7702, 7
    %v7704 = vsub.s32 0, %v7703
    %v7705 = vrot.slane %v7700, %v7704
    %v7707 = vshrl.u32 %v7689, 16
    %v7708 = vpack.i.b16 %v7707, %v7707
    %v7710 = vlaneseq
    %v7711 = vshrl.u32 %v7710, 7
    %v7712 = vsub.s32 0, %v7711
    %v7713 = vrot.slane %v7708, %v7712
    %7717 = vrot.lane.b32.xlu0 %v7697, 8
    %v7718 = vpop.permute.xlu0 %7717
    %7719 = vrot.lane.b32.xlu0 %v7705, 8
    %v7720 = vpop.permute.xlu0 %7719
    %7721 = vrot.lane.b32.xlu0 %v7713, 8
    %v7722 = vpop.permute.xlu0 %7721
    %v7723 = vsel %vm4948, %v7718, %v7720
    %v7724 = vsel %vm4948, %v7720, %v7722
    %v7729 = vmul.bf16 %v7676, %v7718
    %v7730 = vmul.bf16 %v7677, %v7723
    %v7731 = vmul.bf16 %v7678, %v7724
    %v7732 = vmul.bf16 %v7679, %v7722
    %7737 = vrot.lane.b32.xlu0 %v7729, 120
    %v7738 = vpop.permute.xlu0 %7737
    %7739 = vrot.lane.b32.xlu0 %v7730, 120
    %v7740 = vpop.permute.xlu0 %7739
    %7741 = vrot.lane.b32.xlu0 %v7731, 120
    %v7742 = vpop.permute.xlu0 %7741
    %7743 = vrot.lane.b32.xlu0 %v7732, 120
    %v7744 = vpop.permute.xlu0 %7743
    %v7745 = vsel %vm5000, %v7738, %v7740
    %v7746 = vsel %vm5000, %v7740, %v7742
    %v7747 = vsel %vm5000, %v7742, %v7744
    %7751 = vst [vmem:[#allocation4 + $0x18] sm:$0xff] %v7745
    %7752 = vst [vmem:[#allocation4 + $0x20] sm:$0xff] %v7746
    %7753 = vst [vmem:[#allocation4 + $0x28] sm:$0xff] %v7747
    %v7754 = vld [vmem:[#allocation6] sm:$0xff]
    %v7755 = vld [vmem:[#allocation6 + $0x8] sm:$0xff]
    %v7756 = vld [vmem:[#allocation6 + $0x10] sm:$0xff]
    %v7757 = vld [vmem:[#allocation6 + $0x18] sm:$0xff]
    %v7758 = vld [vmem:[%s9] sm:$0x22]
    %v7759 = vld [vmem:[%s9 + $0x8] sm:$0x2]
    %v7762 = vunpack.c.l.b16 %v7758
    %v7763 = vunpack.c.h.b16 %v7758
    %v7764 = vunpack.c.l.b16 %v7759
    %v7765 = vpack.c.b16 %v7762, %v7762
    %v7766 = vpack.c.b16 %v7763, %v7763
    %v7767 = vpack.c.b16 %v7764, %v7764
    %v7769 = vpack.i.b16 %v7765, %v7765
    %v7771 = vlaneseq
    %v7772 = vshrl.u32 %v7771, 7
    %v7773 = vsub.s32 1, %v7772
    %v7774 = vrot.slane %v7769, %v7773
    %v7776 = vpack.i.b16 %v7766, %v7766
    %v7778 = vlaneseq
    %v7779 = vshrl.u32 %v7778, 7
    %v7780 = vsub.s32 1, %v7779
    %v7781 = vrot.slane %v7776, %v7780
    %v7783 = vpack.i.b16 %v7767, %v7767
    %v7785 = vlaneseq
    %v7786 = vshrl.u32 %v7785, 7
    %v7787 = vsub.s32 1, %v7786
    %v7788 = vrot.slane %v7783, %v7787
    %7792 = vrot.lane.b32.xlu0 %v7774, 16
    %v7793 = vpop.permute.xlu0 %7792
    %7794 = vrot.lane.b32.xlu0 %v7781, 16
    %v7795 = vpop.permute.xlu0 %7794
    %7796 = vrot.lane.b32.xlu0 %v7788, 16
    %v7797 = vpop.permute.xlu0 %7796
    %vm7798 = vcmask 130048
    %v7799 = vsel %vm7798, %v7793, %v7795
    %v7800 = vsel %vm7798, %v7795, %v7797
    %v7805 = vmul.bf16 %v7754, %v7793
    %v7806 = vmul.bf16 %v7755, %v7799
    %v7807 = vmul.bf16 %v7756, %v7800
    %v7808 = vmul.bf16 %v7757, %v7797
    %7813 = vrot.lane.b32.xlu0 %v7805, 112
    %v7814 = vpop.permute.xlu0 %7813
    %7815 = vrot.lane.b32.xlu0 %v7806, 112
    %v7816 = vpop.permute.xlu0 %7815
    %7817 = vrot.lane.b32.xlu0 %v7807, 112
    %v7818 = vpop.permute.xlu0 %7817
    %7819 = vrot.lane.b32.xlu0 %v7808, 112
    %v7820 = vpop.permute.xlu0 %7819
    %vm7821 = vcmask 916480
    %v7822 = vsel %vm7821, %v7814, %v7816
    %v7823 = vsel %vm7821, %v7816, %v7818
    %v7824 = vsel %vm7821, %v7818, %v7820
    %7828 = vst [vmem:[#allocation4 + $0x30] sm:$0xff] %v7822
    %7829 = vst [vmem:[#allocation4 + $0x38] sm:$0xff] %v7823
    %7830 = vst [vmem:[#allocation4 + $0x40] sm:$0xff] %v7824
    %v7831 = vld [vmem:[#allocation6] sm:$0xff]
    %v7832 = vld [vmem:[#allocation6 + $0x8] sm:$0xff]
    %v7833 = vld [vmem:[#allocation6 + $0x10] sm:$0xff]
    %v7834 = vld [vmem:[#allocation6 + $0x18] sm:$0xff]
    %v7835 = vld [vmem:[%s9] sm:$0x22]
    %v7836 = vld [vmem:[%s9 + $0x8] sm:$0x2]
    %v7839 = vunpack.c.l.b16 %v7835
    %v7840 = vunpack.c.h.b16 %v7835
    %v7841 = vunpack.c.l.b16 %v7836
    %v7842 = vpack.c.b16 %v7839, %v7839
    %v7843 = vpack.c.b16 %v7840, %v7840
    %v7844 = vpack.c.b16 %v7841, %v7841
    %v7846 = vshrl.u32 %v7842, 16
    %v7847 = vpack.i.b16 %v7846, %v7846
    %v7849 = vlaneseq
    %v7850 = vshrl.u32 %v7849, 7
    %v7851 = vsub.s32 1, %v7850
    %v7852 = vrot.slane %v7847, %v7851
    %v7854 = vshrl.u32 %v7843, 16
    %v7855 = vpack.i.b16 %v7854, %v7854
    %v7857 = vlaneseq
    %v7858 = vshrl.u32 %v7857, 7
    %v7859 = vsub.s32 1, %v7858
    %v7860 = vrot.slane %v7855, %v7859
    %v7862 = vshrl.u32 %v7844, 16
    %v7863 = vpack.i.b16 %v7862, %v7862
    %v7865 = vlaneseq
    %v7866 = vshrl.u32 %v7865, 7
    %v7867 = vsub.s32 1, %v7866
    %v7868 = vrot.slane %v7863, %v7867
    %7872 = vrot.lane.b32.xlu0 %v7852, 24
    %v7873 = vpop.permute.xlu0 %7872
    %7874 = vrot.lane.b32.xlu0 %v7860, 24
    %v7875 = vpop.permute.xlu0 %7874
    %7876 = vrot.lane.b32.xlu0 %v7868, 24
    %v7877 = vpop.permute.xlu0 %7876
    %vm7878 = vcmask 195584
    %v7879 = vsel %vm7878, %v7873, %v7875
    %v7880 = vsel %vm7878, %v7875, %v7877
    %v7885 = vmul.bf16 %v7831, %v7873
    %v7886 = vmul.bf16 %v7832, %v7879
    %v7887 = vmul.bf16 %v7833, %v7880
    %v7888 = vmul.bf16 %v7834, %v7877
    %7893 = vrot.lane.b32.xlu0 %v7885, 104
    %v7894 = vpop.permute.xlu0 %7893
    %7895 = vrot.lane.b32.xlu0 %v7886, 104
    %v7896 = vpop.permute.xlu0 %7895
    %7897 = vrot.lane.b32.xlu0 %v7887, 104
    %v7898 = vpop.permute.xlu0 %7897
    %7899 = vrot.lane.b32.xlu0 %v7888, 104
    %v7900 = vpop.permute.xlu0 %7899
    %vm7901 = vcmask 850944
    %v7902 = vsel %vm7901, %v7894, %v7896
    %v7903 = vsel %vm7901, %v7896, %v7898
    %v7904 = vsel %vm7901, %v7898, %v7900
    %7908 = vst [vmem:[#allocation4 + $0x48] sm:$0xff] %v7902
    %7909 = vst [vmem:[#allocation4 + $0x50] sm:$0xff] %v7903
    %7910 = vst [vmem:[#allocation4 + $0x58] sm:$0xff] %v7904
    %v7911 = vld [vmem:[#allocation6 + $0x8] sm:$0xff]
    %v7912 = vld [vmem:[#allocation6 + $0x10] sm:$0xff]
    %v7913 = vld [vmem:[#allocation6 + $0x18] sm:$0xff]
    %v7914 = vld [vmem:[%s9] sm:$0x44]
    %v7915 = vld [vmem:[%s9 + $0x8] sm:$0x4]
    %v7918 = vunpack.c.l.b16 %v7914
    %v7919 = vunpack.c.h.b16 %v7914
    %v7920 = vunpack.c.l.b16 %v7915
    %v7921 = vpack.c.b16 %v7918, %v7918
    %v7922 = vpack.c.b16 %v7919, %v7919
    %v7923 = vpack.c.b16 %v7920, %v7920
    %v7925 = vpack.i.b16 %v7921, %v7921
    %v7927 = vlaneseq
    %v7928 = vshrl.u32 %v7927, 7
    %v7929 = vsub.s32 2, %v7928
    %v7930 = vrot.slane %v7925, %v7929
    %v7932 = vpack.i.b16 %v7922, %v7922
    %v7934 = vlaneseq
    %v7935 = vshrl.u32 %v7934, 7
    %v7936 = vsub.s32 2, %v7935
    %v7937 = vrot.slane %v7932, %v7936
    %v7939 = vpack.i.b16 %v7923, %v7923
    %v7941 = vlaneseq
    %v7942 = vshrl.u32 %v7941, 7
    %v7943 = vsub.s32 2, %v7942
    %v7944 = vrot.slane %v7939, %v7943
    %v7945 = vmul.bf16 %v7911, %v7930
    %v7946 = vmul.bf16 %v7912, %v7937
    %v7947 = vmul.bf16 %v7913, %v7944
    %7948 = vst [vmem:[#allocation4 + $0x60] sm:$0xff] %v7945
    %7949 = vst [vmem:[#allocation4 + $0x68] sm:$0xff] %v7946
    %7950 = vst [vmem:[#allocation4 + $0x70] sm:$0xff] %v7947
    %v7951 = vld [vmem:[#allocation6 + $0x8] sm:$0xff]
    %v7952 = vld [vmem:[#allocation6 + $0x10] sm:$0xff]
    %v7953 = vld [vmem:[#allocation6 + $0x18] sm:$0xff]
    %v7954 = vld [vmem:[#allocation6 + $0x20] sm:$0xff]
    %v7955 = vld [vmem:[%s9] sm:$0x44]
    %v7956 = vld [vmem:[%s9 + $0x8] sm:$0x4]
    %v7959 = vunpack.c.l.b16 %v7955
    %v7960 = vunpack.c.h.b16 %v7955
    %v7961 = vunpack.c.l.b16 %v7956
    %v7962 = vpack.c.b16 %v7959, %v7959
    %v7963 = vpack.c.b16 %v7960, %v7960
    %v7964 = vpack.c.b16 %v7961, %v7961
    %v7966 = vshrl.u32 %v7962, 16
    %v7967 = vpack.i.b16 %v7966, %v7966
    %v7969 = vlaneseq
    %v7970 = vshrl.u32 %v7969, 7
    %v7971 = vsub.s32 2, %v7970
    %v7972 = vrot.slane %v7967, %v7971
    %v7974 = vshrl.u32 %v7963, 16
    %v7975 = vpack.i.b16 %v7974, %v7974
    %v7977 = vlaneseq
    %v7978 = vshrl.u32 %v7977, 7
    %v7979 = vsub.s32 2, %v7978
    %v7980 = vrot.slane %v7975, %v7979
    %v7982 = vshrl.u32 %v7964, 16
    %v7983 = vpack.i.b16 %v7982, %v7982
    %v7985 = vlaneseq
    %v7986 = vshrl.u32 %v7985, 7
    %v7987 = vsub.s32 2, %v7986
    %v7988 = vrot.slane %v7983, %v7987
    %7992 = vrot.lane.b32.xlu0 %v7972, 8
    %v7993 = vpop.permute.xlu0 %7992
    %7994 = vrot.lane.b32.xlu0 %v7980, 8
    %v7995 = vpop.permute.xlu0 %7994
    %7996 = vrot.lane.b32.xlu0 %v7988, 8
    %v7997 = vpop.permute.xlu0 %7996
    %v7998 = vsel %vm4948, %v7993, %v7995
    %v7999 = vsel %vm4948, %v7995, %v7997
    %v8004 = vmul.bf16 %v7951, %v7993
    %v8005 = vmul.bf16 %v7952, %v7998
    %v8006 = vmul.bf16 %v7953, %v7999
    %v8007 = vmul.bf16 %v7954, %v7997
    %8012 = vrot.lane.b32.xlu0 %v8004, 120
    %v8013 = vpop.permute.xlu0 %8012
    %8014 = vrot.lane.b32.xlu0 %v8005, 120
    %v8015 = vpop.permute.xlu0 %8014
    %8016 = vrot.lane.b32.xlu0 %v8006, 120
    %v8017 = vpop.permute.xlu0 %8016
    %8018 = vrot.lane.b32.xlu0 %v8007, 120
    %v8019 = vpop.permute.xlu0 %8018
    %v8020 = vsel %vm5000, %v8013, %v8015
    %v8021 = vsel %vm5000, %v8015, %v8017
    %v8022 = vsel %vm5000, %v8017, %v8019
    %8026 = vst [vmem:[#allocation4 + $0x78] sm:$0xff] %v8020
    %8027 = vst [vmem:[#allocation4 + $0x80] sm:$0xff] %v8021
    %8028 = vst [vmem:[#allocation4 + $0x88] sm:$0xff] %v8022
    %v8029 = vld [vmem:[#allocation6 + $0x8] sm:$0xff]
    %v8030 = vld [vmem:[#allocation6 + $0x10] sm:$0xff]
    %v8031 = vld [vmem:[#allocation6 + $0x18] sm:$0xff]
    %v8032 = vld [vmem:[#allocation6 + $0x20] sm:$0xff]
    %v8033 = vld [vmem:[%s9] sm:$0x88]
    %v8034 = vld [vmem:[%s9 + $0x8] sm:$0x8]
    %v8037 = vunpack.c.l.b16 %v8033
    %v8038 = vunpack.c.h.b16 %v8033
    %v8039 = vunpack.c.l.b16 %v8034
    %v8040 = vpack.c.b16 %v8037, %v8037
    %v8041 = vpack.c.b16 %v8038, %v8038
    %v8042 = vpack.c.b16 %v8039, %v8039
    %v8044 = vpack.i.b16 %v8040, %v8040
    %v8046 = vlaneseq
    %v8047 = vshrl.u32 %v8046, 7
    %v8048 = vsub.s32 3, %v8047
    %v8049 = vrot.slane %v8044, %v8048
    %v8051 = vpack.i.b16 %v8041, %v8041
    %v8053 = vlaneseq
    %v8054 = vshrl.u32 %v8053, 7
    %v8055 = vsub.s32 3, %v8054
    %v8056 = vrot.slane %v8051, %v8055
    %v8058 = vpack.i.b16 %v8042, %v8042
    %v8060 = vlaneseq
    %v8061 = vshrl.u32 %v8060, 7
    %v8062 = vsub.s32 3, %v8061
    %v8063 = vrot.slane %v8058, %v8062
    %8067 = vrot.lane.b32.xlu0 %v8049, 16
    %v8068 = vpop.permute.xlu0 %8067
    %8069 = vrot.lane.b32.xlu0 %v8056, 16
    %v8070 = vpop.permute.xlu0 %8069
    %8071 = vrot.lane.b32.xlu0 %v8063, 16
    %v8072 = vpop.permute.xlu0 %8071
    %v8073 = vsel %vm7798, %v8068, %v8070
    %v8074 = vsel %vm7798, %v8070, %v8072
    %v8079 = vmul.bf16 %v8029, %v8068
    %v8080 = vmul.bf16 %v8030, %v8073
    %v8081 = vmul.bf16 %v8031, %v8074
    %v8082 = vmul.bf16 %v8032, %v8072
    %8087 = vrot.lane.b32.xlu0 %v8079, 112
    %v8088 = vpop.permute.xlu0 %8087
    %8089 = vrot.lane.b32.xlu0 %v8080, 112
    %v8090 = vpop.permute.xlu0 %8089
    %8091 = vrot.lane.b32.xlu0 %v8081, 112
    %v8092 = vpop.permute.xlu0 %8091
    %8093 = vrot.lane.b32.xlu0 %v8082, 112
    %v8094 = vpop.permute.xlu0 %8093
    %v8095 = vsel %vm7821, %v8088, %v8090
    %v8096 = vsel %vm7821, %v8090, %v8092
    %v8097 = vsel %vm7821, %v8092, %v8094
    %8101 = vst [vmem:[#allocation4 + $0x90] sm:$0xff] %v8095
    %8102 = vst [vmem:[#allocation4 + $0x98] sm:$0xff] %v8096
    %8103 = vst [vmem:[#allocation4 + $0xa0] sm:$0xff] %v8097
    %v8104 = vld [vmem:[#allocation6 + $0x8] sm:$0xff]
    %v8105 = vld [vmem:[#allocation6 + $0x10] sm:$0xff]
    %v8106 = vld [vmem:[#allocation6 + $0x18] sm:$0xff]
    %v8107 = vld [vmem:[#allocation6 + $0x20] sm:$0xff]
    %v8108 = vld [vmem:[%s9] sm:$0x88]
    %v8109 = vld [vmem:[%s9 + $0x8] sm:$0x8]
    %v8112 = vunpack.c.l.b16 %v8108
    %v8113 = vunpack.c.h.b16 %v8108
    %v8114 = vunpack.c.l.b16 %v8109
    %v8115 = vpack.c.b16 %v8112, %v8112
    %v8116 = vpack.c.b16 %v8113, %v8113
    %v8117 = vpack.c.b16 %v8114, %v8114
    %v8119 = vshrl.u32 %v8115, 16
    %v8120 = vpack.i.b16 %v8119, %v8119
    %v8122 = vlaneseq
    %v8123 = vshrl.u32 %v8122, 7
    %v8124 = vsub.s32 3, %v8123
    %v8125 = vrot.slane %v8120, %v8124
    %v8127 = vshrl.u32 %v8116, 16
    %v8128 = vpack.i.b16 %v8127, %v8127
    %v8130 = vlaneseq
    %v8131 = vshrl.u32 %v8130, 7
    %v8132 = vsub.s32 3, %v8131
    %v8133 = vrot.slane %v8128, %v8132
    %v8135 = vshrl.u32 %v8117, 16
    %v8136 = vpack.i.b16 %v8135, %v8135
    %v8138 = vlaneseq
    %v8139 = vshrl.u32 %v8138, 7
    %v8140 = vsub.s32 3, %v8139
    %v8141 = vrot.slane %v8136, %v8140
    %8145 = vrot.lane.b32.xlu0 %v8125, 24
    %v8146 = vpop.permute.xlu0 %8145
    %8147 = vrot.lane.b32.xlu0 %v8133, 24
    %v8148 = vpop.permute.xlu0 %8147
    %8149 = vrot.lane.b32.xlu0 %v8141, 24
    %v8150 = vpop.permute.xlu0 %8149
    %v8151 = vsel %vm7878, %v8146, %v8148
    %v8152 = vsel %vm7878, %v8148, %v8150
    %v8157 = vmul.bf16 %v8104, %v8146
    %v8158 = vmul.bf16 %v8105, %v8151
    %v8159 = vmul.bf16 %v8106, %v8152
    %v8160 = vmul.bf16 %v8107, %v8150
    %8165 = vrot.lane.b32.xlu0 %v8157, 104
    %v8166 = vpop.permute.xlu0 %8165
    %8167 = vrot.lane.b32.xlu0 %v8158, 104
    %v8168 = vpop.permute.xlu0 %8167
    %8169 = vrot.lane.b32.xlu0 %v8159, 104
    %v8170 = vpop.permute.xlu0 %8169
    %8171 = vrot.lane.b32.xlu0 %v8160, 104
    %v8172 = vpop.permute.xlu0 %8171
    %v8173 = vsel %vm7901, %v8166, %v8168
    %v8174 = vsel %vm7901, %v8168, %v8170
    %v8175 = vsel %vm7901, %v8170, %v8172
    %8179 = vst [vmem:[#allocation4 + $0xa8] sm:$0xff] %v8173
    %8180 = vst [vmem:[#allocation4 + $0xb0] sm:$0xff] %v8174
    %8181 = vst [vmem:[#allocation4 + $0xb8] sm:$0xff] %v8175
    %v8182 = vld [vmem:[#allocation6 + $0x10] sm:$0xff]
    %v8183 = vld [vmem:[#allocation6 + $0x18] sm:$0xff]
    %v8184 = vld [vmem:[#allocation6 + $0x20] sm:$0xff]
    %v8185 = vld [vmem:[%s9 + $0xc] sm:$0x11]
    %v8186 = vld [vmem:[%s9 + $0x14] sm:$0x1]
    %v8189 = vunpack.c.l.b16 %v8185
    %v8190 = vunpack.c.h.b16 %v8185
    %v8191 = vunpack.c.l.b16 %v8186
    %v8192 = vpack.c.b16 %v8189, %v8189
    %v8193 = vpack.c.b16 %v8190, %v8190
    %v8194 = vpack.c.b16 %v8191, %v8191
    %v8196 = vpack.i.b16 %v8192, %v8192
    %v8198 = vlaneseq
    %v8199 = vshrl.u32 %v8198, 7
    %v8200 = vsub.s32 0, %v8199
    %v8201 = vrot.slane %v8196, %v8200
    %v8203 = vpack.i.b16 %v8193, %v8193
    %v8205 = vlaneseq
    %v8206 = vshrl.u32 %v8205, 7
    %v8207 = vsub.s32 0, %v8206
    %v8208 = vrot.slane %v8203, %v8207
    %v8210 = vpack.i.b16 %v8194, %v8194
    %v8212 = vlaneseq
    %v8213 = vshrl.u32 %v8212, 7
    %v8214 = vsub.s32 0, %v8213
    %v8215 = vrot.slane %v8210, %v8214
    %v8216 = vmul.bf16 %v8182, %v8201
    %v8217 = vmul.bf16 %v8183, %v8208
    %v8218 = vmul.bf16 %v8184, %v8215
    %8219 = vst [vmem:[#allocation4 + $0xc0] sm:$0xff] %v8216
    %8220 = vst [vmem:[#allocation4 + $0xc8] sm:$0xff] %v8217
    %8221 = vst [vmem:[#allocation4 + $0xd0] sm:$0xff] %v8218
    %v8222 = vld [vmem:[#allocation6 + $0x10] sm:$0xff]
    %v8223 = vld [vmem:[#allocation6 + $0x18] sm:$0xff]
    %v8224 = vld [vmem:[#allocation6 + $0x20] sm:$0xff]
    %v8225 = vld [vmem:[#allocation6 + $0x28] sm:$0xff]
    %v8226 = vld [vmem:[%s9 + $0xc] sm:$0x11]
    %v8227 = vld [vmem:[%s9 + $0x14] sm:$0x1]
    %v8230 = vunpack.c.l.b16 %v8226
    %v8231 = vunpack.c.h.b16 %v8226
    %v8232 = vunpack.c.l.b16 %v8227
    %v8233 = vpack.c.b16 %v8230, %v8230
    %v8234 = vpack.c.b16 %v8231, %v8231
    %v8235 = vpack.c.b16 %v8232, %v8232
    %v8237 = vshrl.u32 %v8233, 16
    %v8238 = vpack.i.b16 %v8237, %v8237
    %v8240 = vlaneseq
    %v8241 = vshrl.u32 %v8240, 7
    %v8242 = vsub.s32 0, %v8241
    %v8243 = vrot.slane %v8238, %v8242
    %v8245 = vshrl.u32 %v8234, 16
    %v8246 = vpack.i.b16 %v8245, %v8245
    %v8248 = vlaneseq
    %v8249 = vshrl.u32 %v8248, 7
    %v8250 = vsub.s32 0, %v8249
    %v8251 = vrot.slane %v8246, %v8250
    %v8253 = vshrl.u32 %v8235, 16
    %v8254 = vpack.i.b16 %v8253, %v8253
    %v8256 = vlaneseq
    %v8257 = vshrl.u32 %v8256, 7
    %v8258 = vsub.s32 0, %v8257
    %v8259 = vrot.slane %v8254, %v8258
    %8263 = vrot.lane.b32.xlu0 %v8243, 8
    %v8264 = vpop.permute.xlu0 %8263
    %8265 = vrot.lane.b32.xlu0 %v8251, 8
    %v8266 = vpop.permute.xlu0 %8265
    %8267 = vrot.lane.b32.xlu0 %v8259, 8
    %v8268 = vpop.permute.xlu0 %8267
    %v8269 = vsel %vm4948, %v8264, %v8266
    %v8270 = vsel %vm4948, %v8266, %v8268
    %v8275 = vmul.bf16 %v8222, %v8264
    %v8276 = vmul.bf16 %v8223, %v8269
    %v8277 = vmul.bf16 %v8224, %v8270
    %v8278 = vmul.bf16 %v8225, %v8268
    %8283 = vrot.lane.b32.xlu0 %v8275, 120
    %v8284 = vpop.permute.xlu0 %8283
    %8285 = vrot.lane.b32.xlu0 %v8276, 120
    %v8286 = vpop.permute.xlu0 %8285
    %8287 = vrot.lane.b32.xlu0 %v8277, 120
    %v8288 = vpop.permute.xlu0 %8287
    %8289 = vrot.lane.b32.xlu0 %v8278, 120
    %v8290 = vpop.permute.xlu0 %8289
    %v8291 = vsel %vm5000, %v8284, %v8286
    %v8292 = vsel %vm5000, %v8286, %v8288
    %v8293 = vsel %vm5000, %v8288, %v8290
    %8297 = vst [vmem:[#allocation4 + $0xd8] sm:$0xff] %v8291
    %8298 = vst [vmem:[#allocation4 + $0xe0] sm:$0xff] %v8292
    %8299 = vst [vmem:[#allocation4 + $0xe8] sm:$0xff] %v8293
    %v8300 = vld [vmem:[#allocation6 + $0x10] sm:$0xff]
    %v8301 = vld [vmem:[#allocation6 + $0x18] sm:$0xff]
    %v8302 = vld [vmem:[#allocation6 + $0x20] sm:$0xff]
    %v8303 = vld [vmem:[#allocation6 + $0x28] sm:$0xff]
    %v8304 = vld [vmem:[%s9 + $0xc] sm:$0x22]
    %v8305 = vld [vmem:[%s9 + $0x14] sm:$0x2]
    %v8308 = vunpack.c.l.b16 %v8304
    %v8309 = vunpack.c.h.b16 %v8304
    %v8310 = vunpack.c.l.b16 %v8305
    %v8311 = vpack.c.b16 %v8308, %v8308
    %v8312 = vpack.c.b16 %v8309, %v8309
    %v8313 = vpack.c.b16 %v8310, %v8310
    %v8315 = vpack.i.b16 %v8311, %v8311
    %v8317 = vlaneseq
    %v8318 = vshrl.u32 %v8317, 7
    %v8319 = vsub.s32 1, %v8318
    %v8320 = vrot.slane %v8315, %v8319
    %v8322 = vpack.i.b16 %v8312, %v8312
    %v8324 = vlaneseq
    %v8325 = vshrl.u32 %v8324, 7
    %v8326 = vsub.s32 1, %v8325
    %v8327 = vrot.slane %v8322, %v8326
    %v8329 = vpack.i.b16 %v8313, %v8313
    %v8331 = vlaneseq
    %v8332 = vshrl.u32 %v8331, 7
    %v8333 = vsub.s32 1, %v8332
    %v8334 = vrot.slane %v8329, %v8333
    %8338 = vrot.lane.b32.xlu0 %v8320, 16
    %v8339 = vpop.permute.xlu0 %8338
    %8340 = vrot.lane.b32.xlu0 %v8327, 16
    %v8341 = vpop.permute.xlu0 %8340
    %8342 = vrot.lane.b32.xlu0 %v8334, 16
    %v8343 = vpop.permute.xlu0 %8342
    %v8344 = vsel %vm7798, %v8339, %v8341
    %v8345 = vsel %vm7798, %v8341, %v8343
    %v8350 = vmul.bf16 %v8300, %v8339
    %v8351 = vmul.bf16 %v8301, %v8344
    %v8352 = vmul.bf16 %v8302, %v8345
    %v8353 = vmul.bf16 %v8303, %v8343
    %8358 = vrot.lane.b32.xlu0 %v8350, 112
    %v8359 = vpop.permute.xlu0 %8358
    %8360 = vrot.lane.b32.xlu0 %v8351, 112
    %v8361 = vpop.permute.xlu0 %8360
    %8362 = vrot.lane.b32.xlu0 %v8352, 112
    %v8363 = vpop.permute.xlu0 %8362
    %8364 = vrot.lane.b32.xlu0 %v8353, 112
    %v8365 = vpop.permute.xlu0 %8364
    %v8366 = vsel %vm7821, %v8359, %v8361
    %v8367 = vsel %vm7821, %v8361, %v8363
    %v8368 = vsel %vm7821, %v8363, %v8365
    %8372 = vst [vmem:[#allocation4 + $0xf0] sm:$0xff] %v8366
    %8373 = vst [vmem:[#allocation4 + $0xf8] sm:$0xff] %v8367
    %8374 = vst [vmem:[#allocation4 + $0x100] sm:$0xff] %v8368
    %v8375 = vld [vmem:[#allocation6 + $0x10] sm:$0xff]
    %v8376 = vld [vmem:[#allocation6 + $0x18] sm:$0xff]
    %v8377 = vld [vmem:[#allocation6 + $0x20] sm:$0xff]
    %v8378 = vld [vmem:[#allocation6 + $0x28] sm:$0xff]
    %v8379 = vld [vmem:[%s9 + $0xc] sm:$0x22]
    %v8380 = vld [vmem:[%s9 + $0x14] sm:$0x2]
    %v8383 = vunpack.c.l.b16 %v8379
    %v8384 = vunpack.c.h.b16 %v8379
    %v8385 = vunpack.c.l.b16 %v8380
    %v8386 = vpack.c.b16 %v8383, %v8383
    %v8387 = vpack.c.b16 %v8384, %v8384
    %v8388 = vpack.c.b16 %v8385, %v8385
    %v8390 = vshrl.u32 %v8386, 16
    %v8391 = vpack.i.b16 %v8390, %v8390
    %v8393 = vlaneseq
    %v8394 = vshrl.u32 %v8393, 7
    %v8395 = vsub.s32 1, %v8394
    %v8396 = vrot.slane %v8391, %v8395
    %v8398 = vshrl.u32 %v8387, 16
    %v8399 = vpack.i.b16 %v8398, %v8398
    %v8401 = vlaneseq
    %v8402 = vshrl.u32 %v8401, 7
    %v8403 = vsub.s32 1, %v8402
    %v8404 = vrot.slane %v8399, %v8403
    %v8406 = vshrl.u32 %v8388, 16
    %v8407 = vpack.i.b16 %v8406, %v8406
    %v8409 = vlaneseq
    %v8410 = vshrl.u32 %v8409, 7
    %v8411 = vsub.s32 1, %v8410
    %v8412 = vrot.slane %v8407, %v8411
    %8416 = vrot.lane.b32.xlu0 %v8396, 24
    %v8417 = vpop.permute.xlu0 %8416
    %8418 = vrot.lane.b32.xlu0 %v8404, 24
    %v8419 = vpop.permute.xlu0 %8418
    %8420 = vrot.lane.b32.xlu0 %v8412, 24
    %v8421 = vpop.permute.xlu0 %8420
    %v8422 = vsel %vm7878, %v8417, %v8419
    %v8423 = vsel %vm7878, %v8419, %v8421
    %v8428 = vmul.bf16 %v8375, %v8417
    %v8429 = vmul.bf16 %v8376, %v8422
    %v8430 = vmul.bf16 %v8377, %v8423
    %v8431 = vmul.bf16 %v8378, %v8421
    %8436 = vrot.lane.b32.xlu0 %v8428, 104
    %v8437 = vpop.permute.xlu0 %8436
    %8438 = vrot.lane.b32.xlu0 %v8429, 104
    %v8439 = vpop.permute.xlu0 %8438
    %8440 = vrot.lane.b32.xlu0 %v8430, 104
    %v8441 = vpop.permute.xlu0 %8440
    %8442 = vrot.lane.b32.xlu0 %v8431, 104
    %v8443 = vpop.permute.xlu0 %8442
    %v8444 = vsel %vm7901, %v8437, %v8439
    %v8445 = vsel %vm7901, %v8439, %v8441
    %v8446 = vsel %vm7901, %v8441, %v8443
    %8450 = vst [vmem:[#allocation4 + $0x108] sm:$0xff] %v8444
    %8451 = vst [vmem:[#allocation4 + $0x110] sm:$0xff] %v8445
    %8452 = vst [vmem:[#allocation4 + $0x118] sm:$0xff] %v8446
    %v8453 = vld [vmem:[#allocation6 + $0x18] sm:$0xff]
    %v8454 = vld [vmem:[#allocation6 + $0x20] sm:$0xff]
    %v8455 = vld [vmem:[#allocation6 + $0x28] sm:$0xff]
    %v8456 = vld [vmem:[%s9 + $0xc] sm:$0x44]
    %v8457 = vld [vmem:[%s9 + $0x14] sm:$0x4]
    %v8460 = vunpack.c.l.b16 %v8456
    %v8461 = vunpack.c.h.b16 %v8456
    %v8462 = vunpack.c.l.b16 %v8457
    %v8463 = vpack.c.b16 %v8460, %v8460
    %v8464 = vpack.c.b16 %v8461, %v8461
    %v8465 = vpack.c.b16 %v8462, %v8462
    %v8467 = vpack.i.b16 %v8463, %v8463
    %v8469 = vlaneseq
    %v8470 = vshrl.u32 %v8469, 7
    %v8471 = vsub.s32 2, %v8470
    %v8472 = vrot.slane %v8467, %v8471
    %v8474 = vpack.i.b16 %v8464, %v8464
    %v8476 = vlaneseq
    %v8477 = vshrl.u32 %v8476, 7
    %v8478 = vsub.s32 2, %v8477
    %v8479 = vrot.slane %v8474, %v8478
    %v8481 = vpack.i.b16 %v8465, %v8465
    %v8483 = vlaneseq
    %v8484 = vshrl.u32 %v8483, 7
    %v8485 = vsub.s32 2, %v8484
    %v8486 = vrot.slane %v8481, %v8485
    %v8487 = vmul.bf16 %v8453, %v8472
    %v8488 = vmul.bf16 %v8454, %v8479
    %v8489 = vmul.bf16 %v8455, %v8486
    %8490 = vst [vmem:[#allocation4 + $0x120] sm:$0xff] %v8487
    %8491 = vst [vmem:[#allocation4 + $0x128] sm:$0xff] %v8488
    %8492 = vst [vmem:[#allocation4 + $0x130] sm:$0xff] %v8489
    %v8493 = vld [vmem:[#allocation6 + $0x18] sm:$0xff]
    %v8494 = vld [vmem:[#allocation6 + $0x20] sm:$0xff]
    %v8495 = vld [vmem:[#allocation6 + $0x28] sm:$0xff]
    %v8496 = vld [vmem:[#allocation6 + $0x30] sm:$0xff]
    %v8497 = vld [vmem:[%s9 + $0xc] sm:$0x44]
    %v8498 = vld [vmem:[%s9 + $0x14] sm:$0x4]
    %v8501 = vunpack.c.l.b16 %v8497
    %v8502 = vunpack.c.h.b16 %v8497
    %v8503 = vunpack.c.l.b16 %v8498
    %v8504 = vpack.c.b16 %v8501, %v8501
    %v8505 = vpack.c.b16 %v8502, %v8502
    %v8506 = vpack.c.b16 %v8503, %v8503
    %v8508 = vshrl.u32 %v8504, 16
    %v8509 = vpack.i.b16 %v8508, %v8508
    %v8511 = vlaneseq
    %v8512 = vshrl.u32 %v8511, 7
    %v8513 = vsub.s32 2, %v8512
    %v8514 = vrot.slane %v8509, %v8513
    %v8516 = vshrl.u32 %v8505, 16
    %v8517 = vpack.i.b16 %v8516, %v8516
    %v8519 = vlaneseq
    %v8520 = vshrl.u32 %v8519, 7
    %v8521 = vsub.s32 2, %v8520
    %v8522 = vrot.slane %v8517, %v8521
    %v8524 = vshrl.u32 %v8506, 16
    %v8525 = vpack.i.b16 %v8524, %v8524
    %v8527 = vlaneseq
    %v8528 = vshrl.u32 %v8527, 7
    %v8529 = vsub.s32 2, %v8528
    %v8530 = vrot.slane %v8525, %v8529
    %8534 = vrot.lane.b32.xlu0 %v8514, 8
    %v8535 = vpop.permute.xlu0 %8534
    %8536 = vrot.lane.b32.xlu0 %v8522, 8
    %v8537 = vpop.permute.xlu0 %8536
    %8538 = vrot.lane.b32.xlu0 %v8530, 8
    %v8539 = vpop.permute.xlu0 %8538
    %v8540 = vsel %vm4948, %v8535, %v8537
    %v8541 = vsel %vm4948, %v8537, %v8539
    %v8546 = vmul.bf16 %v8493, %v8535
    %v8547 = vmul.bf16 %v8494, %v8540
    %v8548 = vmul.bf16 %v8495, %v8541
    %v8549 = vmul.bf16 %v8496, %v8539
    %8554 = vrot.lane.b32.xlu0 %v8546, 120
    %v8555 = vpop.permute.xlu0 %8554
    %8556 = vrot.lane.b32.xlu0 %v8547, 120
    %v8557 = vpop.permute.xlu0 %8556
    %8558 = vrot.lane.b32.xlu0 %v8548, 120
    %v8559 = vpop.permute.xlu0 %8558
    %8560 = vrot.lane.b32.xlu0 %v8549, 120
    %v8561 = vpop.permute.xlu0 %8560
    %v8562 = vsel %vm5000, %v8555, %v8557
    %v8563 = vsel %vm5000, %v8557, %v8559
    %v8564 = vsel %vm5000, %v8559, %v8561
    %8568 = vst [vmem:[#allocation4 + $0x138] sm:$0xff] %v8562
    %8569 = vst [vmem:[#allocation4 + $0x140] sm:$0xff] %v8563
    %8570 = vst [vmem:[#allocation4 + $0x148] sm:$0xff] %v8564
    %v8571 = vld [vmem:[#allocation6 + $0x18] sm:$0xff]
    %v8572 = vld [vmem:[#allocation6 + $0x20] sm:$0xff]
    %v8573 = vld [vmem:[#allocation6 + $0x28] sm:$0xff]
    %v8574 = vld [vmem:[#allocation6 + $0x30] sm:$0xff]
    %v8575 = vld [vmem:[%s9 + $0xc] sm:$0x88]
    %v8576 = vld [vmem:[%s9 + $0x14] sm:$0x8]
    %v8579 = vunpack.c.l.b16 %v8575
    %v8580 = vunpack.c.h.b16 %v8575
    %v8581 = vunpack.c.l.b16 %v8576
    %v8582 = vpack.c.b16 %v8579, %v8579
    %v8583 = vpack.c.b16 %v8580, %v8580
    %v8584 = vpack.c.b16 %v8581, %v8581
    %v8586 = vpack.i.b16 %v8582, %v8582
    %v8588 = vlaneseq
    %v8589 = vshrl.u32 %v8588, 7
    %v8590 = vsub.s32 3, %v8589
    %v8591 = vrot.slane %v8586, %v8590
    %v8593 = vpack.i.b16 %v8583, %v8583
    %v8595 = vlaneseq
    %v8596 = vshrl.u32 %v8595, 7
    %v8597 = vsub.s32 3, %v8596
    %v8598 = vrot.slane %v8593, %v8597
    %v8600 = vpack.i.b16 %v8584, %v8584
    %v8602 = vlaneseq
    %v8603 = vshrl.u32 %v8602, 7
    %v8604 = vsub.s32 3, %v8603
    %v8605 = vrot.slane %v8600, %v8604
    %8609 = vrot.lane.b32.xlu0 %v8591, 16
    %v8610 = vpop.permute.xlu0 %8609
    %8611 = vrot.lane.b32.xlu0 %v8598, 16
    %v8612 = vpop.permute.xlu0 %8611
    %8613 = vrot.lane.b32.xlu0 %v8605, 16
    %v8614 = vpop.permute.xlu0 %8613
    %v8615 = vsel %vm7798, %v8610, %v8612
    %v8616 = vsel %vm7798, %v8612, %v8614
    %v8621 = vmul.bf16 %v8571, %v8610
    %v8622 = vmul.bf16 %v8572, %v8615
    %v8623 = vmul.bf16 %v8573, %v8616
    %v8624 = vmul.bf16 %v8574, %v8614
    %8629 = vrot.lane.b32.xlu0 %v8621, 112
    %v8630 = vpop.permute.xlu0 %8629
    %8631 = vrot.lane.b32.xlu0 %v8622, 112
    %v8632 = vpop.permute.xlu0 %8631
    %8633 = vrot.lane.b32.xlu0 %v8623, 112
    %v8634 = vpop.permute.xlu0 %8633
    %8635 = vrot.lane.b32.xlu0 %v8624, 112
    %v8636 = vpop.permute.xlu0 %8635
    %v8637 = vsel %vm7821, %v8630, %v8632
    %v8638 = vsel %vm7821, %v8632, %v8634
    %v8639 = vsel %vm7821, %v8634, %v8636
    %8643 = vst [vmem:[#allocation4 + $0x150] sm:$0xff] %v8637
    %8644 = vst [vmem:[#allocation4 + $0x158] sm:$0xff] %v8638
    %8645 = vst [vmem:[#allocation4 + $0x160] sm:$0xff] %v8639
    %v8646 = vld [vmem:[#allocation6 + $0x18] sm:$0xff]
    %v8647 = vld [vmem:[#allocation6 + $0x20] sm:$0xff]
    %v8648 = vld [vmem:[#allocation6 + $0x28] sm:$0xff]
    %v8649 = vld [vmem:[#allocation6 + $0x30] sm:$0xff]
    %v8650 = vld [vmem:[%s9 + $0xc] sm:$0x88]
    %v8651 = vld [vmem:[%s9 + $0x14] sm:$0x8]
    %v8654 = vunpack.c.l.b16 %v8650
    %v8655 = vunpack.c.h.b16 %v8650
    %v8656 = vunpack.c.l.b16 %v8651
    %v8657 = vpack.c.b16 %v8654, %v8654
    %v8658 = vpack.c.b16 %v8655, %v8655
    %v8659 = vpack.c.b16 %v8656, %v8656
    %v8661 = vshrl.u32 %v8657, 16
    %v8662 = vpack.i.b16 %v8661, %v8661
    %v8664 = vlaneseq
    %v8665 = vshrl.u32 %v8664, 7
    %v8666 = vsub.s32 3, %v8665
    %v8667 = vrot.slane %v8662, %v8666
    %v8669 = vshrl.u32 %v8658, 16
    %v8670 = vpack.i.b16 %v8669, %v8669
    %v8672 = vlaneseq
    %v8673 = vshrl.u32 %v8672, 7
    %v8674 = vsub.s32 3, %v8673
    %v8675 = vrot.slane %v8670, %v8674
    %v8677 = vshrl.u32 %v8659, 16
    %v8678 = vpack.i.b16 %v8677, %v8677
    %v8680 = vlaneseq
    %v8681 = vshrl.u32 %v8680, 7
    %v8682 = vsub.s32 3, %v8681
    %v8683 = vrot.slane %v8678, %v8682
    %8687 = vrot.lane.b32.xlu0 %v8667, 24
    %v8688 = vpop.permute.xlu0 %8687
    %8689 = vrot.lane.b32.xlu0 %v8675, 24
    %v8690 = vpop.permute.xlu0 %8689
    %8691 = vrot.lane.b32.xlu0 %v8683, 24
    %v8692 = vpop.permute.xlu0 %8691
    %v8693 = vsel %vm7878, %v8688, %v8690
    %v8694 = vsel %vm7878, %v8690, %v8692
    %v8699 = vmul.bf16 %v8646, %v8688
    %v8700 = vmul.bf16 %v8647, %v8693
    %v8701 = vmul.bf16 %v8648, %v8694
    %v8702 = vmul.bf16 %v8649, %v8692
    %8707 = vrot.lane.b32.xlu0 %v8699, 104
    %v8708 = vpop.permute.xlu0 %8707
    %8709 = vrot.lane.b32.xlu0 %v8700, 104
    %v8710 = vpop.permute.xlu0 %8709
    %8711 = vrot.lane.b32.xlu0 %v8701, 104
    %v8712 = vpop.permute.xlu0 %8711
    %8713 = vrot.lane.b32.xlu0 %v8702, 104
    %v8714 = vpop.permute.xlu0 %8713
    %v8715 = vsel %vm7901, %v8708, %v8710
    %v8716 = vsel %vm7901, %v8710, %v8712
    %v8717 = vsel %vm7901, %v8712, %v8714
    %8721 = vst [vmem:[#allocation4 + $0x168] sm:$0xff] %v8715
    %8722 = vst [vmem:[#allocation4 + $0x170] sm:$0xff] %v8716
    %8723 = vst [vmem:[#allocation4 + $0x178] sm:$0xff] %v8717
    %v8724 = vld [vmem:[%s7] sm:$0xff]
    %v8725 = vld [vmem:[%s7 + $0x8] sm:$0xff]
    %v8726 = vld [vmem:[%s7 + $0x10] sm:$0xff]
    %v8727 = vld [vmem:[%s7 + $0x18] sm:$0xff]
    %v8728 = vld [vmem:[#allocation4] sm:$0xff]
    %v8729 = vld [vmem:[#allocation4 + $0x8] sm:$0xff]
    %v8730 = vld [vmem:[#allocation4 + $0x10] sm:$0xff]
    %v8731 = vld [vmem:[#allocation4 + $0x18] sm:$0xff]
    %v8732 = vld [vmem:[#allocation4 + $0x20] sm:$0xff]
    %v8733 = vld [vmem:[#allocation4 + $0x28] sm:$0xff]
    %v8734 = vld [vmem:[#allocation4 + $0x30] sm:$0xff]
    %v8735 = vld [vmem:[#allocation4 + $0x38] sm:$0xff]
    %v8736 = vld [vmem:[#allocation4 + $0x40] sm:$0xff]
    %v8737 = vld [vmem:[#allocation4 + $0x48] sm:$0xff]
    %v8738 = vld [vmem:[#allocation4 + $0x50] sm:$0xff]
    %v8739 = vld [vmem:[#allocation4 + $0x58] sm:$0xff]
    %v8740 = vld [vmem:[#allocation4 + $0x60] sm:$0xff]
    %v8741 = vld [vmem:[#allocation4 + $0x68] sm:$0xff]
    %v8742 = vld [vmem:[#allocation4 + $0x70] sm:$0xff]
    %v8743 = vld [vmem:[#allocation4 + $0x78] sm:$0xff]
    %v8744 = vld [vmem:[#allocation4 + $0x80] sm:$0xff]
    %v8745 = vld [vmem:[#allocation4 + $0x88] sm:$0xff]
    %v8746 = vld [vmem:[#allocation4 + $0x90] sm:$0xff]
    %v8747 = vld [vmem:[#allocation4 + $0x98] sm:$0xff]
    %v8748 = vld [vmem:[#allocation4 + $0xa0] sm:$0xff]
    %v8749 = vld [vmem:[#allocation4 + $0xa8] sm:$0xff]
    %v8750 = vld [vmem:[#allocation4 + $0xb0] sm:$0xff]
    %v8751 = vld [vmem:[#allocation4 + $0xb8] sm:$0xff]
    %v8752 = vld [vmem:[#allocation4 + $0xc0] sm:$0xff]
    %v8753 = vld [vmem:[#allocation4 + $0xc8] sm:$0xff]
    %v8754 = vld [vmem:[#allocation4 + $0xd0] sm:$0xff]
    %v8755 = vld [vmem:[#allocation4 + $0xd8] sm:$0xff]
    %v8756 = vld [vmem:[#allocation4 + $0xe0] sm:$0xff]
    %v8757 = vld [vmem:[#allocation4 + $0xe8] sm:$0xff]
    %v8758 = vld [vmem:[#allocation4 + $0xf0] sm:$0xff]
    %v8759 = vld [vmem:[#allocation4 + $0xf8] sm:$0xff]
    %v8760 = vld [vmem:[#allocation4 + $0x100] sm:$0xff]
    %v8761 = vld [vmem:[#allocation4 + $0x108] sm:$0xff]
    %v8762 = vld [vmem:[#allocation4 + $0x110] sm:$0xff]
    %v8763 = vld [vmem:[#allocation4 + $0x118] sm:$0xff]
    %v8764 = vld [vmem:[#allocation4 + $0x120] sm:$0xff]
    %v8765 = vld [vmem:[#allocation4 + $0x128] sm:$0xff]
    %v8766 = vld [vmem:[#allocation4 + $0x130] sm:$0xff]
    %v8767 = vld [vmem:[#allocation4 + $0x138] sm:$0xff]
    %v8768 = vld [vmem:[#allocation4 + $0x140] sm:$0xff]
    %v8769 = vld [vmem:[#allocation4 + $0x148] sm:$0xff]
    %v8770 = vld [vmem:[#allocation4 + $0x150] sm:$0xff]
    %v8771 = vld [vmem:[#allocation4 + $0x158] sm:$0xff]
    %v8772 = vld [vmem:[#allocation4 + $0x160] sm:$0xff]
    %v8773 = vld [vmem:[#allocation4 + $0x168] sm:$0xff]
    %v8774 = vld [vmem:[#allocation4 + $0x170] sm:$0xff]
    %v8775 = vld [vmem:[#allocation4 + $0x178] sm:$0xff]
    %v8776 = vld [vmem:[%s8] sm:$0xff]
    %v8777 = vld [vmem:[%s8 + $0x8] sm:$0xff]
    %v8778 = vld [vmem:[%s8 + $0x10] sm:$0xff]
    %v8779 = vld [vmem:[%s8 + $0x18] sm:$0xff]
    %8781 = vset.pattern.permute.xlu0 0
    %8782 = vperm.xlu0 %8781, %v8776
    %v8783 = vpop.permute.xlu0 %8782
    %8786 = vset.pattern.permute.xlu0 0
    %8787 = vperm.xlu0 %8786, %v8777
    %v8788 = vpop.permute.xlu0 %8787
    %8791 = vset.pattern.permute.xlu0 0
    %8792 = vperm.xlu0 %8791, %v8778
    %v8793 = vpop.permute.xlu0 %8792
    %8796 = vset.pattern.permute.xlu0 0
    %8797 = vperm.xlu0 %8796, %v8779
    %v8798 = vpop.permute.xlu0 %8797
    %v8804 = vunpack.c.l.b16 %v8724
    %v8805 = vunpack.c.h.b16 %v8724
    %v8806 = vunpack.c.l.b16 %v8725
    %v8807 = vunpack.c.h.b16 %v8725
    %v8808 = vunpack.c.l.b16 %v8726
    %v8809 = vunpack.c.h.b16 %v8726
    %v8810 = vunpack.c.l.b16 %v8727
    %v8811 = vunpack.c.h.b16 %v8727
    %v8812 = vpack.c.b16 %v8806, %v8804
    %v8813 = vpack.c.b16 %v8807, %v8805
    %v8814 = vpack.c.b16 %v8810, %v8808
    %v8815 = vpack.c.b16 %v8811, %v8809
    %8820 = vmatprep.subr.bf16.mxu0 %v8729
    %8821 = vmatpush1.bf16.msra.mxu0 %v8728
    %8822 = vmatprep.subr.bf16.mxu0 %v8732
    %8823 = vmatpush1.bf16.msra.mxu0 %v8731
    %8824 = vmatprep.subr.bf16.mxu0 %v8735
    %8825 = vmatpush1.bf16.msra.mxu0 %v8734
    %8826 = vmatprep.subr.bf16.mxu0 %v8738
    %8827 = vmatpush1.bf16.msra.mxu0 %v8737
    %8828 = vmatprep.subr.bf16.mxu0 %v8741
    %8829 = vmatpush1.bf16.msra.mxu0 %v8740
    %8830 = vmatprep.subr.bf16.mxu0 %v8744
    %8831 = vmatpush1.bf16.msra.mxu0 %v8743
    %8832 = vmatprep.subr.bf16.mxu0 %v8747
    %8833 = vmatpush1.bf16.msra.mxu0 %v8746
    %8834 = vmatprep.subr.bf16.mxu0 %v8750
    %8835 = vmatpush1.bf16.msra.mxu0 %v8749
    %8836 = vmatprep.subr.bf16.mxu0 %v8753
    %8837 = vmatpush1.bf16.msra.mxu0 %v8752
    %8838 = vmatprep.subr.bf16.mxu0 %v8756
    %8839 = vmatpush1.bf16.msra.mxu0 %v8755
    %8840 = vmatprep.subr.bf16.mxu0 %v8759
    %8841 = vmatpush1.bf16.msra.mxu0 %v8758
    %8842 = vmatprep.subr.bf16.mxu0 %v8762
    %8843 = vmatpush1.bf16.msra.mxu0 %v8761
    %8844 = vmatprep.subr.bf16.mxu0 %v8765
    %8845 = vmatpush1.bf16.msra.mxu0 %v8764
    %8846 = vmatprep.subr.bf16.mxu0 %v8768
    %8847 = vmatpush1.bf16.msra.mxu0 %v8767
    %8848 = vmatprep.subr.bf16.mxu0 %v8771
    %8849 = vmatpush1.bf16.msra.mxu0 %v8770
    %8850 = vmatprep.subr.bf16.mxu0 %v8774
    %8851 = vmatpush1.bf16.msra.mxu0 %v8773
    %8852 = vmatprep.mubr.bf16.mxu0 %v8813
    %8853 = vmatmul.mubr.bf16.gmra.mrb[0].mxu0 %v8812
    %v8854 = vpop.f32.mrb[0].mxu0
    %v8855 = vadd.f32 %v8783, %v8854
    %v8856 = vpop.f32.mrb[0].mxu0
    %v8857 = vadd.f32 %v8783, %v8856
    %v8858 = vpop.f32.mrb[0].mxu0
    %v8859 = vadd.f32 %v8788, %v8858
    %v8860 = vpop.f32.mrb[0].mxu0
    %v8861 = vadd.f32 %v8788, %v8860
    %8862 = vmatprep.mubr.bf16.mxu0 %v8815
    %8863 = vmatmul.mubr.bf16.gmra.mrb[0].mxu0 %v8814
    %v8864 = vpop.f32.mrb[0].mxu0
    %v8865 = vadd.f32 %v8793, %v8864
    %v8866 = vpop.f32.mrb[0].mxu0
    %v8867 = vadd.f32 %v8793, %v8866
    %v8868 = vpop.f32.mrb[0].mxu0
    %v8869 = vadd.f32 %v8798, %v8868
    %v8870 = vpop.f32.mrb[0].mxu0
    %v8871 = vadd.f32 %v8798, %v8870
    %8872 = vdwg.mxu0
    %8873 = vmatprep.subr.bf16.mxu0 0
    %8874 = vmatpush1.bf16.msra.mxu0 %v8730
    %8875 = vmatprep.subr.bf16.mxu0 0
    %8876 = vmatpush1.bf16.msra.mxu0 %v8733
    %8877 = vmatprep.subr.bf16.mxu0 0
    %8878 = vmatpush1.bf16.msra.mxu0 %v8736
    %8879 = vmatprep.subr.bf16.mxu0 0
    %8880 = vmatpush1.bf16.msra.mxu0 %v8739
    %8881 = vmatprep.subr.bf16.mxu0 0
    %8882 = vmatpush1.bf16.msra.mxu0 %v8742
    %8883 = vmatprep.subr.bf16.mxu0 0
    %8884 = vmatpush1.bf16.msra.mxu0 %v8745
    %8885 = vmatprep.subr.bf16.mxu0 0
    %8886 = vmatpush1.bf16.msra.mxu0 %v8748
    %8887 = vmatprep.subr.bf16.mxu0 0
    %8888 = vmatpush1.bf16.msra.mxu0 %v8751
    %8889 = vmatprep.subr.bf16.mxu0 0
    %8890 = vmatpush1.bf16.msra.mxu0 %v8754
    %8891 = vmatprep.subr.bf16.mxu0 0
    %8892 = vmatpush1.bf16.msra.mxu0 %v8757
    %8893 = vmatprep.subr.bf16.mxu0 0
    %8894 = vmatpush1.bf16.msra.mxu0 %v8760
    %8895 = vmatprep.subr.bf16.mxu0 0
    %8896 = vmatpush1.bf16.msra.mxu0 %v8763
    %8897 = vmatprep.subr.bf16.mxu0 0
    %8898 = vmatpush1.bf16.msra.mxu0 %v8766
    %8899 = vmatprep.subr.bf16.mxu0 0
    %8900 = vmatpush1.bf16.msra.mxu0 %v8769
    %8901 = vmatprep.subr.bf16.mxu0 0
    %8902 = vmatpush1.bf16.msra.mxu0 %v8772
    %8903 = vmatprep.subr.bf16.mxu0 0
    %8904 = vmatpush1.bf16.msra.mxu0 %v8775
    %8905 = vmatprep.mubr.bf16.mxu0 %v8813
    %8906 = vmatmul.mubr.bf16.gmra.mrb[0].mxu0 %v8812
    %v8907 = vpop.f32.mrb[0].mxu0
    %v8908 = vadd.f32 %v8783, %v8907
    %v8909 = vpop.f32.mrb[0].mxu0
    %v8910 = vpop.f32.mrb[0].mxu0
    %v8911 = vadd.f32 %v8788, %v8910
    %v8912 = vpop.f32.mrb[0].mxu0
    %8913 = vmatprep.mubr.bf16.mxu0 %v8815
    %8914 = vmatmul.mubr.bf16.gmra.mrb[0].mxu0 %v8814
    %v8915 = vpop.f32.mrb[0].mxu0
    %v8916 = vadd.f32 %v8793, %v8915
    %v8917 = vpop.f32.mrb[0].mxu0
    %v8918 = vpop.f32.mrb[0].mxu0
    %v8919 = vadd.f32 %v8798, %v8918
    %v8920 = vpop.f32.mrb[0].mxu0
    %8921 = vdwg.mxu0
    %vm8922 = vcmp.ge.f32.partialorder %v8855, 0.0
    %vm8923 = vcmp.ge.f32.partialorder %v8857, 0.0
    %vm8924 = vcmp.ge.f32.partialorder %v8908, 0.0
    %vm8925 = vcmp.ge.f32.partialorder %v8859, 0.0
    %vm8926 = vcmp.ge.f32.partialorder %v8861, 0.0
    %vm8927 = vcmp.ge.f32.partialorder %v8911, 0.0
    %vm8928 = vcmp.ge.f32.partialorder %v8865, 0.0
    %vm8929 = vcmp.ge.f32.partialorder %v8867, 0.0
    %vm8930 = vcmp.ge.f32.partialorder %v8916, 0.0
    %vm8931 = vcmp.ge.f32.partialorder %v8869, 0.0
    %vm8932 = vcmp.ge.f32.partialorder %v8871, 0.0
    %vm8933 = vcmp.ge.f32.partialorder %v8919, 0.0
    %v8934 = vmul.f32 %v8855, 0.01
    %v8935 = vmul.f32 %v8857, 0.01
    %v8936 = vmul.f32 %v8908, 0.01
    %v8937 = vmul.f32 %v8859, 0.01
    %v8938 = vmul.f32 %v8861, 0.01
    %v8939 = vmul.f32 %v8911, 0.01
    %v8940 = vmul.f32 %v8865, 0.01
    %v8941 = vmul.f32 %v8867, 0.01
    %v8942 = vmul.f32 %v8916, 0.01
    %v8943 = vmul.f32 %v8869, 0.01
    %v8944 = vmul.f32 %v8871, 0.01
    %v8945 = vmul.f32 %v8919, 0.01
    %v8946 = vsel %vm8922, %v8855, %v8934
    %v8947 = vsel %vm8923, %v8857, %v8935
    %v8948 = vsel %vm8924, %v8908, %v8936
    %v8949 = vsel %vm8925, %v8859, %v8937
    %v8950 = vsel %vm8926, %v8861, %v8938
    %v8951 = vsel %vm8927, %v8911, %v8939
    %v8952 = vsel %vm8928, %v8865, %v8940
    %v8953 = vsel %vm8929, %v8867, %v8941
    %v8954 = vsel %vm8930, %v8916, %v8942
    %v8955 = vsel %vm8931, %v8869, %v8943
    %v8956 = vsel %vm8932, %v8871, %v8944
    %v8957 = vsel %vm8933, %v8919, %v8945
    %v8958 = vpack.c.bf16 %v8949, %v8946
    %v8959 = vpack.c.bf16 %v8950, %v8947
    %v8960 = vpack.c.bf16 %v8951, %v8948
    %v8961 = vpack.c.bf16 %v8955, %v8952
    %v8962 = vpack.c.bf16 %v8956, %v8953
    %v8963 = vpack.c.bf16 %v8957, %v8954
    %8964 = vst [vmem:[#allocation7] sm:$0xff] %v8958
    %8965 = vst [vmem:[#allocation7 + $0x8] sm:$0xff] %v8959
    %8966 = vst [vmem:[#allocation7 + $0x10] sm:$0xff] %v8960
    %8967 = vst [vmem:[#allocation7 + $0x18] sm:$0xff] %v8961
    %8968 = vst [vmem:[#allocation7 + $0x20] sm:$0xff] %v8962
    %8969 = vst [vmem:[#allocation7 + $0x28] sm:$0xff] %v8963
    %v8970 = vld [vmem:[#allocation7] sm:$0xff]
    %v8971 = vld [vmem:[#allocation7 + $0x18] sm:$0xff]
    %v8972 = vld [vmem:[#allocation7 + $0x10] sm:$0xff]
    %v8973 = vld [vmem:[#allocation7 + $0x28] sm:$0xff]
    %8976 = vrot.lane.b32.xlu0 %v8970, 112
    %v8977 = vpop.permute.xlu0 %8976
    %8978 = vrot.lane.b32.xlu0 %v8971, 112
    %v8979 = vpop.permute.xlu0 %8978
    %8984 = vrot.lane.b32.xlu0 %v8972, 112
    %v8985 = vpop.permute.xlu0 %8984
    %8986 = vrot.lane.b32.xlu0 %v8973, 112
    %v8987 = vpop.permute.xlu0 %8986
    %v8990 = vld [vmem:[%s10] sm:$0xf]
    %v8991 = vld [vmem:[%s10 + $0x4] sm:$0x3]
    %v8992 = vld [vmem:[%s11] sm:$0xff]
    %v8993 = vld [vmem:[%s11 + $0x8] sm:$0x7]
    %8995 = vset.pattern.permute.xlu0 0
    %8996 = vperm.xlu0 %8995, %v8992
    %v8997 = vpop.permute.xlu0 %8996
    %9000 = vset.pattern.permute.xlu0 0
    %9001 = vperm.xlu0 %9000, %v8993
    %v9002 = vpop.permute.xlu0 %9001
    %v9006 = vunpack.c.l.b16 %v8990
    %v9007 = vunpack.c.l.b16 %v8991
    %v9008 = vpack.c.b16 %v9007, %v9006
    %9010 = vmatprep.subr.bf16.mxu0 0
    %9011 = vmatpush1.bf16.msra.mxu0 %v8970
    %9012 = vmatprep.subr.bf16.mxu0 0
    %9013 = vmatpush1.bf16.msra.mxu0 %v8971
    %9014 = vmatprep.subr.bf16.mxu0 0
    %9015 = vmatpush1.bf16.msra.mxu0 %v8977
    %9016 = vmatprep.subr.bf16.mxu0 0
    %9017 = vmatpush1.bf16.msra.mxu0 %v8979
    %9018 = vmatprep.subr.bf16.mxu0 0
    %9019 = vmatpush1.bf16.msra.mxu0 %v8972
    %9020 = vmatprep.subr.bf16.mxu0 0
    %9021 = vmatpush1.bf16.msra.mxu0 %v8973
    %9022 = vmatprep.subr.bf16.mxu0 0
    %9023 = vmatpush1.bf16.msra.mxu0 %v8985
    %9024 = vmatprep.subr.bf16.mxu0 0
    %9025 = vmatpush1.bf16.msra.mxu0 %v8987
    %9026 = vmatprep.subr.bf16.mxu0 0
    %9027 = vmatpush1.bf16.msra.mxu0 0
    %9028 = vmatprep.subr.bf16.mxu0 0
    %9029 = vmatpush1.bf16.msra.mxu0 0
    %9030 = vmatprep.subr.bf16.mxu0 0
    %9031 = vmatpush1.bf16.msra.mxu0 0
    %9032 = vmatprep.subr.bf16.mxu0 0
    %9033 = vmatpush1.bf16.msra.mxu0 0
    %9034 = vmatprep.subr.bf16.mxu0 0
    %9035 = vmatpush1.bf16.msra.mxu0 0
    %9036 = vmatprep.subr.bf16.mxu0 0
    %9037 = vmatpush1.bf16.msra.mxu0 0
    %9038 = vmatprep.subr.bf16.mxu0 0
    %9039 = vmatpush1.bf16.msra.mxu0 0
    %9040 = vmatprep.subr.bf16.mxu0 0
    %9041 = vmatpush1.bf16.msra.mxu0 0
    %9042 = vmatprep.mubr.bf16.mxu0 0
    %9043 = vmatmul.mubr.bf16.gmra.mrb[0].mxu0 %v9008
    %v9044 = vpop.f32.mrb[0].mxu0
    %v9045 = vadd.f32 %v8997, %v9044
    %v9046 = vpop.f32.mrb[0].mxu0
    %v9047 = vpop.f32.mrb[0].mxu0
    %v9048 = vadd.f32 %v9002, %v9047
    %v9049 = vpop.f32.mrb[0].mxu0
    %9050 = vdwg.mxu0
    %vm9051 = vcmask 15360
    %9052 = vst.msk [vmem:[%s12] sm:$0xff] %vm9051, %v9045
    %vm9053 = vcmask 10240
    %9054 = vst.msk [vmem:[%s12 + $0x8] sm:$0x7] %vm9053, %v9048
    %v9055 = vunpack.c.l.bf16 %v8970
    %v9056 = vunpack.c.h.bf16 %v8970
    %v9057 = vunpack.c.l.bf16 %v8971
    %v9058 = vunpack.c.h.bf16 %v8971
    %v9059 = vunpack.c.l.bf16 %v8977
    %v9060 = vunpack.c.h.bf16 %v8977
    %v9061 = vunpack.c.l.bf16 %v8979
    %v9062 = vunpack.c.h.bf16 %v8979
    %v9063 = vunpack.c.l.bf16 %v8972
    %v9064 = vunpack.c.h.bf16 %v8972
    %v9065 = vunpack.c.l.bf16 %v8973
    %v9066 = vunpack.c.h.bf16 %v8973
    %v9067 = vunpack.c.l.bf16 %v8985
    %v9068 = vunpack.c.h.bf16 %v8985
    %v9069 = vunpack.c.l.bf16 %v8987
    %v9070 = vunpack.c.h.bf16 %v8987
    %9071 = vst.msk [vmem:[#allocation8] sm:$0xff] %vm9051, %v9055
    %9072 = vst.msk [vmem:[#allocation8 + $0x8] sm:$0xff] %vm9051, %v9056
    %9073 = vst.msk [vmem:[#allocation8 + $0x10] sm:$0xff] %vm9051, %v9057
    %9074 = vst.msk [vmem:[#allocation8 + $0x18] sm:$0xff] %vm9051, %v9058
    %9075 = vst.msk [vmem:[#allocation8 + $0x20] sm:$0xff] %vm9051, %v9059
    %9076 = vst.msk [vmem:[#allocation8 + $0x28] sm:$0xff] %vm9051, %v9060
    %9077 = vst.msk [vmem:[#allocation8 + $0x30] sm:$0xff] %vm9051, %v9061
    %9078 = vst.msk [vmem:[#allocation8 + $0x38] sm:$0xff] %vm9051, %v9062
    %9079 = vst.msk [vmem:[#allocation8 + $0x40] sm:$0xff] %vm9051, %v9063
    %9080 = vst.msk [vmem:[#allocation8 + $0x48] sm:$0xff] %vm9051, %v9064
    %9081 = vst.msk [vmem:[#allocation8 + $0x50] sm:$0xff] %vm9051, %v9065
    %9082 = vst.msk [vmem:[#allocation8 + $0x58] sm:$0xff] %vm9051, %v9066
    %9083 = vst.msk [vmem:[#allocation8 + $0x60] sm:$0xff] %vm9051, %v9067
    %9084 = vst.msk [vmem:[#allocation8 + $0x68] sm:$0xff] %vm9051, %v9068
    %9085 = vst.msk [vmem:[#allocation8 + $0x70] sm:$0xff] %vm9051, %v9069
    %9086 = vst.msk [vmem:[#allocation8 + $0x78] sm:$0xff] %vm9051, %v9070
    // Predicated region
    $region50: #{forward.1} parent=1 // pred_check
      _
    $region51: #{forward.1} parent=1 // pred_check_branch
      %9088 = sbr.rel (0) target = $region53
    $region52: #{forward.1} parent=1 // pred_region
      _
    $region53: #{forward.1} parent=1 // pred_fallthru
      _
    // Predicated region
    $region54: #{forward.1} parent=1 // pred_check
      _
    $region55: #{forward.1} parent=1 // pred_check_branch
      %9090 = sbr.rel (0) target = $region57
    $region56: #{forward.1} parent=1 // pred_region
      %s9092 = ssub.s32 2048, 2048
      %9093 = vsyncadd [#allocation9], %s9092
      %s9094 = sshll.u32 [#allocation8], 4
      %s9095 = int_to_ptr.vmem [resolvable:$true] %s9094
      %9100 = dma.vmem_to_hbm [thread:$0]  %s9095, 2048, %s13, [#allocation9], 128, 128, 8
    $region57: #{forward.1} parent=1 // pred_fallthru
      _
    // Predicated region
    $region58: #{forward.1} parent=1 // pred_check
      _
    $region59: #{forward.1} parent=1 // pred_check_branch
      %9102 = sbr.rel (0) target = $region61
    $region60: #{forward.1} parent=1 // pred_region
      _
    $region61: #{forward.1} parent=1 // pred_fallthru
      _
    // Predicated region
    $region62: #{forward.1} parent=1 // pred_check
      _
    $region63: #{forward.1} parent=1 // pred_check_branch
      %9104 = sbr.rel (0) target = $region65
    $region64: #{forward.1} parent=1 // pred_region
      %9105 = dma.done [#allocation9], 2048
    $region65: #{forward.1} parent=1 // pred_fallthru
      _
    %9106 = vsyncpa [#allocation9], 1

</llo_original>
